<compile_context>
chip_gen: v7x
topology: tpu7x:2x2x1
jax: 0.10.0
libtpu: 0.0.40
codegen_flags: <defaults>
</compile_context>

<pallas_src>
import functools

import jax
import jax.numpy as jnp
from jax import lax
from jax.experimental import pallas as pl
from jax.experimental.pallas import tpu as pltpu


_N_ENC_STACK = 15   # stacked weight arrays per encoder-layer group
_N_DEC_STACK = 16   # stacked weight arrays per decoder-layer group


def _normalize(x, gain, bias, eps=1e-6):
    # sequence_models.layers.Normalize: unbiased var, (sigma + eps) denominator.
    h = x.shape[-1]
    mu = jnp.mean(x, axis=-1, keepdims=True)
    d = x - mu
    var = jnp.sum(d * d, axis=-1, keepdims=True) / (h - 1)
    inv = 1.0 / (jnp.sqrt(var + eps) + eps)        # per-row reciprocal, then VPU mul
    return gain * d * inv + bias


# -----------------------------------------------------------------------------
# Fused GNN kernel: one grid step = b_blk batch elements, all layers in-kernel.
# -----------------------------------------------------------------------------
def _gnn_kernel(*args, n_enc, n_dec, b_blk, L, K, H, scale, want_logits):
    (nodes_ref, edges_ref, conn_ref, mask_ref, hs_ref) = args[0:5]
    wv_ref, bv_ref, we_ref, bee_ref = args[5:9]
    enc = args[9:9 + _N_ENC_STACK]
    dec = args[9 + _N_ENC_STACK:9 + _N_ENC_STACK + _N_DEC_STACK]
    wout_ref, bout_ref = args[9 + _N_ENC_STACK + _N_DEC_STACK:-1]
    o_ref = args[-1]

    f32, bf16 = jnp.float32, jnp.bfloat16
    LK = L * K
    R = b_blk * L          # rows per grid step (stacked batch elements)
    RK = R * K
    inv_scale = 1.0 / scale

    nodes = nodes_ref[...]                       # [R, Fn]   f32
    edges = edges_ref[...]                       # [RK, Fe]  f32
    conn = conn_ref[...]                         # [RK, 1]   i32, per-element in [0, L)
    mask = mask_ref[...]                         # [RK, 1]   f32
    h_S_bf = hs_ref[...].astype(bf16)            # [R, H]

    # ---- input projections (bf16 MXU operands, f32 accumulation) --------------
    h_V = jnp.dot(nodes.astype(bf16), wv_ref[...],
                  preferred_element_type=f32) + bv_ref[...]              # [R, H]
    h_E_bf = (jnp.dot(edges.astype(bf16), we_ref[...],
                      preferred_element_type=f32) + bee_ref[...]).astype(bf16)

    # ---- one-hot neighbour-gather matrices (exact in bf16), per element -------
    # TODO(synk): connection indices outside [0, L) (e.g. -1 padding) gather a zero
    #             row here instead of a real row like torch.gather; such neighbours
    #             must be zeroed by edge_mask (true for this instantiation).
    lane = lax.broadcasted_iota(jnp.int32, (LK, L), 1)
    gather_mats = [
        (conn[b * LK:(b + 1) * LK] == lane).astype(bf16) for b in range(b_blk)
    ]

    def gather_rows(x):
        """gather(x)[i*K + k] = x[connections[i, k]] within each batch element."""
        x_bf = x.astype(bf16)
        parts = [
            jnp.dot(gather_mats[b], x_bf[b * L:(b + 1) * L],
                    preferred_element_type=f32)
            for b in range(b_blk)
        ]
        return parts[0] if b_blk == 1 else jnp.concatenate(parts, axis=0)

    def run_layer(h_v, pre_self, pre_edges,
                  w2, b2, w3, b3, g0, be0, wi, bi, wo, bo, g1, be1):
        # message MLP: W3(relu(W2(relu(W1([h_V_i, h_M_ij])))))
        # pre_edges [RK, H] = edge + gathered-neighbour W1 terms;
        # pre_self  [R, H]  = self W1 term + b1, broadcast over the K edges (VPU add,
        # replaces the old expand_mat MXU matmul).
        h1 = jnp.maximum(
            pre_edges.reshape(R, K, H) + pre_self[:, None, :], 0.0
        ).reshape(RK, H)
        h2 = jnp.maximum(
            jnp.dot(h1.astype(bf16), w2, preferred_element_type=f32) + b2, 0.0)
        h3 = (jnp.dot(h2.astype(bf16), w3, preferred_element_type=f32) + b3) * mask
        # masked sum over the K neighbours: sublane reduce (replaces sum_mat matmul)
        dh = jnp.sum(h3.reshape(R, K, H), axis=1) * inv_scale            # [R, H]
        x = _normalize(h_v + dh, g0, be0)
        # position-wise FFN
        ff = jnp.maximum(
            jnp.dot(x.astype(bf16), wi, preferred_element_type=f32) + bi, 0.0)
        ff = jnp.dot(ff.astype(bf16), wo, preferred_element_type=f32) + bo
        return _normalize(x + ff, g1, be1)

    # ---- encoder layers: messages from [h_V_i, h_E_ij, h_V_j] -----------------
    (e_w1sn, e_w1e, e_b1, e_w2, e_b2, e_w3, e_b3,
     e_g0, e_be0, e_wi, e_bi, e_wo, e_bo, e_g1, e_be1) = enc
    # TODO(synk): at production layer counts switch these static loops to
    #             lax.fori_loop over the stacked weight refs to bound code size.
    for l in range(n_enc):
        # fused self+neighbour W1 (shared LHS h_V): one [R, H] x [H, 2H] pass
        pre = jnp.dot(h_V.astype(bf16), e_w1sn[l], preferred_element_type=f32)
        pre_self = pre[:, :H] + e_b1[l]
        pre_edges = (jnp.dot(h_E_bf, e_w1e[l], preferred_element_type=f32)
                     + gather_rows(pre[:, H:]))
        h_V = run_layer(h_V, pre_self, pre_edges,
                        e_w2[l], e_b2[l], e_w3[l], e_b3[l], e_g0[l], e_be0[l],
                        e_wi[l], e_bi[l], e_wo[l], e_bo[l], e_g1[l], e_be1[l])

    # ---- decoder layers: messages from [h_V_i, h_E_ij, h_S_j, h_V_j] ----------
    (d_w1sn, d_w1e, d_w1S, d_b1, d_w2, d_b2, d_w3, d_b3,
     d_g0, d_be0, d_wi, d_bi, d_wo, d_bo, d_g1, d_be1) = dec
    # h_S is layer-invariant: a single wide pass covers every decoder layer's W1_S.
    s_proj_all = jnp.dot(h_S_bf, d_w1S[...], preferred_element_type=f32)  # [R, n_dec*H]
    for l in range(n_dec):
        pre = jnp.dot(h_V.astype(bf16), d_w1sn[l], preferred_element_type=f32)
        pre_self = pre[:, :H] + d_b1[l]
        nbr = pre[:, H:] + s_proj_all[:, l * H:(l + 1) * H]
        pre_edges = (jnp.dot(h_E_bf, d_w1e[l], preferred_element_type=f32)
                     + gather_rows(nbr))
        h_V = run_layer(h_V, pre_self, pre_edges,
                        d_w2[l], d_b2[l], d_w3[l], d_b3[l], d_g0[l], d_be0[l],
                        d_wi[l], d_bi[l], d_wo[l], d_bo[l], d_g1[l], d_be1[l])

    if want_logits:
        o_ref[...] = (jnp.dot(h_V.astype(bf16), wout_ref[...],
                              preferred_element_type=f32) + bout_ref[...])
    else:
        o_ref[...] = h_V


# -----------------------------------------------------------------------------
# Parameters
# -----------------------------------------------------------------------------
def init_params(key, node_features, edge_features, hidden, vocab, num_letters,
                n_enc, n_dec):
    keys = iter(jax.random.split(key, 256))

    def lin(cin, cout, scale=0.1):
        w = (jax.random.normal(next(keys), (cin, cout)) * scale).astype(jnp.float32)
        b = (jax.random.normal(next(keys), (1, cout)) * 0.01).astype(jnp.float32)
        return (w, b)

    def layer(num_in):
        return dict(
            W1=lin(hidden + num_in, hidden),
            W2=lin(hidden, hidden),
            W3=lin(hidden, hidden),
            norm0=(jnp.ones((1, hidden), jnp.float32),
                   jnp.zeros((1, hidden), jnp.float32)),
            ffn_in=lin(hidden, hidden * 4),
            ffn_out=lin(hidden * 4, hidden),
            norm1=(jnp.ones((1, hidden), jnp.float32),
                   jnp.zeros((1, hidden), jnp.float32)),
        )

    return dict(
        W_v=lin(node_features, hidden),
        W_e=lin(edge_features, hidden),
        W_s=(jax.random.normal(next(keys), (vocab, hidden)) * 0.1).astype(jnp.float32),
        W_out=lin(hidden, num_letters),
        encoder_layers=[layer(2 * hidden) for _ in range(n_enc)],
        decoder_layers=[layer(3 * hidden) for _ in range(n_dec)],
    )


def _stack_layer_params(layers, hidden, decoder):
    """Stack per-layer params into [n_layers, ...] arrays.

    W1 is split by input block; the self + gathered-neighbour blocks (same LHS h_V)
    are fused into one [H, 2H] weight; decoder W1_S blocks are concatenated into a
    single [H, n_dec*H] array.  Matmul weights -> bf16; biases / norm params -> f32.
    """
    bf16 = jnp.bfloat16
    H = hidden

    def st(get, dt=None):
        a = jnp.stack([get(lp) for lp in layers])
        return a.astype(dt) if dt is not None else a

    if decoder:
        # W1 input layout: [h_V_i | h_E | h_S_j | h_V_j]
        w1sn = st(lambda lp: jnp.concatenate(
            [lp["W1"][0][:H], lp["W1"][0][3 * H:4 * H]], axis=1), bf16)
        w1e = st(lambda lp: lp["W1"][0][H:2 * H], bf16)
        w1S_cat = jnp.concatenate(
            [lp["W1"][0][2 * H:3 * H] for lp in layers], axis=1).astype(bf16)
        head = [w1sn, w1e, w1S_cat]
    else:
        # W1 input layout: [h_V_i | h_E | h_V_j]
        w1sn = st(lambda lp: jnp.concatenate(
            [lp["W1"][0][:H], lp["W1"][0][2 * H:3 * H]], axis=1), bf16)
        w1e = st(lambda lp: lp["W1"][0][H:2 * H], bf16)
        head = [w1sn, w1e]

    return head + [
        st(lambda lp: lp["W1"][1]),
        st(lambda lp: lp["W2"][0], bf16), st(lambda lp: lp["W2"][1]),
        st(lambda lp: lp["W3"][0], bf16), st(lambda lp: lp["W3"][1]),
        st(lambda lp: lp["norm0"][0]), st(lambda lp: lp["norm0"][1]),
        st(lambda lp: lp["ffn_in"][0], bf16), st(lambda lp: lp["ffn_in"][1]),
        st(lambda lp: lp["ffn_out"][0], bf16), st(lambda lp: lp["ffn_out"][1]),
        st(lambda lp: lp["norm1"][0]), st(lambda lp: lp["norm1"][1]),
    ]


def _choose_b_blk(B, L, target_rows=256):
    """Batch elements per grid step: grow M toward the MXU depth, but keep at least
    two grid steps (when B >= 2) so both v7x TensorCores get work."""
    best = 1
    for cand in range(1, B + 1):
        if B % cand != 0:
            continue
        if cand * L > target_rows and cand > 1:
            continue
        if B >= 2 and B // cand < 2:
            continue
        best = max(best, cand)
    return best


# -----------------------------------------------------------------------------
# Wrapper
# -----------------------------------------------------------------------------
def gnn_forward(params, nodes, edges, connections, src, edge_mask, decoder):
    B, L, Fn = nodes.shape
    K = connections.shape[-1]
    Fe = edges.shape[-1]
    H = params["W_v"][0].shape[1]
    num_letters = params["W_out"][0].shape[1]
    n_enc = len(params["encoder_layers"])
    n_dec = len(params["decoder_layers"])
    bf16 = jnp.bfloat16

    b_blk = _choose_b_blk(B, L)
    G = B // b_blk
    R = b_blk * L
    RK = R * K

    # Lay the per-step data out so the kernel only ever sees clean 2-D slabs.
    nodes_f = nodes.astype(jnp.float32).reshape(G, R, Fn)
    edges_flat = edges.astype(jnp.float32).reshape(G, RK, Fe)
    conn_col = connections.astype(jnp.int32).reshape(G, RK, 1)
    mask_col = edge_mask.astype(jnp.float32).reshape(G, RK, 1)
    h_S = params["W_s"][src].reshape(G, R, H)          # embedding rows

    # Lane-dense logits: pad W_out / b_out to a multiple of 128 output columns.
    out_pad = ((num_letters + 127) // 128) * 128
    w_out = jnp.pad(params["W_out"][0], ((0, 0), (0, out_pad - num_letters)))
    b_out = jnp.pad(params["W_out"][1], ((0, 0), (0, out_pad - num_letters)))

    weight_list = (
        [params["W_v"][0].astype(bf16), params["W_v"][1],
         params["W_e"][0].astype(bf16), params["W_e"][1]]
        + _stack_layer_params(params["encoder_layers"], H, decoder=False)
        + _stack_layer_params(params["decoder_layers"], H, decoder=True)
        + [w_out.astype(bf16), b_out]
    )

    data_specs = [
        pl.BlockSpec((None, R, Fn), lambda g: (g, 0, 0)),
        pl.BlockSpec((None, RK, Fe), lambda g: (g, 0, 0)),
        pl.BlockSpec((None, RK, 1), lambda g: (g, 0, 0)),
        pl.BlockSpec((None, RK, 1), lambda g: (g, 0, 0)),
        pl.BlockSpec((None, R, H), lambda g: (g, 0, 0)),
    ]
    # Weights: whole array, constant block index -> fetched once, not per step.
    # TODO(synk): pipeline_mode=pl.Buffered(1) on these would halve their VMEM
    #             footprint on v7x once single-buffered block specs are supported
    #             everywhere.
    weight_specs = [
        pl.BlockSpec(w.shape, lambda g, nd=w.ndim: (0,) * nd) for w in weight_list
    ]

    out_dim = out_pad if decoder else H
    out_shape = jax.ShapeDtypeStruct((G, R, out_dim), jnp.float32)
    out_spec = pl.BlockSpec((None, R, out_dim), lambda g: (g, 0, 0))

    kernel = functools.partial(
        _gnn_kernel, n_enc=n_enc, n_dec=n_dec, b_blk=b_blk, L=L, K=K, H=H,
        scale=30.0, want_logits=decoder)

    out = pl.pallas_call(
        kernel,
        out_shape=out_shape,
        grid=(G,),
        in_specs=data_specs + weight_specs,
        out_specs=out_spec,
        compiler_params=pltpu.CompilerParams(
            dimension_semantics=("parallel",),
            # Modest request: <= 50% of v7x's 64 MiB, above the v5e scoped default.
            # TODO(synk): re-derive for production L/K (L-tiled grid path).
            vmem_limit_bytes=32 * 1024 * 1024),
    )(nodes_f, edges_flat, conn_col, mask_col, h_S, *weight_list)

    out = out.reshape(B, L, out_dim)
    return out[:, :, :num_letters] if decoder else out


def mif_forward(params, src, nodes, edges, connections, edge_mask, result="repr"):
    """Equivalent of MIF.forward (cnn=None)."""
    if result == "logits":
        decoder = True
    elif result == "repr":
        decoder = False
    else:
        raise ValueError("Result must be either 'repr' or 'logits'")
    # self.cnn is None in this instantiation -> src passed through unchanged.
    # TODO(synk): if both 'repr' and 'logits' are needed for the same inputs, a
    #             dual-output pallas_call would halve the work; the module API only
    #             exposes one result at a time, so this mirrors that contract.
    return gnn_forward(params, nodes, edges, connections, src, edge_mask, decoder)


# -----------------------------------------------------------------------------
if __name__ == "__main__":
    B, L, K = 2, 16, 8
    NODE_F, EDGE_F = 10, 11
    HIDDEN = 128            # lane-dense hidden / repr output
    VOCAB, NUM_LETTERS = 22, 20
    N_ENC, N_DEC = 2, 2     # small layer counts for the synthetic test

    root = jax.random.PRNGKey(0)
    k_par, k_nodes, k_edges, k_conn, k_src, k_mask = jax.random.split(root, 6)

    params = init_params(k_par, NODE_F, EDGE_F, HIDDEN, VOCAB, NUM_LETTERS,
                         N_ENC, N_DEC)

    nodes = jax.random.normal(k_nodes, (B, L, NODE_F), jnp.float32)
    edges = jax.random.normal(k_edges, (B, L, K, EDGE_F), jnp.float32)
    connections = jax.random.randint(k_conn, (B, L, K), 0, L, dtype=jnp.int32)
    src = jax.random.randint(k_src, (B, L), 0, VOCAB, dtype=jnp.int32)
    edge_mask = (jax.random.uniform(k_mask, (B, L, K)) > 0.2).astype(jnp.float32)

    reprs = mif_forward(params, src, nodes, edges, connections, edge_mask,
                        result="repr")
    logits = mif_forward(params, src, nodes, edges, connections, edge_mask,
                         result="logits")

    jax.block_until_ready(reprs)
    jax.block_until_ready(logits)

    assert reprs.shape == (B, L, HIDDEN)
    assert logits.shape == (B, L, NUM_LETTERS)
    assert bool(jnp.all(jnp.isfinite(reprs))) and bool(jnp.all(jnp.isfinite(logits)))

    print("KERNEL_OK")
</pallas_src>

<mosaic_0001>
module attributes {stable_mosaic.version = 11 : i64} {
  func.func @_gnn_kernel(%arg0: i32, %arg1: memref<1x16x10xf32, #tpu.memory_space<vmem>>, %arg2: memref<1x128x11xf32, #tpu.memory_space<vmem>>, %arg3: memref<1x128x1xi32, #tpu.memory_space<vmem>>, %arg4: memref<1x128x1xf32, #tpu.memory_space<vmem>>, %arg5: memref<1x16x128xf32, #tpu.memory_space<vmem>>, %arg6: memref<10x128xbf16, #tpu.memory_space<vmem>>, %arg7: memref<1x128xf32, #tpu.memory_space<vmem>>, %arg8: memref<11x128xbf16, #tpu.memory_space<vmem>>, %arg9: memref<1x128xf32, #tpu.memory_space<vmem>>, %arg10: memref<2x128x256xbf16, #tpu.memory_space<vmem>>, %arg11: memref<2x128x128xbf16, #tpu.memory_space<vmem>>, %arg12: memref<2x1x128xf32, #tpu.memory_space<vmem>>, %arg13: memref<2x128x128xbf16, #tpu.memory_space<vmem>>, %arg14: memref<2x1x128xf32, #tpu.memory_space<vmem>>, %arg15: memref<2x128x128xbf16, #tpu.memory_space<vmem>>, %arg16: memref<2x1x128xf32, #tpu.memory_space<vmem>>, %arg17: memref<2x1x128xf32, #tpu.memory_space<vmem>>, %arg18: memref<2x1x128xf32, #tpu.memory_space<vmem>>, %arg19: memref<2x128x512xbf16, #tpu.memory_space<vmem>>, %arg20: memref<2x1x512xf32, #tpu.memory_space<vmem>>, %arg21: memref<2x512x128xbf16, #tpu.memory_space<vmem>>, %arg22: memref<2x1x128xf32, #tpu.memory_space<vmem>>, %arg23: memref<2x1x128xf32, #tpu.memory_space<vmem>>, %arg24: memref<2x1x128xf32, #tpu.memory_space<vmem>>, %arg25: memref<2x128x256xbf16, #tpu.memory_space<vmem>>, %arg26: memref<2x128x128xbf16, #tpu.memory_space<vmem>>, %arg27: memref<128x256xbf16, #tpu.memory_space<vmem>>, %arg28: memref<2x1x128xf32, #tpu.memory_space<vmem>>, %arg29: memref<2x128x128xbf16, #tpu.memory_space<vmem>>, %arg30: memref<2x1x128xf32, #tpu.memory_space<vmem>>, %arg31: memref<2x128x128xbf16, #tpu.memory_space<vmem>>, %arg32: memref<2x1x128xf32, #tpu.memory_space<vmem>>, %arg33: memref<2x1x128xf32, #tpu.memory_space<vmem>>, %arg34: memref<2x1x128xf32, #tpu.memory_space<vmem>>, %arg35: memref<2x128x512xbf16, #tpu.memory_space<vmem>>, %arg36: memref<2x1x512xf32, #tpu.memory_space<vmem>>, %arg37: memref<2x512x128xbf16, #tpu.memory_space<vmem>>, %arg38: memref<2x1x128xf32, #tpu.memory_space<vmem>>, %arg39: memref<2x1x128xf32, #tpu.memory_space<vmem>>, %arg40: memref<2x1x128xf32, #tpu.memory_space<vmem>>, %arg41: memref<128x128xbf16, #tpu.memory_space<vmem>>, %arg42: memref<1x128xf32, #tpu.memory_space<vmem>>, %arg43: memref<1x16x128xf32, #tpu.memory_space<vmem>>) attributes {dimension_semantics = [#tpu.dimension_semantics<parallel>], iteration_bounds = array<i64: 2>, scalar_prefetch = 0 : i64, scratch_operands = 0 : i64, tpu.core_type = #tpu.core_type<tc>, window_params = [{transform_indices = @transform_0, window_bounds = array<i64: 1, 16, 10>}, {transform_indices = @transform_1, window_bounds = array<i64: 1, 128, 11>}, {transform_indices = @transform_2, window_bounds = array<i64: 1, 128, 1>}, {transform_indices = @transform_3, window_bounds = array<i64: 1, 128, 1>}, {transform_indices = @transform_4, window_bounds = array<i64: 1, 16, 128>}, {pipeline_mode = #tpu.pipeline_mode<synchronous>, transform_indices = @transform_5, window_bounds = array<i64: 10, 128>}, {pipeline_mode = #tpu.pipeline_mode<synchronous>, transform_indices = @transform_6, window_bounds = array<i64: 1, 128>}, {pipeline_mode = #tpu.pipeline_mode<synchronous>, transform_indices = @transform_7, window_bounds = array<i64: 11, 128>}, {pipeline_mode = #tpu.pipeline_mode<synchronous>, transform_indices = @transform_8, window_bounds = array<i64: 1, 128>}, {pipeline_mode = #tpu.pipeline_mode<synchronous>, transform_indices = @transform_9, window_bounds = array<i64: 2, 128, 256>}, {pipeline_mode = #tpu.pipeline_mode<synchronous>, transform_indices = @transform_10, window_bounds = array<i64: 2, 128, 128>}, {pipeline_mode = #tpu.pipeline_mode<synchronous>, transform_indices = @transform_11, window_bounds = array<i64: 2, 1, 128>}, {pipeline_mode = #tpu.pipeline_mode<synchronous>, transform_indices = @transform_12, window_bounds = array<i64: 2, 128, 128>}, {pipeline_mode = #tpu.pipeline_mode<synchronous>, transform_indices = @transform_13, window_bounds = array<i64: 2, 1, 128>}, {pipeline_mode = #tpu.pipeline_mode<synchronous>, transform_indices = @transform_14, window_bounds = array<i64: 2, 128, 128>}, {pipeline_mode = #tpu.pipeline_mode<synchronous>, transform_indices = @transform_15, window_bounds = array<i64: 2, 1, 128>}, {pipeline_mode = #tpu.pipeline_mode<synchronous>, transform_indices = @transform_16, window_bounds = array<i64: 2, 1, 128>}, {pipeline_mode = #tpu.pipeline_mode<synchronous>, transform_indices = @transform_17, window_bounds = array<i64: 2, 1, 128>}, {pipeline_mode = #tpu.pipeline_mode<synchronous>, transform_indices = @transform_18, window_bounds = array<i64: 2, 128, 512>}, {pipeline_mode = #tpu.pipeline_mode<synchronous>, transform_indices = @transform_19, window_bounds = array<i64: 2, 1, 512>}, {pipeline_mode = #tpu.pipeline_mode<synchronous>, transform_indices = @transform_20, window_bounds = array<i64: 2, 512, 128>}, {pipeline_mode = #tpu.pipeline_mode<synchronous>, transform_indices = @transform_21, window_bounds = array<i64: 2, 1, 128>}, {pipeline_mode = #tpu.pipeline_mode<synchronous>, transform_indices = @transform_22, window_bounds = array<i64: 2, 1, 128>}, {pipeline_mode = #tpu.pipeline_mode<synchronous>, transform_indices = @transform_23, window_bounds = array<i64: 2, 1, 128>}, {pipeline_mode = #tpu.pipeline_mode<synchronous>, transform_indices = @transform_24, window_bounds = array<i64: 2, 128, 256>}, {pipeline_mode = #tpu.pipeline_mode<synchronous>, transform_indices = @transform_25, window_bounds = array<i64: 2, 128, 128>}, {pipeline_mode = #tpu.pipeline_mode<synchronous>, transform_indices = @transform_26, window_bounds = array<i64: 128, 256>}, {pipeline_mode = #tpu.pipeline_mode<synchronous>, transform_indices = @transform_27, window_bounds = array<i64: 2, 1, 128>}, {pipeline_mode = #tpu.pipeline_mode<synchronous>, transform_indices = @transform_28, window_bounds = array<i64: 2, 128, 128>}, {pipeline_mode = #tpu.pipeline_mode<synchronous>, transform_indices = @transform_29, window_bounds = array<i64: 2, 1, 128>}, {pipeline_mode = #tpu.pipeline_mode<synchronous>, transform_indices = @transform_30, window_bounds = array<i64: 2, 128, 128>}, {pipeline_mode = #tpu.pipeline_mode<synchronous>, transform_indices = @transform_31, window_bounds = array<i64: 2, 1, 128>}, {pipeline_mode = #tpu.pipeline_mode<synchronous>, transform_indices = @transform_32, window_bounds = array<i64: 2, 1, 128>}, {pipeline_mode = #tpu.pipeline_mode<synchronous>, transform_indices = @transform_33, window_bounds = array<i64: 2, 1, 128>}, {pipeline_mode = #tpu.pipeline_mode<synchronous>, transform_indices = @transform_34, window_bounds = array<i64: 2, 128, 512>}, {pipeline_mode = #tpu.pipeline_mode<synchronous>, transform_indices = @transform_35, window_bounds = array<i64: 2, 1, 512>}, {pipeline_mode = #tpu.pipeline_mode<synchronous>, transform_indices = @transform_36, window_bounds = array<i64: 2, 512, 128>}, {pipeline_mode = #tpu.pipeline_mode<synchronous>, transform_indices = @transform_37, window_bounds = array<i64: 2, 1, 128>}, {pipeline_mode = #tpu.pipeline_mode<synchronous>, transform_indices = @transform_38, window_bounds = array<i64: 2, 1, 128>}, {pipeline_mode = #tpu.pipeline_mode<synchronous>, transform_indices = @transform_39, window_bounds = array<i64: 2, 1, 128>}, {pipeline_mode = #tpu.pipeline_mode<synchronous>, transform_indices = @transform_40, window_bounds = array<i64: 128, 128>}, {pipeline_mode = #tpu.pipeline_mode<synchronous>, transform_indices = @transform_41, window_bounds = array<i64: 1, 128>}, {transform_indices = @transform_42, window_bounds = array<i64: 1, 16, 128>}]} {
    %c0 = arith.constant 0 : index
    %c0_0 = arith.constant 0 : index
    %c0_1 = arith.constant 0 : index
    %0 = vector.load %arg1[%c0, %c0_0, %c0_1] : memref<1x16x10xf32, #tpu.memory_space<vmem>>, vector<1x16x10xf32>
    %1 = vector.shape_cast %0 : vector<1x16x10xf32> to vector<16x10xf32>
    %c0_2 = arith.constant 0 : index
    %c0_3 = arith.constant 0 : index
    %c0_4 = arith.constant 0 : index
    %2 = vector.load %arg2[%c0_2, %c0_3, %c0_4] : memref<1x128x11xf32, #tpu.memory_space<vmem>>, vector<1x128x11xf32>
    %3 = vector.shape_cast %2 : vector<1x128x11xf32> to vector<128x11xf32>
    %c0_5 = arith.constant 0 : index
    %c0_6 = arith.constant 0 : index
    %c0_7 = arith.constant 0 : index
    %4 = vector.load %arg3[%c0_5, %c0_6, %c0_7] : memref<1x128x1xi32, #tpu.memory_space<vmem>>, vector<1x128x1xi32>
    %5 = vector.shape_cast %4 : vector<1x128x1xi32> to vector<128x1xi32>
    %c0_8 = arith.constant 0 : index
    %c0_9 = arith.constant 0 : index
    %c0_10 = arith.constant 0 : index
    %6 = vector.load %arg4[%c0_8, %c0_9, %c0_10] : memref<1x128x1xf32, #tpu.memory_space<vmem>>, vector<1x128x1xf32>
    %7 = vector.shape_cast %6 : vector<1x128x1xf32> to vector<128x1xf32>
    %c0_11 = arith.constant 0 : index
    %c0_12 = arith.constant 0 : index
    %c0_13 = arith.constant 0 : index
    %8 = vector.load %arg5[%c0_11, %c0_12, %c0_13] : memref<1x16x128xf32, #tpu.memory_space<vmem>>, vector<1x16x128xf32>
    %9 = vector.shape_cast %8 : vector<1x16x128xf32> to vector<16x128xf32>
    %10 = arith.truncf %9 : vector<16x128xf32> to vector<16x128xbf16>
    %11 = arith.truncf %1 : vector<16x10xf32> to vector<16x10xbf16>
    %c0_14 = arith.constant 0 : index
    %c0_15 = arith.constant 0 : index
    %12 = vector.load %arg6[%c0_14, %c0_15] : memref<10x128xbf16, #tpu.memory_space<vmem>>, vector<10x128xbf16>
    %cst = arith.constant dense<0.000000e+00> : vector<16x128xf32>
    %13 = tpu.matmul %11, %12, %cst {dimension_numbers = #tpu.dot_dimension_numbers<[1], [0], [0], [1], [0, 0, 1, 1], [], []>} : vector<16x10xbf16>, vector<10x128xbf16>, vector<16x128xf32> -> vector<16x128xf32>
    %c0_16 = arith.constant 0 : index
    %c0_17 = arith.constant 0 : index
    %14 = vector.load %arg7[%c0_16, %c0_17] : memref<1x128xf32, #tpu.memory_space<vmem>>, vector<1x128xf32>
    %15 = vector.broadcast %14 : vector<1x128xf32> to vector<16x128xf32>
    %16 = arith.addf %13, %15 : vector<16x128xf32>
    %17 = arith.truncf %3 : vector<128x11xf32> to vector<128x11xbf16>
    %c0_18 = arith.constant 0 : index
    %c0_19 = arith.constant 0 : index
    %18 = vector.load %arg8[%c0_18, %c0_19] : memref<11x128xbf16, #tpu.memory_space<vmem>>, vector<11x128xbf16>
    %cst_20 = arith.constant dense<0.000000e+00> : vector<128x128xf32>
    %19 = tpu.matmul %17, %18, %cst_20 {dimension_numbers = #tpu.dot_dimension_numbers<[1], [0], [0], [1], [0, 0, 1, 1], [], []>} : vector<128x11xbf16>, vector<11x128xbf16>, vector<128x128xf32> -> vector<128x128xf32>
    %c0_21 = arith.constant 0 : index
    %c0_22 = arith.constant 0 : index
    %20 = vector.load %arg9[%c0_21, %c0_22] : memref<1x128xf32, #tpu.memory_space<vmem>>, vector<1x128xf32>
    %21 = vector.broadcast %20 : vector<1x128xf32> to vector<128x128xf32>
    %22 = arith.addf %19, %21 : vector<128x128xf32>
    %23 = arith.truncf %22 : vector<128x128xf32> to vector<128x128xbf16>
    %24 = tpu.iota {dimensions = array<i32: 1>} : vector<128x16xi32>
    %25 = vector.broadcast %5 : vector<128x1xi32> to vector<128x16xi32>
    %26 = arith.cmpi eq, %25, %24 : vector<128x16xi32>
    %27 = arith.extui %26 : vector<128x16xi1> to vector<128x16xi32>
    %28 = arith.sitofp %27 : vector<128x16xi32> to vector<128x16xf32>
    %29 = arith.truncf %28 : vector<128x16xf32> to vector<128x16xbf16>
    %30 = arith.truncf %16 : vector<16x128xf32> to vector<16x128xbf16>
    %c0_23 = arith.constant 0 : index
    %c0_24 = arith.constant 0 : index
    %c0_25 = arith.constant 0 : index
    %31 = vector.load %arg10[%c0_23, %c0_24, %c0_25] : memref<2x128x256xbf16, #tpu.memory_space<vmem>>, vector<1x128x256xbf16>
    %32 = vector.shape_cast %31 : vector<1x128x256xbf16> to vector<128x256xbf16>
    %cst_26 = arith.constant dense<0.000000e+00> : vector<16x256xf32>
    %33 = tpu.matmul %30, %32, %cst_26 {dimension_numbers = #tpu.dot_dimension_numbers<[1], [0], [0], [1], [0, 0, 1, 1], [], []>} : vector<16x128xbf16>, vector<128x256xbf16>, vector<16x256xf32> -> vector<16x256xf32>
    %34 = vector.extract_strided_slice %33 {offsets = [0, 0], sizes = [16, 128], strides = [1, 1]} : vector<16x256xf32> to vector<16x128xf32>
    %c0_27 = arith.constant 0 : index
    %c0_28 = arith.constant 0 : index
    %c0_29 = arith.constant 0 : index
    %35 = vector.load %arg12[%c0_27, %c0_28, %c0_29] : memref<2x1x128xf32, #tpu.memory_space<vmem>>, vector<1x1x128xf32>
    %36 = vector.shape_cast %35 : vector<1x1x128xf32> to vector<1x128xf32>
    %37 = vector.broadcast %36 : vector<1x128xf32> to vector<16x128xf32>
    %38 = arith.addf %34, %37 : vector<16x128xf32>
    %c0_30 = arith.constant 0 : index
    %c0_31 = arith.constant 0 : index
    %c0_32 = arith.constant 0 : index
    %39 = vector.load %arg11[%c0_30, %c0_31, %c0_32] : memref<2x128x128xbf16, #tpu.memory_space<vmem>>, vector<1x128x128xbf16>
    %40 = vector.shape_cast %39 : vector<1x128x128xbf16> to vector<128x128xbf16>
    %cst_33 = arith.constant dense<0.000000e+00> : vector<128x128xf32>
    %41 = tpu.matmul %23, %40, %cst_33 {dimension_numbers = #tpu.dot_dimension_numbers<[1], [0], [0], [1], [0, 0, 1, 1], [], []>} : vector<128x128xbf16>, vector<128x128xbf16>, vector<128x128xf32> -> vector<128x128xf32>
    %42 = vector.extract_strided_slice %33 {offsets = [0, 128], sizes = [16, 128], strides = [1, 1]} : vector<16x256xf32> to vector<16x128xf32>
    %43 = arith.truncf %42 : vector<16x128xf32> to vector<16x128xbf16>
    %cst_34 = arith.constant dense<0.000000e+00> : vector<128x128xf32>
    %44 = tpu.matmul %29, %43, %cst_34 {dimension_numbers = #tpu.dot_dimension_numbers<[1], [0], [0], [1], [0, 0, 1, 1], [], []>} : vector<128x16xbf16>, vector<16x128xbf16>, vector<128x128xf32> -> vector<128x128xf32>
    %45 = arith.addf %41, %44 : vector<128x128xf32>
    %c0_35 = arith.constant 0 : index
    %c0_36 = arith.constant 0 : index
    %c0_37 = arith.constant 0 : index
    %46 = vector.load %arg13[%c0_35, %c0_36, %c0_37] : memref<2x128x128xbf16, #tpu.memory_space<vmem>>, vector<1x128x128xbf16>
    %47 = vector.shape_cast %46 : vector<1x128x128xbf16> to vector<128x128xbf16>
    %c0_38 = arith.constant 0 : index
    %c0_39 = arith.constant 0 : index
    %c0_40 = arith.constant 0 : index
    %48 = vector.load %arg14[%c0_38, %c0_39, %c0_40] : memref<2x1x128xf32, #tpu.memory_space<vmem>>, vector<1x1x128xf32>
    %49 = vector.shape_cast %48 : vector<1x1x128xf32> to vector<1x128xf32>
    %c0_41 = arith.constant 0 : index
    %c0_42 = arith.constant 0 : index
    %c0_43 = arith.constant 0 : index
    %50 = vector.load %arg15[%c0_41, %c0_42, %c0_43] : memref<2x128x128xbf16, #tpu.memory_space<vmem>>, vector<1x128x128xbf16>
    %51 = vector.shape_cast %50 : vector<1x128x128xbf16> to vector<128x128xbf16>
    %c0_44 = arith.constant 0 : index
    %c0_45 = arith.constant 0 : index
    %c0_46 = arith.constant 0 : index
    %52 = vector.load %arg16[%c0_44, %c0_45, %c0_46] : memref<2x1x128xf32, #tpu.memory_space<vmem>>, vector<1x1x128xf32>
    %53 = vector.shape_cast %52 : vector<1x1x128xf32> to vector<1x128xf32>
    %c0_47 = arith.constant 0 : index
    %c0_48 = arith.constant 0 : index
    %c0_49 = arith.constant 0 : index
    %54 = vector.load %arg17[%c0_47, %c0_48, %c0_49] : memref<2x1x128xf32, #tpu.memory_space<vmem>>, vector<1x1x128xf32>
    %55 = vector.shape_cast %54 : vector<1x1x128xf32> to vector<1x128xf32>
    %c0_50 = arith.constant 0 : index
    %c0_51 = arith.constant 0 : index
    %c0_52 = arith.constant 0 : index
    %56 = vector.load %arg18[%c0_50, %c0_51, %c0_52] : memref<2x1x128xf32, #tpu.memory_space<vmem>>, vector<1x1x128xf32>
    %57 = vector.shape_cast %56 : vector<1x1x128xf32> to vector<1x128xf32>
    %c0_53 = arith.constant 0 : index
    %c0_54 = arith.constant 0 : index
    %c0_55 = arith.constant 0 : index
    %58 = vector.load %arg19[%c0_53, %c0_54, %c0_55] : memref<2x128x512xbf16, #tpu.memory_space<vmem>>, vector<1x128x512xbf16>
    %59 = vector.shape_cast %58 : vector<1x128x512xbf16> to vector<128x512xbf16>
    %c0_56 = arith.constant 0 : index
    %c0_57 = arith.constant 0 : index
    %c0_58 = arith.constant 0 : index
    %60 = vector.load %arg20[%c0_56, %c0_57, %c0_58] : memref<2x1x512xf32, #tpu.memory_space<vmem>>, vector<1x1x512xf32>
    %61 = vector.shape_cast %60 : vector<1x1x512xf32> to vector<1x512xf32>
    %c0_59 = arith.constant 0 : index
    %c0_60 = arith.constant 0 : index
    %c0_61 = arith.constant 0 : index
    %62 = vector.load %arg21[%c0_59, %c0_60, %c0_61] : memref<2x512x128xbf16, #tpu.memory_space<vmem>>, vector<1x512x128xbf16>
    %63 = vector.shape_cast %62 : vector<1x512x128xbf16> to vector<512x128xbf16>
    %c0_62 = arith.constant 0 : index
    %c0_63 = arith.constant 0 : index
    %c0_64 = arith.constant 0 : index
    %64 = vector.load %arg22[%c0_62, %c0_63, %c0_64] : memref<2x1x128xf32, #tpu.memory_space<vmem>>, vector<1x1x128xf32>
    %65 = vector.shape_cast %64 : vector<1x1x128xf32> to vector<1x128xf32>
    %c0_65 = arith.constant 0 : index
    %c0_66 = arith.constant 0 : index
    %c0_67 = arith.constant 0 : index
    %66 = vector.load %arg23[%c0_65, %c0_66, %c0_67] : memref<2x1x128xf32, #tpu.memory_space<vmem>>, vector<1x1x128xf32>
    %67 = vector.shape_cast %66 : vector<1x1x128xf32> to vector<1x128xf32>
    %c0_68 = arith.constant 0 : index
    %c0_69 = arith.constant 0 : index
    %c0_70 = arith.constant 0 : index
    %68 = vector.load %arg24[%c0_68, %c0_69, %c0_70] : memref<2x1x128xf32, #tpu.memory_space<vmem>>, vector<1x1x128xf32>
    %69 = vector.shape_cast %68 : vector<1x1x128xf32> to vector<1x128xf32>
    %70 = vector.shape_cast %45 : vector<128x128xf32> to vector<16x8x128xf32>
    %71 = vector.shape_cast %38 : vector<16x128xf32> to vector<16x1x128xf32>
    %72 = vector.broadcast %71 : vector<16x1x128xf32> to vector<16x8x128xf32>
    %73 = arith.addf %70, %72 : vector<16x8x128xf32>
    %cst_71 = arith.constant 0.000000e+00 : f32
    %74 = vector.broadcast %cst_71 : f32 to vector<16x8x128xf32>
    %75 = arith.maximumf %73, %74 : vector<16x8x128xf32>
    %76 = vector.shape_cast %75 : vector<16x8x128xf32> to vector<128x128xf32>
    %77 = arith.truncf %76 : vector<128x128xf32> to vector<128x128xbf16>
    %cst_72 = arith.constant dense<0.000000e+00> : vector<128x128xf32>
    %78 = tpu.matmul %77, %47, %cst_72 {dimension_numbers = #tpu.dot_dimension_numbers<[1], [0], [0], [1], [0, 0, 1, 1], [], []>} : vector<128x128xbf16>, vector<128x128xbf16>, vector<128x128xf32> -> vector<128x128xf32>
    %79 = vector.broadcast %49 : vector<1x128xf32> to vector<128x128xf32>
    %80 = arith.addf %78, %79 : vector<128x128xf32>
    %cst_73 = arith.constant 0.000000e+00 : f32
    %81 = vector.broadcast %cst_73 : f32 to vector<128x128xf32>
    %82 = arith.maximumf %80, %81 : vector<128x128xf32>
    %83 = arith.truncf %82 : vector<128x128xf32> to vector<128x128xbf16>
    %cst_74 = arith.constant dense<0.000000e+00> : vector<128x128xf32>
    %84 = tpu.matmul %83, %51, %cst_74 {dimension_numbers = #tpu.dot_dimension_numbers<[1], [0], [0], [1], [0, 0, 1, 1], [], []>} : vector<128x128xbf16>, vector<128x128xbf16>, vector<128x128xf32> -> vector<128x128xf32>
    %85 = vector.broadcast %53 : vector<1x128xf32> to vector<128x128xf32>
    %86 = arith.addf %84, %85 : vector<128x128xf32>
    %87 = vector.broadcast %7 : vector<128x1xf32> to vector<128x128xf32>
    %88 = arith.mulf %86, %87 : vector<128x128xf32>
    %89 = vector.shape_cast %88 : vector<128x128xf32> to vector<16x8x128xf32>
    %cst_75 = arith.constant dense<0.000000e+00> : vector<16x128xf32>
    %90 = vector.multi_reduction <add>, %89, %cst_75 [1] : vector<16x8x128xf32> to vector<16x128xf32>
    %cst_76 = arith.constant 0.0333333351 : f32
    %91 = vector.broadcast %cst_76 : f32 to vector<16x128xf32>
    %92 = arith.mulf %90, %91 : vector<16x128xf32>
    %93 = arith.addf %16, %92 : vector<16x128xf32>
    %cst_77 = arith.constant dense<0.000000e+00> : vector<16xf32>
    %94 = vector.multi_reduction <add>, %93, %cst_77 [1] : vector<16x128xf32> to vector<16xf32>
    %95 = vector.shape_cast %94 : vector<16xf32> to vector<16x1xf32>
    %cst_78 = arith.constant 1.280000e+02 : f32
    %96 = vector.broadcast %cst_78 : f32 to vector<16x1xf32>
    %97 = arith.divf %95, %96 : vector<16x1xf32>
    %98 = vector.broadcast %97 : vector<16x1xf32> to vector<16x128xf32>
    %99 = arith.subf %93, %98 : vector<16x128xf32>
    %100 = arith.mulf %99, %99 : vector<16x128xf32>
    %cst_79 = arith.constant dense<0.000000e+00> : vector<16xf32>
    %101 = vector.multi_reduction <add>, %100, %cst_79 [1] : vector<16x128xf32> to vector<16xf32>
    %102 = vector.shape_cast %101 : vector<16xf32> to vector<16x1xf32>
    %cst_80 = arith.constant 1.270000e+02 : f32
    %103 = vector.broadcast %cst_80 : f32 to vector<16x1xf32>
    %104 = arith.divf %102, %103 : vector<16x1xf32>
    %cst_81 = arith.constant 9.99999997E-7 : f32
    %105 = vector.broadcast %cst_81 : f32 to vector<16x1xf32>
    %106 = arith.addf %104, %105 : vector<16x1xf32>
    %107 = math.sqrt %106 : vector<16x1xf32>
    %cst_82 = arith.constant 9.99999997E-7 : f32
    %108 = vector.broadcast %cst_82 : f32 to vector<16x1xf32>
    %109 = arith.addf %107, %108 : vector<16x1xf32>
    %cst_83 = arith.constant 1.000000e+00 : f32
    %110 = vector.broadcast %cst_83 : f32 to vector<16x1xf32>
    %111 = arith.divf %110, %109 : vector<16x1xf32>
    %112 = vector.broadcast %55 : vector<1x128xf32> to vector<16x128xf32>
    %113 = arith.mulf %112, %99 : vector<16x128xf32>
    %114 = vector.broadcast %111 : vector<16x1xf32> to vector<16x128xf32>
    %115 = arith.mulf %113, %114 : vector<16x128xf32>
    %116 = vector.broadcast %57 : vector<1x128xf32> to vector<16x128xf32>
    %117 = arith.addf %115, %116 : vector<16x128xf32>
    %118 = arith.truncf %117 : vector<16x128xf32> to vector<16x128xbf16>
    %cst_84 = arith.constant dense<0.000000e+00> : vector<16x512xf32>
    %119 = tpu.matmul %118, %59, %cst_84 {dimension_numbers = #tpu.dot_dimension_numbers<[1], [0], [0], [1], [0, 0, 1, 1], [], []>} : vector<16x128xbf16>, vector<128x512xbf16>, vector<16x512xf32> -> vector<16x512xf32>
    %120 = vector.broadcast %61 : vector<1x512xf32> to vector<16x512xf32>
    %121 = arith.addf %119, %120 : vector<16x512xf32>
    %cst_85 = arith.constant 0.000000e+00 : f32
    %122 = vector.broadcast %cst_85 : f32 to vector<16x512xf32>
    %123 = arith.maximumf %121, %122 : vector<16x512xf32>
    %124 = arith.truncf %123 : vector<16x512xf32> to vector<16x512xbf16>
    %cst_86 = arith.constant dense<0.000000e+00> : vector<16x128xf32>
    %125 = tpu.matmul %124, %63, %cst_86 {dimension_numbers = #tpu.dot_dimension_numbers<[1], [0], [0], [1], [0, 0, 1, 1], [], []>} : vector<16x512xbf16>, vector<512x128xbf16>, vector<16x128xf32> -> vector<16x128xf32>
    %126 = vector.broadcast %65 : vector<1x128xf32> to vector<16x128xf32>
    %127 = arith.addf %125, %126 : vector<16x128xf32>
    %128 = arith.addf %117, %127 : vector<16x128xf32>
    %cst_87 = arith.constant dense<0.000000e+00> : vector<16xf32>
    %129 = vector.multi_reduction <add>, %128, %cst_87 [1] : vector<16x128xf32> to vector<16xf32>
    %130 = vector.shape_cast %129 : vector<16xf32> to vector<16x1xf32>
    %cst_88 = arith.constant 1.280000e+02 : f32
    %131 = vector.broadcast %cst_88 : f32 to vector<16x1xf32>
    %132 = arith.divf %130, %131 : vector<16x1xf32>
    %133 = vector.broadcast %132 : vector<16x1xf32> to vector<16x128xf32>
    %134 = arith.subf %128, %133 : vector<16x128xf32>
    %135 = arith.mulf %134, %134 : vector<16x128xf32>
    %cst_89 = arith.constant dense<0.000000e+00> : vector<16xf32>
    %136 = vector.multi_reduction <add>, %135, %cst_89 [1] : vector<16x128xf32> to vector<16xf32>
    %137 = vector.shape_cast %136 : vector<16xf32> to vector<16x1xf32>
    %cst_90 = arith.constant 1.270000e+02 : f32
    %138 = vector.broadcast %cst_90 : f32 to vector<16x1xf32>
    %139 = arith.divf %137, %138 : vector<16x1xf32>
    %cst_91 = arith.constant 9.99999997E-7 : f32
    %140 = vector.broadcast %cst_91 : f32 to vector<16x1xf32>
    %141 = arith.addf %139, %140 : vector<16x1xf32>
    %142 = math.sqrt %141 : vector<16x1xf32>
    %cst_92 = arith.constant 9.99999997E-7 : f32
    %143 = vector.broadcast %cst_92 : f32 to vector<16x1xf32>
    %144 = arith.addf %142, %143 : vector<16x1xf32>
    %cst_93 = arith.constant 1.000000e+00 : f32
    %145 = vector.broadcast %cst_93 : f32 to vector<16x1xf32>
    %146 = arith.divf %145, %144 : vector<16x1xf32>
    %147 = vector.broadcast %67 : vector<1x128xf32> to vector<16x128xf32>
    %148 = arith.mulf %147, %134 : vector<16x128xf32>
    %149 = vector.broadcast %146 : vector<16x1xf32> to vector<16x128xf32>
    %150 = arith.mulf %148, %149 : vector<16x128xf32>
    %151 = vector.broadcast %69 : vector<1x128xf32> to vector<16x128xf32>
    %152 = arith.addf %150, %151 : vector<16x128xf32>
    %153 = arith.truncf %152 : vector<16x128xf32> to vector<16x128xbf16>
    %c1 = arith.constant 1 : index
    %c0_94 = arith.constant 0 : index
    %c0_95 = arith.constant 0 : index
    %154 = vector.load %arg10[%c1, %c0_94, %c0_95] : memref<2x128x256xbf16, #tpu.memory_space<vmem>>, vector<1x128x256xbf16>
    %155 = vector.shape_cast %154 : vector<1x128x256xbf16> to vector<128x256xbf16>
    %cst_96 = arith.constant dense<0.000000e+00> : vector<16x256xf32>
    %156 = tpu.matmul %153, %155, %cst_96 {dimension_numbers = #tpu.dot_dimension_numbers<[1], [0], [0], [1], [0, 0, 1, 1], [], []>} : vector<16x128xbf16>, vector<128x256xbf16>, vector<16x256xf32> -> vector<16x256xf32>
    %157 = vector.extract_strided_slice %156 {offsets = [0, 0], sizes = [16, 128], strides = [1, 1]} : vector<16x256xf32> to vector<16x128xf32>
    %c1_97 = arith.constant 1 : index
    %c0_98 = arith.constant 0 : index
    %c0_99 = arith.constant 0 : index
    %158 = vector.load %arg12[%c1_97, %c0_98, %c0_99] : memref<2x1x128xf32, #tpu.memory_space<vmem>>, vector<1x1x128xf32>
    %159 = vector.shape_cast %158 : vector<1x1x128xf32> to vector<1x128xf32>
    %160 = vector.broadcast %159 : vector<1x128xf32> to vector<16x128xf32>
    %161 = arith.addf %157, %160 : vector<16x128xf32>
    %c1_100 = arith.constant 1 : index
    %c0_101 = arith.constant 0 : index
    %c0_102 = arith.constant 0 : index
    %162 = vector.load %arg11[%c1_100, %c0_101, %c0_102] : memref<2x128x128xbf16, #tpu.memory_space<vmem>>, vector<1x128x128xbf16>
    %163 = vector.shape_cast %162 : vector<1x128x128xbf16> to vector<128x128xbf16>
    %cst_103 = arith.constant dense<0.000000e+00> : vector<128x128xf32>
    %164 = tpu.matmul %23, %163, %cst_103 {dimension_numbers = #tpu.dot_dimension_numbers<[1], [0], [0], [1], [0, 0, 1, 1], [], []>} : vector<128x128xbf16>, vector<128x128xbf16>, vector<128x128xf32> -> vector<128x128xf32>
    %165 = vector.extract_strided_slice %156 {offsets = [0, 128], sizes = [16, 128], strides = [1, 1]} : vector<16x256xf32> to vector<16x128xf32>
    %166 = arith.truncf %165 : vector<16x128xf32> to vector<16x128xbf16>
    %cst_104 = arith.constant dense<0.000000e+00> : vector<128x128xf32>
    %167 = tpu.matmul %29, %166, %cst_104 {dimension_numbers = #tpu.dot_dimension_numbers<[1], [0], [0], [1], [0, 0, 1, 1], [], []>} : vector<128x16xbf16>, vector<16x128xbf16>, vector<128x128xf32> -> vector<128x128xf32>
    %168 = arith.addf %164, %167 : vector<128x128xf32>
    %c1_105 = arith.constant 1 : index
    %c0_106 = arith.constant 0 : index
    %c0_107 = arith.constant 0 : index
    %169 = vector.load %arg13[%c1_105, %c0_106, %c0_107] : memref<2x128x128xbf16, #tpu.memory_space<vmem>>, vector<1x128x128xbf16>
    %170 = vector.shape_cast %169 : vector<1x128x128xbf16> to vector<128x128xbf16>
    %c1_108 = arith.constant 1 : index
    %c0_109 = arith.constant 0 : index
    %c0_110 = arith.constant 0 : index
    %171 = vector.load %arg14[%c1_108, %c0_109, %c0_110] : memref<2x1x128xf32, #tpu.memory_space<vmem>>, vector<1x1x128xf32>
    %172 = vector.shape_cast %171 : vector<1x1x128xf32> to vector<1x128xf32>
    %c1_111 = arith.constant 1 : index
    %c0_112 = arith.constant 0 : index
    %c0_113 = arith.constant 0 : index
    %173 = vector.load %arg15[%c1_111, %c0_112, %c0_113] : memref<2x128x128xbf16, #tpu.memory_space<vmem>>, vector<1x128x128xbf16>
    %174 = vector.shape_cast %173 : vector<1x128x128xbf16> to vector<128x128xbf16>
    %c1_114 = arith.constant 1 : index
    %c0_115 = arith.constant 0 : index
    %c0_116 = arith.constant 0 : index
    %175 = vector.load %arg16[%c1_114, %c0_115, %c0_116] : memref<2x1x128xf32, #tpu.memory_space<vmem>>, vector<1x1x128xf32>
    %176 = vector.shape_cast %175 : vector<1x1x128xf32> to vector<1x128xf32>
    %c1_117 = arith.constant 1 : index
    %c0_118 = arith.constant 0 : index
    %c0_119 = arith.constant 0 : index
    %177 = vector.load %arg17[%c1_117, %c0_118, %c0_119] : memref<2x1x128xf32, #tpu.memory_space<vmem>>, vector<1x1x128xf32>
    %178 = vector.shape_cast %177 : vector<1x1x128xf32> to vector<1x128xf32>
    %c1_120 = arith.constant 1 : index
    %c0_121 = arith.constant 0 : index
    %c0_122 = arith.constant 0 : index
    %179 = vector.load %arg18[%c1_120, %c0_121, %c0_122] : memref<2x1x128xf32, #tpu.memory_space<vmem>>, vector<1x1x128xf32>
    %180 = vector.shape_cast %179 : vector<1x1x128xf32> to vector<1x128xf32>
    %c1_123 = arith.constant 1 : index
    %c0_124 = arith.constant 0 : index
    %c0_125 = arith.constant 0 : index
    %181 = vector.load %arg19[%c1_123, %c0_124, %c0_125] : memref<2x128x512xbf16, #tpu.memory_space<vmem>>, vector<1x128x512xbf16>
    %182 = vector.shape_cast %181 : vector<1x128x512xbf16> to vector<128x512xbf16>
    %c1_126 = arith.constant 1 : index
    %c0_127 = arith.constant 0 : index
    %c0_128 = arith.constant 0 : index
    %183 = vector.load %arg20[%c1_126, %c0_127, %c0_128] : memref<2x1x512xf32, #tpu.memory_space<vmem>>, vector<1x1x512xf32>
    %184 = vector.shape_cast %183 : vector<1x1x512xf32> to vector<1x512xf32>
    %c1_129 = arith.constant 1 : index
    %c0_130 = arith.constant 0 : index
    %c0_131 = arith.constant 0 : index
    %185 = vector.load %arg21[%c1_129, %c0_130, %c0_131] : memref<2x512x128xbf16, #tpu.memory_space<vmem>>, vector<1x512x128xbf16>
    %186 = vector.shape_cast %185 : vector<1x512x128xbf16> to vector<512x128xbf16>
    %c1_132 = arith.constant 1 : index
    %c0_133 = arith.constant 0 : index
    %c0_134 = arith.constant 0 : index
    %187 = vector.load %arg22[%c1_132, %c0_133, %c0_134] : memref<2x1x128xf32, #tpu.memory_space<vmem>>, vector<1x1x128xf32>
    %188 = vector.shape_cast %187 : vector<1x1x128xf32> to vector<1x128xf32>
    %c1_135 = arith.constant 1 : index
    %c0_136 = arith.constant 0 : index
    %c0_137 = arith.constant 0 : index
    %189 = vector.load %arg23[%c1_135, %c0_136, %c0_137] : memref<2x1x128xf32, #tpu.memory_space<vmem>>, vector<1x1x128xf32>
    %190 = vector.shape_cast %189 : vector<1x1x128xf32> to vector<1x128xf32>
    %c1_138 = arith.constant 1 : index
    %c0_139 = arith.constant 0 : index
    %c0_140 = arith.constant 0 : index
    %191 = vector.load %arg24[%c1_138, %c0_139, %c0_140] : memref<2x1x128xf32, #tpu.memory_space<vmem>>, vector<1x1x128xf32>
    %192 = vector.shape_cast %191 : vector<1x1x128xf32> to vector<1x128xf32>
    %193 = vector.shape_cast %168 : vector<128x128xf32> to vector<16x8x128xf32>
    %194 = vector.shape_cast %161 : vector<16x128xf32> to vector<16x1x128xf32>
    %195 = vector.broadcast %194 : vector<16x1x128xf32> to vector<16x8x128xf32>
    %196 = arith.addf %193, %195 : vector<16x8x128xf32>
    %cst_141 = arith.constant 0.000000e+00 : f32
    %197 = vector.broadcast %cst_141 : f32 to vector<16x8x128xf32>
    %198 = arith.maximumf %196, %197 : vector<16x8x128xf32>
    %199 = vector.shape_cast %198 : vector<16x8x128xf32> to vector<128x128xf32>
    %200 = arith.truncf %199 : vector<128x128xf32> to vector<128x128xbf16>
    %cst_142 = arith.constant dense<0.000000e+00> : vector<128x128xf32>
    %201 = tpu.matmul %200, %170, %cst_142 {dimension_numbers = #tpu.dot_dimension_numbers<[1], [0], [0], [1], [0, 0, 1, 1], [], []>} : vector<128x128xbf16>, vector<128x128xbf16>, vector<128x128xf32> -> vector<128x128xf32>
    %202 = vector.broadcast %172 : vector<1x128xf32> to vector<128x128xf32>
    %203 = arith.addf %201, %202 : vector<128x128xf32>
    %cst_143 = arith.constant 0.000000e+00 : f32
    %204 = vector.broadcast %cst_143 : f32 to vector<128x128xf32>
    %205 = arith.maximumf %203, %204 : vector<128x128xf32>
    %206 = arith.truncf %205 : vector<128x128xf32> to vector<128x128xbf16>
    %cst_144 = arith.constant dense<0.000000e+00> : vector<128x128xf32>
    %207 = tpu.matmul %206, %174, %cst_144 {dimension_numbers = #tpu.dot_dimension_numbers<[1], [0], [0], [1], [0, 0, 1, 1], [], []>} : vector<128x128xbf16>, vector<128x128xbf16>, vector<128x128xf32> -> vector<128x128xf32>
    %208 = vector.broadcast %176 : vector<1x128xf32> to vector<128x128xf32>
    %209 = arith.addf %207, %208 : vector<128x128xf32>
    %210 = vector.broadcast %7 : vector<128x1xf32> to vector<128x128xf32>
    %211 = arith.mulf %209, %210 : vector<128x128xf32>
    %212 = vector.shape_cast %211 : vector<128x128xf32> to vector<16x8x128xf32>
    %cst_145 = arith.constant dense<0.000000e+00> : vector<16x128xf32>
    %213 = vector.multi_reduction <add>, %212, %cst_145 [1] : vector<16x8x128xf32> to vector<16x128xf32>
    %cst_146 = arith.constant 0.0333333351 : f32
    %214 = vector.broadcast %cst_146 : f32 to vector<16x128xf32>
    %215 = arith.mulf %213, %214 : vector<16x128xf32>
    %216 = arith.addf %152, %215 : vector<16x128xf32>
    %cst_147 = arith.constant dense<0.000000e+00> : vector<16xf32>
    %217 = vector.multi_reduction <add>, %216, %cst_147 [1] : vector<16x128xf32> to vector<16xf32>
    %218 = vector.shape_cast %217 : vector<16xf32> to vector<16x1xf32>
    %cst_148 = arith.constant 1.280000e+02 : f32
    %219 = vector.broadcast %cst_148 : f32 to vector<16x1xf32>
    %220 = arith.divf %218, %219 : vector<16x1xf32>
    %221 = vector.broadcast %220 : vector<16x1xf32> to vector<16x128xf32>
    %222 = arith.subf %216, %221 : vector<16x128xf32>
    %223 = arith.mulf %222, %222 : vector<16x128xf32>
    %cst_149 = arith.constant dense<0.000000e+00> : vector<16xf32>
    %224 = vector.multi_reduction <add>, %223, %cst_149 [1] : vector<16x128xf32> to vector<16xf32>
    %225 = vector.shape_cast %224 : vector<16xf32> to vector<16x1xf32>
    %cst_150 = arith.constant 1.270000e+02 : f32
    %226 = vector.broadcast %cst_150 : f32 to vector<16x1xf32>
    %227 = arith.divf %225, %226 : vector<16x1xf32>
    %cst_151 = arith.constant 9.99999997E-7 : f32
    %228 = vector.broadcast %cst_151 : f32 to vector<16x1xf32>
    %229 = arith.addf %227, %228 : vector<16x1xf32>
    %230 = math.sqrt %229 : vector<16x1xf32>
    %cst_152 = arith.constant 9.99999997E-7 : f32
    %231 = vector.broadcast %cst_152 : f32 to vector<16x1xf32>
    %232 = arith.addf %230, %231 : vector<16x1xf32>
    %cst_153 = arith.constant 1.000000e+00 : f32
    %233 = vector.broadcast %cst_153 : f32 to vector<16x1xf32>
    %234 = arith.divf %233, %232 : vector<16x1xf32>
    %235 = vector.broadcast %178 : vector<1x128xf32> to vector<16x128xf32>
    %236 = arith.mulf %235, %222 : vector<16x128xf32>
    %237 = vector.broadcast %234 : vector<16x1xf32> to vector<16x128xf32>
    %238 = arith.mulf %236, %237 : vector<16x128xf32>
    %239 = vector.broadcast %180 : vector<1x128xf32> to vector<16x128xf32>
    %240 = arith.addf %238, %239 : vector<16x128xf32>
    %241 = arith.truncf %240 : vector<16x128xf32> to vector<16x128xbf16>
    %cst_154 = arith.constant dense<0.000000e+00> : vector<16x512xf32>
    %242 = tpu.matmul %241, %182, %cst_154 {dimension_numbers = #tpu.dot_dimension_numbers<[1], [0], [0], [1], [0, 0, 1, 1], [], []>} : vector<16x128xbf16>, vector<128x512xbf16>, vector<16x512xf32> -> vector<16x512xf32>
    %243 = vector.broadcast %184 : vector<1x512xf32> to vector<16x512xf32>
    %244 = arith.addf %242, %243 : vector<16x512xf32>
    %cst_155 = arith.constant 0.000000e+00 : f32
    %245 = vector.broadcast %cst_155 : f32 to vector<16x512xf32>
    %246 = arith.maximumf %244, %245 : vector<16x512xf32>
    %247 = arith.truncf %246 : vector<16x512xf32> to vector<16x512xbf16>
    %cst_156 = arith.constant dense<0.000000e+00> : vector<16x128xf32>
    %248 = tpu.matmul %247, %186, %cst_156 {dimension_numbers = #tpu.dot_dimension_numbers<[1], [0], [0], [1], [0, 0, 1, 1], [], []>} : vector<16x512xbf16>, vector<512x128xbf16>, vector<16x128xf32> -> vector<16x128xf32>
    %249 = vector.broadcast %188 : vector<1x128xf32> to vector<16x128xf32>
    %250 = arith.addf %248, %249 : vector<16x128xf32>
    %251 = arith.addf %240, %250 : vector<16x128xf32>
    %cst_157 = arith.constant dense<0.000000e+00> : vector<16xf32>
    %252 = vector.multi_reduction <add>, %251, %cst_157 [1] : vector<16x128xf32> to vector<16xf32>
    %253 = vector.shape_cast %252 : vector<16xf32> to vector<16x1xf32>
    %cst_158 = arith.constant 1.280000e+02 : f32
    %254 = vector.broadcast %cst_158 : f32 to vector<16x1xf32>
    %255 = arith.divf %253, %254 : vector<16x1xf32>
    %256 = vector.broadcast %255 : vector<16x1xf32> to vector<16x128xf32>
    %257 = arith.subf %251, %256 : vector<16x128xf32>
    %258 = arith.mulf %257, %257 : vector<16x128xf32>
    %cst_159 = arith.constant dense<0.000000e+00> : vector<16xf32>
    %259 = vector.multi_reduction <add>, %258, %cst_159 [1] : vector<16x128xf32> to vector<16xf32>
    %260 = vector.shape_cast %259 : vector<16xf32> to vector<16x1xf32>
    %cst_160 = arith.constant 1.270000e+02 : f32
    %261 = vector.broadcast %cst_160 : f32 to vector<16x1xf32>
    %262 = arith.divf %260, %261 : vector<16x1xf32>
    %cst_161 = arith.constant 9.99999997E-7 : f32
    %263 = vector.broadcast %cst_161 : f32 to vector<16x1xf32>
    %264 = arith.addf %262, %263 : vector<16x1xf32>
    %265 = math.sqrt %264 : vector<16x1xf32>
    %cst_162 = arith.constant 9.99999997E-7 : f32
    %266 = vector.broadcast %cst_162 : f32 to vector<16x1xf32>
    %267 = arith.addf %265, %266 : vector<16x1xf32>
    %cst_163 = arith.constant 1.000000e+00 : f32
    %268 = vector.broadcast %cst_163 : f32 to vector<16x1xf32>
    %269 = arith.divf %268, %267 : vector<16x1xf32>
    %270 = vector.broadcast %190 : vector<1x128xf32> to vector<16x128xf32>
    %271 = arith.mulf %270, %257 : vector<16x128xf32>
    %272 = vector.broadcast %269 : vector<16x1xf32> to vector<16x128xf32>
    %273 = arith.mulf %271, %272 : vector<16x128xf32>
    %274 = vector.broadcast %192 : vector<1x128xf32> to vector<16x128xf32>
    %275 = arith.addf %273, %274 : vector<16x128xf32>
    %c0_164 = arith.constant 0 : index
    %c0_165 = arith.constant 0 : index
    %276 = vector.load %arg27[%c0_164, %c0_165] : memref<128x256xbf16, #tpu.memory_space<vmem>>, vector<128x256xbf16>
    %cst_166 = arith.constant dense<0.000000e+00> : vector<16x256xf32>
    %277 = tpu.matmul %10, %276, %cst_166 {dimension_numbers = #tpu.dot_dimension_numbers<[1], [0], [0], [1], [0, 0, 1, 1], [], []>} : vector<16x128xbf16>, vector<128x256xbf16>, vector<16x256xf32> -> vector<16x256xf32>
    %278 = arith.truncf %275 : vector<16x128xf32> to vector<16x128xbf16>
    %c0_167 = arith.constant 0 : index
    %c0_168 = arith.constant 0 : index
    %c0_169 = arith.constant 0 : index
    %279 = vector.load %arg25[%c0_167, %c0_168, %c0_169] : memref<2x128x256xbf16, #tpu.memory_space<vmem>>, vector<1x128x256xbf16>
    %280 = vector.shape_cast %279 : vector<1x128x256xbf16> to vector<128x256xbf16>
    %cst_170 = arith.constant dense<0.000000e+00> : vector<16x256xf32>
    %281 = tpu.matmul %278, %280, %cst_170 {dimension_numbers = #tpu.dot_dimension_numbers<[1], [0], [0], [1], [0, 0, 1, 1], [], []>} : vector<16x128xbf16>, vector<128x256xbf16>, vector<16x256xf32> -> vector<16x256xf32>
    %282 = vector.extract_strided_slice %281 {offsets = [0, 0], sizes = [16, 128], strides = [1, 1]} : vector<16x256xf32> to vector<16x128xf32>
    %c0_171 = arith.constant 0 : index
    %c0_172 = arith.constant 0 : index
    %c0_173 = arith.constant 0 : index
    %283 = vector.load %arg28[%c0_171, %c0_172, %c0_173] : memref<2x1x128xf32, #tpu.memory_space<vmem>>, vector<1x1x128xf32>
    %284 = vector.shape_cast %283 : vector<1x1x128xf32> to vector<1x128xf32>
    %285 = vector.broadcast %284 : vector<1x128xf32> to vector<16x128xf32>
    %286 = arith.addf %282, %285 : vector<16x128xf32>
    %287 = vector.extract_strided_slice %281 {offsets = [0, 128], sizes = [16, 128], strides = [1, 1]} : vector<16x256xf32> to vector<16x128xf32>
    %288 = vector.extract_strided_slice %277 {offsets = [0, 0], sizes = [16, 128], strides = [1, 1]} : vector<16x256xf32> to vector<16x128xf32>
    %289 = arith.addf %287, %288 : vector<16x128xf32>
    %c0_174 = arith.constant 0 : index
    %c0_175 = arith.constant 0 : index
    %c0_176 = arith.constant 0 : index
    %290 = vector.load %arg26[%c0_174, %c0_175, %c0_176] : memref<2x128x128xbf16, #tpu.memory_space<vmem>>, vector<1x128x128xbf16>
    %291 = vector.shape_cast %290 : vector<1x128x128xbf16> to vector<128x128xbf16>
    %cst_177 = arith.constant dense<0.000000e+00> : vector<128x128xf32>
    %292 = tpu.matmul %23, %291, %cst_177 {dimension_numbers = #tpu.dot_dimension_numbers<[1], [0], [0], [1], [0, 0, 1, 1], [], []>} : vector<128x128xbf16>, vector<128x128xbf16>, vector<128x128xf32> -> vector<128x128xf32>
    %293 = arith.truncf %289 : vector<16x128xf32> to vector<16x128xbf16>
    %cst_178 = arith.constant dense<0.000000e+00> : vector<128x128xf32>
    %294 = tpu.matmul %29, %293, %cst_178 {dimension_numbers = #tpu.dot_dimension_numbers<[1], [0], [0], [1], [0, 0, 1, 1], [], []>} : vector<128x16xbf16>, vector<16x128xbf16>, vector<128x128xf32> -> vector<128x128xf32>
    %295 = arith.addf %292, %294 : vector<128x128xf32>
    %c0_179 = arith.constant 0 : index
    %c0_180 = arith.constant 0 : index
    %c0_181 = arith.constant 0 : index
    %296 = vector.load %arg29[%c0_179, %c0_180, %c0_181] : memref<2x128x128xbf16, #tpu.memory_space<vmem>>, vector<1x128x128xbf16>
    %297 = vector.shape_cast %296 : vector<1x128x128xbf16> to vector<128x128xbf16>
    %c0_182 = arith.constant 0 : index
    %c0_183 = arith.constant 0 : index
    %c0_184 = arith.constant 0 : index
    %298 = vector.load %arg30[%c0_182, %c0_183, %c0_184] : memref<2x1x128xf32, #tpu.memory_space<vmem>>, vector<1x1x128xf32>
    %299 = vector.shape_cast %298 : vector<1x1x128xf32> to vector<1x128xf32>
    %c0_185 = arith.constant 0 : index
    %c0_186 = arith.constant 0 : index
    %c0_187 = arith.constant 0 : index
    %300 = vector.load %arg31[%c0_185, %c0_186, %c0_187] : memref<2x128x128xbf16, #tpu.memory_space<vmem>>, vector<1x128x128xbf16>
    %301 = vector.shape_cast %300 : vector<1x128x128xbf16> to vector<128x128xbf16>
    %c0_188 = arith.constant 0 : index
    %c0_189 = arith.constant 0 : index
    %c0_190 = arith.constant 0 : index
    %302 = vector.load %arg32[%c0_188, %c0_189, %c0_190] : memref<2x1x128xf32, #tpu.memory_space<vmem>>, vector<1x1x128xf32>
    %303 = vector.shape_cast %302 : vector<1x1x128xf32> to vector<1x128xf32>
    %c0_191 = arith.constant 0 : index
    %c0_192 = arith.constant 0 : index
    %c0_193 = arith.constant 0 : index
    %304 = vector.load %arg33[%c0_191, %c0_192, %c0_193] : memref<2x1x128xf32, #tpu.memory_space<vmem>>, vector<1x1x128xf32>
    %305 = vector.shape_cast %304 : vector<1x1x128xf32> to vector<1x128xf32>
    %c0_194 = arith.constant 0 : index
    %c0_195 = arith.constant 0 : index
    %c0_196 = arith.constant 0 : index
    %306 = vector.load %arg34[%c0_194, %c0_195, %c0_196] : memref<2x1x128xf32, #tpu.memory_space<vmem>>, vector<1x1x128xf32>
    %307 = vector.shape_cast %306 : vector<1x1x128xf32> to vector<1x128xf32>
    %c0_197 = arith.constant 0 : index
    %c0_198 = arith.constant 0 : index
    %c0_199 = arith.constant 0 : index
    %308 = vector.load %arg35[%c0_197, %c0_198, %c0_199] : memref<2x128x512xbf16, #tpu.memory_space<vmem>>, vector<1x128x512xbf16>
    %309 = vector.shape_cast %308 : vector<1x128x512xbf16> to vector<128x512xbf16>
    %c0_200 = arith.constant 0 : index
    %c0_201 = arith.constant 0 : index
    %c0_202 = arith.constant 0 : index
    %310 = vector.load %arg36[%c0_200, %c0_201, %c0_202] : memref<2x1x512xf32, #tpu.memory_space<vmem>>, vector<1x1x512xf32>
    %311 = vector.shape_cast %310 : vector<1x1x512xf32> to vector<1x512xf32>
    %c0_203 = arith.constant 0 : index
    %c0_204 = arith.constant 0 : index
    %c0_205 = arith.constant 0 : index
    %312 = vector.load %arg37[%c0_203, %c0_204, %c0_205] : memref<2x512x128xbf16, #tpu.memory_space<vmem>>, vector<1x512x128xbf16>
    %313 = vector.shape_cast %312 : vector<1x512x128xbf16> to vector<512x128xbf16>
    %c0_206 = arith.constant 0 : index
    %c0_207 = arith.constant 0 : index
    %c0_208 = arith.constant 0 : index
    %314 = vector.load %arg38[%c0_206, %c0_207, %c0_208] : memref<2x1x128xf32, #tpu.memory_space<vmem>>, vector<1x1x128xf32>
    %315 = vector.shape_cast %314 : vector<1x1x128xf32> to vector<1x128xf32>
    %c0_209 = arith.constant 0 : index
    %c0_210 = arith.constant 0 : index
    %c0_211 = arith.constant 0 : index
    %316 = vector.load %arg39[%c0_209, %c0_210, %c0_211] : memref<2x1x128xf32, #tpu.memory_space<vmem>>, vector<1x1x128xf32>
    %317 = vector.shape_cast %316 : vector<1x1x128xf32> to vector<1x128xf32>
    %c0_212 = arith.constant 0 : index
    %c0_213 = arith.constant 0 : index
    %c0_214 = arith.constant 0 : index
    %318 = vector.load %arg40[%c0_212, %c0_213, %c0_214] : memref<2x1x128xf32, #tpu.memory_space<vmem>>, vector<1x1x128xf32>
    %319 = vector.shape_cast %318 : vector<1x1x128xf32> to vector<1x128xf32>
    %320 = vector.shape_cast %295 : vector<128x128xf32> to vector<16x8x128xf32>
    %321 = vector.shape_cast %286 : vector<16x128xf32> to vector<16x1x128xf32>
    %322 = vector.broadcast %321 : vector<16x1x128xf32> to vector<16x8x128xf32>
    %323 = arith.addf %320, %322 : vector<16x8x128xf32>
    %cst_215 = arith.constant 0.000000e+00 : f32
    %324 = vector.broadcast %cst_215 : f32 to vector<16x8x128xf32>
    %325 = arith.maximumf %323, %324 : vector<16x8x128xf32>
    %326 = vector.shape_cast %325 : vector<16x8x128xf32> to vector<128x128xf32>
    %327 = arith.truncf %326 : vector<128x128xf32> to vector<128x128xbf16>
    %cst_216 = arith.constant dense<0.000000e+00> : vector<128x128xf32>
    %328 = tpu.matmul %327, %297, %cst_216 {dimension_numbers = #tpu.dot_dimension_numbers<[1], [0], [0], [1], [0, 0, 1, 1], [], []>} : vector<128x128xbf16>, vector<128x128xbf16>, vector<128x128xf32> -> vector<128x128xf32>
    %329 = vector.broadcast %299 : vector<1x128xf32> to vector<128x128xf32>
    %330 = arith.addf %328, %329 : vector<128x128xf32>
    %cst_217 = arith.constant 0.000000e+00 : f32
    %331 = vector.broadcast %cst_217 : f32 to vector<128x128xf32>
    %332 = arith.maximumf %330, %331 : vector<128x128xf32>
    %333 = arith.truncf %332 : vector<128x128xf32> to vector<128x128xbf16>
    %cst_218 = arith.constant dense<0.000000e+00> : vector<128x128xf32>
    %334 = tpu.matmul %333, %301, %cst_218 {dimension_numbers = #tpu.dot_dimension_numbers<[1], [0], [0], [1], [0, 0, 1, 1], [], []>} : vector<128x128xbf16>, vector<128x128xbf16>, vector<128x128xf32> -> vector<128x128xf32>
    %335 = vector.broadcast %303 : vector<1x128xf32> to vector<128x128xf32>
    %336 = arith.addf %334, %335 : vector<128x128xf32>
    %337 = vector.broadcast %7 : vector<128x1xf32> to vector<128x128xf32>
    %338 = arith.mulf %336, %337 : vector<128x128xf32>
    %339 = vector.shape_cast %338 : vector<128x128xf32> to vector<16x8x128xf32>
    %cst_219 = arith.constant dense<0.000000e+00> : vector<16x128xf32>
    %340 = vector.multi_reduction <add>, %339, %cst_219 [1] : vector<16x8x128xf32> to vector<16x128xf32>
    %cst_220 = arith.constant 0.0333333351 : f32
    %341 = vector.broadcast %cst_220 : f32 to vector<16x128xf32>
    %342 = arith.mulf %340, %341 : vector<16x128xf32>
    %343 = arith.addf %275, %342 : vector<16x128xf32>
    %cst_221 = arith.constant dense<0.000000e+00> : vector<16xf32>
    %344 = vector.multi_reduction <add>, %343, %cst_221 [1] : vector<16x128xf32> to vector<16xf32>
    %345 = vector.shape_cast %344 : vector<16xf32> to vector<16x1xf32>
    %cst_222 = arith.constant 1.280000e+02 : f32
    %346 = vector.broadcast %cst_222 : f32 to vector<16x1xf32>
    %347 = arith.divf %345, %346 : vector<16x1xf32>
    %348 = vector.broadcast %347 : vector<16x1xf32> to vector<16x128xf32>
    %349 = arith.subf %343, %348 : vector<16x128xf32>
    %350 = arith.mulf %349, %349 : vector<16x128xf32>
    %cst_223 = arith.constant dense<0.000000e+00> : vector<16xf32>
    %351 = vector.multi_reduction <add>, %350, %cst_223 [1] : vector<16x128xf32> to vector<16xf32>
    %352 = vector.shape_cast %351 : vector<16xf32> to vector<16x1xf32>
    %cst_224 = arith.constant 1.270000e+02 : f32
    %353 = vector.broadcast %cst_224 : f32 to vector<16x1xf32>
    %354 = arith.divf %352, %353 : vector<16x1xf32>
    %cst_225 = arith.constant 9.99999997E-7 : f32
    %355 = vector.broadcast %cst_225 : f32 to vector<16x1xf32>
    %356 = arith.addf %354, %355 : vector<16x1xf32>
    %357 = math.sqrt %356 : vector<16x1xf32>
    %cst_226 = arith.constant 9.99999997E-7 : f32
    %358 = vector.broadcast %cst_226 : f32 to vector<16x1xf32>
    %359 = arith.addf %357, %358 : vector<16x1xf32>
    %cst_227 = arith.constant 1.000000e+00 : f32
    %360 = vector.broadcast %cst_227 : f32 to vector<16x1xf32>
    %361 = arith.divf %360, %359 : vector<16x1xf32>
    %362 = vector.broadcast %305 : vector<1x128xf32> to vector<16x128xf32>
    %363 = arith.mulf %362, %349 : vector<16x128xf32>
    %364 = vector.broadcast %361 : vector<16x1xf32> to vector<16x128xf32>
    %365 = arith.mulf %363, %364 : vector<16x128xf32>
    %366 = vector.broadcast %307 : vector<1x128xf32> to vector<16x128xf32>
    %367 = arith.addf %365, %366 : vector<16x128xf32>
    %368 = arith.truncf %367 : vector<16x128xf32> to vector<16x128xbf16>
    %cst_228 = arith.constant dense<0.000000e+00> : vector<16x512xf32>
    %369 = tpu.matmul %368, %309, %cst_228 {dimension_numbers = #tpu.dot_dimension_numbers<[1], [0], [0], [1], [0, 0, 1, 1], [], []>} : vector<16x128xbf16>, vector<128x512xbf16>, vector<16x512xf32> -> vector<16x512xf32>
    %370 = vector.broadcast %311 : vector<1x512xf32> to vector<16x512xf32>
    %371 = arith.addf %369, %370 : vector<16x512xf32>
    %cst_229 = arith.constant 0.000000e+00 : f32
    %372 = vector.broadcast %cst_229 : f32 to vector<16x512xf32>
    %373 = arith.maximumf %371, %372 : vector<16x512xf32>
    %374 = arith.truncf %373 : vector<16x512xf32> to vector<16x512xbf16>
    %cst_230 = arith.constant dense<0.000000e+00> : vector<16x128xf32>
    %375 = tpu.matmul %374, %313, %cst_230 {dimension_numbers = #tpu.dot_dimension_numbers<[1], [0], [0], [1], [0, 0, 1, 1], [], []>} : vector<16x512xbf16>, vector<512x128xbf16>, vector<16x128xf32> -> vector<16x128xf32>
    %376 = vector.broadcast %315 : vector<1x128xf32> to vector<16x128xf32>
    %377 = arith.addf %375, %376 : vector<16x128xf32>
    %378 = arith.addf %367, %377 : vector<16x128xf32>
    %cst_231 = arith.constant dense<0.000000e+00> : vector<16xf32>
    %379 = vector.multi_reduction <add>, %378, %cst_231 [1] : vector<16x128xf32> to vector<16xf32>
    %380 = vector.shape_cast %379 : vector<16xf32> to vector<16x1xf32>
    %cst_232 = arith.constant 1.280000e+02 : f32
    %381 = vector.broadcast %cst_232 : f32 to vector<16x1xf32>
    %382 = arith.divf %380, %381 : vector<16x1xf32>
    %383 = vector.broadcast %382 : vector<16x1xf32> to vector<16x128xf32>
    %384 = arith.subf %378, %383 : vector<16x128xf32>
    %385 = arith.mulf %384, %384 : vector<16x128xf32>
    %cst_233 = arith.constant dense<0.000000e+00> : vector<16xf32>
    %386 = vector.multi_reduction <add>, %385, %cst_233 [1] : vector<16x128xf32> to vector<16xf32>
    %387 = vector.shape_cast %386 : vector<16xf32> to vector<16x1xf32>
    %cst_234 = arith.constant 1.270000e+02 : f32
    %388 = vector.broadcast %cst_234 : f32 to vector<16x1xf32>
    %389 = arith.divf %387, %388 : vector<16x1xf32>
    %cst_235 = arith.constant 9.99999997E-7 : f32
    %390 = vector.broadcast %cst_235 : f32 to vector<16x1xf32>
    %391 = arith.addf %389, %390 : vector<16x1xf32>
    %392 = math.sqrt %391 : vector<16x1xf32>
    %cst_236 = arith.constant 9.99999997E-7 : f32
    %393 = vector.broadcast %cst_236 : f32 to vector<16x1xf32>
    %394 = arith.addf %392, %393 : vector<16x1xf32>
    %cst_237 = arith.constant 1.000000e+00 : f32
    %395 = vector.broadcast %cst_237 : f32 to vector<16x1xf32>
    %396 = arith.divf %395, %394 : vector<16x1xf32>
    %397 = vector.broadcast %317 : vector<1x128xf32> to vector<16x128xf32>
    %398 = arith.mulf %397, %384 : vector<16x128xf32>
    %399 = vector.broadcast %396 : vector<16x1xf32> to vector<16x128xf32>
    %400 = arith.mulf %398, %399 : vector<16x128xf32>
    %401 = vector.broadcast %319 : vector<1x128xf32> to vector<16x128xf32>
    %402 = arith.addf %400, %401 : vector<16x128xf32>
    %403 = arith.truncf %402 : vector<16x128xf32> to vector<16x128xbf16>
    %c1_238 = arith.constant 1 : index
    %c0_239 = arith.constant 0 : index
    %c0_240 = arith.constant 0 : index
    %404 = vector.load %arg25[%c1_238, %c0_239, %c0_240] : memref<2x128x256xbf16, #tpu.memory_space<vmem>>, vector<1x128x256xbf16>
    %405 = vector.shape_cast %404 : vector<1x128x256xbf16> to vector<128x256xbf16>
    %cst_241 = arith.constant dense<0.000000e+00> : vector<16x256xf32>
    %406 = tpu.matmul %403, %405, %cst_241 {dimension_numbers = #tpu.dot_dimension_numbers<[1], [0], [0], [1], [0, 0, 1, 1], [], []>} : vector<16x128xbf16>, vector<128x256xbf16>, vector<16x256xf32> -> vector<16x256xf32>
    %407 = vector.extract_strided_slice %406 {offsets = [0, 0], sizes = [16, 128], strides = [1, 1]} : vector<16x256xf32> to vector<16x128xf32>
    %c1_242 = arith.constant 1 : index
    %c0_243 = arith.constant 0 : index
    %c0_244 = arith.constant 0 : index
    %408 = vector.load %arg28[%c1_242, %c0_243, %c0_244] : memref<2x1x128xf32, #tpu.memory_space<vmem>>, vector<1x1x128xf32>
    %409 = vector.shape_cast %408 : vector<1x1x128xf32> to vector<1x128xf32>
    %410 = vector.broadcast %409 : vector<1x128xf32> to vector<16x128xf32>
    %411 = arith.addf %407, %410 : vector<16x128xf32>
    %412 = vector.extract_strided_slice %406 {offsets = [0, 128], sizes = [16, 128], strides = [1, 1]} : vector<16x256xf32> to vector<16x128xf32>
    %413 = vector.extract_strided_slice %277 {offsets = [0, 128], sizes = [16, 128], strides = [1, 1]} : vector<16x256xf32> to vector<16x128xf32>
    %414 = arith.addf %412, %413 : vector<16x128xf32>
    %c1_245 = arith.constant 1 : index
    %c0_246 = arith.constant 0 : index
    %c0_247 = arith.constant 0 : index
    %415 = vector.load %arg26[%c1_245, %c0_246, %c0_247] : memref<2x128x128xbf16, #tpu.memory_space<vmem>>, vector<1x128x128xbf16>
    %416 = vector.shape_cast %415 : vector<1x128x128xbf16> to vector<128x128xbf16>
    %cst_248 = arith.constant dense<0.000000e+00> : vector<128x128xf32>
    %417 = tpu.matmul %23, %416, %cst_248 {dimension_numbers = #tpu.dot_dimension_numbers<[1], [0], [0], [1], [0, 0, 1, 1], [], []>} : vector<128x128xbf16>, vector<128x128xbf16>, vector<128x128xf32> -> vector<128x128xf32>
    %418 = arith.truncf %414 : vector<16x128xf32> to vector<16x128xbf16>
    %cst_249 = arith.constant dense<0.000000e+00> : vector<128x128xf32>
    %419 = tpu.matmul %29, %418, %cst_249 {dimension_numbers = #tpu.dot_dimension_numbers<[1], [0], [0], [1], [0, 0, 1, 1], [], []>} : vector<128x16xbf16>, vector<16x128xbf16>, vector<128x128xf32> -> vector<128x128xf32>
    %420 = arith.addf %417, %419 : vector<128x128xf32>
    %c1_250 = arith.constant 1 : index
    %c0_251 = arith.constant 0 : index
    %c0_252 = arith.constant 0 : index
    %421 = vector.load %arg29[%c1_250, %c0_251, %c0_252] : memref<2x128x128xbf16, #tpu.memory_space<vmem>>, vector<1x128x128xbf16>
    %422 = vector.shape_cast %421 : vector<1x128x128xbf16> to vector<128x128xbf16>
    %c1_253 = arith.constant 1 : index
    %c0_254 = arith.constant 0 : index
    %c0_255 = arith.constant 0 : index
    %423 = vector.load %arg30[%c1_253, %c0_254, %c0_255] : memref<2x1x128xf32, #tpu.memory_space<vmem>>, vector<1x1x128xf32>
    %424 = vector.shape_cast %423 : vector<1x1x128xf32> to vector<1x128xf32>
    %c1_256 = arith.constant 1 : index
    %c0_257 = arith.constant 0 : index
    %c0_258 = arith.constant 0 : index
    %425 = vector.load %arg31[%c1_256, %c0_257, %c0_258] : memref<2x128x128xbf16, #tpu.memory_space<vmem>>, vector<1x128x128xbf16>
    %426 = vector.shape_cast %425 : vector<1x128x128xbf16> to vector<128x128xbf16>
    %c1_259 = arith.constant 1 : index
    %c0_260 = arith.constant 0 : index
    %c0_261 = arith.constant 0 : index
    %427 = vector.load %arg32[%c1_259, %c0_260, %c0_261] : memref<2x1x128xf32, #tpu.memory_space<vmem>>, vector<1x1x128xf32>
    %428 = vector.shape_cast %427 : vector<1x1x128xf32> to vector<1x128xf32>
    %c1_262 = arith.constant 1 : index
    %c0_263 = arith.constant 0 : index
    %c0_264 = arith.constant 0 : index
    %429 = vector.load %arg33[%c1_262, %c0_263, %c0_264] : memref<2x1x128xf32, #tpu.memory_space<vmem>>, vector<1x1x128xf32>
    %430 = vector.shape_cast %429 : vector<1x1x128xf32> to vector<1x128xf32>
    %c1_265 = arith.constant 1 : index
    %c0_266 = arith.constant 0 : index
    %c0_267 = arith.constant 0 : index
    %431 = vector.load %arg34[%c1_265, %c0_266, %c0_267] : memref<2x1x128xf32, #tpu.memory_space<vmem>>, vector<1x1x128xf32>
    %432 = vector.shape_cast %431 : vector<1x1x128xf32> to vector<1x128xf32>
    %c1_268 = arith.constant 1 : index
    %c0_269 = arith.constant 0 : index
    %c0_270 = arith.constant 0 : index
    %433 = vector.load %arg35[%c1_268, %c0_269, %c0_270] : memref<2x128x512xbf16, #tpu.memory_space<vmem>>, vector<1x128x512xbf16>
    %434 = vector.shape_cast %433 : vector<1x128x512xbf16> to vector<128x512xbf16>
    %c1_271 = arith.constant 1 : index
    %c0_272 = arith.constant 0 : index
    %c0_273 = arith.constant 0 : index
    %435 = vector.load %arg36[%c1_271, %c0_272, %c0_273] : memref<2x1x512xf32, #tpu.memory_space<vmem>>, vector<1x1x512xf32>
    %436 = vector.shape_cast %435 : vector<1x1x512xf32> to vector<1x512xf32>
    %c1_274 = arith.constant 1 : index
    %c0_275 = arith.constant 0 : index
    %c0_276 = arith.constant 0 : index
    %437 = vector.load %arg37[%c1_274, %c0_275, %c0_276] : memref<2x512x128xbf16, #tpu.memory_space<vmem>>, vector<1x512x128xbf16>
    %438 = vector.shape_cast %437 : vector<1x512x128xbf16> to vector<512x128xbf16>
    %c1_277 = arith.constant 1 : index
    %c0_278 = arith.constant 0 : index
    %c0_279 = arith.constant 0 : index
    %439 = vector.load %arg38[%c1_277, %c0_278, %c0_279] : memref<2x1x128xf32, #tpu.memory_space<vmem>>, vector<1x1x128xf32>
    %440 = vector.shape_cast %439 : vector<1x1x128xf32> to vector<1x128xf32>
    %c1_280 = arith.constant 1 : index
    %c0_281 = arith.constant 0 : index
    %c0_282 = arith.constant 0 : index
    %441 = vector.load %arg39[%c1_280, %c0_281, %c0_282] : memref<2x1x128xf32, #tpu.memory_space<vmem>>, vector<1x1x128xf32>
    %442 = vector.shape_cast %441 : vector<1x1x128xf32> to vector<1x128xf32>
    %c1_283 = arith.constant 1 : index
    %c0_284 = arith.constant 0 : index
    %c0_285 = arith.constant 0 : index
    %443 = vector.load %arg40[%c1_283, %c0_284, %c0_285] : memref<2x1x128xf32, #tpu.memory_space<vmem>>, vector<1x1x128xf32>
    %444 = vector.shape_cast %443 : vector<1x1x128xf32> to vector<1x128xf32>
    %445 = vector.shape_cast %420 : vector<128x128xf32> to vector<16x8x128xf32>
    %446 = vector.shape_cast %411 : vector<16x128xf32> to vector<16x1x128xf32>
    %447 = vector.broadcast %446 : vector<16x1x128xf32> to vector<16x8x128xf32>
    %448 = arith.addf %445, %447 : vector<16x8x128xf32>
    %cst_286 = arith.constant 0.000000e+00 : f32
    %449 = vector.broadcast %cst_286 : f32 to vector<16x8x128xf32>
    %450 = arith.maximumf %448, %449 : vector<16x8x128xf32>
    %451 = vector.shape_cast %450 : vector<16x8x128xf32> to vector<128x128xf32>
    %452 = arith.truncf %451 : vector<128x128xf32> to vector<128x128xbf16>
    %cst_287 = arith.constant dense<0.000000e+00> : vector<128x128xf32>
    %453 = tpu.matmul %452, %422, %cst_287 {dimension_numbers = #tpu.dot_dimension_numbers<[1], [0], [0], [1], [0, 0, 1, 1], [], []>} : vector<128x128xbf16>, vector<128x128xbf16>, vector<128x128xf32> -> vector<128x128xf32>
    %454 = vector.broadcast %424 : vector<1x128xf32> to vector<128x128xf32>
    %455 = arith.addf %453, %454 : vector<128x128xf32>
    %cst_288 = arith.constant 0.000000e+00 : f32
    %456 = vector.broadcast %cst_288 : f32 to vector<128x128xf32>
    %457 = arith.maximumf %455, %456 : vector<128x128xf32>
    %458 = arith.truncf %457 : vector<128x128xf32> to vector<128x128xbf16>
    %cst_289 = arith.constant dense<0.000000e+00> : vector<128x128xf32>
    %459 = tpu.matmul %458, %426, %cst_289 {dimension_numbers = #tpu.dot_dimension_numbers<[1], [0], [0], [1], [0, 0, 1, 1], [], []>} : vector<128x128xbf16>, vector<128x128xbf16>, vector<128x128xf32> -> vector<128x128xf32>
    %460 = vector.broadcast %428 : vector<1x128xf32> to vector<128x128xf32>
    %461 = arith.addf %459, %460 : vector<128x128xf32>
    %462 = vector.broadcast %7 : vector<128x1xf32> to vector<128x128xf32>
    %463 = arith.mulf %461, %462 : vector<128x128xf32>
    %464 = vector.shape_cast %463 : vector<128x128xf32> to vector<16x8x128xf32>
    %cst_290 = arith.constant dense<0.000000e+00> : vector<16x128xf32>
    %465 = vector.multi_reduction <add>, %464, %cst_290 [1] : vector<16x8x128xf32> to vector<16x128xf32>
    %cst_291 = arith.constant 0.0333333351 : f32
    %466 = vector.broadcast %cst_291 : f32 to vector<16x128xf32>
    %467 = arith.mulf %465, %466 : vector<16x128xf32>
    %468 = arith.addf %402, %467 : vector<16x128xf32>
    %cst_292 = arith.constant dense<0.000000e+00> : vector<16xf32>
    %469 = vector.multi_reduction <add>, %468, %cst_292 [1] : vector<16x128xf32> to vector<16xf32>
    %470 = vector.shape_cast %469 : vector<16xf32> to vector<16x1xf32>
    %cst_293 = arith.constant 1.280000e+02 : f32
    %471 = vector.broadcast %cst_293 : f32 to vector<16x1xf32>
    %472 = arith.divf %470, %471 : vector<16x1xf32>
    %473 = vector.broadcast %472 : vector<16x1xf32> to vector<16x128xf32>
    %474 = arith.subf %468, %473 : vector<16x128xf32>
    %475 = arith.mulf %474, %474 : vector<16x128xf32>
    %cst_294 = arith.constant dense<0.000000e+00> : vector<16xf32>
    %476 = vector.multi_reduction <add>, %475, %cst_294 [1] : vector<16x128xf32> to vector<16xf32>
    %477 = vector.shape_cast %476 : vector<16xf32> to vector<16x1xf32>
    %cst_295 = arith.constant 1.270000e+02 : f32
    %478 = vector.broadcast %cst_295 : f32 to vector<16x1xf32>
    %479 = arith.divf %477, %478 : vector<16x1xf32>
    %cst_296 = arith.constant 9.99999997E-7 : f32
    %480 = vector.broadcast %cst_296 : f32 to vector<16x1xf32>
    %481 = arith.addf %479, %480 : vector<16x1xf32>
    %482 = math.sqrt %481 : vector<16x1xf32>
    %cst_297 = arith.constant 9.99999997E-7 : f32
    %483 = vector.broadcast %cst_297 : f32 to vector<16x1xf32>
    %484 = arith.addf %482, %483 : vector<16x1xf32>
    %cst_298 = arith.constant 1.000000e+00 : f32
    %485 = vector.broadcast %cst_298 : f32 to vector<16x1xf32>
    %486 = arith.divf %485, %484 : vector<16x1xf32>
    %487 = vector.broadcast %430 : vector<1x128xf32> to vector<16x128xf32>
    %488 = arith.mulf %487, %474 : vector<16x128xf32>
    %489 = vector.broadcast %486 : vector<16x1xf32> to vector<16x128xf32>
    %490 = arith.mulf %488, %489 : vector<16x128xf32>
    %491 = vector.broadcast %432 : vector<1x128xf32> to vector<16x128xf32>
    %492 = arith.addf %490, %491 : vector<16x128xf32>
    %493 = arith.truncf %492 : vector<16x128xf32> to vector<16x128xbf16>
    %cst_299 = arith.constant dense<0.000000e+00> : vector<16x512xf32>
    %494 = tpu.matmul %493, %434, %cst_299 {dimension_numbers = #tpu.dot_dimension_numbers<[1], [0], [0], [1], [0, 0, 1, 1], [], []>} : vector<16x128xbf16>, vector<128x512xbf16>, vector<16x512xf32> -> vector<16x512xf32>
    %495 = vector.broadcast %436 : vector<1x512xf32> to vector<16x512xf32>
    %496 = arith.addf %494, %495 : vector<16x512xf32>
    %cst_300 = arith.constant 0.000000e+00 : f32
    %497 = vector.broadcast %cst_300 : f32 to vector<16x512xf32>
    %498 = arith.maximumf %496, %497 : vector<16x512xf32>
    %499 = arith.truncf %498 : vector<16x512xf32> to vector<16x512xbf16>
    %cst_301 = arith.constant dense<0.000000e+00> : vector<16x128xf32>
    %500 = tpu.matmul %499, %438, %cst_301 {dimension_numbers = #tpu.dot_dimension_numbers<[1], [0], [0], [1], [0, 0, 1, 1], [], []>} : vector<16x512xbf16>, vector<512x128xbf16>, vector<16x128xf32> -> vector<16x128xf32>
    %501 = vector.broadcast %440 : vector<1x128xf32> to vector<16x128xf32>
    %502 = arith.addf %500, %501 : vector<16x128xf32>
    %503 = arith.addf %492, %502 : vector<16x128xf32>
    %cst_302 = arith.constant dense<0.000000e+00> : vector<16xf32>
    %504 = vector.multi_reduction <add>, %503, %cst_302 [1] : vector<16x128xf32> to vector<16xf32>
    %505 = vector.shape_cast %504 : vector<16xf32> to vector<16x1xf32>
    %cst_303 = arith.constant 1.280000e+02 : f32
    %506 = vector.broadcast %cst_303 : f32 to vector<16x1xf32>
    %507 = arith.divf %505, %506 : vector<16x1xf32>
    %508 = vector.broadcast %507 : vector<16x1xf32> to vector<16x128xf32>
    %509 = arith.subf %503, %508 : vector<16x128xf32>
    %510 = arith.mulf %509, %509 : vector<16x128xf32>
    %cst_304 = arith.constant dense<0.000000e+00> : vector<16xf32>
    %511 = vector.multi_reduction <add>, %510, %cst_304 [1] : vector<16x128xf32> to vector<16xf32>
    %512 = vector.shape_cast %511 : vector<16xf32> to vector<16x1xf32>
    %cst_305 = arith.constant 1.270000e+02 : f32
    %513 = vector.broadcast %cst_305 : f32 to vector<16x1xf32>
    %514 = arith.divf %512, %513 : vector<16x1xf32>
    %cst_306 = arith.constant 9.99999997E-7 : f32
    %515 = vector.broadcast %cst_306 : f32 to vector<16x1xf32>
    %516 = arith.addf %514, %515 : vector<16x1xf32>
    %517 = math.sqrt %516 : vector<16x1xf32>
    %cst_307 = arith.constant 9.99999997E-7 : f32
    %518 = vector.broadcast %cst_307 : f32 to vector<16x1xf32>
    %519 = arith.addf %517, %518 : vector<16x1xf32>
    %cst_308 = arith.constant 1.000000e+00 : f32
    %520 = vector.broadcast %cst_308 : f32 to vector<16x1xf32>
    %521 = arith.divf %520, %519 : vector<16x1xf32>
    %522 = vector.broadcast %442 : vector<1x128xf32> to vector<16x128xf32>
    %523 = arith.mulf %522, %509 : vector<16x128xf32>
    %524 = vector.broadcast %521 : vector<16x1xf32> to vector<16x128xf32>
    %525 = arith.mulf %523, %524 : vector<16x128xf32>
    %526 = vector.broadcast %444 : vector<1x128xf32> to vector<16x128xf32>
    %527 = arith.addf %525, %526 : vector<16x128xf32>
    %c0_309 = arith.constant 0 : index
    %c0_310 = arith.constant 0 : index
    %c0_311 = arith.constant 0 : index
    %528 = vector.load %arg43[%c0_309, %c0_310, %c0_311] : memref<1x16x128xf32, #tpu.memory_space<vmem>>, vector<1x16x128xf32>
    %529 = vector.shape_cast %528 : vector<1x16x128xf32> to vector<16x128xf32>
    %530 = vector.shape_cast %527 : vector<16x128xf32> to vector<1x16x128xf32>
    tpu.vector_store %arg43[%c0_309, %c0_310, %c0_311], %530 {strides = array<i32>} : memref<1x16x128xf32, #tpu.memory_space<vmem>>, vector<1x16x128xf32>,
    return
  }
  func.func @transform_0(%arg0: i32) -> (i32, i32, i32) {
    %c0_i32 = arith.constant 0 : i32
    %c0_i32_0 = arith.constant 0 : i32
    %c0_i32_1 = arith.constant 0 : i32
    return %arg0, %c0_i32, %c0_i32_0 : i32, i32, i32
  }
  func.func @transform_1(%arg0: i32) -> (i32, i32, i32) {
    %c0_i32 = arith.constant 0 : i32
    %c0_i32_0 = arith.constant 0 : i32
    %c0_i32_1 = arith.constant 0 : i32
    return %arg0, %c0_i32, %c0_i32_0 : i32, i32, i32
  }
  func.func @transform_2(%arg0: i32) -> (i32, i32, i32) {
    %c0_i32 = arith.constant 0 : i32
    %c0_i32_0 = arith.constant 0 : i32
    %c0_i32_1 = arith.constant 0 : i32
    return %arg0, %c0_i32, %c0_i32_0 : i32, i32, i32
  }
  func.func @transform_3(%arg0: i32) -> (i32, i32, i32) {
    %c0_i32 = arith.constant 0 : i32
    %c0_i32_0 = arith.constant 0 : i32
    %c0_i32_1 = arith.constant 0 : i32
    return %arg0, %c0_i32, %c0_i32_0 : i32, i32, i32
  }
  func.func @transform_4(%arg0: i32) -> (i32, i32, i32) {
    %c0_i32 = arith.constant 0 : i32
    %c0_i32_0 = arith.constant 0 : i32
    %c0_i32_1 = arith.constant 0 : i32
    return %arg0, %c0_i32, %c0_i32_0 : i32, i32, i32
  }
  func.func @transform_5(%arg0: i32) -> (i32, i32) {
    %c0_i32 = arith.constant 0 : i32
    %c0_i32_0 = arith.constant 0 : i32
    %c0_i32_1 = arith.constant 0 : i32
    return %c0_i32, %c0_i32_0 : i32, i32
  }
  func.func @transform_6(%arg0: i32) -> (i32, i32) {
    %c0_i32 = arith.constant 0 : i32
    %c0_i32_0 = arith.constant 0 : i32
    %c0_i32_1 = arith.constant 0 : i32
    return %c0_i32, %c0_i32_0 : i32, i32
  }
  func.func @transform_7(%arg0: i32) -> (i32, i32) {
    %c0_i32 = arith.constant 0 : i32
    %c0_i32_0 = arith.constant 0 : i32
    %c0_i32_1 = arith.constant 0 : i32
    return %c0_i32, %c0_i32_0 : i32, i32
  }
  func.func @transform_8(%arg0: i32) -> (i32, i32) {
    %c0_i32 = arith.constant 0 : i32
    %c0_i32_0 = arith.constant 0 : i32
    %c0_i32_1 = arith.constant 0 : i32
    return %c0_i32, %c0_i32_0 : i32, i32
  }
  func.func @transform_9(%arg0: i32) -> (i32, i32, i32) {
    %c0_i32 = arith.constant 0 : i32
    %c0_i32_0 = arith.constant 0 : i32
    %c0_i32_1 = arith.constant 0 : i32
    %c0_i32_2 = arith.constant 0 : i32
    return %c0_i32, %c0_i32_0, %c0_i32_1 : i32, i32, i32
  }
  func.func @transform_10(%arg0: i32) -> (i32, i32, i32) {
    %c0_i32 = arith.constant 0 : i32
    %c0_i32_0 = arith.constant 0 : i32
    %c0_i32_1 = arith.constant 0 : i32
    %c0_i32_2 = arith.constant 0 : i32
    return %c0_i32, %c0_i32_0, %c0_i32_1 : i32, i32, i32
  }
  func.func @transform_11(%arg0: i32) -> (i32, i32, i32) {
    %c0_i32 = arith.constant 0 : i32
    %c0_i32_0 = arith.constant 0 : i32
    %c0_i32_1 = arith.constant 0 : i32
    %c0_i32_2 = arith.constant 0 : i32
    return %c0_i32, %c0_i32_0, %c0_i32_1 : i32, i32, i32
  }
  func.func @transform_12(%arg0: i32) -> (i32, i32, i32) {
    %c0_i32 = arith.constant 0 : i32
    %c0_i32_0 = arith.constant 0 : i32
    %c0_i32_1 = arith.constant 0 : i32
    %c0_i32_2 = arith.constant 0 : i32
    return %c0_i32, %c0_i32_0, %c0_i32_1 : i32, i32, i32
  }
  func.func @transform_13(%arg0: i32) -> (i32, i32, i32) {
    %c0_i32 = arith.constant 0 : i32
    %c0_i32_0 = arith.constant 0 : i32
    %c0_i32_1 = arith.constant 0 : i32
    %c0_i32_2 = arith.constant 0 : i32
    return %c0_i32, %c0_i32_0, %c0_i32_1 : i32, i32, i32
  }
  func.func @transform_14(%arg0: i32) -> (i32, i32, i32) {
    %c0_i32 = arith.constant 0 : i32
    %c0_i32_0 = arith.constant 0 : i32
    %c0_i32_1 = arith.constant 0 : i32
    %c0_i32_2 = arith.constant 0 : i32
    return %c0_i32, %c0_i32_0, %c0_i32_1 : i32, i32, i32
  }
  func.func @transform_15(%arg0: i32) -> (i32, i32, i32) {
    %c0_i32 = arith.constant 0 : i32
    %c0_i32_0 = arith.constant 0 : i32
    %c0_i32_1 = arith.constant 0 : i32
    %c0_i32_2 = arith.constant 0 : i32
    return %c0_i32, %c0_i32_0, %c0_i32_1 : i32, i32, i32
  }
  func.func @transform_16(%arg0: i32) -> (i32, i32, i32) {
    %c0_i32 = arith.constant 0 : i32
    %c0_i32_0 = arith.constant 0 : i32
    %c0_i32_1 = arith.constant 0 : i32
    %c0_i32_2 = arith.constant 0 : i32
    return %c0_i32, %c0_i32_0, %c0_i32_1 : i32, i32, i32
  }
  func.func @transform_17(%arg0: i32) -> (i32, i32, i32) {
    %c0_i32 = arith.constant 0 : i32
    %c0_i32_0 = arith.constant 0 : i32
    %c0_i32_1 = arith.constant 0 : i32
    %c0_i32_2 = arith.constant 0 : i32
    return %c0_i32, %c0_i32_0, %c0_i32_1 : i32, i32, i32
  }
  func.func @transform_18(%arg0: i32) -> (i32, i32, i32) {
    %c0_i32 = arith.constant 0 : i32
    %c0_i32_0 = arith.constant 0 : i32
    %c0_i32_1 = arith.constant 0 : i32
    %c0_i32_2 = arith.constant 0 : i32
    return %c0_i32, %c0_i32_0, %c0_i32_1 : i32, i32, i32
  }
  func.func @transform_19(%arg0: i32) -> (i32, i32, i32) {
    %c0_i32 = arith.constant 0 : i32
    %c0_i32_0 = arith.constant 0 : i32
    %c0_i32_1 = arith.constant 0 : i32
    %c0_i32_2 = arith.constant 0 : i32
    return %c0_i32, %c0_i32_0, %c0_i32_1 : i32, i32, i32
  }
  func.func @transform_20(%arg0: i32) -> (i32, i32, i32) {
    %c0_i32 = arith.constant 0 : i32
    %c0_i32_0 = arith.constant 0 : i32
    %c0_i32_1 = arith.constant 0 : i32
    %c0_i32_2 = arith.constant 0 : i32
    return %c0_i32, %c0_i32_0, %c0_i32_1 : i32, i32, i32
  }
  func.func @transform_21(%arg0: i32) -> (i32, i32, i32) {
    %c0_i32 = arith.constant 0 : i32
    %c0_i32_0 = arith.constant 0 : i32
    %c0_i32_1 = arith.constant 0 : i32
    %c0_i32_2 = arith.constant 0 : i32
    return %c0_i32, %c0_i32_0, %c0_i32_1 : i32, i32, i32
  }
  func.func @transform_22(%arg0: i32) -> (i32, i32, i32) {
    %c0_i32 = arith.constant 0 : i32
    %c0_i32_0 = arith.constant 0 : i32
    %c0_i32_1 = arith.constant 0 : i32
    %c0_i32_2 = arith.constant 0 : i32
    return %c0_i32, %c0_i32_0, %c0_i32_1 : i32, i32, i32
  }
  func.func @transform_23(%arg0: i32) -> (i32, i32, i32) {
    %c0_i32 = arith.constant 0 : i32
    %c0_i32_0 = arith.constant 0 : i32
    %c0_i32_1 = arith.constant 0 : i32
    %c0_i32_2 = arith.constant 0 : i32
    return %c0_i32, %c0_i32_0, %c0_i32_1 : i32, i32, i32
  }
  func.func @transform_24(%arg0: i32) -> (i32, i32, i32) {
    %c0_i32 = arith.constant 0 : i32
    %c0_i32_0 = arith.constant 0 : i32
    %c0_i32_1 = arith.constant 0 : i32
    %c0_i32_2 = arith.constant 0 : i32
    return %c0_i32, %c0_i32_0, %c0_i32_1 : i32, i32, i32
  }
  func.func @transform_25(%arg0: i32) -> (i32, i32, i32) {
    %c0_i32 = arith.constant 0 : i32
    %c0_i32_0 = arith.constant 0 : i32
    %c0_i32_1 = arith.constant 0 : i32
    %c0_i32_2 = arith.constant 0 : i32
    return %c0_i32, %c0_i32_0, %c0_i32_1 : i32, i32, i32
  }
  func.func @transform_26(%arg0: i32) -> (i32, i32) {
    %c0_i32 = arith.constant 0 : i32
    %c0_i32_0 = arith.constant 0 : i32
    %c0_i32_1 = arith.constant 0 : i32
    return %c0_i32, %c0_i32_0 : i32, i32
  }
  func.func @transform_27(%arg0: i32) -> (i32, i32, i32) {
    %c0_i32 = arith.constant 0 : i32
    %c0_i32_0 = arith.constant 0 : i32
    %c0_i32_1 = arith.constant 0 : i32
    %c0_i32_2 = arith.constant 0 : i32
    return %c0_i32, %c0_i32_0, %c0_i32_1 : i32, i32, i32
  }
  func.func @transform_28(%arg0: i32) -> (i32, i32, i32) {
    %c0_i32 = arith.constant 0 : i32
    %c0_i32_0 = arith.constant 0 : i32
    %c0_i32_1 = arith.constant 0 : i32
    %c0_i32_2 = arith.constant 0 : i32
    return %c0_i32, %c0_i32_0, %c0_i32_1 : i32, i32, i32
  }
  func.func @transform_29(%arg0: i32) -> (i32, i32, i32) {
    %c0_i32 = arith.constant 0 : i32
    %c0_i32_0 = arith.constant 0 : i32
    %c0_i32_1 = arith.constant 0 : i32
    %c0_i32_2 = arith.constant 0 : i32
    return %c0_i32, %c0_i32_0, %c0_i32_1 : i32, i32, i32
  }
  func.func @transform_30(%arg0: i32) -> (i32, i32, i32) {
    %c0_i32 = arith.constant 0 : i32
    %c0_i32_0 = arith.constant 0 : i32
    %c0_i32_1 = arith.constant 0 : i32
    %c0_i32_2 = arith.constant 0 : i32
    return %c0_i32, %c0_i32_0, %c0_i32_1 : i32, i32, i32
  }
  func.func @transform_31(%arg0: i32) -> (i32, i32, i32) {
    %c0_i32 = arith.constant 0 : i32
    %c0_i32_0 = arith.constant 0 : i32
    %c0_i32_1 = arith.constant 0 : i32
    %c0_i32_2 = arith.constant 0 : i32
    return %c0_i32, %c0_i32_0, %c0_i32_1 : i32, i32, i32
  }
  func.func @transform_32(%arg0: i32) -> (i32, i32, i32) {
    %c0_i32 = arith.constant 0 : i32
    %c0_i32_0 = arith.constant 0 : i32
    %c0_i32_1 = arith.constant 0 : i32
    %c0_i32_2 = arith.constant 0 : i32
    return %c0_i32, %c0_i32_0, %c0_i32_1 : i32, i32, i32
  }
  func.func @transform_33(%arg0: i32) -> (i32, i32, i32) {
    %c0_i32 = arith.constant 0 : i32
    %c0_i32_0 = arith.constant 0 : i32
    %c0_i32_1 = arith.constant 0 : i32
    %c0_i32_2 = arith.constant 0 : i32
    return %c0_i32, %c0_i32_0, %c0_i32_1 : i32, i32, i32
  }
  func.func @transform_34(%arg0: i32) -> (i32, i32, i32) {
    %c0_i32 = arith.constant 0 : i32
    %c0_i32_0 = arith.constant 0 : i32
    %c0_i32_1 = arith.constant 0 : i32
    %c0_i32_2 = arith.constant 0 : i32
    return %c0_i32, %c0_i32_0, %c0_i32_1 : i32, i32, i32
  }
  func.func @transform_35(%arg0: i32) -> (i32, i32, i32) {
    %c0_i32 = arith.constant 0 : i32
    %c0_i32_0 = arith.constant 0 : i32
    %c0_i32_1 = arith.constant 0 : i32
    %c0_i32_2 = arith.constant 0 : i32
    return %c0_i32, %c0_i32_0, %c0_i32_1 : i32, i32, i32
  }
  func.func @transform_36(%arg0: i32) -> (i32, i32, i32) {
    %c0_i32 = arith.constant 0 : i32
    %c0_i32_0 = arith.constant 0 : i32
    %c0_i32_1 = arith.constant 0 : i32
    %c0_i32_2 = arith.constant 0 : i32
    return %c0_i32, %c0_i32_0, %c0_i32_1 : i32, i32, i32
  }
  func.func @transform_37(%arg0: i32) -> (i32, i32, i32) {
    %c0_i32 = arith.constant 0 : i32
    %c0_i32_0 = arith.constant 0 : i32
    %c0_i32_1 = arith.constant 0 : i32
    %c0_i32_2 = arith.constant 0 : i32
    return %c0_i32, %c0_i32_0, %c0_i32_1 : i32, i32, i32
  }
  func.func @transform_38(%arg0: i32) -> (i32, i32, i32) {
    %c0_i32 = arith.constant 0 : i32
    %c0_i32_0 = arith.constant 0 : i32
    %c0_i32_1 = arith.constant 0 : i32
    %c0_i32_2 = arith.constant 0 : i32
    return %c0_i32, %c0_i32_0, %c0_i32_1 : i32, i32, i32
  }
  func.func @transform_39(%arg0: i32) -> (i32, i32, i32) {
    %c0_i32 = arith.constant 0 : i32
    %c0_i32_0 = arith.constant 0 : i32
    %c0_i32_1 = arith.constant 0 : i32
    %c0_i32_2 = arith.constant 0 : i32
    return %c0_i32, %c0_i32_0, %c0_i32_1 : i32, i32, i32
  }
  func.func @transform_40(%arg0: i32) -> (i32, i32) {
    %c0_i32 = arith.constant 0 : i32
    %c0_i32_0 = arith.constant 0 : i32
    %c0_i32_1 = arith.constant 0 : i32
    return %c0_i32, %c0_i32_0 : i32, i32
  }
  func.func @transform_41(%arg0: i32) -> (i32, i32) {
    %c0_i32 = arith.constant 0 : i32
    %c0_i32_0 = arith.constant 0 : i32
    %c0_i32_1 = arith.constant 0 : i32
    return %c0_i32, %c0_i32_0 : i32, i32
  }
  func.func @transform_42(%arg0: i32) -> (i32, i32, i32) {
    %c0_i32 = arith.constant 0 : i32
    %c0_i32_0 = arith.constant 0 : i32
    %c0_i32_1 = arith.constant 0 : i32
    return %arg0, %c0_i32, %c0_i32_0 : i32, i32, i32
  }
}

</mosaic_0001>

<llo_original>
// kernel: tpu_custom_call.1
$region0: #{tpu_custom_call.1}
  #allocation0 [shape = 'u32[]', space=smem, size = 0x4, offset = 0x4, fixed_abs, tag = 'smem constant byte address 0x4 - core index']
  #allocation1 [shape = 'u32[144,128]{1,0:T(1,128)}', space=vmem, size = 0x12000, scoped, tag = 'internal scratch']
  %s0 = inlined_call_operand.smem [shape: u32[43], index: -1, kind: input, shape index: {}]
  %s1 = sld [smem:[%s0]]
  %s2 = scalar_lea.smem %s0, 1
  %s3 = sld [smem:[%s2]]
  %s4 = scalar_lea.smem %s0, 2
  %s5 = sld [smem:[%s4]]
  %s6 = scalar_lea.smem %s0, 3
  %s7 = sld [smem:[%s6]]
  %s8 = scalar_lea.smem %s0, 4
  %s9 = sld [smem:[%s8]]
  %s10 = scalar_lea.smem %s0, 5
  %s11 = sld [smem:[%s10]]
  %s12 = scalar_lea.smem %s0, 6
  %s13 = sld [smem:[%s12]]
  %s14 = scalar_lea.smem %s0, 7
  %s15 = sld [smem:[%s14]]
  %s16 = scalar_lea.smem %s0, 8
  %s17 = sld [smem:[%s16]]
  %s18 = scalar_lea.smem %s0, 9
  %s19 = sld [smem:[%s18]]
  %s20 = scalar_lea.smem %s0, 10
  %s21 = sld [smem:[%s20]]
  %s22 = scalar_lea.smem %s0, 11
  %s23 = sld [smem:[%s22]]
  %s24 = scalar_lea.smem %s0, 12
  %s25 = sld [smem:[%s24]]
  %s26 = scalar_lea.smem %s0, 13
  %s27 = sld [smem:[%s26]]
  %s28 = scalar_lea.smem %s0, 14
  %s29 = sld [smem:[%s28]]
  %s30 = scalar_lea.smem %s0, 15
  %s31 = sld [smem:[%s30]]
  %s32 = scalar_lea.smem %s0, 16
  %s33 = sld [smem:[%s32]]
  %s34 = scalar_lea.smem %s0, 17
  %s35 = sld [smem:[%s34]]
  %s36 = scalar_lea.smem %s0, 18
  %s37 = sld [smem:[%s36]]
  %s38 = scalar_lea.smem %s0, 19
  %s39 = sld [smem:[%s38]]
  %s40 = scalar_lea.smem %s0, 20
  %s41 = sld [smem:[%s40]]
  %s42 = scalar_lea.smem %s0, 21
  %s43 = sld [smem:[%s42]]
  %s44 = scalar_lea.smem %s0, 22
  %s45 = sld [smem:[%s44]]
  %s46 = scalar_lea.smem %s0, 23
  %s47 = sld [smem:[%s46]]
  %s48 = scalar_lea.smem %s0, 24
  %s49 = sld [smem:[%s48]]
  %s50 = scalar_lea.smem %s0, 25
  %s51 = sld [smem:[%s50]]
  %s52 = scalar_lea.smem %s0, 26
  %s53 = sld [smem:[%s52]]
  %s54 = scalar_lea.smem %s0, 27
  %s55 = sld [smem:[%s54]]
  %s56 = scalar_lea.smem %s0, 28
  %s57 = sld [smem:[%s56]]
  %s58 = scalar_lea.smem %s0, 29
  %s59 = sld [smem:[%s58]]
  %s60 = scalar_lea.smem %s0, 30
  %s61 = sld [smem:[%s60]]
  %s62 = scalar_lea.smem %s0, 31
  %s63 = sld [smem:[%s62]]
  %s64 = scalar_lea.smem %s0, 32
  %s65 = sld [smem:[%s64]]
  %s66 = scalar_lea.smem %s0, 33
  %s67 = sld [smem:[%s66]]
  %s68 = scalar_lea.smem %s0, 34
  %s69 = sld [smem:[%s68]]
  %s70 = scalar_lea.smem %s0, 35
  %s71 = sld [smem:[%s70]]
  %s72 = scalar_lea.smem %s0, 36
  %s73 = sld [smem:[%s72]]
  %s74 = scalar_lea.smem %s0, 37
  %s75 = sld [smem:[%s74]]
  %s76 = scalar_lea.smem %s0, 38
  %s77 = sld [smem:[%s76]]
  %s78 = scalar_lea.smem %s0, 39
  %s79 = sld [smem:[%s78]]
  %s80 = scalar_lea.smem %s0, 40
  %s81 = sld [smem:[%s80]]
  %s82 = scalar_lea.smem %s0, 41
  %s83 = sld [smem:[%s82]]
  %s84 = scalar_lea.smem %s0, 42
  %s85 = sld [smem:[%s84]]
  %s86 = sld [smem:[#allocation0]]
  $region317: #{tpu_custom_call.1} parent=0
    _
  %s88 = ssub.s32 1, %s86
  %s89 = scalar_select 0, %s88, %s86
  $region1: #{tpu_custom_call.1} parent=0
    #allocation2 [shape = 'u8[16384]{0}', space=vmem, size = 0x4000, scoped, tag = 'input window, operand 4']
    #allocation3 [shape = 's32[2]{0}', space=sflag, size = 0x8, scoped, tag = 'scoped memory for tpu_custom_call.1']
    #allocation4 [shape = 's32[2]{0}', space=sflag, size = 0x8, scoped, tag = 'scoped memory for tpu_custom_call.1']
    #allocation5 [shape = 'u8[512]{0}', space=vmem, size = 0x400, scoped, tag = 'input window, operand 6, single buffered']
    #allocation6 [shape = 's32[1]{0}', space=sflag, size = 0x4, scoped, tag = 'scoped memory for tpu_custom_call.1']
    #allocation7 [shape = 'u8[4096]{0}', space=vmem, size = 0x1000, scoped, tag = 'input window, operand 7, single buffered']
    #allocation8 [shape = 'u8[512]{0}', space=vmem, size = 0x400, scoped, tag = 'input window, operand 8, single buffered']
    #allocation9 [shape = 's32[1]{0}', space=sflag, size = 0x4, scoped, tag = 'scoped memory for tpu_custom_call.1']
    #allocation10 [shape = 'u8[1024]{0}', space=vmem, size = 0x400, scoped, tag = 'input window, operand 11, single buffered']
    #allocation11 [shape = 'u8[65536]{0}', space=vmem, size = 0x10000, scoped, tag = 'input window, operand 12, single buffered']
    #allocation12 [shape = 's32[1]{0}', space=sflag, size = 0x4, scoped, tag = 'scoped memory for tpu_custom_call.1']
    #allocation13 [shape = 'u8[1024]{0}', space=vmem, size = 0x400, scoped, tag = 'input window, operand 13, single buffered']
    #allocation14 [shape = 'u8[65536]{0}', space=vmem, size = 0x10000, scoped, tag = 'input window, operand 14, single buffered']
    #allocation15 [shape = 's32[1]{0}', space=sflag, size = 0x4, scoped, tag = 'scoped memory for tpu_custom_call.1']
    #allocation16 [shape = 'u8[1024]{0}', space=vmem, size = 0x400, scoped, tag = 'input window, operand 15, single buffered']
    #allocation17 [shape = 'u8[1024]{0}', space=vmem, size = 0x400, scoped, tag = 'input window, operand 16, single buffered']
    #allocation18 [shape = 's32[1]{0}', space=sflag, size = 0x4, scoped, tag = 'scoped memory for tpu_custom_call.1']
    #allocation19 [shape = 'u8[1024]{0}', space=vmem, size = 0x400, scoped, tag = 'input window, operand 17, single buffered']
    #allocation20 [shape = 'u8[4096]{0}', space=vmem, size = 0x1000, scoped, tag = 'input window, operand 19, single buffered']
    #allocation21 [shape = 's32[1]{0}', space=sflag, size = 0x4, scoped, tag = 'scoped memory for tpu_custom_call.1']
    #allocation22 [shape = 'u8[262144]{0}', space=vmem, size = 0x40000, scoped, tag = 'input window, operand 20, single buffered']
    #allocation23 [shape = 'u8[1024]{0}', space=vmem, size = 0x400, scoped, tag = 'input window, operand 21, single buffered']
    #allocation24 [shape = 's32[1]{0}', space=sflag, size = 0x4, scoped, tag = 'scoped memory for tpu_custom_call.1']
    #allocation25 [shape = 'u8[1024]{0}', space=vmem, size = 0x400, scoped, tag = 'input window, operand 22, single buffered']
    #allocation26 [shape = 'u8[1024]{0}', space=vmem, size = 0x400, scoped, tag = 'input window, operand 23, single buffered']
    #allocation27 [shape = 's32[1]{0}', space=sflag, size = 0x4, scoped, tag = 'scoped memory for tpu_custom_call.1']
    #allocation28 [shape = 'u8[131072]{0}', space=vmem, size = 0x20000, scoped, tag = 'input window, operand 24, single buffered']
    #allocation29 [shape = 'u8[65536]{0}', space=vmem, size = 0x10000, scoped, tag = 'input window, operand 25, single buffered']
    #allocation30 [shape = 's32[1]{0}', space=sflag, size = 0x4, scoped, tag = 'scoped memory for tpu_custom_call.1']
    #allocation31 [shape = 'u8[65536]{0}', space=vmem, size = 0x10000, scoped, tag = 'input window, operand 26, single buffered']
    #allocation32 [shape = 'u8[1024]{0}', space=vmem, size = 0x400, scoped, tag = 'input window, operand 27, single buffered']
    #allocation33 [shape = 's32[1]{0}', space=sflag, size = 0x4, scoped, tag = 'scoped memory for tpu_custom_call.1']
    #allocation34 [shape = 'u8[65536]{0}', space=vmem, size = 0x10000, scoped, tag = 'input window, operand 28, single buffered']
    #allocation35 [shape = 'u8[1024]{0}', space=vmem, size = 0x400, scoped, tag = 'input window, operand 29, single buffered']
    #allocation36 [shape = 's32[1]{0}', space=sflag, size = 0x4, scoped, tag = 'scoped memory for tpu_custom_call.1']
    #allocation37 [shape = 'u8[65536]{0}', space=vmem, size = 0x10000, scoped, tag = 'input window, operand 30, single buffered']
    #allocation38 [shape = 'u8[1024]{0}', space=vmem, size = 0x400, scoped, tag = 'input window, operand 31, single buffered']
    #allocation39 [shape = 's32[1]{0}', space=sflag, size = 0x4, scoped, tag = 'scoped memory for tpu_custom_call.1']
    #allocation40 [shape = 'u8[1024]{0}', space=vmem, size = 0x400, scoped, tag = 'input window, operand 32, single buffered']
    #allocation41 [shape = 'u8[1024]{0}', space=vmem, size = 0x400, scoped, tag = 'input window, operand 33, single buffered']
    #allocation42 [shape = 's32[1]{0}', space=sflag, size = 0x4, scoped, tag = 'scoped memory for tpu_custom_call.1']
    #allocation43 [shape = 'u8[262144]{0}', space=vmem, size = 0x40000, scoped, tag = 'input window, operand 34, single buffered']
    #allocation44 [shape = 'u8[4096]{0}', space=vmem, size = 0x1000, scoped, tag = 'input window, operand 35, single buffered']
    #allocation45 [shape = 's32[1]{0}', space=sflag, size = 0x4, scoped, tag = 'scoped memory for tpu_custom_call.1']
    #allocation46 [shape = 'u8[262144]{0}', space=vmem, size = 0x40000, scoped, tag = 'input window, operand 36, single buffered']
    #allocation47 [shape = 'u8[16384]{0}', space=vmem, size = 0x4000, scoped, tag = 'output window, operand 0']
    %90 = vsyncpa [#allocation3], 0
    %s91 = scalar_lea.sflag [#allocation3], 1
    %92 = vsyncpa %s91, 0
    %93 = vsyncpa [#allocation6], 0
    %94 = vsyncpa [#allocation9], 0
    %95 = vsyncpa [#allocation12], 0
    %96 = vsyncpa [#allocation15], 0
    %97 = vsyncpa [#allocation18], 0
    %98 = vsyncpa [#allocation21], 0
    %99 = vsyncpa [#allocation24], 0
    %100 = vsyncpa [#allocation27], 0
    %101 = vsyncpa [#allocation30], 0
    %102 = vsyncpa [#allocation33], 0
    %103 = vsyncpa [#allocation36], 0
    %104 = vsyncpa [#allocation39], 0
    %105 = vsyncpa [#allocation42], 0
    %106 = vsyncpa [#allocation45], 0
    %107 = vsyncpa [#allocation4], 0
    %s108 = scalar_lea.sflag [#allocation4], 1
    %109 = vsyncpa %s108, 0
    loop: start=0, step=1, limit=4
    $region2: #{tpu_custom_call.1} parent=1 // loop_pre_header
      _
    $region3: #{tpu_custom_call.1} parent=1 // loop_header
      %s111 = sphi 0, %s115
      %p112 = scmp.ge.s32.totalorder %s111, 4
      %s121 = sphi 0, %s123
      %s124 = sphi 0, %s121
      %s125 = sphi 0, %s124
      %s141 = sphi 0, %s125
      %s147 = sphi 0, %s149
      %s150 = sphi 0, %s147
      %s151 = sphi 0, %s150
      %s167 = sphi 0, %s151
      %s173 = sphi 0, %s175
      %s176 = sphi 0, %s173
      %s177 = sphi 0, %s176
      %s193 = sphi 0, %s177
      %s199 = sphi 0, %s201
      %s202 = sphi 0, %s199
      %s203 = sphi 0, %s202
      %s219 = sphi 0, %s203
      %s225 = sphi 0, %s227
      %s228 = sphi 0, %s225
      %s229 = sphi 0, %s228
      %s245 = sphi 0, %s229
      %s249 = sphi 0, %s249
      %s251 = sphi 0, %s249
      %s252 = sphi 0, %s251
      %s266 = sphi 0, %s252
      %s270 = sphi 0, %s270
      %s272 = sphi 0, %s270
      %s273 = sphi 0, %s272
      %s287 = sphi 0, %s273
      %s291 = sphi 0, %s291
      %s293 = sphi 0, %s291
      %s294 = sphi 0, %s293
      %s308 = sphi 0, %s294
      %s312 = sphi 0, %s312
      %s314 = sphi 0, %s312
      %s315 = sphi 0, %s314
      %s329 = sphi 0, %s315
      %s333 = sphi 0, %s333
      %s335 = sphi 0, %s333
      %s336 = sphi 0, %s335
      %s350 = sphi 0, %s336
      %s354 = sphi 0, %s354
      %s356 = sphi 0, %s354
      %s357 = sphi 0, %s356
      %s371 = sphi 0, %s357
      %s375 = sphi 0, %s375
      %s377 = sphi 0, %s375
      %s378 = sphi 0, %s377
      %s392 = sphi 0, %s378
      %s396 = sphi 0, %s396
      %s398 = sphi 0, %s396
      %s399 = sphi 0, %s398
      %s413 = sphi 0, %s399
      %s417 = sphi 0, %s417
      %s419 = sphi 0, %s417
      %s420 = sphi 0, %s419
      %s434 = sphi 0, %s420
      %s438 = sphi 0, %s438
      %s440 = sphi 0, %s438
      %s441 = sphi 0, %s440
      %s455 = sphi 0, %s441
      %s459 = sphi 0, %s459
      %s461 = sphi 0, %s459
      %s462 = sphi 0, %s461
      %s476 = sphi 0, %s462
      %s480 = sphi 0, %s480
      %s482 = sphi 0, %s480
      %s483 = sphi 0, %s482
      %s497 = sphi 0, %s483
      %s501 = sphi 0, %s501
      %s503 = sphi 0, %s501
      %s504 = sphi 0, %s503
      %s518 = sphi 0, %s504
      %s522 = sphi 0, %s522
      %s524 = sphi 0, %s522
      %s525 = sphi 0, %s524
      %s539 = sphi 0, %s525
      %s543 = sphi 0, %s543
      %s545 = sphi 0, %s543
      %s546 = sphi 0, %s545
      %s560 = sphi 0, %s546
      %s564 = sphi 0, %s564
      %s566 = sphi 0, %s564
      %s567 = sphi 0, %s566
      %s581 = sphi 0, %s567
      %s585 = sphi 0, %s585
      %s587 = sphi 0, %s585
      %s588 = sphi 0, %s587
      %s602 = sphi 0, %s588
      %s606 = sphi 0, %s606
      %s608 = sphi 0, %s606
      %s609 = sphi 0, %s608
      %s623 = sphi 0, %s609
      %s627 = sphi 0, %s627
      %s629 = sphi 0, %s627
      %s630 = sphi 0, %s629
      %s644 = sphi 0, %s630
      %s648 = sphi 0, %s648
      %s650 = sphi 0, %s648
      %s651 = sphi 0, %s650
      %s665 = sphi 0, %s651
      %s669 = sphi 0, %s669
      %s671 = sphi 0, %s669
      %s672 = sphi 0, %s671
      %s686 = sphi 0, %s672
      %s690 = sphi 0, %s690
      %s692 = sphi 0, %s690
      %s693 = sphi 0, %s692
      %s707 = sphi 0, %s693
      %s711 = sphi 0, %s711
      %s713 = sphi 0, %s711
      %s714 = sphi 0, %s713
      %s728 = sphi 0, %s714
      %s732 = sphi 0, %s732
      %s734 = sphi 0, %s732
      %s735 = sphi 0, %s734
      %s749 = sphi 0, %s735
      %s753 = sphi 0, %s753
      %s755 = sphi 0, %s753
      %s756 = sphi 0, %s755
      %s770 = sphi 0, %s756
      %s774 = sphi 0, %s774
      %s776 = sphi 0, %s774
      %s777 = sphi 0, %s776
      %s791 = sphi 0, %s777
      %s795 = sphi 0, %s795
      %s797 = sphi 0, %s795
      %s798 = sphi 0, %s797
      %s812 = sphi 0, %s798
      %s816 = sphi 0, %s816
      %s818 = sphi 0, %s816
      %s819 = sphi 0, %s818
      %s833 = sphi 0, %s819
      %s837 = sphi 0, %s837
      %s839 = sphi 0, %s837
      %s840 = sphi 0, %s839
      %s854 = sphi 0, %s840
      %s858 = sphi 0, %s858
      %s860 = sphi 0, %s858
      %s861 = sphi 0, %s860
      %s875 = sphi 0, %s861
      %s879 = sphi 0, %s879
      %s881 = sphi 0, %s879
      %s882 = sphi 0, %s881
      %s896 = sphi 0, %s882
      %s900 = sphi 0, %s900
      %s902 = sphi 0, %s900
      %s903 = sphi 0, %s902
      %s917 = sphi 0, %s903
      %s921 = sphi 0, %s921
      %s923 = sphi 0, %s921
      %s924 = sphi 0, %s923
      %s938 = sphi 0, %s924
      %s942 = sphi 0, %s942
      %s944 = sphi 0, %s942
      %s945 = sphi 0, %s944
      %s959 = sphi 0, %s945
      %s963 = sphi 0, %s963
      %s965 = sphi 0, %s963
      %s966 = sphi 0, %s965
      %s980 = sphi 0, %s966
      %s984 = sphi 0, %s984
      %s986 = sphi 0, %s984
      %s987 = sphi 0, %s986
      %s1001 = sphi 0, %s987
      %s1005 = sphi 0, %s1005
      %s1007 = sphi 0, %s1005
      %s1008 = sphi 0, %s1007
      %s1022 = sphi 0, %s1008
      %s1028 = sphi 0, %s1030
      %s1031 = sphi 0, %s1028
      %s1032 = sphi 0, %s1031
      %s1048 = sphi 0, %s1032
    $region4: #{tpu_custom_call.1} parent=1 // loop_header_branch
      %114 = sbr.rel (%p112) target = $region8
    $region5: #{tpu_custom_call.1} parent=1 // loop_body
      %s116 = ssub.s32 %s111, 1
      %s117 = ssub.s32 %s111, 2
      %s118 = sadd.s32 %s111, 1
      %s119 = ssub.s32 %s111, %s118
      %p120 = scmp.eq.s32.totalorder %s119, 0
      %s122 = sadd.s32 %s121, 1
      %s123 = scalar_select %p120, %s121, %s122
      %p126 = pneg %p120
      %p127 = scmp.eq.s32.totalorder %s111, 1
      %p128 = por %p126, %p127
      %p129 = scmp.ne.s32.totalorder %s121, %s124
      %p130 = scmp.eq.s32.totalorder %s111, 0
      %p131 = por %p129, %p130
      %p132 = scmp.ne.s32.totalorder %s121, %s124
      %p133 = scmp.eq.s32.totalorder %s116, 1
      %p134 = por %p132, %p133
      %p135 = scmp.ne.s32.totalorder %s124, %s125
      %p136 = scmp.eq.s32.totalorder %s116, 0
      %p137 = por %p135, %p136
      %p138 = scmp.ne.s32.totalorder %s124, %s125
      %p139 = scmp.eq.s32.totalorder %s117, 1
      %p140 = por %p138, %p139
      %p142 = scmp.ne.s32.totalorder %s125, %s141
      %p143 = scmp.eq.s32.totalorder %s117, 0
      %p144 = por %p142, %p143
      %s145 = ssub.s32 %s111, %s118
      %p146 = scmp.eq.s32.totalorder %s145, 0
      %s148 = sadd.s32 %s147, 1
      %s149 = scalar_select %p146, %s147, %s148
      %p152 = pneg %p146
      %p153 = scmp.eq.s32.totalorder %s111, 1
      %p154 = por %p152, %p153
      %p155 = scmp.ne.s32.totalorder %s147, %s150
      %p156 = scmp.eq.s32.totalorder %s111, 0
      %p157 = por %p155, %p156
      %p158 = scmp.ne.s32.totalorder %s147, %s150
      %p159 = scmp.eq.s32.totalorder %s116, 1
      %p160 = por %p158, %p159
      %p161 = scmp.ne.s32.totalorder %s150, %s151
      %p162 = scmp.eq.s32.totalorder %s116, 0
      %p163 = por %p161, %p162
      %p164 = scmp.ne.s32.totalorder %s150, %s151
      %p165 = scmp.eq.s32.totalorder %s117, 1
      %p166 = por %p164, %p165
      %p168 = scmp.ne.s32.totalorder %s151, %s167
      %p169 = scmp.eq.s32.totalorder %s117, 0
      %p170 = por %p168, %p169
      %s171 = ssub.s32 %s111, %s118
      %p172 = scmp.eq.s32.totalorder %s171, 0
      %s174 = sadd.s32 %s173, 1
      %s175 = scalar_select %p172, %s173, %s174
      %p178 = pneg %p172
      %p179 = scmp.eq.s32.totalorder %s111, 1
      %p180 = por %p178, %p179
      %p181 = scmp.ne.s32.totalorder %s173, %s176
      %p182 = scmp.eq.s32.totalorder %s111, 0
      %p183 = por %p181, %p182
      %p184 = scmp.ne.s32.totalorder %s173, %s176
      %p185 = scmp.eq.s32.totalorder %s116, 1
      %p186 = por %p184, %p185
      %p187 = scmp.ne.s32.totalorder %s176, %s177
      %p188 = scmp.eq.s32.totalorder %s116, 0
      %p189 = por %p187, %p188
      %p190 = scmp.ne.s32.totalorder %s176, %s177
      %p191 = scmp.eq.s32.totalorder %s117, 1
      %p192 = por %p190, %p191
      %p194 = scmp.ne.s32.totalorder %s177, %s193
      %p195 = scmp.eq.s32.totalorder %s117, 0
      %p196 = por %p194, %p195
      %s197 = ssub.s32 %s111, %s118
      %p198 = scmp.eq.s32.totalorder %s197, 0
      %s200 = sadd.s32 %s199, 1
      %s201 = scalar_select %p198, %s199, %s200
      %p204 = pneg %p198
      %p205 = scmp.eq.s32.totalorder %s111, 1
      %p206 = por %p204, %p205
      %p207 = scmp.ne.s32.totalorder %s199, %s202
      %p208 = scmp.eq.s32.totalorder %s111, 0
      %p209 = por %p207, %p208
      %p210 = scmp.ne.s32.totalorder %s199, %s202
      %p211 = scmp.eq.s32.totalorder %s116, 1
      %p212 = por %p210, %p211
      %p213 = scmp.ne.s32.totalorder %s202, %s203
      %p214 = scmp.eq.s32.totalorder %s116, 0
      %p215 = por %p213, %p214
      %p216 = scmp.ne.s32.totalorder %s202, %s203
      %p217 = scmp.eq.s32.totalorder %s117, 1
      %p218 = por %p216, %p217
      %p220 = scmp.ne.s32.totalorder %s203, %s219
      %p221 = scmp.eq.s32.totalorder %s117, 0
      %p222 = por %p220, %p221
      %s223 = ssub.s32 %s111, %s118
      %p224 = scmp.eq.s32.totalorder %s223, 0
      %s226 = sadd.s32 %s225, 1
      %s227 = scalar_select %p224, %s225, %s226
      %p230 = pneg %p224
      %p231 = scmp.eq.s32.totalorder %s111, 1
      %p232 = por %p230, %p231
      %p233 = scmp.ne.s32.totalorder %s225, %s228
      %p234 = scmp.eq.s32.totalorder %s111, 0
      %p235 = por %p233, %p234
      %p236 = scmp.ne.s32.totalorder %s225, %s228
      %p237 = scmp.eq.s32.totalorder %s116, 1
      %p238 = por %p236, %p237
      %p239 = scmp.ne.s32.totalorder %s228, %s229
      %p240 = scmp.eq.s32.totalorder %s116, 0
      %p241 = por %p239, %p240
      %p242 = scmp.ne.s32.totalorder %s228, %s229
      %p243 = scmp.eq.s32.totalorder %s117, 1
      %p244 = por %p242, %p243
      %p246 = scmp.ne.s32.totalorder %s229, %s245
      %p247 = scmp.eq.s32.totalorder %s117, 0
      %p248 = por %p246, %p247
      %s250 = sadd.s32 %s249, 1
      %p253 = scmp.eq.s32.totalorder %s111, 1
      %p254 = scmp.ne.s32.totalorder %s249, %s251
      %p255 = scmp.eq.s32.totalorder %s111, 0
      %p256 = por %p254, %p255
      %p257 = scmp.ne.s32.totalorder %s249, %s251
      %p258 = scmp.eq.s32.totalorder %s116, 1
      %p259 = por %p257, %p258
      %p260 = scmp.ne.s32.totalorder %s251, %s252
      %p261 = scmp.eq.s32.totalorder %s116, 0
      %p262 = por %p260, %p261
      %p263 = scmp.ne.s32.totalorder %s251, %s252
      %p264 = scmp.eq.s32.totalorder %s117, 1
      %p265 = por %p263, %p264
      %p267 = scmp.ne.s32.totalorder %s252, %s266
      %p268 = scmp.eq.s32.totalorder %s117, 0
      %p269 = por %p267, %p268
      %s271 = sadd.s32 %s270, 1
      %p274 = scmp.eq.s32.totalorder %s111, 1
      %p275 = scmp.ne.s32.totalorder %s270, %s272
      %p276 = scmp.eq.s32.totalorder %s111, 0
      %p277 = por %p275, %p276
      %p278 = scmp.ne.s32.totalorder %s270, %s272
      %p279 = scmp.eq.s32.totalorder %s116, 1
      %p280 = por %p278, %p279
      %p281 = scmp.ne.s32.totalorder %s272, %s273
      %p282 = scmp.eq.s32.totalorder %s116, 0
      %p283 = por %p281, %p282
      %p284 = scmp.ne.s32.totalorder %s272, %s273
      %p285 = scmp.eq.s32.totalorder %s117, 1
      %p286 = por %p284, %p285
      %p288 = scmp.ne.s32.totalorder %s273, %s287
      %p289 = scmp.eq.s32.totalorder %s117, 0
      %p290 = por %p288, %p289
      %s292 = sadd.s32 %s291, 1
      %p295 = scmp.eq.s32.totalorder %s111, 1
      %p296 = scmp.ne.s32.totalorder %s291, %s293
      %p297 = scmp.eq.s32.totalorder %s111, 0
      %p298 = por %p296, %p297
      %p299 = scmp.ne.s32.totalorder %s291, %s293
      %p300 = scmp.eq.s32.totalorder %s116, 1
      %p301 = por %p299, %p300
      %p302 = scmp.ne.s32.totalorder %s293, %s294
      %p303 = scmp.eq.s32.totalorder %s116, 0
      %p304 = por %p302, %p303
      %p305 = scmp.ne.s32.totalorder %s293, %s294
      %p306 = scmp.eq.s32.totalorder %s117, 1
      %p307 = por %p305, %p306
      %p309 = scmp.ne.s32.totalorder %s294, %s308
      %p310 = scmp.eq.s32.totalorder %s117, 0
      %p311 = por %p309, %p310
      %s313 = sadd.s32 %s312, 1
      %p316 = scmp.eq.s32.totalorder %s111, 1
      %p317 = scmp.ne.s32.totalorder %s312, %s314
      %p318 = scmp.eq.s32.totalorder %s111, 0
      %p319 = por %p317, %p318
      %p320 = scmp.ne.s32.totalorder %s312, %s314
      %p321 = scmp.eq.s32.totalorder %s116, 1
      %p322 = por %p320, %p321
      %p323 = scmp.ne.s32.totalorder %s314, %s315
      %p324 = scmp.eq.s32.totalorder %s116, 0
      %p325 = por %p323, %p324
      %p326 = scmp.ne.s32.totalorder %s314, %s315
      %p327 = scmp.eq.s32.totalorder %s117, 1
      %p328 = por %p326, %p327
      %p330 = scmp.ne.s32.totalorder %s315, %s329
      %p331 = scmp.eq.s32.totalorder %s117, 0
      %p332 = por %p330, %p331
      %s334 = sadd.s32 %s333, 1
      %p337 = scmp.eq.s32.totalorder %s111, 1
      %p338 = scmp.ne.s32.totalorder %s333, %s335
      %p339 = scmp.eq.s32.totalorder %s111, 0
      %p340 = por %p338, %p339
      %p341 = scmp.ne.s32.totalorder %s333, %s335
      %p342 = scmp.eq.s32.totalorder %s116, 1
      %p343 = por %p341, %p342
      %p344 = scmp.ne.s32.totalorder %s335, %s336
      %p345 = scmp.eq.s32.totalorder %s116, 0
      %p346 = por %p344, %p345
      %p347 = scmp.ne.s32.totalorder %s335, %s336
      %p348 = scmp.eq.s32.totalorder %s117, 1
      %p349 = por %p347, %p348
      %p351 = scmp.ne.s32.totalorder %s336, %s350
      %p352 = scmp.eq.s32.totalorder %s117, 0
      %p353 = por %p351, %p352
      %s355 = sadd.s32 %s354, 1
      %p358 = scmp.eq.s32.totalorder %s111, 1
      %p359 = scmp.ne.s32.totalorder %s354, %s356
      %p360 = scmp.eq.s32.totalorder %s111, 0
      %p361 = por %p359, %p360
      %p362 = scmp.ne.s32.totalorder %s354, %s356
      %p363 = scmp.eq.s32.totalorder %s116, 1
      %p364 = por %p362, %p363
      %p365 = scmp.ne.s32.totalorder %s356, %s357
      %p366 = scmp.eq.s32.totalorder %s116, 0
      %p367 = por %p365, %p366
      %p368 = scmp.ne.s32.totalorder %s356, %s357
      %p369 = scmp.eq.s32.totalorder %s117, 1
      %p370 = por %p368, %p369
      %p372 = scmp.ne.s32.totalorder %s357, %s371
      %p373 = scmp.eq.s32.totalorder %s117, 0
      %p374 = por %p372, %p373
      %s376 = sadd.s32 %s375, 1
      %p379 = scmp.eq.s32.totalorder %s111, 1
      %p380 = scmp.ne.s32.totalorder %s375, %s377
      %p381 = scmp.eq.s32.totalorder %s111, 0
      %p382 = por %p380, %p381
      %p383 = scmp.ne.s32.totalorder %s375, %s377
      %p384 = scmp.eq.s32.totalorder %s116, 1
      %p385 = por %p383, %p384
      %p386 = scmp.ne.s32.totalorder %s377, %s378
      %p387 = scmp.eq.s32.totalorder %s116, 0
      %p388 = por %p386, %p387
      %p389 = scmp.ne.s32.totalorder %s377, %s378
      %p390 = scmp.eq.s32.totalorder %s117, 1
      %p391 = por %p389, %p390
      %p393 = scmp.ne.s32.totalorder %s378, %s392
      %p394 = scmp.eq.s32.totalorder %s117, 0
      %p395 = por %p393, %p394
      %s397 = sadd.s32 %s396, 1
      %p400 = scmp.eq.s32.totalorder %s111, 1
      %p401 = scmp.ne.s32.totalorder %s396, %s398
      %p402 = scmp.eq.s32.totalorder %s111, 0
      %p403 = por %p401, %p402
      %p404 = scmp.ne.s32.totalorder %s396, %s398
      %p405 = scmp.eq.s32.totalorder %s116, 1
      %p406 = por %p404, %p405
      %p407 = scmp.ne.s32.totalorder %s398, %s399
      %p408 = scmp.eq.s32.totalorder %s116, 0
      %p409 = por %p407, %p408
      %p410 = scmp.ne.s32.totalorder %s398, %s399
      %p411 = scmp.eq.s32.totalorder %s117, 1
      %p412 = por %p410, %p411
      %p414 = scmp.ne.s32.totalorder %s399, %s413
      %p415 = scmp.eq.s32.totalorder %s117, 0
      %p416 = por %p414, %p415
      %s418 = sadd.s32 %s417, 1
      %p421 = scmp.eq.s32.totalorder %s111, 1
      %p422 = scmp.ne.s32.totalorder %s417, %s419
      %p423 = scmp.eq.s32.totalorder %s111, 0
      %p424 = por %p422, %p423
      %p425 = scmp.ne.s32.totalorder %s417, %s419
      %p426 = scmp.eq.s32.totalorder %s116, 1
      %p427 = por %p425, %p426
      %p428 = scmp.ne.s32.totalorder %s419, %s420
      %p429 = scmp.eq.s32.totalorder %s116, 0
      %p430 = por %p428, %p429
      %p431 = scmp.ne.s32.totalorder %s419, %s420
      %p432 = scmp.eq.s32.totalorder %s117, 1
      %p433 = por %p431, %p432
      %p435 = scmp.ne.s32.totalorder %s420, %s434
      %p436 = scmp.eq.s32.totalorder %s117, 0
      %p437 = por %p435, %p436
      %s439 = sadd.s32 %s438, 1
      %p442 = scmp.eq.s32.totalorder %s111, 1
      %p443 = scmp.ne.s32.totalorder %s438, %s440
      %p444 = scmp.eq.s32.totalorder %s111, 0
      %p445 = por %p443, %p444
      %p446 = scmp.ne.s32.totalorder %s438, %s440
      %p447 = scmp.eq.s32.totalorder %s116, 1
      %p448 = por %p446, %p447
      %p449 = scmp.ne.s32.totalorder %s440, %s441
      %p450 = scmp.eq.s32.totalorder %s116, 0
      %p451 = por %p449, %p450
      %p452 = scmp.ne.s32.totalorder %s440, %s441
      %p453 = scmp.eq.s32.totalorder %s117, 1
      %p454 = por %p452, %p453
      %p456 = scmp.ne.s32.totalorder %s441, %s455
      %p457 = scmp.eq.s32.totalorder %s117, 0
      %p458 = por %p456, %p457
      %s460 = sadd.s32 %s459, 1
      %p463 = scmp.eq.s32.totalorder %s111, 1
      %p464 = scmp.ne.s32.totalorder %s459, %s461
      %p465 = scmp.eq.s32.totalorder %s111, 0
      %p466 = por %p464, %p465
      %p467 = scmp.ne.s32.totalorder %s459, %s461
      %p468 = scmp.eq.s32.totalorder %s116, 1
      %p469 = por %p467, %p468
      %p470 = scmp.ne.s32.totalorder %s461, %s462
      %p471 = scmp.eq.s32.totalorder %s116, 0
      %p472 = por %p470, %p471
      %p473 = scmp.ne.s32.totalorder %s461, %s462
      %p474 = scmp.eq.s32.totalorder %s117, 1
      %p475 = por %p473, %p474
      %p477 = scmp.ne.s32.totalorder %s462, %s476
      %p478 = scmp.eq.s32.totalorder %s117, 0
      %p479 = por %p477, %p478
      %s481 = sadd.s32 %s480, 1
      %p484 = scmp.eq.s32.totalorder %s111, 1
      %p485 = scmp.ne.s32.totalorder %s480, %s482
      %p486 = scmp.eq.s32.totalorder %s111, 0
      %p487 = por %p485, %p486
      %p488 = scmp.ne.s32.totalorder %s480, %s482
      %p489 = scmp.eq.s32.totalorder %s116, 1
      %p490 = por %p488, %p489
      %p491 = scmp.ne.s32.totalorder %s482, %s483
      %p492 = scmp.eq.s32.totalorder %s116, 0
      %p493 = por %p491, %p492
      %p494 = scmp.ne.s32.totalorder %s482, %s483
      %p495 = scmp.eq.s32.totalorder %s117, 1
      %p496 = por %p494, %p495
      %p498 = scmp.ne.s32.totalorder %s483, %s497
      %p499 = scmp.eq.s32.totalorder %s117, 0
      %p500 = por %p498, %p499
      %s502 = sadd.s32 %s501, 1
      %p505 = scmp.eq.s32.totalorder %s111, 1
      %p506 = scmp.ne.s32.totalorder %s501, %s503
      %p507 = scmp.eq.s32.totalorder %s111, 0
      %p508 = por %p506, %p507
      %p509 = scmp.ne.s32.totalorder %s501, %s503
      %p510 = scmp.eq.s32.totalorder %s116, 1
      %p511 = por %p509, %p510
      %p512 = scmp.ne.s32.totalorder %s503, %s504
      %p513 = scmp.eq.s32.totalorder %s116, 0
      %p514 = por %p512, %p513
      %p515 = scmp.ne.s32.totalorder %s503, %s504
      %p516 = scmp.eq.s32.totalorder %s117, 1
      %p517 = por %p515, %p516
      %p519 = scmp.ne.s32.totalorder %s504, %s518
      %p520 = scmp.eq.s32.totalorder %s117, 0
      %p521 = por %p519, %p520
      %s523 = sadd.s32 %s522, 1
      %p526 = scmp.eq.s32.totalorder %s111, 1
      %p527 = scmp.ne.s32.totalorder %s522, %s524
      %p528 = scmp.eq.s32.totalorder %s111, 0
      %p529 = por %p527, %p528
      %p530 = scmp.ne.s32.totalorder %s522, %s524
      %p531 = scmp.eq.s32.totalorder %s116, 1
      %p532 = por %p530, %p531
      %p533 = scmp.ne.s32.totalorder %s524, %s525
      %p534 = scmp.eq.s32.totalorder %s116, 0
      %p535 = por %p533, %p534
      %p536 = scmp.ne.s32.totalorder %s524, %s525
      %p537 = scmp.eq.s32.totalorder %s117, 1
      %p538 = por %p536, %p537
      %p540 = scmp.ne.s32.totalorder %s525, %s539
      %p541 = scmp.eq.s32.totalorder %s117, 0
      %p542 = por %p540, %p541
      %s544 = sadd.s32 %s543, 1
      %p547 = scmp.eq.s32.totalorder %s111, 1
      %p548 = scmp.ne.s32.totalorder %s543, %s545
      %p549 = scmp.eq.s32.totalorder %s111, 0
      %p550 = por %p548, %p549
      %p551 = scmp.ne.s32.totalorder %s543, %s545
      %p552 = scmp.eq.s32.totalorder %s116, 1
      %p553 = por %p551, %p552
      %p554 = scmp.ne.s32.totalorder %s545, %s546
      %p555 = scmp.eq.s32.totalorder %s116, 0
      %p556 = por %p554, %p555
      %p557 = scmp.ne.s32.totalorder %s545, %s546
      %p558 = scmp.eq.s32.totalorder %s117, 1
      %p559 = por %p557, %p558
      %p561 = scmp.ne.s32.totalorder %s546, %s560
      %p562 = scmp.eq.s32.totalorder %s117, 0
      %p563 = por %p561, %p562
      %s565 = sadd.s32 %s564, 1
      %p568 = scmp.eq.s32.totalorder %s111, 1
      %p569 = scmp.ne.s32.totalorder %s564, %s566
      %p570 = scmp.eq.s32.totalorder %s111, 0
      %p571 = por %p569, %p570
      %p572 = scmp.ne.s32.totalorder %s564, %s566
      %p573 = scmp.eq.s32.totalorder %s116, 1
      %p574 = por %p572, %p573
      %p575 = scmp.ne.s32.totalorder %s566, %s567
      %p576 = scmp.eq.s32.totalorder %s116, 0
      %p577 = por %p575, %p576
      %p578 = scmp.ne.s32.totalorder %s566, %s567
      %p579 = scmp.eq.s32.totalorder %s117, 1
      %p580 = por %p578, %p579
      %p582 = scmp.ne.s32.totalorder %s567, %s581
      %p583 = scmp.eq.s32.totalorder %s117, 0
      %p584 = por %p582, %p583
      %s586 = sadd.s32 %s585, 1
      %p589 = scmp.eq.s32.totalorder %s111, 1
      %p590 = scmp.ne.s32.totalorder %s585, %s587
      %p591 = scmp.eq.s32.totalorder %s111, 0
      %p592 = por %p590, %p591
      %p593 = scmp.ne.s32.totalorder %s585, %s587
      %p594 = scmp.eq.s32.totalorder %s116, 1
      %p595 = por %p593, %p594
      %p596 = scmp.ne.s32.totalorder %s587, %s588
      %p597 = scmp.eq.s32.totalorder %s116, 0
      %p598 = por %p596, %p597
      %p599 = scmp.ne.s32.totalorder %s587, %s588
      %p600 = scmp.eq.s32.totalorder %s117, 1
      %p601 = por %p599, %p600
      %p603 = scmp.ne.s32.totalorder %s588, %s602
      %p604 = scmp.eq.s32.totalorder %s117, 0
      %p605 = por %p603, %p604
      %s607 = sadd.s32 %s606, 1
      %p610 = scmp.eq.s32.totalorder %s111, 1
      %p611 = scmp.ne.s32.totalorder %s606, %s608
      %p612 = scmp.eq.s32.totalorder %s111, 0
      %p613 = por %p611, %p612
      %p614 = scmp.ne.s32.totalorder %s606, %s608
      %p615 = scmp.eq.s32.totalorder %s116, 1
      %p616 = por %p614, %p615
      %p617 = scmp.ne.s32.totalorder %s608, %s609
      %p618 = scmp.eq.s32.totalorder %s116, 0
      %p619 = por %p617, %p618
      %p620 = scmp.ne.s32.totalorder %s608, %s609
      %p621 = scmp.eq.s32.totalorder %s117, 1
      %p622 = por %p620, %p621
      %p624 = scmp.ne.s32.totalorder %s609, %s623
      %p625 = scmp.eq.s32.totalorder %s117, 0
      %p626 = por %p624, %p625
      %s628 = sadd.s32 %s627, 1
      %p631 = scmp.eq.s32.totalorder %s111, 1
      %p632 = scmp.ne.s32.totalorder %s627, %s629
      %p633 = scmp.eq.s32.totalorder %s111, 0
      %p634 = por %p632, %p633
      %p635 = scmp.ne.s32.totalorder %s627, %s629
      %p636 = scmp.eq.s32.totalorder %s116, 1
      %p637 = por %p635, %p636
      %p638 = scmp.ne.s32.totalorder %s629, %s630
      %p639 = scmp.eq.s32.totalorder %s116, 0
      %p640 = por %p638, %p639
      %p641 = scmp.ne.s32.totalorder %s629, %s630
      %p642 = scmp.eq.s32.totalorder %s117, 1
      %p643 = por %p641, %p642
      %p645 = scmp.ne.s32.totalorder %s630, %s644
      %p646 = scmp.eq.s32.totalorder %s117, 0
      %p647 = por %p645, %p646
      %s649 = sadd.s32 %s648, 1
      %p652 = scmp.eq.s32.totalorder %s111, 1
      %p653 = scmp.ne.s32.totalorder %s648, %s650
      %p654 = scmp.eq.s32.totalorder %s111, 0
      %p655 = por %p653, %p654
      %p656 = scmp.ne.s32.totalorder %s648, %s650
      %p657 = scmp.eq.s32.totalorder %s116, 1
      %p658 = por %p656, %p657
      %p659 = scmp.ne.s32.totalorder %s650, %s651
      %p660 = scmp.eq.s32.totalorder %s116, 0
      %p661 = por %p659, %p660
      %p662 = scmp.ne.s32.totalorder %s650, %s651
      %p663 = scmp.eq.s32.totalorder %s117, 1
      %p664 = por %p662, %p663
      %p666 = scmp.ne.s32.totalorder %s651, %s665
      %p667 = scmp.eq.s32.totalorder %s117, 0
      %p668 = por %p666, %p667
      %s670 = sadd.s32 %s669, 1
      %p673 = scmp.eq.s32.totalorder %s111, 1
      %p674 = scmp.ne.s32.totalorder %s669, %s671
      %p675 = scmp.eq.s32.totalorder %s111, 0
      %p676 = por %p674, %p675
      %p677 = scmp.ne.s32.totalorder %s669, %s671
      %p678 = scmp.eq.s32.totalorder %s116, 1
      %p679 = por %p677, %p678
      %p680 = scmp.ne.s32.totalorder %s671, %s672
      %p681 = scmp.eq.s32.totalorder %s116, 0
      %p682 = por %p680, %p681
      %p683 = scmp.ne.s32.totalorder %s671, %s672
      %p684 = scmp.eq.s32.totalorder %s117, 1
      %p685 = por %p683, %p684
      %p687 = scmp.ne.s32.totalorder %s672, %s686
      %p688 = scmp.eq.s32.totalorder %s117, 0
      %p689 = por %p687, %p688
      %s691 = sadd.s32 %s690, 1
      %p694 = scmp.eq.s32.totalorder %s111, 1
      %p695 = scmp.ne.s32.totalorder %s690, %s692
      %p696 = scmp.eq.s32.totalorder %s111, 0
      %p697 = por %p695, %p696
      %p698 = scmp.ne.s32.totalorder %s690, %s692
      %p699 = scmp.eq.s32.totalorder %s116, 1
      %p700 = por %p698, %p699
      %p701 = scmp.ne.s32.totalorder %s692, %s693
      %p702 = scmp.eq.s32.totalorder %s116, 0
      %p703 = por %p701, %p702
      %p704 = scmp.ne.s32.totalorder %s692, %s693
      %p705 = scmp.eq.s32.totalorder %s117, 1
      %p706 = por %p704, %p705
      %p708 = scmp.ne.s32.totalorder %s693, %s707
      %p709 = scmp.eq.s32.totalorder %s117, 0
      %p710 = por %p708, %p709
      %s712 = sadd.s32 %s711, 1
      %p715 = scmp.eq.s32.totalorder %s111, 1
      %p716 = scmp.ne.s32.totalorder %s711, %s713
      %p717 = scmp.eq.s32.totalorder %s111, 0
      %p718 = por %p716, %p717
      %p719 = scmp.ne.s32.totalorder %s711, %s713
      %p720 = scmp.eq.s32.totalorder %s116, 1
      %p721 = por %p719, %p720
      %p722 = scmp.ne.s32.totalorder %s713, %s714
      %p723 = scmp.eq.s32.totalorder %s116, 0
      %p724 = por %p722, %p723
      %p725 = scmp.ne.s32.totalorder %s713, %s714
      %p726 = scmp.eq.s32.totalorder %s117, 1
      %p727 = por %p725, %p726
      %p729 = scmp.ne.s32.totalorder %s714, %s728
      %p730 = scmp.eq.s32.totalorder %s117, 0
      %p731 = por %p729, %p730
      %s733 = sadd.s32 %s732, 1
      %p736 = scmp.eq.s32.totalorder %s111, 1
      %p737 = scmp.ne.s32.totalorder %s732, %s734
      %p738 = scmp.eq.s32.totalorder %s111, 0
      %p739 = por %p737, %p738
      %p740 = scmp.ne.s32.totalorder %s732, %s734
      %p741 = scmp.eq.s32.totalorder %s116, 1
      %p742 = por %p740, %p741
      %p743 = scmp.ne.s32.totalorder %s734, %s735
      %p744 = scmp.eq.s32.totalorder %s116, 0
      %p745 = por %p743, %p744
      %p746 = scmp.ne.s32.totalorder %s734, %s735
      %p747 = scmp.eq.s32.totalorder %s117, 1
      %p748 = por %p746, %p747
      %p750 = scmp.ne.s32.totalorder %s735, %s749
      %p751 = scmp.eq.s32.totalorder %s117, 0
      %p752 = por %p750, %p751
      %s754 = sadd.s32 %s753, 1
      %p757 = scmp.eq.s32.totalorder %s111, 1
      %p758 = scmp.ne.s32.totalorder %s753, %s755
      %p759 = scmp.eq.s32.totalorder %s111, 0
      %p760 = por %p758, %p759
      %p761 = scmp.ne.s32.totalorder %s753, %s755
      %p762 = scmp.eq.s32.totalorder %s116, 1
      %p763 = por %p761, %p762
      %p764 = scmp.ne.s32.totalorder %s755, %s756
      %p765 = scmp.eq.s32.totalorder %s116, 0
      %p766 = por %p764, %p765
      %p767 = scmp.ne.s32.totalorder %s755, %s756
      %p768 = scmp.eq.s32.totalorder %s117, 1
      %p769 = por %p767, %p768
      %p771 = scmp.ne.s32.totalorder %s756, %s770
      %p772 = scmp.eq.s32.totalorder %s117, 0
      %p773 = por %p771, %p772
      %s775 = sadd.s32 %s774, 1
      %p778 = scmp.eq.s32.totalorder %s111, 1
      %p779 = scmp.ne.s32.totalorder %s774, %s776
      %p780 = scmp.eq.s32.totalorder %s111, 0
      %p781 = por %p779, %p780
      %p782 = scmp.ne.s32.totalorder %s774, %s776
      %p783 = scmp.eq.s32.totalorder %s116, 1
      %p784 = por %p782, %p783
      %p785 = scmp.ne.s32.totalorder %s776, %s777
      %p786 = scmp.eq.s32.totalorder %s116, 0
      %p787 = por %p785, %p786
      %p788 = scmp.ne.s32.totalorder %s776, %s777
      %p789 = scmp.eq.s32.totalorder %s117, 1
      %p790 = por %p788, %p789
      %p792 = scmp.ne.s32.totalorder %s777, %s791
      %p793 = scmp.eq.s32.totalorder %s117, 0
      %p794 = por %p792, %p793
      %s796 = sadd.s32 %s795, 1
      %p799 = scmp.eq.s32.totalorder %s111, 1
      %p800 = scmp.ne.s32.totalorder %s795, %s797
      %p801 = scmp.eq.s32.totalorder %s111, 0
      %p802 = por %p800, %p801
      %p803 = scmp.ne.s32.totalorder %s795, %s797
      %p804 = scmp.eq.s32.totalorder %s116, 1
      %p805 = por %p803, %p804
      %p806 = scmp.ne.s32.totalorder %s797, %s798
      %p807 = scmp.eq.s32.totalorder %s116, 0
      %p808 = por %p806, %p807
      %p809 = scmp.ne.s32.totalorder %s797, %s798
      %p810 = scmp.eq.s32.totalorder %s117, 1
      %p811 = por %p809, %p810
      %p813 = scmp.ne.s32.totalorder %s798, %s812
      %p814 = scmp.eq.s32.totalorder %s117, 0
      %p815 = por %p813, %p814
      %s817 = sadd.s32 %s816, 1
      %p820 = scmp.eq.s32.totalorder %s111, 1
      %p821 = scmp.ne.s32.totalorder %s816, %s818
      %p822 = scmp.eq.s32.totalorder %s111, 0
      %p823 = por %p821, %p822
      %p824 = scmp.ne.s32.totalorder %s816, %s818
      %p825 = scmp.eq.s32.totalorder %s116, 1
      %p826 = por %p824, %p825
      %p827 = scmp.ne.s32.totalorder %s818, %s819
      %p828 = scmp.eq.s32.totalorder %s116, 0
      %p829 = por %p827, %p828
      %p830 = scmp.ne.s32.totalorder %s818, %s819
      %p831 = scmp.eq.s32.totalorder %s117, 1
      %p832 = por %p830, %p831
      %p834 = scmp.ne.s32.totalorder %s819, %s833
      %p835 = scmp.eq.s32.totalorder %s117, 0
      %p836 = por %p834, %p835
      %s838 = sadd.s32 %s837, 1
      %p841 = scmp.eq.s32.totalorder %s111, 1
      %p842 = scmp.ne.s32.totalorder %s837, %s839
      %p843 = scmp.eq.s32.totalorder %s111, 0
      %p844 = por %p842, %p843
      %p845 = scmp.ne.s32.totalorder %s837, %s839
      %p846 = scmp.eq.s32.totalorder %s116, 1
      %p847 = por %p845, %p846
      %p848 = scmp.ne.s32.totalorder %s839, %s840
      %p849 = scmp.eq.s32.totalorder %s116, 0
      %p850 = por %p848, %p849
      %p851 = scmp.ne.s32.totalorder %s839, %s840
      %p852 = scmp.eq.s32.totalorder %s117, 1
      %p853 = por %p851, %p852
      %p855 = scmp.ne.s32.totalorder %s840, %s854
      %p856 = scmp.eq.s32.totalorder %s117, 0
      %p857 = por %p855, %p856
      %s859 = sadd.s32 %s858, 1
      %p862 = scmp.eq.s32.totalorder %s111, 1
      %p863 = scmp.ne.s32.totalorder %s858, %s860
      %p864 = scmp.eq.s32.totalorder %s111, 0
      %p865 = por %p863, %p864
      %p866 = scmp.ne.s32.totalorder %s858, %s860
      %p867 = scmp.eq.s32.totalorder %s116, 1
      %p868 = por %p866, %p867
      %p869 = scmp.ne.s32.totalorder %s860, %s861
      %p870 = scmp.eq.s32.totalorder %s116, 0
      %p871 = por %p869, %p870
      %p872 = scmp.ne.s32.totalorder %s860, %s861
      %p873 = scmp.eq.s32.totalorder %s117, 1
      %p874 = por %p872, %p873
      %p876 = scmp.ne.s32.totalorder %s861, %s875
      %p877 = scmp.eq.s32.totalorder %s117, 0
      %p878 = por %p876, %p877
      %s880 = sadd.s32 %s879, 1
      %p883 = scmp.eq.s32.totalorder %s111, 1
      %p884 = scmp.ne.s32.totalorder %s879, %s881
      %p885 = scmp.eq.s32.totalorder %s111, 0
      %p886 = por %p884, %p885
      %p887 = scmp.ne.s32.totalorder %s879, %s881
      %p888 = scmp.eq.s32.totalorder %s116, 1
      %p889 = por %p887, %p888
      %p890 = scmp.ne.s32.totalorder %s881, %s882
      %p891 = scmp.eq.s32.totalorder %s116, 0
      %p892 = por %p890, %p891
      %p893 = scmp.ne.s32.totalorder %s881, %s882
      %p894 = scmp.eq.s32.totalorder %s117, 1
      %p895 = por %p893, %p894
      %p897 = scmp.ne.s32.totalorder %s882, %s896
      %p898 = scmp.eq.s32.totalorder %s117, 0
      %p899 = por %p897, %p898
      %s901 = sadd.s32 %s900, 1
      %p904 = scmp.eq.s32.totalorder %s111, 1
      %p905 = scmp.ne.s32.totalorder %s900, %s902
      %p906 = scmp.eq.s32.totalorder %s111, 0
      %p907 = por %p905, %p906
      %p908 = scmp.ne.s32.totalorder %s900, %s902
      %p909 = scmp.eq.s32.totalorder %s116, 1
      %p910 = por %p908, %p909
      %p911 = scmp.ne.s32.totalorder %s902, %s903
      %p912 = scmp.eq.s32.totalorder %s116, 0
      %p913 = por %p911, %p912
      %p914 = scmp.ne.s32.totalorder %s902, %s903
      %p915 = scmp.eq.s32.totalorder %s117, 1
      %p916 = por %p914, %p915
      %p918 = scmp.ne.s32.totalorder %s903, %s917
      %p919 = scmp.eq.s32.totalorder %s117, 0
      %p920 = por %p918, %p919
      %s922 = sadd.s32 %s921, 1
      %p925 = scmp.eq.s32.totalorder %s111, 1
      %p926 = scmp.ne.s32.totalorder %s921, %s923
      %p927 = scmp.eq.s32.totalorder %s111, 0
      %p928 = por %p926, %p927
      %p929 = scmp.ne.s32.totalorder %s921, %s923
      %p930 = scmp.eq.s32.totalorder %s116, 1
      %p931 = por %p929, %p930
      %p932 = scmp.ne.s32.totalorder %s923, %s924
      %p933 = scmp.eq.s32.totalorder %s116, 0
      %p934 = por %p932, %p933
      %p935 = scmp.ne.s32.totalorder %s923, %s924
      %p936 = scmp.eq.s32.totalorder %s117, 1
      %p937 = por %p935, %p936
      %p939 = scmp.ne.s32.totalorder %s924, %s938
      %p940 = scmp.eq.s32.totalorder %s117, 0
      %p941 = por %p939, %p940
      %s943 = sadd.s32 %s942, 1
      %p946 = scmp.eq.s32.totalorder %s111, 1
      %p947 = scmp.ne.s32.totalorder %s942, %s944
      %p948 = scmp.eq.s32.totalorder %s111, 0
      %p949 = por %p947, %p948
      %p950 = scmp.ne.s32.totalorder %s942, %s944
      %p951 = scmp.eq.s32.totalorder %s116, 1
      %p952 = por %p950, %p951
      %p953 = scmp.ne.s32.totalorder %s944, %s945
      %p954 = scmp.eq.s32.totalorder %s116, 0
      %p955 = por %p953, %p954
      %p956 = scmp.ne.s32.totalorder %s944, %s945
      %p957 = scmp.eq.s32.totalorder %s117, 1
      %p958 = por %p956, %p957
      %p960 = scmp.ne.s32.totalorder %s945, %s959
      %p961 = scmp.eq.s32.totalorder %s117, 0
      %p962 = por %p960, %p961
      %s964 = sadd.s32 %s963, 1
      %p967 = scmp.eq.s32.totalorder %s111, 1
      %p968 = scmp.ne.s32.totalorder %s963, %s965
      %p969 = scmp.eq.s32.totalorder %s111, 0
      %p970 = por %p968, %p969
      %p971 = scmp.ne.s32.totalorder %s963, %s965
      %p972 = scmp.eq.s32.totalorder %s116, 1
      %p973 = por %p971, %p972
      %p974 = scmp.ne.s32.totalorder %s965, %s966
      %p975 = scmp.eq.s32.totalorder %s116, 0
      %p976 = por %p974, %p975
      %p977 = scmp.ne.s32.totalorder %s965, %s966
      %p978 = scmp.eq.s32.totalorder %s117, 1
      %p979 = por %p977, %p978
      %p981 = scmp.ne.s32.totalorder %s966, %s980
      %p982 = scmp.eq.s32.totalorder %s117, 0
      %p983 = por %p981, %p982
      %s985 = sadd.s32 %s984, 1
      %p988 = scmp.eq.s32.totalorder %s111, 1
      %p989 = scmp.ne.s32.totalorder %s984, %s986
      %p990 = scmp.eq.s32.totalorder %s111, 0
      %p991 = por %p989, %p990
      %p992 = scmp.ne.s32.totalorder %s984, %s986
      %p993 = scmp.eq.s32.totalorder %s116, 1
      %p994 = por %p992, %p993
      %p995 = scmp.ne.s32.totalorder %s986, %s987
      %p996 = scmp.eq.s32.totalorder %s116, 0
      %p997 = por %p995, %p996
      %p998 = scmp.ne.s32.totalorder %s986, %s987
      %p999 = scmp.eq.s32.totalorder %s117, 1
      %p1000 = por %p998, %p999
      %p1002 = scmp.ne.s32.totalorder %s987, %s1001
      %p1003 = scmp.eq.s32.totalorder %s117, 0
      %p1004 = por %p1002, %p1003
      %s1006 = sadd.s32 %s1005, 1
      %p1009 = scmp.eq.s32.totalorder %s111, 1
      %p1010 = scmp.ne.s32.totalorder %s1005, %s1007
      %p1011 = scmp.eq.s32.totalorder %s111, 0
      %p1012 = por %p1010, %p1011
      %p1013 = scmp.ne.s32.totalorder %s1005, %s1007
      %p1014 = scmp.eq.s32.totalorder %s116, 1
      %p1015 = por %p1013, %p1014
      %p1016 = scmp.ne.s32.totalorder %s1007, %s1008
      %p1017 = scmp.eq.s32.totalorder %s116, 0
      %p1018 = por %p1016, %p1017
      %p1019 = scmp.ne.s32.totalorder %s1007, %s1008
      %p1020 = scmp.eq.s32.totalorder %s117, 1
      %p1021 = por %p1019, %p1020
      %p1023 = scmp.ne.s32.totalorder %s1008, %s1022
      %p1024 = scmp.eq.s32.totalorder %s117, 0
      %p1025 = por %p1023, %p1024
      %s1026 = ssub.s32 %s111, %s118
      %p1027 = scmp.eq.s32.totalorder %s1026, 0
      %s1029 = sadd.s32 %s1028, 1
      %s1030 = scalar_select %p1027, %s1028, %s1029
      %p1033 = pneg %p1027
      %p1034 = scmp.eq.s32.totalorder %s111, 1
      %p1035 = por %p1033, %p1034
      %p1036 = scmp.ne.s32.totalorder %s1028, %s1031
      %p1037 = scmp.eq.s32.totalorder %s111, 0
      %p1038 = por %p1036, %p1037
      %p1039 = scmp.ne.s32.totalorder %s1028, %s1031
      %p1040 = scmp.eq.s32.totalorder %s116, 1
      %p1041 = por %p1039, %p1040
      %p1042 = scmp.ne.s32.totalorder %s1031, %s1032
      %p1043 = scmp.eq.s32.totalorder %s116, 0
      %p1044 = por %p1042, %p1043
      %p1045 = scmp.ne.s32.totalorder %s1031, %s1032
      %p1046 = scmp.eq.s32.totalorder %s117, 1
      %p1047 = por %p1045, %p1046
      %p1049 = scmp.ne.s32.totalorder %s1032, %s1048
      %p1050 = scmp.eq.s32.totalorder %s117, 0
      %p1051 = por %p1049, %p1050
      %p1052 = scmp.le.s32.totalorder 1, %s111
      %p1053 = scmp.lt.s32.totalorder %s111, 3
      %p1054 = pnand %p1052, %p1053
      %p1055 = pneg %p1054
      // Predicated region
      $region9: #{tpu_custom_call.1} parent=5 // pred_check
        _
      $region10: #{tpu_custom_call.1} parent=5 // pred_check_branch
        %1057 = sbr.rel (%p1054) target = $region12
      $region11: #{tpu_custom_call.1} parent=5 // pred_region
        %s1058 = ssub.s32 %s111, 1
        // Predicated region
        $region13: #{tpu_custom_call.1} parent=11 // pred_check
          %p1059 = pneg %p262
        $region14: #{tpu_custom_call.1} parent=11 // pred_check_branch
          %1061 = sbr.rel (%p1059) target = $region16
        $region15: #{tpu_custom_call.1} parent=11 // pred_region
          _
        $region16: #{tpu_custom_call.1} parent=11 // pred_fallthru
          _
        // Predicated region
        $region17: #{tpu_custom_call.1} parent=11 // pred_check
          %p1062 = pneg %p283
        $region18: #{tpu_custom_call.1} parent=11 // pred_check_branch
          %1064 = sbr.rel (%p1062) target = $region20
        $region19: #{tpu_custom_call.1} parent=11 // pred_region
          %s1066 = ssub.s32 16, 16
          %1067 = vsyncadd [#allocation6], %s1066
          %s1069 = sshll.u32 [#allocation5], 4
          %s1070 = int_to_ptr.vmem [resolvable:$true] %s1069
          %1072 = dma.hbm_to_vmem [thread:$0]  %s13, 16, %s1070, [#allocation6]
        $region20: #{tpu_custom_call.1} parent=11 // pred_fallthru
          _
        // Predicated region
        $region21: #{tpu_custom_call.1} parent=11 // pred_check
          %p1073 = pneg %p304
        $region22: #{tpu_custom_call.1} parent=11 // pred_check_branch
          %1075 = sbr.rel (%p1073) target = $region24
        $region23: #{tpu_custom_call.1} parent=11 // pred_region
          %s1077 = ssub.s32 128, 128
          %1078 = vsyncadd [#allocation6], %s1077
          %s1079 = sshll.u32 [#allocation7], 4
          %s1080 = int_to_ptr.vmem [resolvable:$true] %s1079
          %1085 = dma.hbm_to_vmem [thread:$0]  %s15, 128, %s1080, [#allocation6], 64, 64, 4
        $region24: #{tpu_custom_call.1} parent=11 // pred_fallthru
          _
        // Predicated region
        $region25: #{tpu_custom_call.1} parent=11 // pred_check
          %p1086 = pneg %p325
        $region26: #{tpu_custom_call.1} parent=11 // pred_check_branch
          %1088 = sbr.rel (%p1086) target = $region28
        $region27: #{tpu_custom_call.1} parent=11 // pred_region
          %s1090 = ssub.s32 16, 16
          %1091 = vsyncadd [#allocation9], %s1090
          %s1093 = sshll.u32 [#allocation8], 4
          %s1094 = int_to_ptr.vmem [resolvable:$true] %s1093
          %1096 = dma.hbm_to_vmem [thread:$0]  %s17, 16, %s1094, [#allocation9]
        $region28: #{tpu_custom_call.1} parent=11 // pred_fallthru
          _
        // Predicated region
        $region29: #{tpu_custom_call.1} parent=11 // pred_check
          %p1097 = pneg %p346
        $region30: #{tpu_custom_call.1} parent=11 // pred_check_branch
          %1099 = sbr.rel (%p1097) target = $region32
        $region31: #{tpu_custom_call.1} parent=11 // pred_region
          _
        $region32: #{tpu_custom_call.1} parent=11 // pred_fallthru
          _
        // Predicated region
        $region33: #{tpu_custom_call.1} parent=11 // pred_check
          %p1100 = pneg %p367
        $region34: #{tpu_custom_call.1} parent=11 // pred_check_branch
          %1102 = sbr.rel (%p1100) target = $region36
        $region35: #{tpu_custom_call.1} parent=11 // pred_region
          _
        $region36: #{tpu_custom_call.1} parent=11 // pred_fallthru
          _
        // Predicated region
        $region37: #{tpu_custom_call.1} parent=11 // pred_check
          %p1103 = pneg %p388
        $region38: #{tpu_custom_call.1} parent=11 // pred_check_branch
          %1105 = sbr.rel (%p1103) target = $region40
        $region39: #{tpu_custom_call.1} parent=11 // pred_region
          %s1107 = ssub.s32 32, 32
          %1108 = vsyncadd [#allocation9], %s1107
          %s1109 = sshll.u32 [#allocation10], 4
          %s1110 = int_to_ptr.vmem [resolvable:$true] %s1109
          %1115 = dma.hbm_to_vmem [thread:$0]  %s23, 32, %s1110, [#allocation9], 16, 16, 1
        $region40: #{tpu_custom_call.1} parent=11 // pred_fallthru
          _
        // Predicated region
        $region41: #{tpu_custom_call.1} parent=11 // pred_check
          %p1116 = pneg %p409
        $region42: #{tpu_custom_call.1} parent=11 // pred_check_branch
          %1118 = sbr.rel (%p1116) target = $region44
        $region43: #{tpu_custom_call.1} parent=11 // pred_region
          %s1120 = ssub.s32 2048, 2048
          %1121 = vsyncadd [#allocation12], %s1120
          %s1122 = sshll.u32 [#allocation11], 4
          %s1123 = int_to_ptr.vmem [resolvable:$true] %s1122
          %1128 = dma.hbm_to_vmem [thread:$0]  %s25, 2048, %s1123, [#allocation12], 64, 64, 4
        $region44: #{tpu_custom_call.1} parent=11 // pred_fallthru
          _
        // Predicated region
        $region45: #{tpu_custom_call.1} parent=11 // pred_check
          %p1129 = pneg %p430
        $region46: #{tpu_custom_call.1} parent=11 // pred_check_branch
          %1131 = sbr.rel (%p1129) target = $region48
        $region47: #{tpu_custom_call.1} parent=11 // pred_region
          %s1133 = ssub.s32 32, 32
          %1134 = vsyncadd [#allocation12], %s1133
          %s1135 = sshll.u32 [#allocation13], 4
          %s1136 = int_to_ptr.vmem [resolvable:$true] %s1135
          %1141 = dma.hbm_to_vmem [thread:$0]  %s27, 32, %s1136, [#allocation12], 16, 16, 1
        $region48: #{tpu_custom_call.1} parent=11 // pred_fallthru
          _
        // Predicated region
        $region49: #{tpu_custom_call.1} parent=11 // pred_check
          %p1142 = pneg %p451
        $region50: #{tpu_custom_call.1} parent=11 // pred_check_branch
          %1144 = sbr.rel (%p1142) target = $region52
        $region51: #{tpu_custom_call.1} parent=11 // pred_region
          %s1146 = ssub.s32 2048, 2048
          %1147 = vsyncadd [#allocation15], %s1146
          %s1148 = sshll.u32 [#allocation14], 4
          %s1149 = int_to_ptr.vmem [resolvable:$true] %s1148
          %1154 = dma.hbm_to_vmem [thread:$0]  %s29, 2048, %s1149, [#allocation15], 64, 64, 4
        $region52: #{tpu_custom_call.1} parent=11 // pred_fallthru
          _
        // Predicated region
        $region53: #{tpu_custom_call.1} parent=11 // pred_check
          %p1155 = pneg %p472
        $region54: #{tpu_custom_call.1} parent=11 // pred_check_branch
          %1157 = sbr.rel (%p1155) target = $region56
        $region55: #{tpu_custom_call.1} parent=11 // pred_region
          %s1159 = ssub.s32 32, 32
          %1160 = vsyncadd [#allocation15], %s1159
          %s1161 = sshll.u32 [#allocation16], 4
          %s1162 = int_to_ptr.vmem [resolvable:$true] %s1161
          %1167 = dma.hbm_to_vmem [thread:$0]  %s31, 32, %s1162, [#allocation15], 16, 16, 1
        $region56: #{tpu_custom_call.1} parent=11 // pred_fallthru
          _
        // Predicated region
        $region57: #{tpu_custom_call.1} parent=11 // pred_check
          %p1168 = pneg %p493
        $region58: #{tpu_custom_call.1} parent=11 // pred_check_branch
          %1170 = sbr.rel (%p1168) target = $region60
        $region59: #{tpu_custom_call.1} parent=11 // pred_region
          %s1172 = ssub.s32 32, 32
          %1173 = vsyncadd [#allocation18], %s1172
          %s1174 = sshll.u32 [#allocation17], 4
          %s1175 = int_to_ptr.vmem [resolvable:$true] %s1174
          %1180 = dma.hbm_to_vmem [thread:$0]  %s33, 32, %s1175, [#allocation18], 16, 16, 1
        $region60: #{tpu_custom_call.1} parent=11 // pred_fallthru
          _
        // Predicated region
        $region61: #{tpu_custom_call.1} parent=11 // pred_check
          %p1181 = pneg %p514
        $region62: #{tpu_custom_call.1} parent=11 // pred_check_branch
          %1183 = sbr.rel (%p1181) target = $region64
        $region63: #{tpu_custom_call.1} parent=11 // pred_region
          %s1185 = ssub.s32 32, 32
          %1186 = vsyncadd [#allocation18], %s1185
          %s1187 = sshll.u32 [#allocation19], 4
          %s1188 = int_to_ptr.vmem [resolvable:$true] %s1187
          %1193 = dma.hbm_to_vmem [thread:$0]  %s35, 32, %s1188, [#allocation18], 16, 16, 1
        $region64: #{tpu_custom_call.1} parent=11 // pred_fallthru
          _
        // Predicated region
        $region65: #{tpu_custom_call.1} parent=11 // pred_check
          %p1194 = pneg %p535
        $region66: #{tpu_custom_call.1} parent=11 // pred_check_branch
          %1196 = sbr.rel (%p1194) target = $region68
        $region67: #{tpu_custom_call.1} parent=11 // pred_region
          _
        $region68: #{tpu_custom_call.1} parent=11 // pred_fallthru
          _
        // Predicated region
        $region69: #{tpu_custom_call.1} parent=11 // pred_check
          %p1197 = pneg %p556
        $region70: #{tpu_custom_call.1} parent=11 // pred_check_branch
          %1199 = sbr.rel (%p1197) target = $region72
        $region71: #{tpu_custom_call.1} parent=11 // pred_region
          %s1201 = ssub.s32 128, 128
          %1202 = vsyncadd [#allocation21], %s1201
          %s1203 = sshll.u32 [#allocation20], 4
          %s1204 = int_to_ptr.vmem [resolvable:$true] %s1203
          %1209 = dma.hbm_to_vmem [thread:$0]  %s39, 128, %s1204, [#allocation21], 64, 64, 4
        $region72: #{tpu_custom_call.1} parent=11 // pred_fallthru
          _
        // Predicated region
        $region73: #{tpu_custom_call.1} parent=11 // pred_check
          %p1210 = pneg %p577
        $region74: #{tpu_custom_call.1} parent=11 // pred_check_branch
          %1212 = sbr.rel (%p1210) target = $region76
        $region75: #{tpu_custom_call.1} parent=11 // pred_region
          %s1214 = ssub.s32 8192, 8192
          %1215 = vsyncadd [#allocation21], %s1214
          %s1216 = sshll.u32 [#allocation22], 4
          %s1217 = int_to_ptr.vmem [resolvable:$true] %s1216
          %1222 = dma.hbm_to_vmem [thread:$0]  %s41, 8192, %s1217, [#allocation21], 64, 64, 4
        $region76: #{tpu_custom_call.1} parent=11 // pred_fallthru
          _
        // Predicated region
        $region77: #{tpu_custom_call.1} parent=11 // pred_check
          %p1223 = pneg %p598
        $region78: #{tpu_custom_call.1} parent=11 // pred_check_branch
          %1225 = sbr.rel (%p1223) target = $region80
        $region79: #{tpu_custom_call.1} parent=11 // pred_region
          %s1227 = ssub.s32 32, 32
          %1228 = vsyncadd [#allocation24], %s1227
          %s1229 = sshll.u32 [#allocation23], 4
          %s1230 = int_to_ptr.vmem [resolvable:$true] %s1229
          %1235 = dma.hbm_to_vmem [thread:$0]  %s43, 32, %s1230, [#allocation24], 16, 16, 1
        $region80: #{tpu_custom_call.1} parent=11 // pred_fallthru
          _
        // Predicated region
        $region81: #{tpu_custom_call.1} parent=11 // pred_check
          %p1236 = pneg %p619
        $region82: #{tpu_custom_call.1} parent=11 // pred_check_branch
          %1238 = sbr.rel (%p1236) target = $region84
        $region83: #{tpu_custom_call.1} parent=11 // pred_region
          %s1240 = ssub.s32 32, 32
          %1241 = vsyncadd [#allocation24], %s1240
          %s1242 = sshll.u32 [#allocation25], 4
          %s1243 = int_to_ptr.vmem [resolvable:$true] %s1242
          %1248 = dma.hbm_to_vmem [thread:$0]  %s45, 32, %s1243, [#allocation24], 16, 16, 1
        $region84: #{tpu_custom_call.1} parent=11 // pred_fallthru
          _
        // Predicated region
        $region85: #{tpu_custom_call.1} parent=11 // pred_check
          %p1249 = pneg %p640
        $region86: #{tpu_custom_call.1} parent=11 // pred_check_branch
          %1251 = sbr.rel (%p1249) target = $region88
        $region87: #{tpu_custom_call.1} parent=11 // pred_region
          %s1253 = ssub.s32 32, 32
          %1254 = vsyncadd [#allocation27], %s1253
          %s1255 = sshll.u32 [#allocation26], 4
          %s1256 = int_to_ptr.vmem [resolvable:$true] %s1255
          %1261 = dma.hbm_to_vmem [thread:$0]  %s47, 32, %s1256, [#allocation27], 16, 16, 1
        $region88: #{tpu_custom_call.1} parent=11 // pred_fallthru
          _
        // Predicated region
        $region89: #{tpu_custom_call.1} parent=11 // pred_check
          %p1262 = pneg %p661
        $region90: #{tpu_custom_call.1} parent=11 // pred_check_branch
          %1264 = sbr.rel (%p1262) target = $region92
        $region91: #{tpu_custom_call.1} parent=11 // pred_region
          %s1266 = ssub.s32 4096, 4096
          %1267 = vsyncadd [#allocation27], %s1266
          %s1268 = sshll.u32 [#allocation28], 4
          %s1269 = int_to_ptr.vmem [resolvable:$true] %s1268
          %1274 = dma.hbm_to_vmem [thread:$0]  %s49, 4096, %s1269, [#allocation27], 128, 128, 8
        $region92: #{tpu_custom_call.1} parent=11 // pred_fallthru
          _
        // Predicated region
        $region93: #{tpu_custom_call.1} parent=11 // pred_check
          %p1275 = pneg %p682
        $region94: #{tpu_custom_call.1} parent=11 // pred_check_branch
          %1277 = sbr.rel (%p1275) target = $region96
        $region95: #{tpu_custom_call.1} parent=11 // pred_region
          %s1279 = ssub.s32 2048, 2048
          %1280 = vsyncadd [#allocation30], %s1279
          %s1281 = sshll.u32 [#allocation29], 4
          %s1282 = int_to_ptr.vmem [resolvable:$true] %s1281
          %1287 = dma.hbm_to_vmem [thread:$0]  %s51, 2048, %s1282, [#allocation30], 64, 64, 4
        $region96: #{tpu_custom_call.1} parent=11 // pred_fallthru
          _
        // Predicated region
        $region97: #{tpu_custom_call.1} parent=11 // pred_check
          %p1288 = pneg %p703
        $region98: #{tpu_custom_call.1} parent=11 // pred_check_branch
          %1290 = sbr.rel (%p1288) target = $region100
        $region99: #{tpu_custom_call.1} parent=11 // pred_region
          %s1292 = ssub.s32 2048, 2048
          %1293 = vsyncadd [#allocation30], %s1292
          %s1294 = sshll.u32 [#allocation31], 4
          %s1295 = int_to_ptr.vmem [resolvable:$true] %s1294
          %1300 = dma.hbm_to_vmem [thread:$0]  %s53, 2048, %s1295, [#allocation30], 128, 128, 8
        $region100: #{tpu_custom_call.1} parent=11 // pred_fallthru
          _
        // Predicated region
        $region101: #{tpu_custom_call.1} parent=11 // pred_check
          %p1301 = pneg %p724
        $region102: #{tpu_custom_call.1} parent=11 // pred_check_branch
          %1303 = sbr.rel (%p1301) target = $region104
        $region103: #{tpu_custom_call.1} parent=11 // pred_region
          %s1305 = ssub.s32 32, 32
          %1306 = vsyncadd [#allocation33], %s1305
          %s1307 = sshll.u32 [#allocation32], 4
          %s1308 = int_to_ptr.vmem [resolvable:$true] %s1307
          %1313 = dma.hbm_to_vmem [thread:$0]  %s55, 32, %s1308, [#allocation33], 16, 16, 1
        $region104: #{tpu_custom_call.1} parent=11 // pred_fallthru
          _
        // Predicated region
        $region105: #{tpu_custom_call.1} parent=11 // pred_check
          %p1314 = pneg %p745
        $region106: #{tpu_custom_call.1} parent=11 // pred_check_branch
          %1316 = sbr.rel (%p1314) target = $region108
        $region107: #{tpu_custom_call.1} parent=11 // pred_region
          %s1318 = ssub.s32 2048, 2048
          %1319 = vsyncadd [#allocation33], %s1318
          %s1320 = sshll.u32 [#allocation34], 4
          %s1321 = int_to_ptr.vmem [resolvable:$true] %s1320
          %1326 = dma.hbm_to_vmem [thread:$0]  %s57, 2048, %s1321, [#allocation33], 64, 64, 4
        $region108: #{tpu_custom_call.1} parent=11 // pred_fallthru
          _
        // Predicated region
        $region109: #{tpu_custom_call.1} parent=11 // pred_check
          %p1327 = pneg %p766
        $region110: #{tpu_custom_call.1} parent=11 // pred_check_branch
          %1329 = sbr.rel (%p1327) target = $region112
        $region111: #{tpu_custom_call.1} parent=11 // pred_region
          %s1331 = ssub.s32 32, 32
          %1332 = vsyncadd [#allocation36], %s1331
          %s1333 = sshll.u32 [#allocation35], 4
          %s1334 = int_to_ptr.vmem [resolvable:$true] %s1333
          %1339 = dma.hbm_to_vmem [thread:$0]  %s59, 32, %s1334, [#allocation36], 16, 16, 1
        $region112: #{tpu_custom_call.1} parent=11 // pred_fallthru
          _
        // Predicated region
        $region113: #{tpu_custom_call.1} parent=11 // pred_check
          %p1340 = pneg %p787
        $region114: #{tpu_custom_call.1} parent=11 // pred_check_branch
          %1342 = sbr.rel (%p1340) target = $region116
        $region115: #{tpu_custom_call.1} parent=11 // pred_region
          %s1344 = ssub.s32 2048, 2048
          %1345 = vsyncadd [#allocation36], %s1344
          %s1346 = sshll.u32 [#allocation37], 4
          %s1347 = int_to_ptr.vmem [resolvable:$true] %s1346
          %1352 = dma.hbm_to_vmem [thread:$0]  %s61, 2048, %s1347, [#allocation36], 64, 64, 4
        $region116: #{tpu_custom_call.1} parent=11 // pred_fallthru
          _
        // Predicated region
        $region117: #{tpu_custom_call.1} parent=11 // pred_check
          %p1353 = pneg %p808
        $region118: #{tpu_custom_call.1} parent=11 // pred_check_branch
          %1355 = sbr.rel (%p1353) target = $region120
        $region119: #{tpu_custom_call.1} parent=11 // pred_region
          %s1357 = ssub.s32 32, 32
          %1358 = vsyncadd [#allocation39], %s1357
          %s1359 = sshll.u32 [#allocation38], 4
          %s1360 = int_to_ptr.vmem [resolvable:$true] %s1359
          %1365 = dma.hbm_to_vmem [thread:$0]  %s63, 32, %s1360, [#allocation39], 16, 16, 1
        $region120: #{tpu_custom_call.1} parent=11 // pred_fallthru
          _
        // Predicated region
        $region121: #{tpu_custom_call.1} parent=11 // pred_check
          %p1366 = pneg %p829
        $region122: #{tpu_custom_call.1} parent=11 // pred_check_branch
          %1368 = sbr.rel (%p1366) target = $region124
        $region123: #{tpu_custom_call.1} parent=11 // pred_region
          %s1370 = ssub.s32 32, 32
          %1371 = vsyncadd [#allocation39], %s1370
          %s1372 = sshll.u32 [#allocation40], 4
          %s1373 = int_to_ptr.vmem [resolvable:$true] %s1372
          %1378 = dma.hbm_to_vmem [thread:$0]  %s65, 32, %s1373, [#allocation39], 16, 16, 1
        $region124: #{tpu_custom_call.1} parent=11 // pred_fallthru
          _
        // Predicated region
        $region125: #{tpu_custom_call.1} parent=11 // pred_check
          %p1379 = pneg %p850
        $region126: #{tpu_custom_call.1} parent=11 // pred_check_branch
          %1381 = sbr.rel (%p1379) target = $region128
        $region127: #{tpu_custom_call.1} parent=11 // pred_region
          %s1383 = ssub.s32 32, 32
          %1384 = vsyncadd [#allocation42], %s1383
          %s1385 = sshll.u32 [#allocation41], 4
          %s1386 = int_to_ptr.vmem [resolvable:$true] %s1385
          %1391 = dma.hbm_to_vmem [thread:$0]  %s67, 32, %s1386, [#allocation42], 16, 16, 1
        $region128: #{tpu_custom_call.1} parent=11 // pred_fallthru
          _
        // Predicated region
        $region129: #{tpu_custom_call.1} parent=11 // pred_check
          %p1392 = pneg %p871
        $region130: #{tpu_custom_call.1} parent=11 // pred_check_branch
          %1394 = sbr.rel (%p1392) target = $region132
        $region131: #{tpu_custom_call.1} parent=11 // pred_region
          %s1396 = ssub.s32 8192, 8192
          %1397 = vsyncadd [#allocation42], %s1396
          %s1398 = sshll.u32 [#allocation43], 4
          %s1399 = int_to_ptr.vmem [resolvable:$true] %s1398
          %1404 = dma.hbm_to_vmem [thread:$0]  %s69, 8192, %s1399, [#allocation42], 256, 256, 16
        $region132: #{tpu_custom_call.1} parent=11 // pred_fallthru
          _
        // Predicated region
        $region133: #{tpu_custom_call.1} parent=11 // pred_check
          %p1405 = pneg %p892
        $region134: #{tpu_custom_call.1} parent=11 // pred_check_branch
          %1407 = sbr.rel (%p1405) target = $region136
        $region135: #{tpu_custom_call.1} parent=11 // pred_region
          %s1409 = ssub.s32 128, 128
          %1410 = vsyncadd [#allocation45], %s1409
          %s1411 = sshll.u32 [#allocation44], 4
          %s1412 = int_to_ptr.vmem [resolvable:$true] %s1411
          %1417 = dma.hbm_to_vmem [thread:$0]  %s71, 128, %s1412, [#allocation45], 64, 64, 4
        $region136: #{tpu_custom_call.1} parent=11 // pred_fallthru
          _
        // Predicated region
        $region137: #{tpu_custom_call.1} parent=11 // pred_check
          %p1418 = pneg %p913
        $region138: #{tpu_custom_call.1} parent=11 // pred_check_branch
          %1420 = sbr.rel (%p1418) target = $region140
        $region139: #{tpu_custom_call.1} parent=11 // pred_region
          %s1422 = ssub.s32 8192, 8192
          %1423 = vsyncadd [#allocation45], %s1422
          %s1424 = sshll.u32 [#allocation46], 4
          %s1425 = int_to_ptr.vmem [resolvable:$true] %s1424
          %1430 = dma.hbm_to_vmem [thread:$0]  %s73, 8192, %s1425, [#allocation45], 64, 64, 4
        $region140: #{tpu_custom_call.1} parent=11 // pred_fallthru
          _
        // Predicated region
        $region141: #{tpu_custom_call.1} parent=11 // pred_check
          %p1431 = pneg %p934
        $region142: #{tpu_custom_call.1} parent=11 // pred_check_branch
          %1433 = sbr.rel (%p1431) target = $region144
        $region143: #{tpu_custom_call.1} parent=11 // pred_region
          _
        $region144: #{tpu_custom_call.1} parent=11 // pred_fallthru
          _
        // Predicated region
        $region145: #{tpu_custom_call.1} parent=11 // pred_check
          %p1434 = pneg %p955
        $region146: #{tpu_custom_call.1} parent=11 // pred_check_branch
          %1436 = sbr.rel (%p1434) target = $region148
        $region147: #{tpu_custom_call.1} parent=11 // pred_region
          _
        $region148: #{tpu_custom_call.1} parent=11 // pred_fallthru
          _
        // Predicated region
        $region149: #{tpu_custom_call.1} parent=11 // pred_check
          %p1437 = pneg %p976
        $region150: #{tpu_custom_call.1} parent=11 // pred_check_branch
          %1439 = sbr.rel (%p1437) target = $region152
        $region151: #{tpu_custom_call.1} parent=11 // pred_region
          _
        $region152: #{tpu_custom_call.1} parent=11 // pred_fallthru
          _
        // Predicated region
        $region153: #{tpu_custom_call.1} parent=11 // pred_check
          %p1440 = pneg %p997
        $region154: #{tpu_custom_call.1} parent=11 // pred_check_branch
          %1442 = sbr.rel (%p1440) target = $region156
        $region155: #{tpu_custom_call.1} parent=11 // pred_region
          _
        $region156: #{tpu_custom_call.1} parent=11 // pred_fallthru
          _
        // Predicated region
        $region157: #{tpu_custom_call.1} parent=11 // pred_check
          %p1443 = pneg %p1018
        $region158: #{tpu_custom_call.1} parent=11 // pred_check_branch
          %1445 = sbr.rel (%p1443) target = $region160
        $region159: #{tpu_custom_call.1} parent=11 // pred_region
          _
        $region160: #{tpu_custom_call.1} parent=11 // pred_fallthru
          _
      $region12: #{tpu_custom_call.1} parent=5 // pred_fallthru
        _
      %p1446 = scmp.lt.s32.totalorder %s111, 2
      // Predicated region
      $region161: #{tpu_custom_call.1} parent=5 // pred_check
        %p1447 = pneg %p1446
      $region162: #{tpu_custom_call.1} parent=5 // pred_check_branch
        %1449 = sbr.rel (%p1447) target = $region164
      $region163: #{tpu_custom_call.1} parent=5 // pred_region
        // Predicated region
        $region165: #{tpu_custom_call.1} parent=163 // pred_check
          %p1450 = pneg %p131
        $region166: #{tpu_custom_call.1} parent=163 // pred_check_branch
          %1452 = sbr.rel (%p1450) target = $region168
        $region167: #{tpu_custom_call.1} parent=163 // pred_region
          %p1453 = scmp.lt.s32.totalorder %s111, 1
          %s1454 = scalar_select %p1453, %s111, 1
          %s1455 = smul.addr %s1454, 2
          %s1456 = smul.addr %s1455, 8
          %s1457 = scalar_lea.vmem %s1, %s1456
        $region168: #{tpu_custom_call.1} parent=163 // pred_fallthru
          _
        // Predicated region
        $region169: #{tpu_custom_call.1} parent=163 // pred_check
          %p1458 = pneg %p157
        $region170: #{tpu_custom_call.1} parent=163 // pred_check_branch
          %1460 = sbr.rel (%p1458) target = $region172
        $region171: #{tpu_custom_call.1} parent=163 // pred_region
          %p1461 = scmp.lt.s32.totalorder %s111, 1
          %s1462 = scalar_select %p1461, %s111, 1
          %s1463 = smul.addr %s1462, 16
          %s1464 = smul.addr %s1463, 8
          %s1465 = scalar_lea.vmem %s3, %s1464
        $region172: #{tpu_custom_call.1} parent=163 // pred_fallthru
          _
        // Predicated region
        $region173: #{tpu_custom_call.1} parent=163 // pred_check
          %p1466 = pneg %p183
        $region174: #{tpu_custom_call.1} parent=163 // pred_check_branch
          %1468 = sbr.rel (%p1466) target = $region176
        $region175: #{tpu_custom_call.1} parent=163 // pred_region
          %p1469 = scmp.lt.s32.totalorder %s111, 1
          %s1470 = scalar_select %p1469, %s111, 1
          %s1471 = smul.addr %s1470, 16
          %s1472 = smul.addr %s1471, 8
          %s1473 = scalar_lea.vmem %s5, %s1472
        $region176: #{tpu_custom_call.1} parent=163 // pred_fallthru
          _
        // Predicated region
        $region177: #{tpu_custom_call.1} parent=163 // pred_check
          %p1474 = pneg %p209
        $region178: #{tpu_custom_call.1} parent=163 // pred_check_branch
          %1476 = sbr.rel (%p1474) target = $region180
        $region179: #{tpu_custom_call.1} parent=163 // pred_region
          %p1477 = scmp.lt.s32.totalorder %s111, 1
          %s1478 = scalar_select %p1477, %s111, 1
          %s1479 = smul.addr %s1478, 16
          %s1480 = smul.addr %s1479, 8
          %s1481 = scalar_lea.vmem %s7, %s1480
        $region180: #{tpu_custom_call.1} parent=163 // pred_fallthru
          _
        // Predicated region
        $region181: #{tpu_custom_call.1} parent=163 // pred_check
          %p1482 = pneg %p235
        $region182: #{tpu_custom_call.1} parent=163 // pred_check_branch
          %1484 = sbr.rel (%p1482) target = $region184
        $region183: #{tpu_custom_call.1} parent=163 // pred_region
          %s1485 = sand.u32 %s225, 1
          %s1486 = scalar_lea.sflag [#allocation3], %s1485
          %s1487 = sand.u32 %s225, 1
          %s1488 = smul.addr %s1487, 16
          %s1489 = scalar_lea.vmem [#allocation2], %s1488
          %s1491 = ssub.s32 256, 256
          %1492 = vsyncadd %s1486, %s1491
          %s1493 = smul.addr %s111, 2
          %s1494 = smul.addr %s1493, 128
          %s1495 = scalar_lea.hbm %s9, %s1494
          %s1496 = sshll.u32 %s1489, 4
          %s1497 = int_to_ptr.vmem [resolvable:$true] %s1496
          %1502 = dma.hbm_to_vmem [thread:$0]  %s1495, 256, %s1497, %s1486, 128, 128, 8
        $region184: #{tpu_custom_call.1} parent=163 // pred_fallthru
          _
      $region164: #{tpu_custom_call.1} parent=5 // pred_fallthru
        _
      %p1503 = scmp.le.s32.totalorder 1, %s111
      %p1504 = scmp.lt.s32.totalorder %s111, 3
      %p1505 = pnand %p1503, %p1504
      %p1506 = pneg %p1505
      // Predicated region
      $region185: #{tpu_custom_call.1} parent=5 // pred_check
        _
      $region186: #{tpu_custom_call.1} parent=5 // pred_check_branch
        %1508 = sbr.rel (%p1505) target = $region188
      $region187: #{tpu_custom_call.1} parent=5 // pred_region
        %s1509 = ssub.s32 %s111, 1
        %s1510 = sand.u32 %s228, 1
        %s1511 = scalar_lea.sflag [#allocation3], %s1510
        %s1512 = sand.u32 %s228, 1
        %s1513 = smul.addr %s1512, 16
        %s1514 = scalar_lea.vmem [#allocation2], %s1513
        // Predicated region
        $region189: #{tpu_custom_call.1} parent=187 // pred_check
          %p1515 = pneg %p241
        $region190: #{tpu_custom_call.1} parent=187 // pred_check_branch
          %1517 = sbr.rel (%p1515) target = $region192
        $region191: #{tpu_custom_call.1} parent=187 // pred_region
          %1518 = dma.done %s1511, 256
        $region192: #{tpu_custom_call.1} parent=187 // pred_fallthru
          _
        // Predicated region
        $region193: #{tpu_custom_call.1} parent=187 // pred_check
          %p1519 = pneg %p283
        $region194: #{tpu_custom_call.1} parent=187 // pred_check_branch
          %1521 = sbr.rel (%p1519) target = $region196
        $region195: #{tpu_custom_call.1} parent=187 // pred_region
          %1522 = dma.done [#allocation6], 16
        $region196: #{tpu_custom_call.1} parent=187 // pred_fallthru
          _
        // Predicated region
        $region197: #{tpu_custom_call.1} parent=187 // pred_check
          %p1523 = pneg %p304
        $region198: #{tpu_custom_call.1} parent=187 // pred_check_branch
          %1525 = sbr.rel (%p1523) target = $region200
        $region199: #{tpu_custom_call.1} parent=187 // pred_region
          %1526 = dma.done [#allocation6], 128
        $region200: #{tpu_custom_call.1} parent=187 // pred_fallthru
          _
        // Predicated region
        $region201: #{tpu_custom_call.1} parent=187 // pred_check
          %p1527 = pneg %p325
        $region202: #{tpu_custom_call.1} parent=187 // pred_check_branch
          %1529 = sbr.rel (%p1527) target = $region204
        $region203: #{tpu_custom_call.1} parent=187 // pred_region
          %1530 = dma.done [#allocation9], 16
        $region204: #{tpu_custom_call.1} parent=187 // pred_fallthru
          _
        // Predicated region
        $region205: #{tpu_custom_call.1} parent=187 // pred_check
          %p1531 = pneg %p388
        $region206: #{tpu_custom_call.1} parent=187 // pred_check_branch
          %1533 = sbr.rel (%p1531) target = $region208
        $region207: #{tpu_custom_call.1} parent=187 // pred_region
          %1534 = dma.done [#allocation9], 32
        $region208: #{tpu_custom_call.1} parent=187 // pred_fallthru
          _
        // Predicated region
        $region209: #{tpu_custom_call.1} parent=187 // pred_check
          %p1535 = pneg %p409
        $region210: #{tpu_custom_call.1} parent=187 // pred_check_branch
          %1537 = sbr.rel (%p1535) target = $region212
        $region211: #{tpu_custom_call.1} parent=187 // pred_region
          %1538 = dma.done [#allocation12], 2048
        $region212: #{tpu_custom_call.1} parent=187 // pred_fallthru
          _
        // Predicated region
        $region213: #{tpu_custom_call.1} parent=187 // pred_check
          %p1539 = pneg %p430
        $region214: #{tpu_custom_call.1} parent=187 // pred_check_branch
          %1541 = sbr.rel (%p1539) target = $region216
        $region215: #{tpu_custom_call.1} parent=187 // pred_region
          %1542 = dma.done [#allocation12], 32
        $region216: #{tpu_custom_call.1} parent=187 // pred_fallthru
          _
        // Predicated region
        $region217: #{tpu_custom_call.1} parent=187 // pred_check
          %p1543 = pneg %p451
        $region218: #{tpu_custom_call.1} parent=187 // pred_check_branch
          %1545 = sbr.rel (%p1543) target = $region220
        $region219: #{tpu_custom_call.1} parent=187 // pred_region
          %1546 = dma.done [#allocation15], 2048
        $region220: #{tpu_custom_call.1} parent=187 // pred_fallthru
          _
        // Predicated region
        $region221: #{tpu_custom_call.1} parent=187 // pred_check
          %p1547 = pneg %p472
        $region222: #{tpu_custom_call.1} parent=187 // pred_check_branch
          %1549 = sbr.rel (%p1547) target = $region224
        $region223: #{tpu_custom_call.1} parent=187 // pred_region
          %1550 = dma.done [#allocation15], 32
        $region224: #{tpu_custom_call.1} parent=187 // pred_fallthru
          _
        // Predicated region
        $region225: #{tpu_custom_call.1} parent=187 // pred_check
          %p1551 = pneg %p493
        $region226: #{tpu_custom_call.1} parent=187 // pred_check_branch
          %1553 = sbr.rel (%p1551) target = $region228
        $region227: #{tpu_custom_call.1} parent=187 // pred_region
          %1554 = dma.done [#allocation18], 32
        $region228: #{tpu_custom_call.1} parent=187 // pred_fallthru
          _
        // Predicated region
        $region229: #{tpu_custom_call.1} parent=187 // pred_check
          %p1555 = pneg %p514
        $region230: #{tpu_custom_call.1} parent=187 // pred_check_branch
          %1557 = sbr.rel (%p1555) target = $region232
        $region231: #{tpu_custom_call.1} parent=187 // pred_region
          %1558 = dma.done [#allocation18], 32
        $region232: #{tpu_custom_call.1} parent=187 // pred_fallthru
          _
        // Predicated region
        $region233: #{tpu_custom_call.1} parent=187 // pred_check
          %p1559 = pneg %p556
        $region234: #{tpu_custom_call.1} parent=187 // pred_check_branch
          %1561 = sbr.rel (%p1559) target = $region236
        $region235: #{tpu_custom_call.1} parent=187 // pred_region
          %1562 = dma.done [#allocation21], 128
        $region236: #{tpu_custom_call.1} parent=187 // pred_fallthru
          _
        // Predicated region
        $region237: #{tpu_custom_call.1} parent=187 // pred_check
          %p1563 = pneg %p577
        $region238: #{tpu_custom_call.1} parent=187 // pred_check_branch
          %1565 = sbr.rel (%p1563) target = $region240
        $region239: #{tpu_custom_call.1} parent=187 // pred_region
          %1566 = dma.done [#allocation21], 8192
        $region240: #{tpu_custom_call.1} parent=187 // pred_fallthru
          _
        // Predicated region
        $region241: #{tpu_custom_call.1} parent=187 // pred_check
          %p1567 = pneg %p598
        $region242: #{tpu_custom_call.1} parent=187 // pred_check_branch
          %1569 = sbr.rel (%p1567) target = $region244
        $region243: #{tpu_custom_call.1} parent=187 // pred_region
          %1570 = dma.done [#allocation24], 32
        $region244: #{tpu_custom_call.1} parent=187 // pred_fallthru
          _
        // Predicated region
        $region245: #{tpu_custom_call.1} parent=187 // pred_check
          %p1571 = pneg %p619
        $region246: #{tpu_custom_call.1} parent=187 // pred_check_branch
          %1573 = sbr.rel (%p1571) target = $region248
        $region247: #{tpu_custom_call.1} parent=187 // pred_region
          %1574 = dma.done [#allocation24], 32
        $region248: #{tpu_custom_call.1} parent=187 // pred_fallthru
          _
        // Predicated region
        $region249: #{tpu_custom_call.1} parent=187 // pred_check
          %p1575 = pneg %p640
        $region250: #{tpu_custom_call.1} parent=187 // pred_check_branch
          %1577 = sbr.rel (%p1575) target = $region252
        $region251: #{tpu_custom_call.1} parent=187 // pred_region
          %1578 = dma.done [#allocation27], 32
        $region252: #{tpu_custom_call.1} parent=187 // pred_fallthru
          _
        // Predicated region
        $region253: #{tpu_custom_call.1} parent=187 // pred_check
          %p1579 = pneg %p661
        $region254: #{tpu_custom_call.1} parent=187 // pred_check_branch
          %1581 = sbr.rel (%p1579) target = $region256
        $region255: #{tpu_custom_call.1} parent=187 // pred_region
          %1582 = dma.done [#allocation27], 4096
        $region256: #{tpu_custom_call.1} parent=187 // pred_fallthru
          _
        // Predicated region
        $region257: #{tpu_custom_call.1} parent=187 // pred_check
          %p1583 = pneg %p682
        $region258: #{tpu_custom_call.1} parent=187 // pred_check_branch
          %1585 = sbr.rel (%p1583) target = $region260
        $region259: #{tpu_custom_call.1} parent=187 // pred_region
          %1586 = dma.done [#allocation30], 2048
        $region260: #{tpu_custom_call.1} parent=187 // pred_fallthru
          _
        // Predicated region
        $region261: #{tpu_custom_call.1} parent=187 // pred_check
          %p1587 = pneg %p703
        $region262: #{tpu_custom_call.1} parent=187 // pred_check_branch
          %1589 = sbr.rel (%p1587) target = $region264
        $region263: #{tpu_custom_call.1} parent=187 // pred_region
          %1590 = dma.done [#allocation30], 2048
        $region264: #{tpu_custom_call.1} parent=187 // pred_fallthru
          _
        // Predicated region
        $region265: #{tpu_custom_call.1} parent=187 // pred_check
          %p1591 = pneg %p724
        $region266: #{tpu_custom_call.1} parent=187 // pred_check_branch
          %1593 = sbr.rel (%p1591) target = $region268
        $region267: #{tpu_custom_call.1} parent=187 // pred_region
          %1594 = dma.done [#allocation33], 32
        $region268: #{tpu_custom_call.1} parent=187 // pred_fallthru
          _
        // Predicated region
        $region269: #{tpu_custom_call.1} parent=187 // pred_check
          %p1595 = pneg %p745
        $region270: #{tpu_custom_call.1} parent=187 // pred_check_branch
          %1597 = sbr.rel (%p1595) target = $region272
        $region271: #{tpu_custom_call.1} parent=187 // pred_region
          %1598 = dma.done [#allocation33], 2048
        $region272: #{tpu_custom_call.1} parent=187 // pred_fallthru
          _
        // Predicated region
        $region273: #{tpu_custom_call.1} parent=187 // pred_check
          %p1599 = pneg %p766
        $region274: #{tpu_custom_call.1} parent=187 // pred_check_branch
          %1601 = sbr.rel (%p1599) target = $region276
        $region275: #{tpu_custom_call.1} parent=187 // pred_region
          %1602 = dma.done [#allocation36], 32
        $region276: #{tpu_custom_call.1} parent=187 // pred_fallthru
          _
        // Predicated region
        $region277: #{tpu_custom_call.1} parent=187 // pred_check
          %p1603 = pneg %p787
        $region278: #{tpu_custom_call.1} parent=187 // pred_check_branch
          %1605 = sbr.rel (%p1603) target = $region280
        $region279: #{tpu_custom_call.1} parent=187 // pred_region
          %1606 = dma.done [#allocation36], 2048
        $region280: #{tpu_custom_call.1} parent=187 // pred_fallthru
          _
        // Predicated region
        $region281: #{tpu_custom_call.1} parent=187 // pred_check
          %p1607 = pneg %p808
        $region282: #{tpu_custom_call.1} parent=187 // pred_check_branch
          %1609 = sbr.rel (%p1607) target = $region284
        $region283: #{tpu_custom_call.1} parent=187 // pred_region
          %1610 = dma.done [#allocation39], 32
        $region284: #{tpu_custom_call.1} parent=187 // pred_fallthru
          _
        // Predicated region
        $region285: #{tpu_custom_call.1} parent=187 // pred_check
          %p1611 = pneg %p829
        $region286: #{tpu_custom_call.1} parent=187 // pred_check_branch
          %1613 = sbr.rel (%p1611) target = $region288
        $region287: #{tpu_custom_call.1} parent=187 // pred_region
          %1614 = dma.done [#allocation39], 32
        $region288: #{tpu_custom_call.1} parent=187 // pred_fallthru
          _
        // Predicated region
        $region289: #{tpu_custom_call.1} parent=187 // pred_check
          %p1615 = pneg %p850
        $region290: #{tpu_custom_call.1} parent=187 // pred_check_branch
          %1617 = sbr.rel (%p1615) target = $region292
        $region291: #{tpu_custom_call.1} parent=187 // pred_region
          %1618 = dma.done [#allocation42], 32
        $region292: #{tpu_custom_call.1} parent=187 // pred_fallthru
          _
        // Predicated region
        $region293: #{tpu_custom_call.1} parent=187 // pred_check
          %p1619 = pneg %p871
        $region294: #{tpu_custom_call.1} parent=187 // pred_check_branch
          %1621 = sbr.rel (%p1619) target = $region296
        $region295: #{tpu_custom_call.1} parent=187 // pred_region
          %1622 = dma.done [#allocation42], 8192
        $region296: #{tpu_custom_call.1} parent=187 // pred_fallthru
          _
        // Predicated region
        $region297: #{tpu_custom_call.1} parent=187 // pred_check
          %p1623 = pneg %p892
        $region298: #{tpu_custom_call.1} parent=187 // pred_check_branch
          %1625 = sbr.rel (%p1623) target = $region300
        $region299: #{tpu_custom_call.1} parent=187 // pred_region
          %1626 = dma.done [#allocation45], 128
        $region300: #{tpu_custom_call.1} parent=187 // pred_fallthru
          _
        // Predicated region
        $region301: #{tpu_custom_call.1} parent=187 // pred_check
          %p1627 = pneg %p913
        $region302: #{tpu_custom_call.1} parent=187 // pred_check_branch
          %1629 = sbr.rel (%p1627) target = $region304
        $region303: #{tpu_custom_call.1} parent=187 // pred_region
          %1630 = dma.done [#allocation45], 8192
        $region304: #{tpu_custom_call.1} parent=187 // pred_fallthru
          _
        %p1631 = scmp.lt.s32.totalorder %s116, 1
        %s1632 = scalar_select %p1631, %s116, 1
        %s1633 = smul.addr %s1632, 2
        %s1634 = smul.addr %s1633, 8
        %s1635 = scalar_lea.vmem %s1, %s1634
        %p1636 = pneg %p137
        %p1637 = pneg %p134
        %p1638 = scmp.lt.s32.totalorder %s116, 1
        %s1639 = scalar_select %p1638, %s116, 1
        %s1640 = smul.addr %s1639, 16
        %s1641 = smul.addr %s1640, 8
        %s1642 = scalar_lea.vmem %s3, %s1641
        %p1643 = pneg %p163
        %p1644 = pneg %p160
        %p1645 = scmp.lt.s32.totalorder %s116, 1
        %s1646 = scalar_select %p1645, %s116, 1
        %s1647 = smul.addr %s1646, 16
        %s1648 = smul.addr %s1647, 8
        %s1649 = scalar_lea.vmem %s5, %s1648
        %p1650 = pneg %p189
        %p1651 = pneg %p186
        %p1652 = scmp.lt.s32.totalorder %s116, 1
        %s1653 = scalar_select %p1652, %s116, 1
        %s1654 = smul.addr %s1653, 16
        %s1655 = smul.addr %s1654, 8
        %s1656 = scalar_lea.vmem %s7, %s1655
        %p1657 = pneg %p215
        %p1658 = pneg %p212
        %s1659 = sand.u32 %s228, 1
        %s1660 = scalar_lea.sflag [#allocation3], %s1659
        %s1661 = sand.u32 %s228, 1
        %s1662 = smul.addr %s1661, 16
        %s1663 = scalar_lea.vmem [#allocation2], %s1662
        %p1664 = pneg %p241
        %p1665 = pneg %p238
        %p1666 = pneg %p262
        %p1667 = pneg %p259
        %p1668 = pneg %p283
        %p1669 = pneg %p280
        %p1670 = pneg %p304
        %p1671 = pneg %p301
        %p1672 = pneg %p325
        %p1673 = pneg %p322
        %p1674 = pneg %p346
        %p1675 = pneg %p343
        %p1676 = pneg %p367
        %p1677 = pneg %p364
        %p1678 = pneg %p388
        %p1679 = pneg %p385
        %p1680 = pneg %p409
        %p1681 = pneg %p406
        %p1682 = pneg %p430
        %p1683 = pneg %p427
        %p1684 = pneg %p451
        %p1685 = pneg %p448
        %p1686 = pneg %p472
        %p1687 = pneg %p469
        %p1688 = pneg %p493
        %p1689 = pneg %p490
        %p1690 = pneg %p514
        %p1691 = pneg %p511
        %p1692 = pneg %p535
        %p1693 = pneg %p532
        %p1694 = pneg %p556
        %p1695 = pneg %p553
        %p1696 = pneg %p577
        %p1697 = pneg %p574
        %p1698 = pneg %p598
        %p1699 = pneg %p595
        %p1700 = pneg %p619
        %p1701 = pneg %p616
        %p1702 = pneg %p640
        %p1703 = pneg %p637
        %p1704 = pneg %p661
        %p1705 = pneg %p658
        %p1706 = pneg %p682
        %p1707 = pneg %p679
        %p1708 = pneg %p703
        %p1709 = pneg %p700
        %p1710 = pneg %p724
        %p1711 = pneg %p721
        %p1712 = pneg %p745
        %p1713 = pneg %p742
        %p1714 = pneg %p766
        %p1715 = pneg %p763
        %p1716 = pneg %p787
        %p1717 = pneg %p784
        %p1718 = pneg %p808
        %p1719 = pneg %p805
        %p1720 = pneg %p829
        %p1721 = pneg %p826
        %p1722 = pneg %p850
        %p1723 = pneg %p847
        %p1724 = pneg %p871
        %p1725 = pneg %p868
        %p1726 = pneg %p892
        %p1727 = pneg %p889
        %p1728 = pneg %p913
        %p1729 = pneg %p910
        %p1730 = pneg %p934
        %p1731 = pneg %p931
        %p1732 = pneg %p955
        %p1733 = pneg %p952
        %p1734 = pneg %p976
        %p1735 = pneg %p973
        %p1736 = pneg %p997
        %p1737 = pneg %p994
        %p1738 = pneg %p1018
        %p1739 = pneg %p1015
        %p1740 = pneg %p1044
        %p1741 = pneg %p1041
        %s1742 = sand.u32 %s1031, 1
        %s1743 = scalar_lea.sflag [#allocation4], %s1742
        %s1744 = sand.u32 %s1031, 1
        %s1745 = smul.addr %s1744, 16
        %s1746 = scalar_lea.vmem [#allocation47], %s1745
        %p1747 = scmp.lt.s32.totalorder %s116, 1
        %s1748 = scalar_select %p1747, %s116, 1
        %s1749 = smul.addr %s1748, 2
        %s1750 = smul.addr %s1749, 8
        %s1751 = scalar_lea.vmem %s1, %s1750
        %p1752 = scmp.lt.s32.totalorder %s116, 1
        %s1753 = scalar_select %p1752, %s116, 1
        %s1754 = smul.addr %s1753, 16
        %s1755 = smul.addr %s1754, 8
        %s1756 = scalar_lea.vmem %s3, %s1755
        %p1757 = scmp.lt.s32.totalorder %s116, 1
        %s1758 = scalar_select %p1757, %s116, 1
        %s1759 = smul.addr %s1758, 16
        %s1760 = smul.addr %s1759, 8
        %s1761 = scalar_lea.vmem %s5, %s1760
        %p1762 = scmp.lt.s32.totalorder %s116, 1
        %s1763 = scalar_select %p1762, %s116, 1
        %s1764 = smul.addr %s1763, 16
        %s1765 = smul.addr %s1764, 8
        %s1766 = scalar_lea.vmem %s7, %s1765
        %v1768 = vld [vmem:[%s1751] sm:$0xff]
        %v1769 = vld [vmem:[%s1751 + $0x8] sm:$0xff]
        %v1770 = vld [vmem:[%s1756] sm:$0xff]
        %v1771 = vld [vmem:[%s1756 + $0x8] sm:$0xff]
        %v1772 = vld [vmem:[%s1756 + $0x10] sm:$0xff]
        %v1773 = vld [vmem:[%s1756 + $0x18] sm:$0xff]
        %v1774 = vld [vmem:[%s1756 + $0x20] sm:$0xff]
        %v1775 = vld [vmem:[%s1756 + $0x28] sm:$0xff]
        %v1776 = vld [vmem:[%s1756 + $0x30] sm:$0xff]
        %v1777 = vld [vmem:[%s1756 + $0x38] sm:$0xff]
        %v1778 = vld [vmem:[%s1756 + $0x40] sm:$0xff]
        %v1779 = vld [vmem:[%s1756 + $0x48] sm:$0xff]
        %v1780 = vld [vmem:[%s1756 + $0x50] sm:$0xff]
        %v1781 = vld [vmem:[%s1756 + $0x58] sm:$0xff]
        %v1782 = vld [vmem:[%s1756 + $0x60] sm:$0xff]
        %v1783 = vld [vmem:[%s1756 + $0x68] sm:$0xff]
        %v1784 = vld [vmem:[%s1756 + $0x70] sm:$0xff]
        %v1785 = vld [vmem:[%s1756 + $0x78] sm:$0xff]
        %v1786 = vld [vmem:[%s1761] sm:$0xff]
        %v1787 = vld [vmem:[%s1761 + $0x8] sm:$0xff]
        %v1788 = vld [vmem:[%s1761 + $0x10] sm:$0xff]
        %v1789 = vld [vmem:[%s1761 + $0x18] sm:$0xff]
        %v1790 = vld [vmem:[%s1761 + $0x20] sm:$0xff]
        %v1791 = vld [vmem:[%s1761 + $0x28] sm:$0xff]
        %v1792 = vld [vmem:[%s1761 + $0x30] sm:$0xff]
        %v1793 = vld [vmem:[%s1761 + $0x38] sm:$0xff]
        %v1794 = vld [vmem:[%s1761 + $0x40] sm:$0xff]
        %v1795 = vld [vmem:[%s1761 + $0x48] sm:$0xff]
        %v1796 = vld [vmem:[%s1761 + $0x50] sm:$0xff]
        %v1797 = vld [vmem:[%s1761 + $0x58] sm:$0xff]
        %v1798 = vld [vmem:[%s1761 + $0x60] sm:$0xff]
        %v1799 = vld [vmem:[%s1761 + $0x68] sm:$0xff]
        %v1800 = vld [vmem:[%s1761 + $0x70] sm:$0xff]
        %v1801 = vld [vmem:[%s1761 + $0x78] sm:$0xff]
        %v1802 = vld [vmem:[%s1766] sm:$0xff]
        %v1803 = vld [vmem:[%s1766 + $0x8] sm:$0xff]
        %v1804 = vld [vmem:[%s1766 + $0x10] sm:$0xff]
        %v1805 = vld [vmem:[%s1766 + $0x18] sm:$0xff]
        %v1806 = vld [vmem:[%s1766 + $0x20] sm:$0xff]
        %v1807 = vld [vmem:[%s1766 + $0x28] sm:$0xff]
        %v1808 = vld [vmem:[%s1766 + $0x30] sm:$0xff]
        %v1809 = vld [vmem:[%s1766 + $0x38] sm:$0xff]
        %v1810 = vld [vmem:[%s1766 + $0x40] sm:$0xff]
        %v1811 = vld [vmem:[%s1766 + $0x48] sm:$0xff]
        %v1812 = vld [vmem:[%s1766 + $0x50] sm:$0xff]
        %v1813 = vld [vmem:[%s1766 + $0x58] sm:$0xff]
        %v1814 = vld [vmem:[%s1766 + $0x60] sm:$0xff]
        %v1815 = vld [vmem:[%s1766 + $0x68] sm:$0xff]
        %v1816 = vld [vmem:[%s1766 + $0x70] sm:$0xff]
        %v1817 = vld [vmem:[%s1766 + $0x78] sm:$0xff]
        %v1818 = vld [vmem:[%s1514] sm:$0xff]
        %v1819 = vld [vmem:[%s1514 + $0x8] sm:$0xff]
        %v1820 = vpack.c.bf16 %v1819, %v1818
        %v1821 = vpack.c.bf16 %v1769, %v1768
        %v1822 = vld [vmem:[%s11] sm:$0xf]
        %v1823 = vld [vmem:[%s11 + $0x4] sm:$0x1]
        %v1824 = vld [vmem:[#allocation5] sm:$0x1]
        %v1826 = vlaneseq
        %v1827 = vshrl.u32 %v1826, 7
        %v1828 = vsub.s32 0, %v1827
        %v1829 = vrot.slane %v1824, %v1828
        %v1833 = vunpack.c.l.b16 %v1822
        %v1834 = vunpack.c.l.b16 %v1823
        %v1835 = vpack.c.b16 %v1834, %v1833
        %vm1836 = vcmask 80896
        %v1838 = vsel %vm1836, %v1821, 0
        %vm1840 = vcmask 1044480
        %v1842 = vsel %vm1840, %v1835, 0
        %1844 = vmatprep.subr.bf16.mxu0 0
        %1845 = vmatpush1.bf16.msra.mxu0 %v1842
        %1846 = vmatprep.subr.bf16.mxu0 0
        %1847 = vmatpush1.bf16.msra.mxu0 0
        %1848 = vmatprep.subr.bf16.mxu0 0
        %1849 = vmatpush1.bf16.msra.mxu0 0
        %1850 = vmatprep.subr.bf16.mxu0 0
        %1851 = vmatpush1.bf16.msra.mxu0 0
        %1852 = vmatprep.subr.bf16.mxu0 0
        %1853 = vmatpush1.bf16.msra.mxu0 0
        %1854 = vmatprep.subr.bf16.mxu0 0
        %1855 = vmatpush1.bf16.msra.mxu0 0
        %1856 = vmatprep.subr.bf16.mxu0 0
        %1857 = vmatpush1.bf16.msra.mxu0 0
        %1858 = vmatprep.subr.bf16.mxu0 0
        %1859 = vmatpush1.bf16.msra.mxu0 0
        %1860 = vmatprep.subr.bf16.mxu0 0
        %1861 = vmatpush1.bf16.msra.mxu0 0
        %1862 = vmatprep.subr.bf16.mxu0 0
        %1863 = vmatpush1.bf16.msra.mxu0 0
        %1864 = vmatprep.subr.bf16.mxu0 0
        %1865 = vmatpush1.bf16.msra.mxu0 0
        %1866 = vmatprep.subr.bf16.mxu0 0
        %1867 = vmatpush1.bf16.msra.mxu0 0
        %1868 = vmatprep.subr.bf16.mxu0 0
        %1869 = vmatpush1.bf16.msra.mxu0 0
        %1870 = vmatprep.subr.bf16.mxu0 0
        %1871 = vmatpush1.bf16.msra.mxu0 0
        %1872 = vmatprep.subr.bf16.mxu0 0
        %1873 = vmatpush1.bf16.msra.mxu0 0
        %1874 = vmatprep.subr.bf16.mxu0 0
        %1875 = vmatpush1.bf16.msra.mxu0 0
        %1876 = vmatprep.mubr.bf16.mxu0 0
        %1877 = vmatmul.mubr.bf16.gmra.mrb[0].mxu0 %v1838
        %v1878 = vpop.f32.mrb[0].mxu0
        %v1879 = vadd.f32 %v1829, %v1878
        %v1880 = vpop.f32.mrb[0].mxu0
        %v1881 = vpop.f32.mrb[0].mxu0
        %v1882 = vadd.f32 %v1829, %v1881
        %v1883 = vpop.f32.mrb[0].mxu0
        %1884 = vdwg.mxu0
        %v1885 = vpack.c.bf16 %v1771, %v1770
        %v1886 = vpack.c.bf16 %v1773, %v1772
        %v1887 = vpack.c.bf16 %v1775, %v1774
        %v1888 = vpack.c.bf16 %v1777, %v1776
        %v1889 = vpack.c.bf16 %v1779, %v1778
        %v1890 = vpack.c.bf16 %v1781, %v1780
        %v1891 = vpack.c.bf16 %v1783, %v1782
        %v1892 = vpack.c.bf16 %v1785, %v1784
        %v1893 = vld [vmem:[#allocation7] sm:$0xf]
        %v1894 = vld [vmem:[#allocation7 + $0x4] sm:$0x3]
        %v1895 = vld [vmem:[#allocation8] sm:$0x1]
        %v1897 = vlaneseq
        %v1898 = vshrl.u32 %v1897, 7
        %v1899 = vsub.s32 0, %v1898
        %v1900 = vrot.slane %v1895, %v1899
        %v1904 = vunpack.c.l.b16 %v1893
        %v1905 = vunpack.c.l.b16 %v1894
        %v1906 = vpack.c.b16 %v1905, %v1904
        %vm1907 = vcmask 89088
        %v1909 = vsel %vm1907, %v1885, 0
        %v1912 = vsel %vm1907, %v1886, 0
        %v1915 = vsel %vm1907, %v1887, 0
        %v1918 = vsel %vm1907, %v1888, 0
        %v1921 = vsel %vm1907, %v1889, 0
        %v1924 = vsel %vm1907, %v1890, 0
        %v1927 = vsel %vm1907, %v1891, 0
        %v1930 = vsel %vm1907, %v1892, 0
        %vm1932 = vcmask 1045504
        %v1933 = vsel %vm1840, 4294967295, 65535
        %v1934 = vsel %vm1932, %v1933, 0
        %v1936 = vand.u32 %v1906, %v1934
        %1938 = vmatprep.subr.bf16.mxu0 0
        %1939 = vmatpush1.bf16.msra.mxu0 %v1936
        %1940 = vmatprep.subr.bf16.mxu0 0
        %1941 = vmatpush1.bf16.msra.mxu0 0
        %1942 = vmatprep.subr.bf16.mxu0 0
        %1943 = vmatpush1.bf16.msra.mxu0 0
        %1944 = vmatprep.subr.bf16.mxu0 0
        %1945 = vmatpush1.bf16.msra.mxu0 0
        %1946 = vmatprep.subr.bf16.mxu0 0
        %1947 = vmatpush1.bf16.msra.mxu0 0
        %1948 = vmatprep.subr.bf16.mxu0 0
        %1949 = vmatpush1.bf16.msra.mxu0 0
        %1950 = vmatprep.subr.bf16.mxu0 0
        %1951 = vmatpush1.bf16.msra.mxu0 0
        %1952 = vmatprep.subr.bf16.mxu0 0
        %1953 = vmatpush1.bf16.msra.mxu0 0
        %1954 = vmatprep.subr.bf16.mxu0 0
        %1955 = vmatpush1.bf16.msra.mxu0 0
        %1956 = vmatprep.subr.bf16.mxu0 0
        %1957 = vmatpush1.bf16.msra.mxu0 0
        %1958 = vmatprep.subr.bf16.mxu0 0
        %1959 = vmatpush1.bf16.msra.mxu0 0
        %1960 = vmatprep.subr.bf16.mxu0 0
        %1961 = vmatpush1.bf16.msra.mxu0 0
        %1962 = vmatprep.subr.bf16.mxu0 0
        %1963 = vmatpush1.bf16.msra.mxu0 0
        %1964 = vmatprep.subr.bf16.mxu0 0
        %1965 = vmatpush1.bf16.msra.mxu0 0
        %1966 = vmatprep.subr.bf16.mxu0 0
        %1967 = vmatpush1.bf16.msra.mxu0 0
        %1968 = vmatprep.subr.bf16.mxu0 0
        %1969 = vmatpush1.bf16.msra.mxu0 0
        %1970 = vmatprep.mubr.bf16.mxu0 0
        %1971 = vmatmul.mubr.bf16.gmra.mrb[0].mxu0 %v1909
        %v1972 = vpop.f32.mrb[0].mxu0
        %v1973 = vadd.f32 %v1900, %v1972
        %v1974 = vpop.f32.mrb[0].mxu0
        %v1975 = vpop.f32.mrb[0].mxu0
        %v1976 = vadd.f32 %v1900, %v1975
        %v1977 = vpop.f32.mrb[0].mxu0
        %1978 = vmatprep.mubr.bf16.mxu0 0
        %1979 = vmatmul.mubr.bf16.gmra.mrb[0].mxu0 %v1912
        %v1980 = vpop.f32.mrb[0].mxu0
        %v1981 = vadd.f32 %v1900, %v1980
        %v1982 = vpop.f32.mrb[0].mxu0
        %v1983 = vpop.f32.mrb[0].mxu0
        %v1984 = vadd.f32 %v1900, %v1983
        %v1985 = vpop.f32.mrb[0].mxu0
        %1986 = vmatprep.mubr.bf16.mxu0 0
        %1987 = vmatmul.mubr.bf16.gmra.mrb[0].mxu0 %v1915
        %v1988 = vpop.f32.mrb[0].mxu0
        %v1989 = vadd.f32 %v1900, %v1988
        %v1990 = vpop.f32.mrb[0].mxu0
        %v1991 = vpop.f32.mrb[0].mxu0
        %v1992 = vadd.f32 %v1900, %v1991
        %v1993 = vpop.f32.mrb[0].mxu0
        %1994 = vmatprep.mubr.bf16.mxu0 0
        %1995 = vmatmul.mubr.bf16.gmra.mrb[0].mxu0 %v1918
        %v1996 = vpop.f32.mrb[0].mxu0
        %v1997 = vadd.f32 %v1900, %v1996
        %v1998 = vpop.f32.mrb[0].mxu0
        %v1999 = vpop.f32.mrb[0].mxu0
        %v2000 = vadd.f32 %v1900, %v1999
        %v2001 = vpop.f32.mrb[0].mxu0
        %2002 = vmatprep.mubr.bf16.mxu0 0
        %2003 = vmatmul.mubr.bf16.gmra.mrb[0].mxu0 %v1921
        %v2004 = vpop.f32.mrb[0].mxu0
        %v2005 = vadd.f32 %v1900, %v2004
        %v2006 = vpop.f32.mrb[0].mxu0
        %v2007 = vpop.f32.mrb[0].mxu0
        %v2008 = vadd.f32 %v1900, %v2007
        %v2009 = vpop.f32.mrb[0].mxu0
        %2010 = vmatprep.mubr.bf16.mxu0 0
        %2011 = vmatmul.mubr.bf16.gmra.mrb[0].mxu0 %v1924
        %v2012 = vpop.f32.mrb[0].mxu0
        %v2013 = vadd.f32 %v1900, %v2012
        %v2014 = vpop.f32.mrb[0].mxu0
        %v2015 = vpop.f32.mrb[0].mxu0
        %v2016 = vadd.f32 %v1900, %v2015
        %v2017 = vpop.f32.mrb[0].mxu0
        %2018 = vmatprep.mubr.bf16.mxu0 0
        %2019 = vmatmul.mubr.bf16.gmra.mrb[0].mxu0 %v1927
        %v2020 = vpop.f32.mrb[0].mxu0
        %v2021 = vadd.f32 %v1900, %v2020
        %v2022 = vpop.f32.mrb[0].mxu0
        %v2023 = vpop.f32.mrb[0].mxu0
        %v2024 = vadd.f32 %v1900, %v2023
        %v2025 = vpop.f32.mrb[0].mxu0
        %2026 = vmatprep.mubr.bf16.mxu0 0
        %2027 = vmatmul.mubr.bf16.gmra.mrb[0].mxu0 %v1930
        %v2028 = vpop.f32.mrb[0].mxu0
        %v2029 = vadd.f32 %v1900, %v2028
        %v2030 = vpop.f32.mrb[0].mxu0
        %v2031 = vpop.f32.mrb[0].mxu0
        %v2032 = vadd.f32 %v1900, %v2031
        %v2033 = vpop.f32.mrb[0].mxu0
        %2034 = vdwg.mxu0
        %v2035 = vpack.c.bf16 %v1976, %v1973
        %v2036 = vpack.c.bf16 %v1984, %v1981
        %v2037 = vpack.c.bf16 %v1992, %v1989
        %v2038 = vpack.c.bf16 %v2000, %v1997
        %v2039 = vpack.c.bf16 %v2008, %v2005
        %v2040 = vpack.c.bf16 %v2016, %v2013
        %v2041 = vpack.c.bf16 %v2024, %v2021
        %v2042 = vpack.c.bf16 %v2032, %v2029
        %v2043 = vlaneseq
        %v2044 = vand.u32 %v2043, 127
        %2045 = vset.pattern.permute.xlu0 0
        %2046 = vperm.xlu0 %2045, %v1786
        %v2047 = vpop.permute.xlu0 %2046
        %2048 = vset.pattern.permute.xlu0 0
        %2049 = vperm.xlu0 %2048, %v1787
        %v2050 = vpop.permute.xlu0 %2049
        %2051 = vset.pattern.permute.xlu0 0
        %2052 = vperm.xlu0 %2051, %v1788
        %v2053 = vpop.permute.xlu0 %2052
        %2054 = vset.pattern.permute.xlu0 0
        %2055 = vperm.xlu0 %2054, %v1789
        %v2056 = vpop.permute.xlu0 %2055
        %2057 = vset.pattern.permute.xlu0 0
        %2058 = vperm.xlu0 %2057, %v1790
        %v2059 = vpop.permute.xlu0 %2058
        %2060 = vset.pattern.permute.xlu0 0
        %2061 = vperm.xlu0 %2060, %v1791
        %v2062 = vpop.permute.xlu0 %2061
        %2063 = vset.pattern.permute.xlu0 0
        %2064 = vperm.xlu0 %2063, %v1792
        %v2065 = vpop.permute.xlu0 %2064
        %2066 = vset.pattern.permute.xlu0 0
        %2067 = vperm.xlu0 %2066, %v1793
        %v2068 = vpop.permute.xlu0 %2067
        %2069 = vset.pattern.permute.xlu0 0
        %2070 = vperm.xlu0 %2069, %v1794
        %v2071 = vpop.permute.xlu0 %2070
        %2072 = vset.pattern.permute.xlu0 0
        %2073 = vperm.xlu0 %2072, %v1795
        %v2074 = vpop.permute.xlu0 %2073
        %2075 = vset.pattern.permute.xlu0 0
        %2076 = vperm.xlu0 %2075, %v1796
        %v2077 = vpop.permute.xlu0 %2076
        %2078 = vset.pattern.permute.xlu0 0
        %2079 = vperm.xlu0 %2078, %v1797
        %v2080 = vpop.permute.xlu0 %2079
        %2081 = vset.pattern.permute.xlu0 0
        %2082 = vperm.xlu0 %2081, %v1798
        %v2083 = vpop.permute.xlu0 %2082
        %2084 = vset.pattern.permute.xlu0 0
        %2085 = vperm.xlu0 %2084, %v1799
        %v2086 = vpop.permute.xlu0 %2085
        %2087 = vset.pattern.permute.xlu0 0
        %2088 = vperm.xlu0 %2087, %v1800
        %v2089 = vpop.permute.xlu0 %2088
        %2090 = vset.pattern.permute.xlu0 0
        %2091 = vperm.xlu0 %2090, %v1801
        %v2092 = vpop.permute.xlu0 %2091
        %vm2093 = vcmp.eq.s32.totalorder %v2047, %v2044
        %vm2094 = vcmp.eq.s32.totalorder %v2050, %v2044
        %vm2095 = vcmp.eq.s32.totalorder %v2053, %v2044
        %vm2096 = vcmp.eq.s32.totalorder %v2056, %v2044
        %vm2097 = vcmp.eq.s32.totalorder %v2059, %v2044
        %vm2098 = vcmp.eq.s32.totalorder %v2062, %v2044
        %vm2099 = vcmp.eq.s32.totalorder %v2065, %v2044
        %vm2100 = vcmp.eq.s32.totalorder %v2068, %v2044
        %vm2101 = vcmp.eq.s32.totalorder %v2071, %v2044
        %vm2102 = vcmp.eq.s32.totalorder %v2074, %v2044
        %vm2103 = vcmp.eq.s32.totalorder %v2077, %v2044
        %vm2104 = vcmp.eq.s32.totalorder %v2080, %v2044
        %vm2105 = vcmp.eq.s32.totalorder %v2083, %v2044
        %vm2106 = vcmp.eq.s32.totalorder %v2086, %v2044
        %vm2107 = vcmp.eq.s32.totalorder %v2089, %v2044
        %vm2108 = vcmp.eq.s32.totalorder %v2092, %v2044
        %v2109 = vsel %vm2093, 1, 0
        %v2110 = vsel %vm2094, 1, 0
        %v2111 = vsel %vm2095, 1, 0
        %v2112 = vsel %vm2096, 1, 0
        %v2113 = vsel %vm2097, 1, 0
        %v2114 = vsel %vm2098, 1, 0
        %v2115 = vsel %vm2099, 1, 0
        %v2116 = vsel %vm2100, 1, 0
        %v2117 = vsel %vm2101, 1, 0
        %v2118 = vsel %vm2102, 1, 0
        %v2119 = vsel %vm2103, 1, 0
        %v2120 = vsel %vm2104, 1, 0
        %v2121 = vsel %vm2105, 1, 0
        %v2122 = vsel %vm2106, 1, 0
        %v2123 = vsel %vm2107, 1, 0
        %v2124 = vsel %vm2108, 1, 0
        %v2125 = vcvt.s32.f32 %v2109
        %v2126 = vcvt.s32.f32 %v2110
        %v2127 = vcvt.s32.f32 %v2111
        %v2128 = vcvt.s32.f32 %v2112
        %v2129 = vcvt.s32.f32 %v2113
        %v2130 = vcvt.s32.f32 %v2114
        %v2131 = vcvt.s32.f32 %v2115
        %v2132 = vcvt.s32.f32 %v2116
        %v2133 = vcvt.s32.f32 %v2117
        %v2134 = vcvt.s32.f32 %v2118
        %v2135 = vcvt.s32.f32 %v2119
        %v2136 = vcvt.s32.f32 %v2120
        %v2137 = vcvt.s32.f32 %v2121
        %v2138 = vcvt.s32.f32 %v2122
        %v2139 = vcvt.s32.f32 %v2123
        %v2140 = vcvt.s32.f32 %v2124
        %v2141 = vpack.c.bf16 %v2126, %v2125
        %v2142 = vpack.c.bf16 %v2128, %v2127
        %v2143 = vpack.c.bf16 %v2130, %v2129
        %v2144 = vpack.c.bf16 %v2132, %v2131
        %v2145 = vpack.c.bf16 %v2134, %v2133
        %v2146 = vpack.c.bf16 %v2136, %v2135
        %v2147 = vpack.c.bf16 %v2138, %v2137
        %v2148 = vpack.c.bf16 %v2140, %v2139
        %v2149 = vpack.c.bf16 %v1882, %v1879
        %v2150 = vld [vmem:[%s19] sm:$0xff]
        %v2151 = vld [vmem:[%s19 + $0x8] sm:$0xff]
        %v2152 = vld [vmem:[%s19 + $0x10] sm:$0xff]
        %v2153 = vld [vmem:[%s19 + $0x18] sm:$0xff]
        %v2154 = vld [vmem:[%s19 + $0x20] sm:$0xff]
        %v2155 = vld [vmem:[%s19 + $0x28] sm:$0xff]
        %v2156 = vld [vmem:[%s19 + $0x30] sm:$0xff]
        %v2157 = vld [vmem:[%s19 + $0x38] sm:$0xff]
        %v2158 = vld [vmem:[%s19 + $0x40] sm:$0xff]
        %v2159 = vld [vmem:[%s19 + $0x48] sm:$0xff]
        %v2160 = vld [vmem:[%s19 + $0x50] sm:$0xff]
        %v2161 = vld [vmem:[%s19 + $0x58] sm:$0xff]
        %v2162 = vld [vmem:[%s19 + $0x60] sm:$0xff]
        %v2163 = vld [vmem:[%s19 + $0x68] sm:$0xff]
        %v2164 = vld [vmem:[%s19 + $0x70] sm:$0xff]
        %v2165 = vld [vmem:[%s19 + $0x78] sm:$0xff]
        %v2182 = vunpack.c.l.b16 %v2150
        %v2183 = vunpack.c.h.b16 %v2150
        %v2184 = vunpack.c.l.b16 %v2151
        %v2185 = vunpack.c.h.b16 %v2151
        %v2186 = vunpack.c.l.b16 %v2152
        %v2187 = vunpack.c.h.b16 %v2152
        %v2188 = vunpack.c.l.b16 %v2153
        %v2189 = vunpack.c.h.b16 %v2153
        %v2190 = vunpack.c.l.b16 %v2154
        %v2191 = vunpack.c.h.b16 %v2154
        %v2192 = vunpack.c.l.b16 %v2155
        %v2193 = vunpack.c.h.b16 %v2155
        %v2194 = vunpack.c.l.b16 %v2156
        %v2195 = vunpack.c.h.b16 %v2156
        %v2196 = vunpack.c.l.b16 %v2157
        %v2197 = vunpack.c.h.b16 %v2157
        %v2198 = vunpack.c.l.b16 %v2158
        %v2199 = vunpack.c.h.b16 %v2158
        %v2200 = vunpack.c.l.b16 %v2159
        %v2201 = vunpack.c.h.b16 %v2159
        %v2202 = vunpack.c.l.b16 %v2160
        %v2203 = vunpack.c.h.b16 %v2160
        %v2204 = vunpack.c.l.b16 %v2161
        %v2205 = vunpack.c.h.b16 %v2161
        %v2206 = vunpack.c.l.b16 %v2162
        %v2207 = vunpack.c.h.b16 %v2162
        %v2208 = vunpack.c.l.b16 %v2163
        %v2209 = vunpack.c.h.b16 %v2163
        %v2210 = vunpack.c.l.b16 %v2164
        %v2211 = vunpack.c.h.b16 %v2164
        %v2212 = vunpack.c.l.b16 %v2165
        %v2213 = vunpack.c.h.b16 %v2165
        %v2214 = vpack.c.b16 %v2184, %v2182
        %v2215 = vpack.c.b16 %v2185, %v2183
        %v2216 = vpack.c.b16 %v2188, %v2186
        %v2217 = vpack.c.b16 %v2189, %v2187
        %v2218 = vpack.c.b16 %v2192, %v2190
        %v2219 = vpack.c.b16 %v2193, %v2191
        %v2220 = vpack.c.b16 %v2196, %v2194
        %v2221 = vpack.c.b16 %v2197, %v2195
        %v2222 = vpack.c.b16 %v2200, %v2198
        %v2223 = vpack.c.b16 %v2201, %v2199
        %v2224 = vpack.c.b16 %v2204, %v2202
        %v2225 = vpack.c.b16 %v2205, %v2203
        %v2226 = vpack.c.b16 %v2208, %v2206
        %v2227 = vpack.c.b16 %v2209, %v2207
        %v2228 = vpack.c.b16 %v2212, %v2210
        %v2229 = vpack.c.b16 %v2213, %v2211
        %2246 = vmatprep.subr.bf16.mxu0 %v2215
        %2247 = vmatpush1.bf16.msra.mxu0 %v2214
        %2248 = vmatprep.subr.bf16.mxu0 %v2217
        %2249 = vmatpush1.bf16.msra.mxu0 %v2216
        %2250 = vmatprep.subr.bf16.mxu0 %v2219
        %2251 = vmatpush1.bf16.msra.mxu0 %v2218
        %2252 = vmatprep.subr.bf16.mxu0 %v2221
        %2253 = vmatpush1.bf16.msra.mxu0 %v2220
        %2254 = vmatprep.subr.bf16.mxu0 %v2223
        %2255 = vmatpush1.bf16.msra.mxu0 %v2222
        %2256 = vmatprep.subr.bf16.mxu0 %v2225
        %2257 = vmatpush1.bf16.msra.mxu0 %v2224
        %2258 = vmatprep.subr.bf16.mxu0 %v2227
        %2259 = vmatpush1.bf16.msra.mxu0 %v2226
        %2260 = vmatprep.subr.bf16.mxu0 %v2229
        %2261 = vmatpush1.bf16.msra.mxu0 %v2228
        %2262 = vmatprep.subr.bf16.mxu0 0
        %2263 = vmatpush1.bf16.msra.mxu0 0
        %2264 = vmatprep.subr.bf16.mxu0 0
        %2265 = vmatpush1.bf16.msra.mxu0 0
        %2266 = vmatprep.subr.bf16.mxu0 0
        %2267 = vmatpush1.bf16.msra.mxu0 0
        %2268 = vmatprep.subr.bf16.mxu0 0
        %2269 = vmatpush1.bf16.msra.mxu0 0
        %2270 = vmatprep.subr.bf16.mxu0 0
        %2271 = vmatpush1.bf16.msra.mxu0 0
        %2272 = vmatprep.subr.bf16.mxu0 0
        %2273 = vmatpush1.bf16.msra.mxu0 0
        %2274 = vmatprep.subr.bf16.mxu0 0
        %2275 = vmatpush1.bf16.msra.mxu0 0
        %2276 = vmatprep.subr.bf16.mxu0 0
        %2277 = vmatpush1.bf16.msra.mxu0 0
        %2278 = vmatprep.mubr.bf16.mxu0 0
        %2279 = vmatmul.mubr.bf16.gmra.mrb[0].mxu0 %v2149
        %v2280 = vpop.f32.mrb[0].mxu0
        %v2281 = vadd.f32 0.0, %v2280
        %v2282 = vpop.f32.mrb[0].mxu0
        %v2283 = vadd.f32 0.0, %v2282
        %v2284 = vpop.f32.mrb[0].mxu0
        %v2285 = vadd.f32 0.0, %v2284
        %v2286 = vpop.f32.mrb[0].mxu0
        %v2287 = vadd.f32 0.0, %v2286
        %2288 = vdwg.mxu0
        %v2289 = vld [vmem:[#allocation10] sm:$0x1]
        %v2291 = vlaneseq
        %v2292 = vshrl.u32 %v2291, 7
        %v2293 = vsub.s32 0, %v2292
        %v2294 = vrot.slane %v2289, %v2293
        %v2296 = vadd.f32 %v2281, %v2294
        %v2297 = vadd.f32 %v2285, %v2294
        %v2298 = vld [vmem:[%s21] sm:$0xf]
        %v2299 = vld [vmem:[%s21 + $0x4] sm:$0xf]
        %v2300 = vld [vmem:[%s21 + $0x8] sm:$0xf]
        %v2301 = vld [vmem:[%s21 + $0xc] sm:$0xf]
        %v2302 = vld [vmem:[%s21 + $0x10] sm:$0xf]
        %v2303 = vld [vmem:[%s21 + $0x14] sm:$0xf]
        %v2304 = vld [vmem:[%s21 + $0x18] sm:$0xf]
        %v2305 = vld [vmem:[%s21 + $0x1c] sm:$0xf]
        %v2306 = vld [vmem:[%s21 + $0x20] sm:$0xf]
        %v2307 = vld [vmem:[%s21 + $0x24] sm:$0xf]
        %v2308 = vld [vmem:[%s21 + $0x28] sm:$0xf]
        %v2309 = vld [vmem:[%s21 + $0x2c] sm:$0xf]
        %v2310 = vld [vmem:[%s21 + $0x30] sm:$0xf]
        %v2311 = vld [vmem:[%s21 + $0x34] sm:$0xf]
        %v2312 = vld [vmem:[%s21 + $0x38] sm:$0xf]
        %v2313 = vld [vmem:[%s21 + $0x3c] sm:$0xf]
        %v2314 = vpack.c.bf16 %v2287, %v2283
        %vm2315 = vcmask 130048
        %v2317 = vsel %vm2315, %v2141, 0
        %v2320 = vsel %vm2315, %v2142, 0
        %v2323 = vsel %vm2315, %v2143, 0
        %v2326 = vsel %vm2315, %v2144, 0
        %v2329 = vsel %vm2315, %v2145, 0
        %v2332 = vsel %vm2315, %v2146, 0
        %v2335 = vsel %vm2315, %v2147, 0
        %v2338 = vsel %vm2315, %v2148, 0
        %2340 = vmatprep.subr.bf16.mxu0 0
        %2341 = vmatpush1.bf16.msra.mxu0 %v2314
        %2342 = vmatprep.subr.bf16.mxu0 0
        %2343 = vmatpush1.bf16.msra.mxu0 0
        %2344 = vmatprep.subr.bf16.mxu0 0
        %2345 = vmatpush1.bf16.msra.mxu0 0
        %2346 = vmatprep.subr.bf16.mxu0 0
        %2347 = vmatpush1.bf16.msra.mxu0 0
        %2348 = vmatprep.subr.bf16.mxu0 0
        %2349 = vmatpush1.bf16.msra.mxu0 0
        %2350 = vmatprep.subr.bf16.mxu0 0
        %2351 = vmatpush1.bf16.msra.mxu0 0
        %2352 = vmatprep.subr.bf16.mxu0 0
        %2353 = vmatpush1.bf16.msra.mxu0 0
        %2354 = vmatprep.subr.bf16.mxu0 0
        %2355 = vmatpush1.bf16.msra.mxu0 0
        %2356 = vmatprep.subr.bf16.mxu0 0
        %2357 = vmatpush1.bf16.msra.mxu0 0
        %2358 = vmatprep.subr.bf16.mxu0 0
        %2359 = vmatpush1.bf16.msra.mxu0 0
        %2360 = vmatprep.subr.bf16.mxu0 0
        %2361 = vmatpush1.bf16.msra.mxu0 0
        %2362 = vmatprep.subr.bf16.mxu0 0
        %2363 = vmatpush1.bf16.msra.mxu0 0
        %2364 = vmatprep.subr.bf16.mxu0 0
        %2365 = vmatpush1.bf16.msra.mxu0 0
        %2366 = vmatprep.subr.bf16.mxu0 0
        %2367 = vmatpush1.bf16.msra.mxu0 0
        %2368 = vmatprep.subr.bf16.mxu0 0
        %2369 = vmatpush1.bf16.msra.mxu0 0
        %2370 = vmatprep.subr.bf16.mxu0 0
        %2371 = vmatpush1.bf16.msra.mxu0 0
        %2372 = vmatprep.mubr.bf16.mxu0 0
        %2373 = vmatmul.mubr.bf16.gmra.mrb[0].mxu0 %v2317
        %v2374 = vpop.f32.mrb[0].mxu0
        %v2375 = vadd.f32 0.0, %v2374
        %v2376 = vpop.f32.mrb[0].mxu0
        %v2377 = vpop.f32.mrb[0].mxu0
        %v2378 = vadd.f32 0.0, %v2377
        %v2379 = vpop.f32.mrb[0].mxu0
        %2380 = vmatprep.mubr.bf16.mxu0 0
        %2381 = vmatmul.mubr.bf16.gmra.mrb[0].mxu0 %v2320
        %v2382 = vpop.f32.mrb[0].mxu0
        %v2383 = vadd.f32 0.0, %v2382
        %v2384 = vpop.f32.mrb[0].mxu0
        %v2385 = vpop.f32.mrb[0].mxu0
        %v2386 = vadd.f32 0.0, %v2385
        %v2387 = vpop.f32.mrb[0].mxu0
        %2388 = vmatprep.mubr.bf16.mxu0 0
        %2389 = vmatmul.mubr.bf16.gmra.mrb[0].mxu0 %v2323
        %v2390 = vpop.f32.mrb[0].mxu0
        %v2391 = vadd.f32 0.0, %v2390
        %v2392 = vpop.f32.mrb[0].mxu0
        %v2393 = vpop.f32.mrb[0].mxu0
        %v2394 = vadd.f32 0.0, %v2393
        %v2395 = vpop.f32.mrb[0].mxu0
        %2396 = vmatprep.mubr.bf16.mxu0 0
        %2397 = vmatmul.mubr.bf16.gmra.mrb[0].mxu0 %v2326
        %v2398 = vpop.f32.mrb[0].mxu0
        %v2399 = vadd.f32 0.0, %v2398
        %v2400 = vpop.f32.mrb[0].mxu0
        %v2401 = vpop.f32.mrb[0].mxu0
        %v2402 = vadd.f32 0.0, %v2401
        %v2403 = vpop.f32.mrb[0].mxu0
        %2404 = vmatprep.mubr.bf16.mxu0 0
        %2405 = vmatmul.mubr.bf16.gmra.mrb[0].mxu0 %v2329
        %v2406 = vpop.f32.mrb[0].mxu0
        %v2407 = vadd.f32 0.0, %v2406
        %v2408 = vpop.f32.mrb[0].mxu0
        %v2409 = vpop.f32.mrb[0].mxu0
        %v2410 = vadd.f32 0.0, %v2409
        %v2411 = vpop.f32.mrb[0].mxu0
        %2412 = vmatprep.mubr.bf16.mxu0 0
        %2413 = vmatmul.mubr.bf16.gmra.mrb[0].mxu0 %v2332
        %v2414 = vpop.f32.mrb[0].mxu0
        %v2415 = vadd.f32 0.0, %v2414
        %v2416 = vpop.f32.mrb[0].mxu0
        %v2417 = vpop.f32.mrb[0].mxu0
        %v2418 = vadd.f32 0.0, %v2417
        %v2419 = vpop.f32.mrb[0].mxu0
        %2420 = vmatprep.mubr.bf16.mxu0 0
        %2421 = vmatmul.mubr.bf16.gmra.mrb[0].mxu0 %v2335
        %v2422 = vpop.f32.mrb[0].mxu0
        %v2423 = vadd.f32 0.0, %v2422
        %v2424 = vpop.f32.mrb[0].mxu0
        %v2425 = vpop.f32.mrb[0].mxu0
        %v2426 = vadd.f32 0.0, %v2425
        %v2427 = vpop.f32.mrb[0].mxu0
        %2428 = vmatprep.mubr.bf16.mxu0 0
        %2429 = vmatmul.mubr.bf16.gmra.mrb[0].mxu0 %v2338
        %v2430 = vpop.f32.mrb[0].mxu0
        %v2431 = vadd.f32 0.0, %v2430
        %v2432 = vpop.f32.mrb[0].mxu0
        %v2433 = vpop.f32.mrb[0].mxu0
        %v2434 = vadd.f32 0.0, %v2433
        %v2435 = vpop.f32.mrb[0].mxu0
        %2436 = vdwg.mxu0
        %v2453 = vunpack.c.l.b16 %v2298
        %v2454 = vunpack.c.l.b16 %v2299
        %v2455 = vunpack.c.l.b16 %v2300
        %v2456 = vunpack.c.l.b16 %v2301
        %v2457 = vunpack.c.l.b16 %v2302
        %v2458 = vunpack.c.l.b16 %v2303
        %v2459 = vunpack.c.l.b16 %v2304
        %v2460 = vunpack.c.l.b16 %v2305
        %v2461 = vunpack.c.l.b16 %v2306
        %v2462 = vunpack.c.l.b16 %v2307
        %v2463 = vunpack.c.l.b16 %v2308
        %v2464 = vunpack.c.l.b16 %v2309
        %v2465 = vunpack.c.l.b16 %v2310
        %v2466 = vunpack.c.l.b16 %v2311
        %v2467 = vunpack.c.l.b16 %v2312
        %v2468 = vunpack.c.l.b16 %v2313
        %v2469 = vpack.c.b16 %v2454, %v2453
        %v2470 = vpack.c.b16 %v2456, %v2455
        %v2471 = vpack.c.b16 %v2458, %v2457
        %v2472 = vpack.c.b16 %v2460, %v2459
        %v2473 = vpack.c.b16 %v2462, %v2461
        %v2474 = vpack.c.b16 %v2464, %v2463
        %v2475 = vpack.c.b16 %v2466, %v2465
        %v2476 = vpack.c.b16 %v2468, %v2467
        %2485 = vmatprep.subr.bf16.mxu0 0
        %2486 = vmatpush1.bf16.msra.mxu0 %v2469
        %2487 = vmatprep.subr.bf16.mxu0 0
        %2488 = vmatpush1.bf16.msra.mxu0 %v2470
        %2489 = vmatprep.subr.bf16.mxu0 0
        %2490 = vmatpush1.bf16.msra.mxu0 %v2471
        %2491 = vmatprep.subr.bf16.mxu0 0
        %2492 = vmatpush1.bf16.msra.mxu0 %v2472
        %2493 = vmatprep.subr.bf16.mxu0 0
        %2494 = vmatpush1.bf16.msra.mxu0 %v2473
        %2495 = vmatprep.subr.bf16.mxu0 0
        %2496 = vmatpush1.bf16.msra.mxu0 %v2474
        %2497 = vmatprep.subr.bf16.mxu0 0
        %2498 = vmatpush1.bf16.msra.mxu0 %v2475
        %2499 = vmatprep.subr.bf16.mxu0 0
        %2500 = vmatpush1.bf16.msra.mxu0 %v2476
        %2501 = vmatprep.subr.bf16.mxu0 0
        %2502 = vmatpush1.bf16.msra.mxu0 0
        %2503 = vmatprep.subr.bf16.mxu0 0
        %2504 = vmatpush1.bf16.msra.mxu0 0
        %2505 = vmatprep.subr.bf16.mxu0 0
        %2506 = vmatpush1.bf16.msra.mxu0 0
        %2507 = vmatprep.subr.bf16.mxu0 0
        %2508 = vmatpush1.bf16.msra.mxu0 0
        %2509 = vmatprep.subr.bf16.mxu0 0
        %2510 = vmatpush1.bf16.msra.mxu0 0
        %2511 = vmatprep.subr.bf16.mxu0 0
        %2512 = vmatpush1.bf16.msra.mxu0 0
        %2513 = vmatprep.subr.bf16.mxu0 0
        %2514 = vmatpush1.bf16.msra.mxu0 0
        %2515 = vmatprep.subr.bf16.mxu0 0
        %2516 = vmatpush1.bf16.msra.mxu0 0
        %2517 = vmatprep.mubr.bf16.mxu0 0
        %2518 = vmatmul.mubr.bf16.gmra.mrb[0].mxu0 %v2035
        %v2519 = vpop.f32.mrb[0].mxu0
        %v2520 = vadd.f32 %v2375, %v2519
        %v2521 = vpop.f32.mrb[0].mxu0
        %v2522 = vpop.f32.mrb[0].mxu0
        %v2523 = vadd.f32 %v2378, %v2522
        %v2524 = vpop.f32.mrb[0].mxu0
        %2525 = vmatprep.mubr.bf16.mxu0 0
        %2526 = vmatmul.mubr.bf16.gmra.mrb[0].mxu0 %v2036
        %v2527 = vpop.f32.mrb[0].mxu0
        %v2528 = vadd.f32 %v2383, %v2527
        %v2529 = vpop.f32.mrb[0].mxu0
        %v2530 = vpop.f32.mrb[0].mxu0
        %v2531 = vadd.f32 %v2386, %v2530
        %v2532 = vpop.f32.mrb[0].mxu0
        %2533 = vmatprep.mubr.bf16.mxu0 0
        %2534 = vmatmul.mubr.bf16.gmra.mrb[0].mxu0 %v2037
        %v2535 = vpop.f32.mrb[0].mxu0
        %v2536 = vadd.f32 %v2391, %v2535
        %v2537 = vpop.f32.mrb[0].mxu0
        %v2538 = vpop.f32.mrb[0].mxu0
        %v2539 = vadd.f32 %v2394, %v2538
        %v2540 = vpop.f32.mrb[0].mxu0
        %2541 = vmatprep.mubr.bf16.mxu0 0
        %2542 = vmatmul.mubr.bf16.gmra.mrb[0].mxu0 %v2038
        %v2543 = vpop.f32.mrb[0].mxu0
        %v2544 = vadd.f32 %v2399, %v2543
        %v2545 = vpop.f32.mrb[0].mxu0
        %v2546 = vpop.f32.mrb[0].mxu0
        %v2547 = vadd.f32 %v2402, %v2546
        %v2548 = vpop.f32.mrb[0].mxu0
        %2549 = vmatprep.mubr.bf16.mxu0 0
        %2550 = vmatmul.mubr.bf16.gmra.mrb[0].mxu0 %v2039
        %v2551 = vpop.f32.mrb[0].mxu0
        %v2552 = vadd.f32 %v2407, %v2551
        %v2553 = vpop.f32.mrb[0].mxu0
        %v2554 = vpop.f32.mrb[0].mxu0
        %v2555 = vadd.f32 %v2410, %v2554
        %v2556 = vpop.f32.mrb[0].mxu0
        %2557 = vmatprep.mubr.bf16.mxu0 0
        %2558 = vmatmul.mubr.bf16.gmra.mrb[0].mxu0 %v2040
        %v2559 = vpop.f32.mrb[0].mxu0
        %v2560 = vadd.f32 %v2415, %v2559
        %v2561 = vpop.f32.mrb[0].mxu0
        %v2562 = vpop.f32.mrb[0].mxu0
        %v2563 = vadd.f32 %v2418, %v2562
        %v2564 = vpop.f32.mrb[0].mxu0
        %2565 = vmatprep.mubr.bf16.mxu0 0
        %2566 = vmatmul.mubr.bf16.gmra.mrb[0].mxu0 %v2041
        %v2567 = vpop.f32.mrb[0].mxu0
        %v2568 = vadd.f32 %v2423, %v2567
        %v2569 = vpop.f32.mrb[0].mxu0
        %v2570 = vpop.f32.mrb[0].mxu0
        %v2571 = vadd.f32 %v2426, %v2570
        %v2572 = vpop.f32.mrb[0].mxu0
        %2573 = vmatprep.mubr.bf16.mxu0 0
        %2574 = vmatmul.mubr.bf16.gmra.mrb[0].mxu0 %v2042
        %v2575 = vpop.f32.mrb[0].mxu0
        %v2576 = vadd.f32 %v2431, %v2575
        %v2577 = vpop.f32.mrb[0].mxu0
        %v2578 = vpop.f32.mrb[0].mxu0
        %v2579 = vadd.f32 %v2434, %v2578
        %v2580 = vpop.f32.mrb[0].mxu0
        %2581 = vdwg.mxu0
        %v2582 = vld [vmem:[#allocation11] sm:$0xf]
        %v2583 = vld [vmem:[#allocation11 + $0x4] sm:$0xf]
        %v2584 = vld [vmem:[#allocation11 + $0x8] sm:$0xf]
        %v2585 = vld [vmem:[#allocation11 + $0xc] sm:$0xf]
        %v2586 = vld [vmem:[#allocation11 + $0x10] sm:$0xf]
        %v2587 = vld [vmem:[#allocation11 + $0x14] sm:$0xf]
        %v2588 = vld [vmem:[#allocation11 + $0x18] sm:$0xf]
        %v2589 = vld [vmem:[#allocation11 + $0x1c] sm:$0xf]
        %v2590 = vld [vmem:[#allocation11 + $0x20] sm:$0xf]
        %v2591 = vld [vmem:[#allocation11 + $0x24] sm:$0xf]
        %v2592 = vld [vmem:[#allocation11 + $0x28] sm:$0xf]
        %v2593 = vld [vmem:[#allocation11 + $0x2c] sm:$0xf]
        %v2594 = vld [vmem:[#allocation11 + $0x30] sm:$0xf]
        %v2595 = vld [vmem:[#allocation11 + $0x34] sm:$0xf]
        %v2596 = vld [vmem:[#allocation11 + $0x38] sm:$0xf]
        %v2597 = vld [vmem:[#allocation11 + $0x3c] sm:$0xf]
        %v2598 = vld [vmem:[#allocation13] sm:$0x1]
        %v2599 = vld [vmem:[#allocation14] sm:$0xf]
        %v2600 = vld [vmem:[#allocation14 + $0x4] sm:$0xf]
        %v2601 = vld [vmem:[#allocation14 + $0x8] sm:$0xf]
        %v2602 = vld [vmem:[#allocation14 + $0xc] sm:$0xf]
        %v2603 = vld [vmem:[#allocation14 + $0x10] sm:$0xf]
        %v2604 = vld [vmem:[#allocation14 + $0x14] sm:$0xf]
        %v2605 = vld [vmem:[#allocation14 + $0x18] sm:$0xf]
        %v2606 = vld [vmem:[#allocation14 + $0x1c] sm:$0xf]
        %v2607 = vld [vmem:[#allocation14 + $0x20] sm:$0xf]
        %v2608 = vld [vmem:[#allocation14 + $0x24] sm:$0xf]
        %v2609 = vld [vmem:[#allocation14 + $0x28] sm:$0xf]
        %v2610 = vld [vmem:[#allocation14 + $0x2c] sm:$0xf]
        %v2611 = vld [vmem:[#allocation14 + $0x30] sm:$0xf]
        %v2612 = vld [vmem:[#allocation14 + $0x34] sm:$0xf]
        %v2613 = vld [vmem:[#allocation14 + $0x38] sm:$0xf]
        %v2614 = vld [vmem:[#allocation14 + $0x3c] sm:$0xf]
        %v2615 = vld [vmem:[#allocation16] sm:$0x1]
        %v2616 = vld [vmem:[#allocation17] sm:$0x1]
        %v2617 = vld [vmem:[#allocation19] sm:$0x1]
        %v2618 = vld [vmem:[%s37] sm:$0xff]
        %v2619 = vld [vmem:[%s37 + $0x8] sm:$0xff]
        %v2620 = vld [vmem:[%s37 + $0x10] sm:$0xff]
        %v2621 = vld [vmem:[%s37 + $0x18] sm:$0xff]
        %v2622 = vld [vmem:[%s37 + $0x20] sm:$0xff]
        %v2623 = vld [vmem:[%s37 + $0x28] sm:$0xff]
        %v2624 = vld [vmem:[%s37 + $0x30] sm:$0xff]
        %v2625 = vld [vmem:[%s37 + $0x38] sm:$0xff]
        %v2626 = vld [vmem:[%s37 + $0x40] sm:$0xff]
        %v2627 = vld [vmem:[%s37 + $0x48] sm:$0xff]
        %v2628 = vld [vmem:[%s37 + $0x50] sm:$0xff]
        %v2629 = vld [vmem:[%s37 + $0x58] sm:$0xff]
        %v2630 = vld [vmem:[%s37 + $0x60] sm:$0xff]
        %v2631 = vld [vmem:[%s37 + $0x68] sm:$0xff]
        %v2632 = vld [vmem:[%s37 + $0x70] sm:$0xff]
        %v2633 = vld [vmem:[%s37 + $0x78] sm:$0xff]
        %v2634 = vld [vmem:[%s37 + $0x80] sm:$0xff]
        %v2635 = vld [vmem:[%s37 + $0x88] sm:$0xff]
        %v2636 = vld [vmem:[%s37 + $0x90] sm:$0xff]
        %v2637 = vld [vmem:[%s37 + $0x98] sm:$0xff]
        %v2638 = vld [vmem:[%s37 + $0xa0] sm:$0xff]
        %v2639 = vld [vmem:[%s37 + $0xa8] sm:$0xff]
        %v2640 = vld [vmem:[%s37 + $0xb0] sm:$0xff]
        %v2641 = vld [vmem:[%s37 + $0xb8] sm:$0xff]
        %v2642 = vld [vmem:[%s37 + $0xc0] sm:$0xff]
        %v2643 = vld [vmem:[%s37 + $0xc8] sm:$0xff]
        %v2644 = vld [vmem:[%s37 + $0xd0] sm:$0xff]
        %v2645 = vld [vmem:[%s37 + $0xd8] sm:$0xff]
        %v2646 = vld [vmem:[%s37 + $0xe0] sm:$0xff]
        %v2647 = vld [vmem:[%s37 + $0xe8] sm:$0xff]
        %v2648 = vld [vmem:[%s37 + $0xf0] sm:$0xff]
        %v2649 = vld [vmem:[%s37 + $0xf8] sm:$0xff]
        %v2650 = vld [vmem:[#allocation20] sm:$0xf]
        %v2651 = vld [vmem:[#allocation22] sm:$0xf]
        %v2652 = vld [vmem:[#allocation22 + $0x4] sm:$0xf]
        %v2653 = vld [vmem:[#allocation22 + $0x8] sm:$0xf]
        %v2654 = vld [vmem:[#allocation22 + $0xc] sm:$0xf]
        %v2655 = vld [vmem:[#allocation22 + $0x10] sm:$0xf]
        %v2656 = vld [vmem:[#allocation22 + $0x14] sm:$0xf]
        %v2657 = vld [vmem:[#allocation22 + $0x18] sm:$0xf]
        %v2658 = vld [vmem:[#allocation22 + $0x1c] sm:$0xf]
        %v2659 = vld [vmem:[#allocation22 + $0x20] sm:$0xf]
        %v2660 = vld [vmem:[#allocation22 + $0x24] sm:$0xf]
        %v2661 = vld [vmem:[#allocation22 + $0x28] sm:$0xf]
        %v2662 = vld [vmem:[#allocation22 + $0x2c] sm:$0xf]
        %v2663 = vld [vmem:[#allocation22 + $0x30] sm:$0xf]
        %v2664 = vld [vmem:[#allocation22 + $0x34] sm:$0xf]
        %v2665 = vld [vmem:[#allocation22 + $0x38] sm:$0xf]
        %v2666 = vld [vmem:[#allocation22 + $0x3c] sm:$0xf]
        %v2667 = vld [vmem:[#allocation22 + $0x40] sm:$0xf]
        %v2668 = vld [vmem:[#allocation22 + $0x44] sm:$0xf]
        %v2669 = vld [vmem:[#allocation22 + $0x48] sm:$0xf]
        %v2670 = vld [vmem:[#allocation22 + $0x4c] sm:$0xf]
        %v2671 = vld [vmem:[#allocation22 + $0x50] sm:$0xf]
        %v2672 = vld [vmem:[#allocation22 + $0x54] sm:$0xf]
        %v2673 = vld [vmem:[#allocation22 + $0x58] sm:$0xf]
        %v2674 = vld [vmem:[#allocation22 + $0x5c] sm:$0xf]
        %v2675 = vld [vmem:[#allocation22 + $0x60] sm:$0xf]
        %v2676 = vld [vmem:[#allocation22 + $0x64] sm:$0xf]
        %v2677 = vld [vmem:[#allocation22 + $0x68] sm:$0xf]
        %v2678 = vld [vmem:[#allocation22 + $0x6c] sm:$0xf]
        %v2679 = vld [vmem:[#allocation22 + $0x70] sm:$0xf]
        %v2680 = vld [vmem:[#allocation22 + $0x74] sm:$0xf]
        %v2681 = vld [vmem:[#allocation22 + $0x78] sm:$0xf]
        %v2682 = vld [vmem:[#allocation22 + $0x7c] sm:$0xf]
        %v2683 = vld [vmem:[#allocation22 + $0x80] sm:$0xf]
        %v2684 = vld [vmem:[#allocation22 + $0x84] sm:$0xf]
        %v2685 = vld [vmem:[#allocation22 + $0x88] sm:$0xf]
        %v2686 = vld [vmem:[#allocation22 + $0x8c] sm:$0xf]
        %v2687 = vld [vmem:[#allocation22 + $0x90] sm:$0xf]
        %v2688 = vld [vmem:[#allocation22 + $0x94] sm:$0xf]
        %v2689 = vld [vmem:[#allocation22 + $0x98] sm:$0xf]
        %v2690 = vld [vmem:[#allocation22 + $0x9c] sm:$0xf]
        %v2691 = vld [vmem:[#allocation22 + $0xa0] sm:$0xf]
        %v2692 = vld [vmem:[#allocation22 + $0xa4] sm:$0xf]
        %v2693 = vld [vmem:[#allocation22 + $0xa8] sm:$0xf]
        %v2694 = vld [vmem:[#allocation22 + $0xac] sm:$0xf]
        %v2695 = vld [vmem:[#allocation22 + $0xb0] sm:$0xf]
        %v2696 = vld [vmem:[#allocation22 + $0xb4] sm:$0xf]
        %v2697 = vld [vmem:[#allocation22 + $0xb8] sm:$0xf]
        %v2698 = vld [vmem:[#allocation22 + $0xbc] sm:$0xf]
        %v2699 = vld [vmem:[#allocation22 + $0xc0] sm:$0xf]
        %v2700 = vld [vmem:[#allocation22 + $0xc4] sm:$0xf]
        %v2701 = vld [vmem:[#allocation22 + $0xc8] sm:$0xf]
        %v2702 = vld [vmem:[#allocation22 + $0xcc] sm:$0xf]
        %v2703 = vld [vmem:[#allocation22 + $0xd0] sm:$0xf]
        %v2704 = vld [vmem:[#allocation22 + $0xd4] sm:$0xf]
        %v2705 = vld [vmem:[#allocation22 + $0xd8] sm:$0xf]
        %v2706 = vld [vmem:[#allocation22 + $0xdc] sm:$0xf]
        %v2707 = vld [vmem:[#allocation22 + $0xe0] sm:$0xf]
        %v2708 = vld [vmem:[#allocation22 + $0xe4] sm:$0xf]
        %v2709 = vld [vmem:[#allocation22 + $0xe8] sm:$0xf]
        %v2710 = vld [vmem:[#allocation22 + $0xec] sm:$0xf]
        %v2711 = vld [vmem:[#allocation22 + $0xf0] sm:$0xf]
        %v2712 = vld [vmem:[#allocation22 + $0xf4] sm:$0xf]
        %v2713 = vld [vmem:[#allocation22 + $0xf8] sm:$0xf]
        %v2714 = vld [vmem:[#allocation22 + $0xfc] sm:$0xf]
        %v2715 = vld [vmem:[#allocation23] sm:$0x1]
        %v2716 = vld [vmem:[#allocation25] sm:$0x1]
        %v2717 = vld [vmem:[#allocation26] sm:$0x1]
        %v2720 = vcombine.high %v2296, %v2296
        %v2722 = vunpack.c.l.s4 1966171168
        %v2723 = vunpack.c.0.s8 %v2722
        %v2724 = vlaneseq
        %v2725 = vshrl.u32 %v2724, 7
        %v2726 = vsub.s32 %v2723, %v2725
        %v2727 = vrot.slane %v2296, %v2726
        %v2729 = vunpack.c.l.s4 1966171168
        %v2730 = vunpack.c.0.s8 %v2729
        %v2731 = vlaneseq
        %v2732 = vshrl.u32 %v2731, 7
        %v2733 = vsub.s32 %v2730, %v2732
        %v2734 = vrot.slane %v2720, %v2733
        %v2735 = vcombine.high %v2727, %v2727
        %v2736 = vcombine.high %v2734, %v2734
        %v2738 = vunpack.c.l.s4 1966171168
        %v2739 = vunpack.c.0.s8 %v2738
        %v2740 = vlaneseq
        %v2741 = vshrl.u32 %v2740, 7
        %v2742 = vsub.s32 %v2739, %v2741
        %v2743 = vrot.slane %v2727, %v2742
        %v2745 = vunpack.c.l.s4 1966171168
        %v2746 = vunpack.c.0.s8 %v2745
        %v2747 = vlaneseq
        %v2748 = vshrl.u32 %v2747, 7
        %v2749 = vsub.s32 %v2746, %v2748
        %v2750 = vrot.slane %v2734, %v2749
        %v2752 = vunpack.c.l.s4 1966171168
        %v2753 = vunpack.c.0.s8 %v2752
        %v2754 = vlaneseq
        %v2755 = vshrl.u32 %v2754, 7
        %v2756 = vsub.s32 %v2753, %v2755
        %v2757 = vrot.slane %v2735, %v2756
        %v2759 = vunpack.c.l.s4 1966171168
        %v2760 = vunpack.c.0.s8 %v2759
        %v2761 = vlaneseq
        %v2762 = vshrl.u32 %v2761, 7
        %v2763 = vsub.s32 %v2760, %v2762
        %v2764 = vrot.slane %v2736, %v2763
        %v2765 = vcombine.high %v2743, %v2743
        %v2766 = vcombine.high %v2750, %v2750
        %v2767 = vcombine.high %v2757, %v2757
        %v2768 = vcombine.high %v2764, %v2764
        %v2769 = vcombine.high %v2297, %v2297
        %v2771 = vunpack.c.l.s4 1966171168
        %v2772 = vunpack.c.0.s8 %v2771
        %v2773 = vlaneseq
        %v2774 = vshrl.u32 %v2773, 7
        %v2775 = vsub.s32 %v2772, %v2774
        %v2776 = vrot.slane %v2297, %v2775
        %v2778 = vunpack.c.l.s4 1966171168
        %v2779 = vunpack.c.0.s8 %v2778
        %v2780 = vlaneseq
        %v2781 = vshrl.u32 %v2780, 7
        %v2782 = vsub.s32 %v2779, %v2781
        %v2783 = vrot.slane %v2769, %v2782
        %v2784 = vcombine.high %v2776, %v2776
        %v2785 = vcombine.high %v2783, %v2783
        %v2787 = vunpack.c.l.s4 1966171168
        %v2788 = vunpack.c.0.s8 %v2787
        %v2789 = vlaneseq
        %v2790 = vshrl.u32 %v2789, 7
        %v2791 = vsub.s32 %v2788, %v2790
        %v2792 = vrot.slane %v2776, %v2791
        %v2794 = vunpack.c.l.s4 1966171168
        %v2795 = vunpack.c.0.s8 %v2794
        %v2796 = vlaneseq
        %v2797 = vshrl.u32 %v2796, 7
        %v2798 = vsub.s32 %v2795, %v2797
        %v2799 = vrot.slane %v2783, %v2798
        %v2801 = vunpack.c.l.s4 1966171168
        %v2802 = vunpack.c.0.s8 %v2801
        %v2803 = vlaneseq
        %v2804 = vshrl.u32 %v2803, 7
        %v2805 = vsub.s32 %v2802, %v2804
        %v2806 = vrot.slane %v2784, %v2805
        %v2808 = vunpack.c.l.s4 1966171168
        %v2809 = vunpack.c.0.s8 %v2808
        %v2810 = vlaneseq
        %v2811 = vshrl.u32 %v2810, 7
        %v2812 = vsub.s32 %v2809, %v2811
        %v2813 = vrot.slane %v2785, %v2812
        %v2814 = vcombine.high %v2792, %v2792
        %v2815 = vcombine.high %v2799, %v2799
        %v2816 = vcombine.high %v2806, %v2806
        %v2817 = vcombine.high %v2813, %v2813
        %v2818 = vlaneseq
        %v2819 = vshrl.u32 %v2818, 7
        %v2820 = vsub.s32 0, %v2819
        %v2821 = vrot.slane %v2743, %v2820
        %v2822 = vlaneseq
        %v2823 = vshrl.u32 %v2822, 7
        %v2824 = vsub.s32 0, %v2823
        %v2825 = vrot.slane %v2757, %v2824
        %v2826 = vlaneseq
        %v2827 = vshrl.u32 %v2826, 7
        %v2828 = vsub.s32 0, %v2827
        %v2829 = vrot.slane %v2765, %v2828
        %v2830 = vlaneseq
        %v2831 = vshrl.u32 %v2830, 7
        %v2832 = vsub.s32 0, %v2831
        %v2833 = vrot.slane %v2767, %v2832
        %v2834 = vlaneseq
        %v2835 = vshrl.u32 %v2834, 7
        %v2836 = vsub.s32 0, %v2835
        %v2837 = vrot.slane %v2750, %v2836
        %v2838 = vlaneseq
        %v2839 = vshrl.u32 %v2838, 7
        %v2840 = vsub.s32 0, %v2839
        %v2841 = vrot.slane %v2764, %v2840
        %v2842 = vlaneseq
        %v2843 = vshrl.u32 %v2842, 7
        %v2844 = vsub.s32 0, %v2843
        %v2845 = vrot.slane %v2766, %v2844
        %v2846 = vlaneseq
        %v2847 = vshrl.u32 %v2846, 7
        %v2848 = vsub.s32 0, %v2847
        %v2849 = vrot.slane %v2768, %v2848
        %v2850 = vlaneseq
        %v2851 = vshrl.u32 %v2850, 7
        %v2852 = vsub.s32 0, %v2851
        %v2853 = vrot.slane %v2792, %v2852
        %v2854 = vlaneseq
        %v2855 = vshrl.u32 %v2854, 7
        %v2856 = vsub.s32 0, %v2855
        %v2857 = vrot.slane %v2806, %v2856
        %v2858 = vlaneseq
        %v2859 = vshrl.u32 %v2858, 7
        %v2860 = vsub.s32 0, %v2859
        %v2861 = vrot.slane %v2814, %v2860
        %v2862 = vlaneseq
        %v2863 = vshrl.u32 %v2862, 7
        %v2864 = vsub.s32 0, %v2863
        %v2865 = vrot.slane %v2816, %v2864
        %v2866 = vlaneseq
        %v2867 = vshrl.u32 %v2866, 7
        %v2868 = vsub.s32 0, %v2867
        %v2869 = vrot.slane %v2799, %v2868
        %v2870 = vlaneseq
        %v2871 = vshrl.u32 %v2870, 7
        %v2872 = vsub.s32 0, %v2871
        %v2873 = vrot.slane %v2813, %v2872
        %v2874 = vlaneseq
        %v2875 = vshrl.u32 %v2874, 7
        %v2876 = vsub.s32 0, %v2875
        %v2877 = vrot.slane %v2815, %v2876
        %v2878 = vlaneseq
        %v2879 = vshrl.u32 %v2878, 7
        %v2880 = vsub.s32 0, %v2879
        %v2881 = vrot.slane %v2817, %v2880
        %v2898 = vadd.f32 %v2520, %v2821
        %v2899 = vadd.f32 %v2523, %v2825
        %v2900 = vadd.f32 %v2528, %v2829
        %v2901 = vadd.f32 %v2531, %v2833
        %v2902 = vadd.f32 %v2536, %v2837
        %v2903 = vadd.f32 %v2539, %v2841
        %v2904 = vadd.f32 %v2544, %v2845
        %v2905 = vadd.f32 %v2547, %v2849
        %v2906 = vadd.f32 %v2552, %v2853
        %v2907 = vadd.f32 %v2555, %v2857
        %v2908 = vadd.f32 %v2560, %v2861
        %v2909 = vadd.f32 %v2563, %v2865
        %v2910 = vadd.f32 %v2568, %v2869
        %v2911 = vadd.f32 %v2571, %v2873
        %v2912 = vadd.f32 %v2576, %v2877
        %v2913 = vadd.f32 %v2579, %v2881
        %v2914 = vmax.f32 %v2898, 0.0
        %v2915 = vmax.f32 %v2899, 0.0
        %v2916 = vmax.f32 %v2900, 0.0
        %v2917 = vmax.f32 %v2901, 0.0
        %v2918 = vmax.f32 %v2902, 0.0
        %v2919 = vmax.f32 %v2903, 0.0
        %v2920 = vmax.f32 %v2904, 0.0
        %v2921 = vmax.f32 %v2905, 0.0
        %v2922 = vmax.f32 %v2906, 0.0
        %v2923 = vmax.f32 %v2907, 0.0
        %v2924 = vmax.f32 %v2908, 0.0
        %v2925 = vmax.f32 %v2909, 0.0
        %v2926 = vmax.f32 %v2910, 0.0
        %v2927 = vmax.f32 %v2911, 0.0
        %v2928 = vmax.f32 %v2912, 0.0
        %v2929 = vmax.f32 %v2913, 0.0
        %v2930 = vpack.c.bf16 %v2915, %v2914
        %v2931 = vpack.c.bf16 %v2917, %v2916
        %v2932 = vpack.c.bf16 %v2919, %v2918
        %v2933 = vpack.c.bf16 %v2921, %v2920
        %v2934 = vpack.c.bf16 %v2923, %v2922
        %v2935 = vpack.c.bf16 %v2925, %v2924
        %v2936 = vpack.c.bf16 %v2927, %v2926
        %v2937 = vpack.c.bf16 %v2929, %v2928
        %v2939 = vlaneseq
        %v2940 = vshrl.u32 %v2939, 7
        %v2941 = vsub.s32 0, %v2940
        %v2942 = vrot.slane %v2598, %v2941
        %v2960 = vunpack.c.l.b16 %v2582
        %v2961 = vunpack.c.l.b16 %v2583
        %v2962 = vunpack.c.l.b16 %v2584
        %v2963 = vunpack.c.l.b16 %v2585
        %v2964 = vunpack.c.l.b16 %v2586
        %v2965 = vunpack.c.l.b16 %v2587
        %v2966 = vunpack.c.l.b16 %v2588
        %v2967 = vunpack.c.l.b16 %v2589
        %v2968 = vunpack.c.l.b16 %v2590
        %v2969 = vunpack.c.l.b16 %v2591
        %v2970 = vunpack.c.l.b16 %v2592
        %v2971 = vunpack.c.l.b16 %v2593
        %v2972 = vunpack.c.l.b16 %v2594
        %v2973 = vunpack.c.l.b16 %v2595
        %v2974 = vunpack.c.l.b16 %v2596
        %v2975 = vunpack.c.l.b16 %v2597
        %v2976 = vpack.c.b16 %v2961, %v2960
        %v2977 = vpack.c.b16 %v2963, %v2962
        %v2978 = vpack.c.b16 %v2965, %v2964
        %v2979 = vpack.c.b16 %v2967, %v2966
        %v2980 = vpack.c.b16 %v2969, %v2968
        %v2981 = vpack.c.b16 %v2971, %v2970
        %v2982 = vpack.c.b16 %v2973, %v2972
        %v2983 = vpack.c.b16 %v2975, %v2974
        %2992 = vmatprep.subr.bf16.mxu0 0
        %2993 = vmatpush1.bf16.msra.mxu0 %v2976
        %2994 = vmatprep.subr.bf16.mxu0 0
        %2995 = vmatpush1.bf16.msra.mxu0 %v2977
        %2996 = vmatprep.subr.bf16.mxu0 0
        %2997 = vmatpush1.bf16.msra.mxu0 %v2978
        %2998 = vmatprep.subr.bf16.mxu0 0
        %2999 = vmatpush1.bf16.msra.mxu0 %v2979
        %3000 = vmatprep.subr.bf16.mxu0 0
        %3001 = vmatpush1.bf16.msra.mxu0 %v2980
        %3002 = vmatprep.subr.bf16.mxu0 0
        %3003 = vmatpush1.bf16.msra.mxu0 %v2981
        %3004 = vmatprep.subr.bf16.mxu0 0
        %3005 = vmatpush1.bf16.msra.mxu0 %v2982
        %3006 = vmatprep.subr.bf16.mxu0 0
        %3007 = vmatpush1.bf16.msra.mxu0 %v2983
        %3008 = vmatprep.subr.bf16.mxu0 0
        %3009 = vmatpush1.bf16.msra.mxu0 0
        %3010 = vmatprep.subr.bf16.mxu0 0
        %3011 = vmatpush1.bf16.msra.mxu0 0
        %3012 = vmatprep.subr.bf16.mxu0 0
        %3013 = vmatpush1.bf16.msra.mxu0 0
        %3014 = vmatprep.subr.bf16.mxu0 0
        %3015 = vmatpush1.bf16.msra.mxu0 0
        %3016 = vmatprep.subr.bf16.mxu0 0
        %3017 = vmatpush1.bf16.msra.mxu0 0
        %3018 = vmatprep.subr.bf16.mxu0 0
        %3019 = vmatpush1.bf16.msra.mxu0 0
        %3020 = vmatprep.subr.bf16.mxu0 0
        %3021 = vmatpush1.bf16.msra.mxu0 0
        %3022 = vmatprep.subr.bf16.mxu0 0
        %3023 = vmatpush1.bf16.msra.mxu0 0
        %3024 = vmatprep.mubr.bf16.mxu0 0
        %3025 = vmatmul.mubr.bf16.gmra.mrb[0].mxu0 %v2930
        %v3026 = vpop.f32.mrb[0].mxu0
        %v3027 = vadd.f32 %v2942, %v3026
        %v3028 = vpop.f32.mrb[0].mxu0
        %v3029 = vpop.f32.mrb[0].mxu0
        %v3030 = vadd.f32 %v2942, %v3029
        %v3031 = vpop.f32.mrb[0].mxu0
        %3032 = vmatprep.mubr.bf16.mxu0 0
        %3033 = vmatmul.mubr.bf16.gmra.mrb[0].mxu0 %v2931
        %v3034 = vpop.f32.mrb[0].mxu0
        %v3035 = vadd.f32 %v2942, %v3034
        %v3036 = vpop.f32.mrb[0].mxu0
        %v3037 = vpop.f32.mrb[0].mxu0
        %v3038 = vadd.f32 %v2942, %v3037
        %v3039 = vpop.f32.mrb[0].mxu0
        %3040 = vmatprep.mubr.bf16.mxu0 0
        %3041 = vmatmul.mubr.bf16.gmra.mrb[0].mxu0 %v2932
        %v3042 = vpop.f32.mrb[0].mxu0
        %v3043 = vadd.f32 %v2942, %v3042
        %v3044 = vpop.f32.mrb[0].mxu0
        %v3045 = vpop.f32.mrb[0].mxu0
        %v3046 = vadd.f32 %v2942, %v3045
        %v3047 = vpop.f32.mrb[0].mxu0
        %3048 = vmatprep.mubr.bf16.mxu0 0
        %3049 = vmatmul.mubr.bf16.gmra.mrb[0].mxu0 %v2933
        %v3050 = vpop.f32.mrb[0].mxu0
        %v3051 = vadd.f32 %v2942, %v3050
        %v3052 = vpop.f32.mrb[0].mxu0
        %v3053 = vpop.f32.mrb[0].mxu0
        %v3054 = vadd.f32 %v2942, %v3053
        %v3055 = vpop.f32.mrb[0].mxu0
        %3056 = vmatprep.mubr.bf16.mxu0 0
        %3057 = vmatmul.mubr.bf16.gmra.mrb[0].mxu0 %v2934
        %v3058 = vpop.f32.mrb[0].mxu0
        %v3059 = vadd.f32 %v2942, %v3058
        %v3060 = vpop.f32.mrb[0].mxu0
        %v3061 = vpop.f32.mrb[0].mxu0
        %v3062 = vadd.f32 %v2942, %v3061
        %v3063 = vpop.f32.mrb[0].mxu0
        %3064 = vmatprep.mubr.bf16.mxu0 0
        %3065 = vmatmul.mubr.bf16.gmra.mrb[0].mxu0 %v2935
        %v3066 = vpop.f32.mrb[0].mxu0
        %v3067 = vadd.f32 %v2942, %v3066
        %v3068 = vpop.f32.mrb[0].mxu0
        %v3069 = vpop.f32.mrb[0].mxu0
        %v3070 = vadd.f32 %v2942, %v3069
        %v3071 = vpop.f32.mrb[0].mxu0
        %3072 = vmatprep.mubr.bf16.mxu0 0
        %3073 = vmatmul.mubr.bf16.gmra.mrb[0].mxu0 %v2936
        %v3074 = vpop.f32.mrb[0].mxu0
        %v3075 = vadd.f32 %v2942, %v3074
        %v3076 = vpop.f32.mrb[0].mxu0
        %v3077 = vpop.f32.mrb[0].mxu0
        %v3078 = vadd.f32 %v2942, %v3077
        %v3079 = vpop.f32.mrb[0].mxu0
        %3080 = vmatprep.mubr.bf16.mxu0 0
        %3081 = vmatmul.mubr.bf16.gmra.mrb[0].mxu0 %v2937
        %v3082 = vpop.f32.mrb[0].mxu0
        %v3083 = vadd.f32 %v2942, %v3082
        %v3084 = vpop.f32.mrb[0].mxu0
        %v3085 = vpop.f32.mrb[0].mxu0
        %v3086 = vadd.f32 %v2942, %v3085
        %v3087 = vpop.f32.mrb[0].mxu0
        %3088 = vdwg.mxu0
        %v3089 = vmax.f32 %v3027, 0.0
        %v3090 = vmax.f32 %v3030, 0.0
        %v3091 = vmax.f32 %v3035, 0.0
        %v3092 = vmax.f32 %v3038, 0.0
        %v3093 = vmax.f32 %v3043, 0.0
        %v3094 = vmax.f32 %v3046, 0.0
        %v3095 = vmax.f32 %v3051, 0.0
        %v3096 = vmax.f32 %v3054, 0.0
        %v3097 = vmax.f32 %v3059, 0.0
        %v3098 = vmax.f32 %v3062, 0.0
        %v3099 = vmax.f32 %v3067, 0.0
        %v3100 = vmax.f32 %v3070, 0.0
        %v3101 = vmax.f32 %v3075, 0.0
        %v3102 = vmax.f32 %v3078, 0.0
        %v3103 = vmax.f32 %v3083, 0.0
        %v3104 = vmax.f32 %v3086, 0.0
        %v3105 = vpack.c.bf16 %v3090, %v3089
        %v3106 = vpack.c.bf16 %v3092, %v3091
        %v3107 = vpack.c.bf16 %v3094, %v3093
        %v3108 = vpack.c.bf16 %v3096, %v3095
        %v3109 = vpack.c.bf16 %v3098, %v3097
        %v3110 = vpack.c.bf16 %v3100, %v3099
        %v3111 = vpack.c.bf16 %v3102, %v3101
        %v3112 = vpack.c.bf16 %v3104, %v3103
        %v3114 = vlaneseq
        %v3115 = vshrl.u32 %v3114, 7
        %v3116 = vsub.s32 0, %v3115
        %v3117 = vrot.slane %v2615, %v3116
        %v3135 = vunpack.c.l.b16 %v2599
        %v3136 = vunpack.c.l.b16 %v2600
        %v3137 = vunpack.c.l.b16 %v2601
        %v3138 = vunpack.c.l.b16 %v2602
        %v3139 = vunpack.c.l.b16 %v2603
        %v3140 = vunpack.c.l.b16 %v2604
        %v3141 = vunpack.c.l.b16 %v2605
        %v3142 = vunpack.c.l.b16 %v2606
        %v3143 = vunpack.c.l.b16 %v2607
        %v3144 = vunpack.c.l.b16 %v2608
        %v3145 = vunpack.c.l.b16 %v2609
        %v3146 = vunpack.c.l.b16 %v2610
        %v3147 = vunpack.c.l.b16 %v2611
        %v3148 = vunpack.c.l.b16 %v2612
        %v3149 = vunpack.c.l.b16 %v2613
        %v3150 = vunpack.c.l.b16 %v2614
        %v3151 = vpack.c.b16 %v3136, %v3135
        %v3152 = vpack.c.b16 %v3138, %v3137
        %v3153 = vpack.c.b16 %v3140, %v3139
        %v3154 = vpack.c.b16 %v3142, %v3141
        %v3155 = vpack.c.b16 %v3144, %v3143
        %v3156 = vpack.c.b16 %v3146, %v3145
        %v3157 = vpack.c.b16 %v3148, %v3147
        %v3158 = vpack.c.b16 %v3150, %v3149
        %3167 = vmatprep.subr.bf16.mxu0 0
        %3168 = vmatpush1.bf16.msra.mxu0 %v3151
        %3169 = vmatprep.subr.bf16.mxu0 0
        %3170 = vmatpush1.bf16.msra.mxu0 %v3152
        %3171 = vmatprep.subr.bf16.mxu0 0
        %3172 = vmatpush1.bf16.msra.mxu0 %v3153
        %3173 = vmatprep.subr.bf16.mxu0 0
        %3174 = vmatpush1.bf16.msra.mxu0 %v3154
        %3175 = vmatprep.subr.bf16.mxu0 0
        %3176 = vmatpush1.bf16.msra.mxu0 %v3155
        %3177 = vmatprep.subr.bf16.mxu0 0
        %3178 = vmatpush1.bf16.msra.mxu0 %v3156
        %3179 = vmatprep.subr.bf16.mxu0 0
        %3180 = vmatpush1.bf16.msra.mxu0 %v3157
        %3181 = vmatprep.subr.bf16.mxu0 0
        %3182 = vmatpush1.bf16.msra.mxu0 %v3158
        %3183 = vmatprep.subr.bf16.mxu0 0
        %3184 = vmatpush1.bf16.msra.mxu0 0
        %3185 = vmatprep.subr.bf16.mxu0 0
        %3186 = vmatpush1.bf16.msra.mxu0 0
        %3187 = vmatprep.subr.bf16.mxu0 0
        %3188 = vmatpush1.bf16.msra.mxu0 0
        %3189 = vmatprep.subr.bf16.mxu0 0
        %3190 = vmatpush1.bf16.msra.mxu0 0
        %3191 = vmatprep.subr.bf16.mxu0 0
        %3192 = vmatpush1.bf16.msra.mxu0 0
        %3193 = vmatprep.subr.bf16.mxu0 0
        %3194 = vmatpush1.bf16.msra.mxu0 0
        %3195 = vmatprep.subr.bf16.mxu0 0
        %3196 = vmatpush1.bf16.msra.mxu0 0
        %3197 = vmatprep.subr.bf16.mxu0 0
        %3198 = vmatpush1.bf16.msra.mxu0 0
        %3199 = vmatprep.mubr.bf16.mxu0 0
        %3200 = vmatmul.mubr.bf16.gmra.mrb[0].mxu0 %v3105
        %v3201 = vpop.f32.mrb[0].mxu0
        %v3202 = vadd.f32 %v3117, %v3201
        %v3203 = vpop.f32.mrb[0].mxu0
        %v3204 = vpop.f32.mrb[0].mxu0
        %v3205 = vadd.f32 %v3117, %v3204
        %v3206 = vpop.f32.mrb[0].mxu0
        %3207 = vmatprep.mubr.bf16.mxu0 0
        %3208 = vmatmul.mubr.bf16.gmra.mrb[0].mxu0 %v3106
        %v3209 = vpop.f32.mrb[0].mxu0
        %v3210 = vadd.f32 %v3117, %v3209
        %v3211 = vpop.f32.mrb[0].mxu0
        %v3212 = vpop.f32.mrb[0].mxu0
        %v3213 = vadd.f32 %v3117, %v3212
        %v3214 = vpop.f32.mrb[0].mxu0
        %3215 = vmatprep.mubr.bf16.mxu0 0
        %3216 = vmatmul.mubr.bf16.gmra.mrb[0].mxu0 %v3107
        %v3217 = vpop.f32.mrb[0].mxu0
        %v3218 = vadd.f32 %v3117, %v3217
        %v3219 = vpop.f32.mrb[0].mxu0
        %v3220 = vpop.f32.mrb[0].mxu0
        %v3221 = vadd.f32 %v3117, %v3220
        %v3222 = vpop.f32.mrb[0].mxu0
        %3223 = vmatprep.mubr.bf16.mxu0 0
        %3224 = vmatmul.mubr.bf16.gmra.mrb[0].mxu0 %v3108
        %v3225 = vpop.f32.mrb[0].mxu0
        %v3226 = vadd.f32 %v3117, %v3225
        %v3227 = vpop.f32.mrb[0].mxu0
        %v3228 = vpop.f32.mrb[0].mxu0
        %v3229 = vadd.f32 %v3117, %v3228
        %v3230 = vpop.f32.mrb[0].mxu0
        %3231 = vmatprep.mubr.bf16.mxu0 0
        %3232 = vmatmul.mubr.bf16.gmra.mrb[0].mxu0 %v3109
        %v3233 = vpop.f32.mrb[0].mxu0
        %v3234 = vadd.f32 %v3117, %v3233
        %v3235 = vpop.f32.mrb[0].mxu0
        %v3236 = vpop.f32.mrb[0].mxu0
        %v3237 = vadd.f32 %v3117, %v3236
        %v3238 = vpop.f32.mrb[0].mxu0
        %3239 = vmatprep.mubr.bf16.mxu0 0
        %3240 = vmatmul.mubr.bf16.gmra.mrb[0].mxu0 %v3110
        %v3241 = vpop.f32.mrb[0].mxu0
        %v3242 = vadd.f32 %v3117, %v3241
        %v3243 = vpop.f32.mrb[0].mxu0
        %v3244 = vpop.f32.mrb[0].mxu0
        %v3245 = vadd.f32 %v3117, %v3244
        %v3246 = vpop.f32.mrb[0].mxu0
        %3247 = vmatprep.mubr.bf16.mxu0 0
        %3248 = vmatmul.mubr.bf16.gmra.mrb[0].mxu0 %v3111
        %v3249 = vpop.f32.mrb[0].mxu0
        %v3250 = vadd.f32 %v3117, %v3249
        %v3251 = vpop.f32.mrb[0].mxu0
        %v3252 = vpop.f32.mrb[0].mxu0
        %v3253 = vadd.f32 %v3117, %v3252
        %v3254 = vpop.f32.mrb[0].mxu0
        %3255 = vmatprep.mubr.bf16.mxu0 0
        %3256 = vmatmul.mubr.bf16.gmra.mrb[0].mxu0 %v3112
        %v3257 = vpop.f32.mrb[0].mxu0
        %v3258 = vadd.f32 %v3117, %v3257
        %v3259 = vpop.f32.mrb[0].mxu0
        %v3260 = vpop.f32.mrb[0].mxu0
        %v3261 = vadd.f32 %v3117, %v3260
        %v3262 = vpop.f32.mrb[0].mxu0
        %3263 = vdwg.mxu0
        %3265 = vset.pattern.permute.xlu0 0
        %3266 = vperm.xlu0 %3265, %v1802
        %v3267 = vpop.permute.xlu0 %3266
        %3270 = vset.pattern.permute.xlu0 0
        %3271 = vperm.xlu0 %3270, %v1803
        %v3272 = vpop.permute.xlu0 %3271
        %3275 = vset.pattern.permute.xlu0 0
        %3276 = vperm.xlu0 %3275, %v1804
        %v3277 = vpop.permute.xlu0 %3276
        %3280 = vset.pattern.permute.xlu0 0
        %3281 = vperm.xlu0 %3280, %v1805
        %v3282 = vpop.permute.xlu0 %3281
        %3285 = vset.pattern.permute.xlu0 0
        %3286 = vperm.xlu0 %3285, %v1806
        %v3287 = vpop.permute.xlu0 %3286
        %3290 = vset.pattern.permute.xlu0 0
        %3291 = vperm.xlu0 %3290, %v1807
        %v3292 = vpop.permute.xlu0 %3291
        %3295 = vset.pattern.permute.xlu0 0
        %3296 = vperm.xlu0 %3295, %v1808
        %v3297 = vpop.permute.xlu0 %3296
        %3300 = vset.pattern.permute.xlu0 0
        %3301 = vperm.xlu0 %3300, %v1809
        %v3302 = vpop.permute.xlu0 %3301
        %3305 = vset.pattern.permute.xlu0 0
        %3306 = vperm.xlu0 %3305, %v1810
        %v3307 = vpop.permute.xlu0 %3306
        %3310 = vset.pattern.permute.xlu0 0
        %3311 = vperm.xlu0 %3310, %v1811
        %v3312 = vpop.permute.xlu0 %3311
        %3315 = vset.pattern.permute.xlu0 0
        %3316 = vperm.xlu0 %3315, %v1812
        %v3317 = vpop.permute.xlu0 %3316
        %3320 = vset.pattern.permute.xlu0 0
        %3321 = vperm.xlu0 %3320, %v1813
        %v3322 = vpop.permute.xlu0 %3321
        %3325 = vset.pattern.permute.xlu0 0
        %3326 = vperm.xlu0 %3325, %v1814
        %v3327 = vpop.permute.xlu0 %3326
        %3330 = vset.pattern.permute.xlu0 0
        %3331 = vperm.xlu0 %3330, %v1815
        %v3332 = vpop.permute.xlu0 %3331
        %3335 = vset.pattern.permute.xlu0 0
        %3336 = vperm.xlu0 %3335, %v1816
        %v3337 = vpop.permute.xlu0 %3336
        %3340 = vset.pattern.permute.xlu0 0
        %3341 = vperm.xlu0 %3340, %v1817
        %v3342 = vpop.permute.xlu0 %3341
        %v3344 = vmul.f32 %v3202, %v3267
        %v3345 = vmul.f32 %v3205, %v3272
        %v3346 = vmul.f32 %v3210, %v3277
        %v3347 = vmul.f32 %v3213, %v3282
        %v3348 = vmul.f32 %v3218, %v3287
        %v3349 = vmul.f32 %v3221, %v3292
        %v3350 = vmul.f32 %v3226, %v3297
        %v3351 = vmul.f32 %v3229, %v3302
        %v3352 = vmul.f32 %v3234, %v3307
        %v3353 = vmul.f32 %v3237, %v3312
        %v3354 = vmul.f32 %v3242, %v3317
        %v3355 = vmul.f32 %v3245, %v3322
        %v3356 = vmul.f32 %v3250, %v3327
        %v3357 = vmul.f32 %v3253, %v3332
        %v3358 = vmul.f32 %v3258, %v3337
        %v3359 = vmul.f32 %v3261, %v3342
        %v3360 = vrot.slane %v3344, 4
        %v3361 = vadd.f32 %v3344, %v3360
        %v3362 = vrot.slane %v3361, 2
        %v3363 = vadd.f32 %v3361, %v3362
        %v3364 = vrot.slane %v3363, 1
        %v3365 = vadd.f32 %v3363, %v3364
        %v3366 = vrot.slane %v3345, 4
        %v3367 = vadd.f32 %v3345, %v3366
        %v3368 = vrot.slane %v3367, 2
        %v3369 = vadd.f32 %v3367, %v3368
        %v3370 = vrot.slane %v3369, 1
        %v3371 = vadd.f32 %v3369, %v3370
        %v3372 = vrot.slane %v3346, 4
        %v3373 = vadd.f32 %v3346, %v3372
        %v3374 = vrot.slane %v3373, 2
        %v3375 = vadd.f32 %v3373, %v3374
        %v3376 = vrot.slane %v3375, 1
        %v3377 = vadd.f32 %v3375, %v3376
        %v3378 = vrot.slane %v3347, 4
        %v3379 = vadd.f32 %v3347, %v3378
        %v3380 = vrot.slane %v3379, 2
        %v3381 = vadd.f32 %v3379, %v3380
        %v3382 = vrot.slane %v3381, 1
        %v3383 = vadd.f32 %v3381, %v3382
        %v3384 = vrot.slane %v3348, 4
        %v3385 = vadd.f32 %v3348, %v3384
        %v3386 = vrot.slane %v3385, 2
        %v3387 = vadd.f32 %v3385, %v3386
        %v3388 = vrot.slane %v3387, 1
        %v3389 = vadd.f32 %v3387, %v3388
        %v3390 = vrot.slane %v3349, 4
        %v3391 = vadd.f32 %v3349, %v3390
        %v3392 = vrot.slane %v3391, 2
        %v3393 = vadd.f32 %v3391, %v3392
        %v3394 = vrot.slane %v3393, 1
        %v3395 = vadd.f32 %v3393, %v3394
        %v3396 = vrot.slane %v3350, 4
        %v3397 = vadd.f32 %v3350, %v3396
        %v3398 = vrot.slane %v3397, 2
        %v3399 = vadd.f32 %v3397, %v3398
        %v3400 = vrot.slane %v3399, 1
        %v3401 = vadd.f32 %v3399, %v3400
        %v3402 = vrot.slane %v3351, 4
        %v3403 = vadd.f32 %v3351, %v3402
        %v3404 = vrot.slane %v3403, 2
        %v3405 = vadd.f32 %v3403, %v3404
        %v3406 = vrot.slane %v3405, 1
        %v3407 = vadd.f32 %v3405, %v3406
        %v3408 = vrot.slane %v3352, 4
        %v3409 = vadd.f32 %v3352, %v3408
        %v3410 = vrot.slane %v3409, 2
        %v3411 = vadd.f32 %v3409, %v3410
        %v3412 = vrot.slane %v3411, 1
        %v3413 = vadd.f32 %v3411, %v3412
        %v3414 = vrot.slane %v3353, 4
        %v3415 = vadd.f32 %v3353, %v3414
        %v3416 = vrot.slane %v3415, 2
        %v3417 = vadd.f32 %v3415, %v3416
        %v3418 = vrot.slane %v3417, 1
        %v3419 = vadd.f32 %v3417, %v3418
        %v3420 = vrot.slane %v3354, 4
        %v3421 = vadd.f32 %v3354, %v3420
        %v3422 = vrot.slane %v3421, 2
        %v3423 = vadd.f32 %v3421, %v3422
        %v3424 = vrot.slane %v3423, 1
        %v3425 = vadd.f32 %v3423, %v3424
        %v3426 = vrot.slane %v3355, 4
        %v3427 = vadd.f32 %v3355, %v3426
        %v3428 = vrot.slane %v3427, 2
        %v3429 = vadd.f32 %v3427, %v3428
        %v3430 = vrot.slane %v3429, 1
        %v3431 = vadd.f32 %v3429, %v3430
        %v3432 = vrot.slane %v3356, 4
        %v3433 = vadd.f32 %v3356, %v3432
        %v3434 = vrot.slane %v3433, 2
        %v3435 = vadd.f32 %v3433, %v3434
        %v3436 = vrot.slane %v3435, 1
        %v3437 = vadd.f32 %v3435, %v3436
        %v3438 = vrot.slane %v3357, 4
        %v3439 = vadd.f32 %v3357, %v3438
        %v3440 = vrot.slane %v3439, 2
        %v3441 = vadd.f32 %v3439, %v3440
        %v3442 = vrot.slane %v3441, 1
        %v3443 = vadd.f32 %v3441, %v3442
        %v3444 = vrot.slane %v3358, 4
        %v3445 = vadd.f32 %v3358, %v3444
        %v3446 = vrot.slane %v3445, 2
        %v3447 = vadd.f32 %v3445, %v3446
        %v3448 = vrot.slane %v3447, 1
        %v3449 = vadd.f32 %v3447, %v3448
        %v3450 = vrot.slane %v3359, 4
        %v3451 = vadd.f32 %v3359, %v3450
        %v3452 = vrot.slane %v3451, 2
        %v3453 = vadd.f32 %v3451, %v3452
        %v3454 = vrot.slane %v3453, 1
        %v3455 = vadd.f32 %v3453, %v3454
        %v3456 = vmul.f32 %v3365, 0.033333335
        %v3457 = vmul.f32 %v3371, 0.033333335
        %v3458 = vmul.f32 %v3377, 0.033333335
        %v3459 = vmul.f32 %v3383, 0.033333335
        %v3460 = vmul.f32 %v3389, 0.033333335
        %v3461 = vmul.f32 %v3395, 0.033333335
        %v3462 = vmul.f32 %v3401, 0.033333335
        %v3463 = vmul.f32 %v3407, 0.033333335
        %v3464 = vmul.f32 %v3413, 0.033333335
        %v3465 = vmul.f32 %v3419, 0.033333335
        %v3466 = vmul.f32 %v3425, 0.033333335
        %v3467 = vmul.f32 %v3431, 0.033333335
        %v3468 = vmul.f32 %v3437, 0.033333335
        %v3469 = vmul.f32 %v3443, 0.033333335
        %v3470 = vmul.f32 %v3449, 0.033333335
        %v3471 = vmul.f32 %v3455, 0.033333335
        %vm3488 = vcmask 1041409
        %v3489 = vsel %vm3488, %v3457, %v3456
        %vm3490 = vcmask 1042434
        %v3491 = vsel %vm3490, %v3458, %v3489
        %vm3492 = vcmask 1043459
        %v3493 = vsel %vm3492, %v3459, %v3491
        %vm3494 = vcmask 1044484
        %v3495 = vsel %vm3494, %v3460, %v3493
        %vm3496 = vcmask 1045509
        %v3497 = vsel %vm3496, %v3461, %v3495
        %vm3498 = vcmask 1046534
        %v3499 = vsel %vm3498, %v3462, %v3497
        %vm3500 = vcmask 1047559
        %v3501 = vsel %vm3500, %v3463, %v3499
        %v3502 = vsel %vm3488, %v3465, %v3464
        %v3503 = vsel %vm3490, %v3466, %v3502
        %v3504 = vsel %vm3492, %v3467, %v3503
        %v3505 = vsel %vm3494, %v3468, %v3504
        %v3506 = vsel %vm3496, %v3469, %v3505
        %v3507 = vsel %vm3498, %v3470, %v3506
        %v3508 = vsel %vm3500, %v3471, %v3507
        %v3511 = vadd.f32 %v1879, %v3501
        %v3512 = vadd.f32 %v1882, %v3508
        %3513 = vadd.xlane.f32.xlu0 %v3511
        %v3514 = vpop.xlane.xlu0 %3513
        %3515 = vadd.xlane.f32.xlu0 %v3512
        %v3516 = vpop.xlane.xlu0 %3515
        %v3517 = vrcp.pop 128.0
        %v3518 = vmul.f32 %v3514, %v3517
        %v3519 = vmul.f32 %v3516, %v3517
        %v3520 = vsub.f32 %v3511, %v3518
        %v3521 = vsub.f32 %v3512, %v3519
        %v3522 = vmul.f32 %v3520, %v3520
        %v3523 = vmul.f32 %v3521, %v3521
        %3524 = vadd.xlane.f32.xlu0 %v3522
        %v3525 = vpop.xlane.xlu0 %3524
        %3526 = vadd.xlane.f32.xlu0 %v3523
        %v3527 = vpop.xlane.xlu0 %3526
        %v3528 = vrcp.pop 127.0
        %v3529 = vmul.f32 %v3525, %v3528
        %v3530 = vmul.f32 %v3527, %v3528
        %v3531 = vadd.f32 %v3529, 1e-06
        %v3532 = vadd.f32 %v3530, 1e-06
        %v3533 = vrsqrt.pop %v3531
        %v3534 = vmul.f32 %v3531, %v3533
        %vm3535 = vcmp.eq.f32.partialorder %v3531, inf
        %v3536 = vsel %vm3535, %v3531, %v3534
        %vm3537 = vcmp.eq.f32.partialorder %v3531, 0.0
        %v3538 = vand.u32 %v3531, 2147483648
        %v3539 = vsel %vm3537, %v3538, %v3536
        %v3540 = vrsqrt.pop %v3532
        %v3541 = vmul.f32 %v3532, %v3540
        %vm3542 = vcmp.eq.f32.partialorder %v3532, inf
        %v3543 = vsel %vm3542, %v3532, %v3541
        %vm3544 = vcmp.eq.f32.partialorder %v3532, 0.0
        %v3545 = vand.u32 %v3532, 2147483648
        %v3546 = vsel %vm3544, %v3545, %v3543
        %v3547 = vadd.f32 %v3539, 1e-06
        %v3548 = vadd.f32 %v3546, 1e-06
        %v3549 = vrcp.pop %v3547
        %v3550 = vmul.f32 1.0, %v3549
        %v3551 = vrcp.pop %v3548
        %v3552 = vmul.f32 1.0, %v3551
        %v3554 = vlaneseq
        %v3555 = vshrl.u32 %v3554, 7
        %v3556 = vsub.s32 0, %v3555
        %v3557 = vrot.slane %v2616, %v3556
        %v3559 = vmul.f32 %v3557, %v3520
        %v3560 = vmul.f32 %v3557, %v3521
        %v3561 = vmul.f32 %v3559, %v3550
        %v3562 = vmul.f32 %v3560, %v3552
        %v3564 = vlaneseq
        %v3565 = vshrl.u32 %v3564, 7
        %v3566 = vsub.s32 0, %v3565
        %v3567 = vrot.slane %v2617, %v3566
        %v3569 = vadd.f32 %v3561, %v3567
        %v3570 = vadd.f32 %v3562, %v3567
        %v3571 = vpack.c.bf16 %v3570, %v3569
        %v3573 = vlaneseq
        %v3574 = vshrl.u32 %v3573, 7
        %v3575 = vsub.s32 0, %v3574
        %v3576 = vrot.slane %v2650, %v3575
        %v3577 = vlaneseq
        %v3578 = vshrl.u32 %v3577, 7
        %v3579 = vsub.s32 1, %v3578
        %v3580 = vrot.slane %v2650, %v3579
        %v3581 = vlaneseq
        %v3582 = vshrl.u32 %v3581, 7
        %v3583 = vsub.s32 2, %v3582
        %v3584 = vrot.slane %v2650, %v3583
        %v3585 = vlaneseq
        %v3586 = vshrl.u32 %v3585, 7
        %v3587 = vsub.s32 3, %v3586
        %v3588 = vrot.slane %v2650, %v3587
        %v3625 = vunpack.c.l.b16 %v2618
        %v3626 = vunpack.c.h.b16 %v2618
        %v3627 = vunpack.c.l.b16 %v2619
        %v3628 = vunpack.c.h.b16 %v2619
        %v3629 = vunpack.c.l.b16 %v2620
        %v3630 = vunpack.c.h.b16 %v2620
        %v3631 = vunpack.c.l.b16 %v2621
        %v3632 = vunpack.c.h.b16 %v2621
        %v3633 = vunpack.c.l.b16 %v2622
        %v3634 = vunpack.c.h.b16 %v2622
        %v3635 = vunpack.c.l.b16 %v2623
        %v3636 = vunpack.c.h.b16 %v2623
        %v3637 = vunpack.c.l.b16 %v2624
        %v3638 = vunpack.c.h.b16 %v2624
        %v3639 = vunpack.c.l.b16 %v2625
        %v3640 = vunpack.c.h.b16 %v2625
        %v3641 = vunpack.c.l.b16 %v2626
        %v3642 = vunpack.c.h.b16 %v2626
        %v3643 = vunpack.c.l.b16 %v2627
        %v3644 = vunpack.c.h.b16 %v2627
        %v3645 = vunpack.c.l.b16 %v2628
        %v3646 = vunpack.c.h.b16 %v2628
        %v3647 = vunpack.c.l.b16 %v2629
        %v3648 = vunpack.c.h.b16 %v2629
        %v3649 = vunpack.c.l.b16 %v2630
        %v3650 = vunpack.c.h.b16 %v2630
        %v3651 = vunpack.c.l.b16 %v2631
        %v3652 = vunpack.c.h.b16 %v2631
        %v3653 = vunpack.c.l.b16 %v2632
        %v3654 = vunpack.c.h.b16 %v2632
        %v3655 = vunpack.c.l.b16 %v2633
        %v3656 = vunpack.c.h.b16 %v2633
        %v3657 = vunpack.c.l.b16 %v2634
        %v3658 = vunpack.c.h.b16 %v2634
        %v3659 = vunpack.c.l.b16 %v2635
        %v3660 = vunpack.c.h.b16 %v2635
        %v3661 = vunpack.c.l.b16 %v2636
        %v3662 = vunpack.c.h.b16 %v2636
        %v3663 = vunpack.c.l.b16 %v2637
        %v3664 = vunpack.c.h.b16 %v2637
        %v3665 = vunpack.c.l.b16 %v2638
        %v3666 = vunpack.c.h.b16 %v2638
        %v3667 = vunpack.c.l.b16 %v2639
        %v3668 = vunpack.c.h.b16 %v2639
        %v3669 = vunpack.c.l.b16 %v2640
        %v3670 = vunpack.c.h.b16 %v2640
        %v3671 = vunpack.c.l.b16 %v2641
        %v3672 = vunpack.c.h.b16 %v2641
        %v3673 = vunpack.c.l.b16 %v2642
        %v3674 = vunpack.c.h.b16 %v2642
        %v3675 = vunpack.c.l.b16 %v2643
        %v3676 = vunpack.c.h.b16 %v2643
        %v3677 = vunpack.c.l.b16 %v2644
        %v3678 = vunpack.c.h.b16 %v2644
        %v3679 = vunpack.c.l.b16 %v2645
        %v3680 = vunpack.c.h.b16 %v2645
        %v3681 = vunpack.c.l.b16 %v2646
        %v3682 = vunpack.c.h.b16 %v2646
        %v3683 = vunpack.c.l.b16 %v2647
        %v3684 = vunpack.c.h.b16 %v2647
        %v3685 = vunpack.c.l.b16 %v2648
        %v3686 = vunpack.c.h.b16 %v2648
        %v3687 = vunpack.c.l.b16 %v2649
        %v3688 = vunpack.c.h.b16 %v2649
        %v3689 = vpack.c.b16 %v3629, %v3625
        %v3690 = vpack.c.b16 %v3630, %v3626
        %v3691 = vpack.c.b16 %v3631, %v3627
        %v3692 = vpack.c.b16 %v3632, %v3628
        %v3693 = vpack.c.b16 %v3637, %v3633
        %v3694 = vpack.c.b16 %v3638, %v3634
        %v3695 = vpack.c.b16 %v3639, %v3635
        %v3696 = vpack.c.b16 %v3640, %v3636
        %v3697 = vpack.c.b16 %v3645, %v3641
        %v3698 = vpack.c.b16 %v3646, %v3642
        %v3699 = vpack.c.b16 %v3647, %v3643
        %v3700 = vpack.c.b16 %v3648, %v3644
        %v3701 = vpack.c.b16 %v3653, %v3649
        %v3702 = vpack.c.b16 %v3654, %v3650
        %v3703 = vpack.c.b16 %v3655, %v3651
        %v3704 = vpack.c.b16 %v3656, %v3652
        %v3705 = vpack.c.b16 %v3661, %v3657
        %v3706 = vpack.c.b16 %v3662, %v3658
        %v3707 = vpack.c.b16 %v3663, %v3659
        %v3708 = vpack.c.b16 %v3664, %v3660
        %v3709 = vpack.c.b16 %v3669, %v3665
        %v3710 = vpack.c.b16 %v3670, %v3666
        %v3711 = vpack.c.b16 %v3671, %v3667
        %v3712 = vpack.c.b16 %v3672, %v3668
        %v3713 = vpack.c.b16 %v3677, %v3673
        %v3714 = vpack.c.b16 %v3678, %v3674
        %v3715 = vpack.c.b16 %v3679, %v3675
        %v3716 = vpack.c.b16 %v3680, %v3676
        %v3717 = vpack.c.b16 %v3685, %v3681
        %v3718 = vpack.c.b16 %v3686, %v3682
        %v3719 = vpack.c.b16 %v3687, %v3683
        %v3720 = vpack.c.b16 %v3688, %v3684
        %3753 = vmatprep.subr.bf16.mxu0 %v3690
        %3754 = vmatpush1.bf16.msra.mxu0 %v3689
        %3755 = vmatprep.subr.bf16.mxu0 %v3694
        %3756 = vmatpush1.bf16.msra.mxu0 %v3693
        %3757 = vmatprep.subr.bf16.mxu0 %v3698
        %3758 = vmatpush1.bf16.msra.mxu0 %v3697
        %3759 = vmatprep.subr.bf16.mxu0 %v3702
        %3760 = vmatpush1.bf16.msra.mxu0 %v3701
        %3761 = vmatprep.subr.bf16.mxu0 %v3706
        %3762 = vmatpush1.bf16.msra.mxu0 %v3705
        %3763 = vmatprep.subr.bf16.mxu0 %v3710
        %3764 = vmatpush1.bf16.msra.mxu0 %v3709
        %3765 = vmatprep.subr.bf16.mxu0 %v3714
        %3766 = vmatpush1.bf16.msra.mxu0 %v3713
        %3767 = vmatprep.subr.bf16.mxu0 %v3718
        %3768 = vmatpush1.bf16.msra.mxu0 %v3717
        %3769 = vmatprep.subr.bf16.mxu0 0
        %3770 = vmatpush1.bf16.msra.mxu0 0
        %3771 = vmatprep.subr.bf16.mxu0 0
        %3772 = vmatpush1.bf16.msra.mxu0 0
        %3773 = vmatprep.subr.bf16.mxu0 0
        %3774 = vmatpush1.bf16.msra.mxu0 0
        %3775 = vmatprep.subr.bf16.mxu0 0
        %3776 = vmatpush1.bf16.msra.mxu0 0
        %3777 = vmatprep.subr.bf16.mxu0 0
        %3778 = vmatpush1.bf16.msra.mxu0 0
        %3779 = vmatprep.subr.bf16.mxu0 0
        %3780 = vmatpush1.bf16.msra.mxu0 0
        %3781 = vmatprep.subr.bf16.mxu0 0
        %3782 = vmatpush1.bf16.msra.mxu0 0
        %3783 = vmatprep.subr.bf16.mxu0 0
        %3784 = vmatpush1.bf16.msra.mxu0 0
        %3785 = vmatprep.mubr.bf16.mxu0 0
        %3786 = vmatmul.mubr.bf16.gmra.mrb[0].mxu0 %v3571
        %v3787 = vpop.f32.mrb[0].mxu0
        %v3788 = vadd.f32 %v3576, %v3787
        %v3789 = vpop.f32.mrb[0].mxu0
        %v3790 = vadd.f32 %v3580, %v3789
        %v3791 = vpop.f32.mrb[0].mxu0
        %v3792 = vadd.f32 %v3576, %v3791
        %v3793 = vpop.f32.mrb[0].mxu0
        %v3794 = vadd.f32 %v3580, %v3793
        %3795 = vdwg.mxu0
        %3796 = vmatprep.subr.bf16.mxu0 %v3692
        %3797 = vmatpush1.bf16.msra.mxu0 %v3691
        %3798 = vmatprep.subr.bf16.mxu0 %v3696
        %3799 = vmatpush1.bf16.msra.mxu0 %v3695
        %3800 = vmatprep.subr.bf16.mxu0 %v3700
        %3801 = vmatpush1.bf16.msra.mxu0 %v3699
        %3802 = vmatprep.subr.bf16.mxu0 %v3704
        %3803 = vmatpush1.bf16.msra.mxu0 %v3703
        %3804 = vmatprep.subr.bf16.mxu0 %v3708
        %3805 = vmatpush1.bf16.msra.mxu0 %v3707
        %3806 = vmatprep.subr.bf16.mxu0 %v3712
        %3807 = vmatpush1.bf16.msra.mxu0 %v3711
        %3808 = vmatprep.subr.bf16.mxu0 %v3716
        %3809 = vmatpush1.bf16.msra.mxu0 %v3715
        %3810 = vmatprep.subr.bf16.mxu0 %v3720
        %3811 = vmatpush1.bf16.msra.mxu0 %v3719
        %3812 = vmatprep.subr.bf16.mxu0 0
        %3813 = vmatpush1.bf16.msra.mxu0 0
        %3814 = vmatprep.subr.bf16.mxu0 0
        %3815 = vmatpush1.bf16.msra.mxu0 0
        %3816 = vmatprep.subr.bf16.mxu0 0
        %3817 = vmatpush1.bf16.msra.mxu0 0
        %3818 = vmatprep.subr.bf16.mxu0 0
        %3819 = vmatpush1.bf16.msra.mxu0 0
        %3820 = vmatprep.subr.bf16.mxu0 0
        %3821 = vmatpush1.bf16.msra.mxu0 0
        %3822 = vmatprep.subr.bf16.mxu0 0
        %3823 = vmatpush1.bf16.msra.mxu0 0
        %3824 = vmatprep.subr.bf16.mxu0 0
        %3825 = vmatpush1.bf16.msra.mxu0 0
        %3826 = vmatprep.subr.bf16.mxu0 0
        %3827 = vmatpush1.bf16.msra.mxu0 0
        %3828 = vmatprep.mubr.bf16.mxu0 0
        %3829 = vmatmul.mubr.bf16.gmra.mrb[0].mxu0 %v3571
        %v3830 = vpop.f32.mrb[0].mxu0
        %v3831 = vadd.f32 %v3584, %v3830
        %v3832 = vpop.f32.mrb[0].mxu0
        %v3833 = vadd.f32 %v3588, %v3832
        %v3834 = vpop.f32.mrb[0].mxu0
        %v3835 = vadd.f32 %v3584, %v3834
        %v3836 = vpop.f32.mrb[0].mxu0
        %v3837 = vadd.f32 %v3588, %v3836
        %3838 = vdwg.mxu0
        %v3839 = vmax.f32 %v3788, 0.0
        %v3840 = vmax.f32 %v3790, 0.0
        %v3841 = vmax.f32 %v3831, 0.0
        %v3842 = vmax.f32 %v3833, 0.0
        %v3843 = vmax.f32 %v3792, 0.0
        %v3844 = vmax.f32 %v3794, 0.0
        %v3845 = vmax.f32 %v3835, 0.0
        %v3846 = vmax.f32 %v3837, 0.0
        %v3847 = vpack.c.bf16 %v3843, %v3839
        %v3848 = vpack.c.bf16 %v3844, %v3840
        %v3849 = vpack.c.bf16 %v3845, %v3841
        %v3850 = vpack.c.bf16 %v3846, %v3842
        %v3852 = vlaneseq
        %v3853 = vshrl.u32 %v3852, 7
        %v3854 = vsub.s32 0, %v3853
        %v3855 = vrot.slane %v2715, %v3854
        %v3921 = vunpack.c.l.b16 %v2651
        %v3922 = vunpack.c.l.b16 %v2652
        %v3923 = vunpack.c.l.b16 %v2653
        %v3924 = vunpack.c.l.b16 %v2654
        %v3925 = vunpack.c.l.b16 %v2655
        %v3926 = vunpack.c.l.b16 %v2656
        %v3927 = vunpack.c.l.b16 %v2657
        %v3928 = vunpack.c.l.b16 %v2658
        %v3929 = vunpack.c.l.b16 %v2659
        %v3930 = vunpack.c.l.b16 %v2660
        %v3931 = vunpack.c.l.b16 %v2661
        %v3932 = vunpack.c.l.b16 %v2662
        %v3933 = vunpack.c.l.b16 %v2663
        %v3934 = vunpack.c.l.b16 %v2664
        %v3935 = vunpack.c.l.b16 %v2665
        %v3936 = vunpack.c.l.b16 %v2666
        %v3937 = vunpack.c.l.b16 %v2667
        %v3938 = vunpack.c.l.b16 %v2668
        %v3939 = vunpack.c.l.b16 %v2669
        %v3940 = vunpack.c.l.b16 %v2670
        %v3941 = vunpack.c.l.b16 %v2671
        %v3942 = vunpack.c.l.b16 %v2672
        %v3943 = vunpack.c.l.b16 %v2673
        %v3944 = vunpack.c.l.b16 %v2674
        %v3945 = vunpack.c.l.b16 %v2675
        %v3946 = vunpack.c.l.b16 %v2676
        %v3947 = vunpack.c.l.b16 %v2677
        %v3948 = vunpack.c.l.b16 %v2678
        %v3949 = vunpack.c.l.b16 %v2679
        %v3950 = vunpack.c.l.b16 %v2680
        %v3951 = vunpack.c.l.b16 %v2681
        %v3952 = vunpack.c.l.b16 %v2682
        %v3953 = vunpack.c.l.b16 %v2683
        %v3954 = vunpack.c.l.b16 %v2684
        %v3955 = vunpack.c.l.b16 %v2685
        %v3956 = vunpack.c.l.b16 %v2686
        %v3957 = vunpack.c.l.b16 %v2687
        %v3958 = vunpack.c.l.b16 %v2688
        %v3959 = vunpack.c.l.b16 %v2689
        %v3960 = vunpack.c.l.b16 %v2690
        %v3961 = vunpack.c.l.b16 %v2691
        %v3962 = vunpack.c.l.b16 %v2692
        %v3963 = vunpack.c.l.b16 %v2693
        %v3964 = vunpack.c.l.b16 %v2694
        %v3965 = vunpack.c.l.b16 %v2695
        %v3966 = vunpack.c.l.b16 %v2696
        %v3967 = vunpack.c.l.b16 %v2697
        %v3968 = vunpack.c.l.b16 %v2698
        %v3969 = vunpack.c.l.b16 %v2699
        %v3970 = vunpack.c.l.b16 %v2700
        %v3971 = vunpack.c.l.b16 %v2701
        %v3972 = vunpack.c.l.b16 %v2702
        %v3973 = vunpack.c.l.b16 %v2703
        %v3974 = vunpack.c.l.b16 %v2704
        %v3975 = vunpack.c.l.b16 %v2705
        %v3976 = vunpack.c.l.b16 %v2706
        %v3977 = vunpack.c.l.b16 %v2707
        %v3978 = vunpack.c.l.b16 %v2708
        %v3979 = vunpack.c.l.b16 %v2709
        %v3980 = vunpack.c.l.b16 %v2710
        %v3981 = vunpack.c.l.b16 %v2711
        %v3982 = vunpack.c.l.b16 %v2712
        %v3983 = vunpack.c.l.b16 %v2713
        %v3984 = vunpack.c.l.b16 %v2714
        %v3985 = vpack.c.b16 %v3922, %v3921
        %v3986 = vpack.c.b16 %v3924, %v3923
        %v3987 = vpack.c.b16 %v3926, %v3925
        %v3988 = vpack.c.b16 %v3928, %v3927
        %v3989 = vpack.c.b16 %v3930, %v3929
        %v3990 = vpack.c.b16 %v3932, %v3931
        %v3991 = vpack.c.b16 %v3934, %v3933
        %v3992 = vpack.c.b16 %v3936, %v3935
        %v3993 = vpack.c.b16 %v3938, %v3937
        %v3994 = vpack.c.b16 %v3940, %v3939
        %v3995 = vpack.c.b16 %v3942, %v3941
        %v3996 = vpack.c.b16 %v3944, %v3943
        %v3997 = vpack.c.b16 %v3946, %v3945
        %v3998 = vpack.c.b16 %v3948, %v3947
        %v3999 = vpack.c.b16 %v3950, %v3949
        %v4000 = vpack.c.b16 %v3952, %v3951
        %v4001 = vpack.c.b16 %v3954, %v3953
        %v4002 = vpack.c.b16 %v3956, %v3955
        %v4003 = vpack.c.b16 %v3958, %v3957
        %v4004 = vpack.c.b16 %v3960, %v3959
        %v4005 = vpack.c.b16 %v3962, %v3961
        %v4006 = vpack.c.b16 %v3964, %v3963
        %v4007 = vpack.c.b16 %v3966, %v3965
        %v4008 = vpack.c.b16 %v3968, %v3967
        %v4009 = vpack.c.b16 %v3970, %v3969
        %v4010 = vpack.c.b16 %v3972, %v3971
        %v4011 = vpack.c.b16 %v3974, %v3973
        %v4012 = vpack.c.b16 %v3976, %v3975
        %v4013 = vpack.c.b16 %v3978, %v3977
        %v4014 = vpack.c.b16 %v3980, %v3979
        %v4015 = vpack.c.b16 %v3982, %v3981
        %v4016 = vpack.c.b16 %v3984, %v3983
        %4049 = vmatprep.subr.bf16.mxu0 0
        %4050 = vmatpush1.bf16.msra.mxu0 %v3985
        %4051 = vmatprep.subr.bf16.mxu0 0
        %4052 = vmatpush1.bf16.msra.mxu0 %v3986
        %4053 = vmatprep.subr.bf16.mxu0 0
        %4054 = vmatpush1.bf16.msra.mxu0 %v3987
        %4055 = vmatprep.subr.bf16.mxu0 0
        %4056 = vmatpush1.bf16.msra.mxu0 %v3988
        %4057 = vmatprep.subr.bf16.mxu0 0
        %4058 = vmatpush1.bf16.msra.mxu0 %v3989
        %4059 = vmatprep.subr.bf16.mxu0 0
        %4060 = vmatpush1.bf16.msra.mxu0 %v3990
        %4061 = vmatprep.subr.bf16.mxu0 0
        %4062 = vmatpush1.bf16.msra.mxu0 %v3991
        %4063 = vmatprep.subr.bf16.mxu0 0
        %4064 = vmatpush1.bf16.msra.mxu0 %v3992
        %4065 = vmatprep.subr.bf16.mxu0 0
        %4066 = vmatpush1.bf16.msra.mxu0 %v3993
        %4067 = vmatprep.subr.bf16.mxu0 0
        %4068 = vmatpush1.bf16.msra.mxu0 %v3994
        %4069 = vmatprep.subr.bf16.mxu0 0
        %4070 = vmatpush1.bf16.msra.mxu0 %v3995
        %4071 = vmatprep.subr.bf16.mxu0 0
        %4072 = vmatpush1.bf16.msra.mxu0 %v3996
        %4073 = vmatprep.subr.bf16.mxu0 0
        %4074 = vmatpush1.bf16.msra.mxu0 %v3997
        %4075 = vmatprep.subr.bf16.mxu0 0
        %4076 = vmatpush1.bf16.msra.mxu0 %v3998
        %4077 = vmatprep.subr.bf16.mxu0 0
        %4078 = vmatpush1.bf16.msra.mxu0 %v3999
        %4079 = vmatprep.subr.bf16.mxu0 0
        %4080 = vmatpush1.bf16.msra.mxu0 %v4000
        %4081 = vmatprep.mubr.bf16.mxu0 %v3848
        %4082 = vmatmul.mubr.bf16.gmra.mrb[0].mxu0 %v3847
        %v4083 = vpop.f32.mrb[0].mxu0
        %v4084 = vadd.f32 %v3855, %v4083
        %v4085 = vpop.f32.mrb[0].mxu0
        %v4086 = vpop.f32.mrb[0].mxu0
        %v4087 = vadd.f32 %v3855, %v4086
        %v4088 = vpop.f32.mrb[0].mxu0
        %4089 = vdwg.mxu0
        %4090 = vmatprep.subr.bf16.mxu0 0
        %4091 = vmatpush1.bf16.msra.mxu0 %v4001
        %4092 = vmatprep.subr.bf16.mxu0 0
        %4093 = vmatpush1.bf16.msra.mxu0 %v4002
        %4094 = vmatprep.subr.bf16.mxu0 0
        %4095 = vmatpush1.bf16.msra.mxu0 %v4003
        %4096 = vmatprep.subr.bf16.mxu0 0
        %4097 = vmatpush1.bf16.msra.mxu0 %v4004
        %4098 = vmatprep.subr.bf16.mxu0 0
        %4099 = vmatpush1.bf16.msra.mxu0 %v4005
        %4100 = vmatprep.subr.bf16.mxu0 0
        %4101 = vmatpush1.bf16.msra.mxu0 %v4006
        %4102 = vmatprep.subr.bf16.mxu0 0
        %4103 = vmatpush1.bf16.msra.mxu0 %v4007
        %4104 = vmatprep.subr.bf16.mxu0 0
        %4105 = vmatpush1.bf16.msra.mxu0 %v4008
        %4106 = vmatprep.subr.bf16.mxu0 0
        %4107 = vmatpush1.bf16.msra.mxu0 %v4009
        %4108 = vmatprep.subr.bf16.mxu0 0
        %4109 = vmatpush1.bf16.msra.mxu0 %v4010
        %4110 = vmatprep.subr.bf16.mxu0 0
        %4111 = vmatpush1.bf16.msra.mxu0 %v4011
        %4112 = vmatprep.subr.bf16.mxu0 0
        %4113 = vmatpush1.bf16.msra.mxu0 %v4012
        %4114 = vmatprep.subr.bf16.mxu0 0
        %4115 = vmatpush1.bf16.msra.mxu0 %v4013
        %4116 = vmatprep.subr.bf16.mxu0 0
        %4117 = vmatpush1.bf16.msra.mxu0 %v4014
        %4118 = vmatprep.subr.bf16.mxu0 0
        %4119 = vmatpush1.bf16.msra.mxu0 %v4015
        %4120 = vmatprep.subr.bf16.mxu0 0
        %4121 = vmatpush1.bf16.msra.mxu0 %v4016
        %4122 = vmatprep.mubr.bf16.mxu0 %v3850
        %4123 = vmatmul.mubr.bf16.gmra.mrb[0].mxu0 %v3849
        %v4124 = vpop.f32.mrb[0].mxu0
        %v4125 = vadd.f32 %v4084, %v4124
        %v4126 = vpop.f32.mrb[0].mxu0
        %v4127 = vpop.f32.mrb[0].mxu0
        %v4128 = vadd.f32 %v4087, %v4127
        %v4129 = vpop.f32.mrb[0].mxu0
        %4130 = vdwg.mxu0
        %v4131 = vadd.f32 %v3569, %v4125
        %v4132 = vadd.f32 %v3570, %v4128
        %4133 = vadd.xlane.f32.xlu0 %v4131
        %v4134 = vpop.xlane.xlu0 %4133
        %4135 = vadd.xlane.f32.xlu0 %v4132
        %v4136 = vpop.xlane.xlu0 %4135
        %v4137 = vmul.f32 %v4134, %v3517
        %v4138 = vmul.f32 %v4136, %v3517
        %v4139 = vsub.f32 %v4131, %v4137
        %v4140 = vsub.f32 %v4132, %v4138
        %v4141 = vmul.f32 %v4139, %v4139
        %v4142 = vmul.f32 %v4140, %v4140
        %4143 = vadd.xlane.f32.xlu0 %v4141
        %v4144 = vpop.xlane.xlu0 %4143
        %4145 = vadd.xlane.f32.xlu0 %v4142
        %v4146 = vpop.xlane.xlu0 %4145
        %v4147 = vmul.f32 %v4144, %v3528
        %v4148 = vmul.f32 %v4146, %v3528
        %v4149 = vadd.f32 %v4147, 1e-06
        %v4150 = vadd.f32 %v4148, 1e-06
        %v4151 = vrsqrt.pop %v4149
        %v4152 = vmul.f32 %v4149, %v4151
        %vm4153 = vcmp.eq.f32.partialorder %v4149, inf
        %v4154 = vsel %vm4153, %v4149, %v4152
        %vm4155 = vcmp.eq.f32.partialorder %v4149, 0.0
        %v4156 = vand.u32 %v4149, 2147483648
        %v4157 = vsel %vm4155, %v4156, %v4154
        %v4158 = vrsqrt.pop %v4150
        %v4159 = vmul.f32 %v4150, %v4158
        %vm4160 = vcmp.eq.f32.partialorder %v4150, inf
        %v4161 = vsel %vm4160, %v4150, %v4159
        %vm4162 = vcmp.eq.f32.partialorder %v4150, 0.0
        %v4163 = vand.u32 %v4150, 2147483648
        %v4164 = vsel %vm4162, %v4163, %v4161
        %v4165 = vadd.f32 %v4157, 1e-06
        %v4166 = vadd.f32 %v4164, 1e-06
        %v4167 = vrcp.pop %v4165
        %v4168 = vmul.f32 1.0, %v4167
        %v4169 = vrcp.pop %v4166
        %v4170 = vmul.f32 1.0, %v4169
        %v4172 = vlaneseq
        %v4173 = vshrl.u32 %v4172, 7
        %v4174 = vsub.s32 0, %v4173
        %v4175 = vrot.slane %v2716, %v4174
        %v4177 = vmul.f32 %v4175, %v4139
        %v4178 = vmul.f32 %v4175, %v4140
        %v4179 = vmul.f32 %v4177, %v4168
        %v4180 = vmul.f32 %v4178, %v4170
        %v4182 = vlaneseq
        %v4183 = vshrl.u32 %v4182, 7
        %v4184 = vsub.s32 0, %v4183
        %v4185 = vrot.slane %v2717, %v4184
        %v4187 = vadd.f32 %v4179, %v4185
        %v4188 = vadd.f32 %v4180, %v4185
        %v4189 = vpack.c.bf16 %v4188, %v4187
        %s4190 = scalar_lea.vmem %s19, 128
        %v4191 = vld [vmem:[%s4190] sm:$0xff]
        %v4192 = vld [vmem:[%s4190 + $0x8] sm:$0xff]
        %v4193 = vld [vmem:[%s4190 + $0x10] sm:$0xff]
        %v4194 = vld [vmem:[%s4190 + $0x18] sm:$0xff]
        %v4195 = vld [vmem:[%s4190 + $0x20] sm:$0xff]
        %v4196 = vld [vmem:[%s4190 + $0x28] sm:$0xff]
        %v4197 = vld [vmem:[%s4190 + $0x30] sm:$0xff]
        %v4198 = vld [vmem:[%s4190 + $0x38] sm:$0xff]
        %v4199 = vld [vmem:[%s4190 + $0x40] sm:$0xff]
        %v4200 = vld [vmem:[%s4190 + $0x48] sm:$0xff]
        %v4201 = vld [vmem:[%s4190 + $0x50] sm:$0xff]
        %v4202 = vld [vmem:[%s4190 + $0x58] sm:$0xff]
        %v4203 = vld [vmem:[%s4190 + $0x60] sm:$0xff]
        %v4204 = vld [vmem:[%s4190 + $0x68] sm:$0xff]
        %v4205 = vld [vmem:[%s4190 + $0x70] sm:$0xff]
        %v4206 = vld [vmem:[%s4190 + $0x78] sm:$0xff]
        %v4223 = vunpack.c.l.b16 %v4191
        %v4224 = vunpack.c.h.b16 %v4191
        %v4225 = vunpack.c.l.b16 %v4192
        %v4226 = vunpack.c.h.b16 %v4192
        %v4227 = vunpack.c.l.b16 %v4193
        %v4228 = vunpack.c.h.b16 %v4193
        %v4229 = vunpack.c.l.b16 %v4194
        %v4230 = vunpack.c.h.b16 %v4194
        %v4231 = vunpack.c.l.b16 %v4195
        %v4232 = vunpack.c.h.b16 %v4195
        %v4233 = vunpack.c.l.b16 %v4196
        %v4234 = vunpack.c.h.b16 %v4196
        %v4235 = vunpack.c.l.b16 %v4197
        %v4236 = vunpack.c.h.b16 %v4197
        %v4237 = vunpack.c.l.b16 %v4198
        %v4238 = vunpack.c.h.b16 %v4198
        %v4239 = vunpack.c.l.b16 %v4199
        %v4240 = vunpack.c.h.b16 %v4199
        %v4241 = vunpack.c.l.b16 %v4200
        %v4242 = vunpack.c.h.b16 %v4200
        %v4243 = vunpack.c.l.b16 %v4201
        %v4244 = vunpack.c.h.b16 %v4201
        %v4245 = vunpack.c.l.b16 %v4202
        %v4246 = vunpack.c.h.b16 %v4202
        %v4247 = vunpack.c.l.b16 %v4203
        %v4248 = vunpack.c.h.b16 %v4203
        %v4249 = vunpack.c.l.b16 %v4204
        %v4250 = vunpack.c.h.b16 %v4204
        %v4251 = vunpack.c.l.b16 %v4205
        %v4252 = vunpack.c.h.b16 %v4205
        %v4253 = vunpack.c.l.b16 %v4206
        %v4254 = vunpack.c.h.b16 %v4206
        %v4255 = vpack.c.b16 %v4225, %v4223
        %v4256 = vpack.c.b16 %v4226, %v4224
        %v4257 = vpack.c.b16 %v4229, %v4227
        %v4258 = vpack.c.b16 %v4230, %v4228
        %v4259 = vpack.c.b16 %v4233, %v4231
        %v4260 = vpack.c.b16 %v4234, %v4232
        %v4261 = vpack.c.b16 %v4237, %v4235
        %v4262 = vpack.c.b16 %v4238, %v4236
        %v4263 = vpack.c.b16 %v4241, %v4239
        %v4264 = vpack.c.b16 %v4242, %v4240
        %v4265 = vpack.c.b16 %v4245, %v4243
        %v4266 = vpack.c.b16 %v4246, %v4244
        %v4267 = vpack.c.b16 %v4249, %v4247
        %v4268 = vpack.c.b16 %v4250, %v4248
        %v4269 = vpack.c.b16 %v4253, %v4251
        %v4270 = vpack.c.b16 %v4254, %v4252
        %4287 = vmatprep.subr.bf16.mxu0 %v4256
        %4288 = vmatpush1.bf16.msra.mxu0 %v4255
        %4289 = vmatprep.subr.bf16.mxu0 %v4258
        %4290 = vmatpush1.bf16.msra.mxu0 %v4257
        %4291 = vmatprep.subr.bf16.mxu0 %v4260
        %4292 = vmatpush1.bf16.msra.mxu0 %v4259
        %4293 = vmatprep.subr.bf16.mxu0 %v4262
        %4294 = vmatpush1.bf16.msra.mxu0 %v4261
        %4295 = vmatprep.subr.bf16.mxu0 %v4264
        %4296 = vmatpush1.bf16.msra.mxu0 %v4263
        %4297 = vmatprep.subr.bf16.mxu0 %v4266
        %4298 = vmatpush1.bf16.msra.mxu0 %v4265
        %4299 = vmatprep.subr.bf16.mxu0 %v4268
        %4300 = vmatpush1.bf16.msra.mxu0 %v4267
        %4301 = vmatprep.subr.bf16.mxu0 %v4270
        %4302 = vmatpush1.bf16.msra.mxu0 %v4269
        %4303 = vmatprep.subr.bf16.mxu0 0
        %4304 = vmatpush1.bf16.msra.mxu0 0
        %4305 = vmatprep.subr.bf16.mxu0 0
        %4306 = vmatpush1.bf16.msra.mxu0 0
        %4307 = vmatprep.subr.bf16.mxu0 0
        %4308 = vmatpush1.bf16.msra.mxu0 0
        %4309 = vmatprep.subr.bf16.mxu0 0
        %4310 = vmatpush1.bf16.msra.mxu0 0
        %4311 = vmatprep.subr.bf16.mxu0 0
        %4312 = vmatpush1.bf16.msra.mxu0 0
        %4313 = vmatprep.subr.bf16.mxu0 0
        %4314 = vmatpush1.bf16.msra.mxu0 0
        %4315 = vmatprep.subr.bf16.mxu0 0
        %4316 = vmatpush1.bf16.msra.mxu0 0
        %4317 = vmatprep.subr.bf16.mxu0 0
        %4318 = vmatpush1.bf16.msra.mxu0 0
        %4319 = vmatprep.mubr.bf16.mxu0 0
        %4320 = vmatmul.mubr.bf16.gmra.mrb[0].mxu0 %v4189
        %v4321 = vpop.f32.mrb[0].mxu0
        %v4322 = vadd.f32 0.0, %v4321
        %v4323 = vpop.f32.mrb[0].mxu0
        %v4324 = vadd.f32 0.0, %v4323
        %v4325 = vpop.f32.mrb[0].mxu0
        %v4326 = vadd.f32 0.0, %v4325
        %v4327 = vpop.f32.mrb[0].mxu0
        %v4328 = vadd.f32 0.0, %v4327
        %4329 = vdwg.mxu0
        %s4330 = scalar_lea.vmem [#allocation10], 1
        %v4331 = vld [vmem:[%s4330] sm:$0x1]
        %v4333 = vlaneseq
        %v4334 = vshrl.u32 %v4333, 7
        %v4335 = vsub.s32 0, %v4334
        %v4336 = vrot.slane %v4331, %v4335
        %v4338 = vadd.f32 %v4322, %v4336
        %v4339 = vadd.f32 %v4326, %v4336
        %s4340 = scalar_lea.vmem %s21, 64
        %v4341 = vld [vmem:[%s4340] sm:$0xf]
        %v4342 = vld [vmem:[%s4340 + $0x4] sm:$0xf]
        %v4343 = vld [vmem:[%s4340 + $0x8] sm:$0xf]
        %v4344 = vld [vmem:[%s4340 + $0xc] sm:$0xf]
        %v4345 = vld [vmem:[%s4340 + $0x10] sm:$0xf]
        %v4346 = vld [vmem:[%s4340 + $0x14] sm:$0xf]
        %v4347 = vld [vmem:[%s4340 + $0x18] sm:$0xf]
        %v4348 = vld [vmem:[%s4340 + $0x1c] sm:$0xf]
        %v4349 = vld [vmem:[%s4340 + $0x20] sm:$0xf]
        %v4350 = vld [vmem:[%s4340 + $0x24] sm:$0xf]
        %v4351 = vld [vmem:[%s4340 + $0x28] sm:$0xf]
        %v4352 = vld [vmem:[%s4340 + $0x2c] sm:$0xf]
        %v4353 = vld [vmem:[%s4340 + $0x30] sm:$0xf]
        %v4354 = vld [vmem:[%s4340 + $0x34] sm:$0xf]
        %v4355 = vld [vmem:[%s4340 + $0x38] sm:$0xf]
        %v4356 = vld [vmem:[%s4340 + $0x3c] sm:$0xf]
        %v4357 = vpack.c.bf16 %v4328, %v4324
        %4358 = vmatprep.subr.bf16.mxu0 0
        %4359 = vmatpush1.bf16.msra.mxu0 %v4357
        %4360 = vmatprep.subr.bf16.mxu0 0
        %4361 = vmatpush1.bf16.msra.mxu0 0
        %4362 = vmatprep.subr.bf16.mxu0 0
        %4363 = vmatpush1.bf16.msra.mxu0 0
        %4364 = vmatprep.subr.bf16.mxu0 0
        %4365 = vmatpush1.bf16.msra.mxu0 0
        %4366 = vmatprep.subr.bf16.mxu0 0
        %4367 = vmatpush1.bf16.msra.mxu0 0
        %4368 = vmatprep.subr.bf16.mxu0 0
        %4369 = vmatpush1.bf16.msra.mxu0 0
        %4370 = vmatprep.subr.bf16.mxu0 0
        %4371 = vmatpush1.bf16.msra.mxu0 0
        %4372 = vmatprep.subr.bf16.mxu0 0
        %4373 = vmatpush1.bf16.msra.mxu0 0
        %4374 = vmatprep.subr.bf16.mxu0 0
        %4375 = vmatpush1.bf16.msra.mxu0 0
        %4376 = vmatprep.subr.bf16.mxu0 0
        %4377 = vmatpush1.bf16.msra.mxu0 0
        %4378 = vmatprep.subr.bf16.mxu0 0
        %4379 = vmatpush1.bf16.msra.mxu0 0
        %4380 = vmatprep.subr.bf16.mxu0 0
        %4381 = vmatpush1.bf16.msra.mxu0 0
        %4382 = vmatprep.subr.bf16.mxu0 0
        %4383 = vmatpush1.bf16.msra.mxu0 0
        %4384 = vmatprep.subr.bf16.mxu0 0
        %4385 = vmatpush1.bf16.msra.mxu0 0
        %4386 = vmatprep.subr.bf16.mxu0 0
        %4387 = vmatpush1.bf16.msra.mxu0 0
        %4388 = vmatprep.subr.bf16.mxu0 0
        %4389 = vmatpush1.bf16.msra.mxu0 0
        %4390 = vmatprep.mubr.bf16.mxu0 0
        %4391 = vmatmul.mubr.bf16.gmra.mrb[0].mxu0 %v2317
        %v4392 = vpop.f32.mrb[0].mxu0
        %v4393 = vadd.f32 0.0, %v4392
        %v4394 = vpop.f32.mrb[0].mxu0
        %v4395 = vpop.f32.mrb[0].mxu0
        %v4396 = vadd.f32 0.0, %v4395
        %v4397 = vpop.f32.mrb[0].mxu0
        %4398 = vmatprep.mubr.bf16.mxu0 0
        %4399 = vmatmul.mubr.bf16.gmra.mrb[0].mxu0 %v2320
        %v4400 = vpop.f32.mrb[0].mxu0
        %v4401 = vadd.f32 0.0, %v4400
        %v4402 = vpop.f32.mrb[0].mxu0
        %v4403 = vpop.f32.mrb[0].mxu0
        %v4404 = vadd.f32 0.0, %v4403
        %v4405 = vpop.f32.mrb[0].mxu0
        %4406 = vmatprep.mubr.bf16.mxu0 0
        %4407 = vmatmul.mubr.bf16.gmra.mrb[0].mxu0 %v2323
        %v4408 = vpop.f32.mrb[0].mxu0
        %v4409 = vadd.f32 0.0, %v4408
        %v4410 = vpop.f32.mrb[0].mxu0
        %v4411 = vpop.f32.mrb[0].mxu0
        %v4412 = vadd.f32 0.0, %v4411
        %v4413 = vpop.f32.mrb[0].mxu0
        %4414 = vmatprep.mubr.bf16.mxu0 0
        %4415 = vmatmul.mubr.bf16.gmra.mrb[0].mxu0 %v2326
        %v4416 = vpop.f32.mrb[0].mxu0
        %v4417 = vadd.f32 0.0, %v4416
        %v4418 = vpop.f32.mrb[0].mxu0
        %v4419 = vpop.f32.mrb[0].mxu0
        %v4420 = vadd.f32 0.0, %v4419
        %v4421 = vpop.f32.mrb[0].mxu0
        %4422 = vmatprep.mubr.bf16.mxu0 0
        %4423 = vmatmul.mubr.bf16.gmra.mrb[0].mxu0 %v2329
        %v4424 = vpop.f32.mrb[0].mxu0
        %v4425 = vadd.f32 0.0, %v4424
        %v4426 = vpop.f32.mrb[0].mxu0
        %v4427 = vpop.f32.mrb[0].mxu0
        %v4428 = vadd.f32 0.0, %v4427
        %v4429 = vpop.f32.mrb[0].mxu0
        %4430 = vmatprep.mubr.bf16.mxu0 0
        %4431 = vmatmul.mubr.bf16.gmra.mrb[0].mxu0 %v2332
        %v4432 = vpop.f32.mrb[0].mxu0
        %v4433 = vadd.f32 0.0, %v4432
        %v4434 = vpop.f32.mrb[0].mxu0
        %v4435 = vpop.f32.mrb[0].mxu0
        %v4436 = vadd.f32 0.0, %v4435
        %v4437 = vpop.f32.mrb[0].mxu0
        %4438 = vmatprep.mubr.bf16.mxu0 0
        %4439 = vmatmul.mubr.bf16.gmra.mrb[0].mxu0 %v2335
        %v4440 = vpop.f32.mrb[0].mxu0
        %v4441 = vadd.f32 0.0, %v4440
        %v4442 = vpop.f32.mrb[0].mxu0
        %v4443 = vpop.f32.mrb[0].mxu0
        %v4444 = vadd.f32 0.0, %v4443
        %v4445 = vpop.f32.mrb[0].mxu0
        %4446 = vmatprep.mubr.bf16.mxu0 0
        %4447 = vmatmul.mubr.bf16.gmra.mrb[0].mxu0 %v2338
        %v4448 = vpop.f32.mrb[0].mxu0
        %v4449 = vadd.f32 0.0, %v4448
        %v4450 = vpop.f32.mrb[0].mxu0
        %v4451 = vpop.f32.mrb[0].mxu0
        %v4452 = vadd.f32 0.0, %v4451
        %v4453 = vpop.f32.mrb[0].mxu0
        %4454 = vdwg.mxu0
        %v4471 = vunpack.c.l.b16 %v4341
        %v4472 = vunpack.c.l.b16 %v4342
        %v4473 = vunpack.c.l.b16 %v4343
        %v4474 = vunpack.c.l.b16 %v4344
        %v4475 = vunpack.c.l.b16 %v4345
        %v4476 = vunpack.c.l.b16 %v4346
        %v4477 = vunpack.c.l.b16 %v4347
        %v4478 = vunpack.c.l.b16 %v4348
        %v4479 = vunpack.c.l.b16 %v4349
        %v4480 = vunpack.c.l.b16 %v4350
        %v4481 = vunpack.c.l.b16 %v4351
        %v4482 = vunpack.c.l.b16 %v4352
        %v4483 = vunpack.c.l.b16 %v4353
        %v4484 = vunpack.c.l.b16 %v4354
        %v4485 = vunpack.c.l.b16 %v4355
        %v4486 = vunpack.c.l.b16 %v4356
        %v4487 = vpack.c.b16 %v4472, %v4471
        %v4488 = vpack.c.b16 %v4474, %v4473
        %v4489 = vpack.c.b16 %v4476, %v4475
        %v4490 = vpack.c.b16 %v4478, %v4477
        %v4491 = vpack.c.b16 %v4480, %v4479
        %v4492 = vpack.c.b16 %v4482, %v4481
        %v4493 = vpack.c.b16 %v4484, %v4483
        %v4494 = vpack.c.b16 %v4486, %v4485
        %4503 = vmatprep.subr.bf16.mxu0 0
        %4504 = vmatpush1.bf16.msra.mxu0 %v4487
        %4505 = vmatprep.subr.bf16.mxu0 0
        %4506 = vmatpush1.bf16.msra.mxu0 %v4488
        %4507 = vmatprep.subr.bf16.mxu0 0
        %4508 = vmatpush1.bf16.msra.mxu0 %v4489
        %4509 = vmatprep.subr.bf16.mxu0 0
        %4510 = vmatpush1.bf16.msra.mxu0 %v4490
        %4511 = vmatprep.subr.bf16.mxu0 0
        %4512 = vmatpush1.bf16.msra.mxu0 %v4491
        %4513 = vmatprep.subr.bf16.mxu0 0
        %4514 = vmatpush1.bf16.msra.mxu0 %v4492
        %4515 = vmatprep.subr.bf16.mxu0 0
        %4516 = vmatpush1.bf16.msra.mxu0 %v4493
        %4517 = vmatprep.subr.bf16.mxu0 0
        %4518 = vmatpush1.bf16.msra.mxu0 %v4494
        %4519 = vmatprep.subr.bf16.mxu0 0
        %4520 = vmatpush1.bf16.msra.mxu0 0
        %4521 = vmatprep.subr.bf16.mxu0 0
        %4522 = vmatpush1.bf16.msra.mxu0 0
        %4523 = vmatprep.subr.bf16.mxu0 0
        %4524 = vmatpush1.bf16.msra.mxu0 0
        %4525 = vmatprep.subr.bf16.mxu0 0
        %4526 = vmatpush1.bf16.msra.mxu0 0
        %4527 = vmatprep.subr.bf16.mxu0 0
        %4528 = vmatpush1.bf16.msra.mxu0 0
        %4529 = vmatprep.subr.bf16.mxu0 0
        %4530 = vmatpush1.bf16.msra.mxu0 0
        %4531 = vmatprep.subr.bf16.mxu0 0
        %4532 = vmatpush1.bf16.msra.mxu0 0
        %4533 = vmatprep.subr.bf16.mxu0 0
        %4534 = vmatpush1.bf16.msra.mxu0 0
        %4535 = vmatprep.mubr.bf16.mxu0 0
        %4536 = vmatmul.mubr.bf16.gmra.mrb[0].mxu0 %v2035
        %v4537 = vpop.f32.mrb[0].mxu0
        %v4538 = vadd.f32 %v4393, %v4537
        %v4539 = vpop.f32.mrb[0].mxu0
        %v4540 = vpop.f32.mrb[0].mxu0
        %v4541 = vadd.f32 %v4396, %v4540
        %v4542 = vpop.f32.mrb[0].mxu0
        %4543 = vmatprep.mubr.bf16.mxu0 0
        %4544 = vmatmul.mubr.bf16.gmra.mrb[0].mxu0 %v2036
        %v4545 = vpop.f32.mrb[0].mxu0
        %v4546 = vadd.f32 %v4401, %v4545
        %v4547 = vpop.f32.mrb[0].mxu0
        %v4548 = vpop.f32.mrb[0].mxu0
        %v4549 = vadd.f32 %v4404, %v4548
        %v4550 = vpop.f32.mrb[0].mxu0
        %4551 = vmatprep.mubr.bf16.mxu0 0
        %4552 = vmatmul.mubr.bf16.gmra.mrb[0].mxu0 %v2037
        %v4553 = vpop.f32.mrb[0].mxu0
        %v4554 = vadd.f32 %v4409, %v4553
        %v4555 = vpop.f32.mrb[0].mxu0
        %v4556 = vpop.f32.mrb[0].mxu0
        %v4557 = vadd.f32 %v4412, %v4556
        %v4558 = vpop.f32.mrb[0].mxu0
        %4559 = vmatprep.mubr.bf16.mxu0 0
        %4560 = vmatmul.mubr.bf16.gmra.mrb[0].mxu0 %v2038
        %v4561 = vpop.f32.mrb[0].mxu0
        %v4562 = vadd.f32 %v4417, %v4561
        %v4563 = vpop.f32.mrb[0].mxu0
        %v4564 = vpop.f32.mrb[0].mxu0
        %v4565 = vadd.f32 %v4420, %v4564
        %v4566 = vpop.f32.mrb[0].mxu0
        %4567 = vmatprep.mubr.bf16.mxu0 0
        %4568 = vmatmul.mubr.bf16.gmra.mrb[0].mxu0 %v2039
        %v4569 = vpop.f32.mrb[0].mxu0
        %v4570 = vadd.f32 %v4425, %v4569
        %v4571 = vpop.f32.mrb[0].mxu0
        %v4572 = vpop.f32.mrb[0].mxu0
        %v4573 = vadd.f32 %v4428, %v4572
        %v4574 = vpop.f32.mrb[0].mxu0
        %4575 = vmatprep.mubr.bf16.mxu0 0
        %4576 = vmatmul.mubr.bf16.gmra.mrb[0].mxu0 %v2040
        %v4577 = vpop.f32.mrb[0].mxu0
        %v4578 = vadd.f32 %v4433, %v4577
        %v4579 = vpop.f32.mrb[0].mxu0
        %v4580 = vpop.f32.mrb[0].mxu0
        %v4581 = vadd.f32 %v4436, %v4580
        %v4582 = vpop.f32.mrb[0].mxu0
        %4583 = vmatprep.mubr.bf16.mxu0 0
        %4584 = vmatmul.mubr.bf16.gmra.mrb[0].mxu0 %v2041
        %v4585 = vpop.f32.mrb[0].mxu0
        %v4586 = vadd.f32 %v4441, %v4585
        %v4587 = vpop.f32.mrb[0].mxu0
        %v4588 = vpop.f32.mrb[0].mxu0
        %v4589 = vadd.f32 %v4444, %v4588
        %v4590 = vpop.f32.mrb[0].mxu0
        %4591 = vmatprep.mubr.bf16.mxu0 0
        %4592 = vmatmul.mubr.bf16.gmra.mrb[0].mxu0 %v2042
        %v4593 = vpop.f32.mrb[0].mxu0
        %v4594 = vadd.f32 %v4449, %v4593
        %v4595 = vpop.f32.mrb[0].mxu0
        %v4596 = vpop.f32.mrb[0].mxu0
        %v4597 = vadd.f32 %v4452, %v4596
        %v4598 = vpop.f32.mrb[0].mxu0
        %4599 = vdwg.mxu0
        %s4600 = scalar_lea.vmem [#allocation11], 64
        %v4601 = vld [vmem:[%s4600] sm:$0xf]
        %v4602 = vld [vmem:[%s4600 + $0x4] sm:$0xf]
        %v4603 = vld [vmem:[%s4600 + $0x8] sm:$0xf]
        %v4604 = vld [vmem:[%s4600 + $0xc] sm:$0xf]
        %v4605 = vld [vmem:[%s4600 + $0x10] sm:$0xf]
        %v4606 = vld [vmem:[%s4600 + $0x14] sm:$0xf]
        %v4607 = vld [vmem:[%s4600 + $0x18] sm:$0xf]
        %v4608 = vld [vmem:[%s4600 + $0x1c] sm:$0xf]
        %v4609 = vld [vmem:[%s4600 + $0x20] sm:$0xf]
        %v4610 = vld [vmem:[%s4600 + $0x24] sm:$0xf]
        %v4611 = vld [vmem:[%s4600 + $0x28] sm:$0xf]
        %v4612 = vld [vmem:[%s4600 + $0x2c] sm:$0xf]
        %v4613 = vld [vmem:[%s4600 + $0x30] sm:$0xf]
        %v4614 = vld [vmem:[%s4600 + $0x34] sm:$0xf]
        %v4615 = vld [vmem:[%s4600 + $0x38] sm:$0xf]
        %v4616 = vld [vmem:[%s4600 + $0x3c] sm:$0xf]
        %s4617 = scalar_lea.vmem [#allocation13], 1
        %v4618 = vld [vmem:[%s4617] sm:$0x1]
        %s4619 = scalar_lea.vmem [#allocation14], 64
        %v4620 = vld [vmem:[%s4619] sm:$0xf]
        %v4621 = vld [vmem:[%s4619 + $0x4] sm:$0xf]
        %v4622 = vld [vmem:[%s4619 + $0x8] sm:$0xf]
        %v4623 = vld [vmem:[%s4619 + $0xc] sm:$0xf]
        %v4624 = vld [vmem:[%s4619 + $0x10] sm:$0xf]
        %v4625 = vld [vmem:[%s4619 + $0x14] sm:$0xf]
        %v4626 = vld [vmem:[%s4619 + $0x18] sm:$0xf]
        %v4627 = vld [vmem:[%s4619 + $0x1c] sm:$0xf]
        %v4628 = vld [vmem:[%s4619 + $0x20] sm:$0xf]
        %v4629 = vld [vmem:[%s4619 + $0x24] sm:$0xf]
        %v4630 = vld [vmem:[%s4619 + $0x28] sm:$0xf]
        %v4631 = vld [vmem:[%s4619 + $0x2c] sm:$0xf]
        %v4632 = vld [vmem:[%s4619 + $0x30] sm:$0xf]
        %v4633 = vld [vmem:[%s4619 + $0x34] sm:$0xf]
        %v4634 = vld [vmem:[%s4619 + $0x38] sm:$0xf]
        %v4635 = vld [vmem:[%s4619 + $0x3c] sm:$0xf]
        %s4636 = scalar_lea.vmem [#allocation16], 1
        %v4637 = vld [vmem:[%s4636] sm:$0x1]
        %s4638 = scalar_lea.vmem [#allocation17], 1
        %v4639 = vld [vmem:[%s4638] sm:$0x1]
        %s4640 = scalar_lea.vmem [#allocation19], 1
        %v4641 = vld [vmem:[%s4640] sm:$0x1]
        %s4642 = scalar_lea.vmem %s37, 256
        %v4643 = vld [vmem:[%s4642] sm:$0xff]
        %v4644 = vld [vmem:[%s4642 + $0x8] sm:$0xff]
        %v4645 = vld [vmem:[%s4642 + $0x10] sm:$0xff]
        %v4646 = vld [vmem:[%s4642 + $0x18] sm:$0xff]
        %v4647 = vld [vmem:[%s4642 + $0x20] sm:$0xff]
        %v4648 = vld [vmem:[%s4642 + $0x28] sm:$0xff]
        %v4649 = vld [vmem:[%s4642 + $0x30] sm:$0xff]
        %v4650 = vld [vmem:[%s4642 + $0x38] sm:$0xff]
        %v4651 = vld [vmem:[%s4642 + $0x40] sm:$0xff]
        %v4652 = vld [vmem:[%s4642 + $0x48] sm:$0xff]
        %v4653 = vld [vmem:[%s4642 + $0x50] sm:$0xff]
        %v4654 = vld [vmem:[%s4642 + $0x58] sm:$0xff]
        %v4655 = vld [vmem:[%s4642 + $0x60] sm:$0xff]
        %v4656 = vld [vmem:[%s4642 + $0x68] sm:$0xff]
        %v4657 = vld [vmem:[%s4642 + $0x70] sm:$0xff]
        %v4658 = vld [vmem:[%s4642 + $0x78] sm:$0xff]
        %v4659 = vld [vmem:[%s4642 + $0x80] sm:$0xff]
        %v4660 = vld [vmem:[%s4642 + $0x88] sm:$0xff]
        %v4661 = vld [vmem:[%s4642 + $0x90] sm:$0xff]
        %v4662 = vld [vmem:[%s4642 + $0x98] sm:$0xff]
        %v4663 = vld [vmem:[%s4642 + $0xa0] sm:$0xff]
        %v4664 = vld [vmem:[%s4642 + $0xa8] sm:$0xff]
        %v4665 = vld [vmem:[%s4642 + $0xb0] sm:$0xff]
        %v4666 = vld [vmem:[%s4642 + $0xb8] sm:$0xff]
        %v4667 = vld [vmem:[%s4642 + $0xc0] sm:$0xff]
        %v4668 = vld [vmem:[%s4642 + $0xc8] sm:$0xff]
        %v4669 = vld [vmem:[%s4642 + $0xd0] sm:$0xff]
        %v4670 = vld [vmem:[%s4642 + $0xd8] sm:$0xff]
        %v4671 = vld [vmem:[%s4642 + $0xe0] sm:$0xff]
        %v4672 = vld [vmem:[%s4642 + $0xe8] sm:$0xff]
        %v4673 = vld [vmem:[%s4642 + $0xf0] sm:$0xff]
        %v4674 = vld [vmem:[%s4642 + $0xf8] sm:$0xff]
        %s4675 = scalar_lea.vmem [#allocation20], 4
        %v4676 = vld [vmem:[%s4675] sm:$0xf]
        %s4677 = scalar_lea.vmem [#allocation22], 256
        %v4678 = vld [vmem:[%s4677] sm:$0xf]
        %v4679 = vld [vmem:[%s4677 + $0x4] sm:$0xf]
        %v4680 = vld [vmem:[%s4677 + $0x8] sm:$0xf]
        %v4681 = vld [vmem:[%s4677 + $0xc] sm:$0xf]
        %v4682 = vld [vmem:[%s4677 + $0x10] sm:$0xf]
        %v4683 = vld [vmem:[%s4677 + $0x14] sm:$0xf]
        %v4684 = vld [vmem:[%s4677 + $0x18] sm:$0xf]
        %v4685 = vld [vmem:[%s4677 + $0x1c] sm:$0xf]
        %v4686 = vld [vmem:[%s4677 + $0x20] sm:$0xf]
        %v4687 = vld [vmem:[%s4677 + $0x24] sm:$0xf]
        %v4688 = vld [vmem:[%s4677 + $0x28] sm:$0xf]
        %v4689 = vld [vmem:[%s4677 + $0x2c] sm:$0xf]
        %v4690 = vld [vmem:[%s4677 + $0x30] sm:$0xf]
        %v4691 = vld [vmem:[%s4677 + $0x34] sm:$0xf]
        %v4692 = vld [vmem:[%s4677 + $0x38] sm:$0xf]
        %v4693 = vld [vmem:[%s4677 + $0x3c] sm:$0xf]
        %v4694 = vld [vmem:[%s4677 + $0x40] sm:$0xf]
        %v4695 = vld [vmem:[%s4677 + $0x44] sm:$0xf]
        %v4696 = vld [vmem:[%s4677 + $0x48] sm:$0xf]
        %v4697 = vld [vmem:[%s4677 + $0x4c] sm:$0xf]
        %v4698 = vld [vmem:[%s4677 + $0x50] sm:$0xf]
        %v4699 = vld [vmem:[%s4677 + $0x54] sm:$0xf]
        %v4700 = vld [vmem:[%s4677 + $0x58] sm:$0xf]
        %v4701 = vld [vmem:[%s4677 + $0x5c] sm:$0xf]
        %v4702 = vld [vmem:[%s4677 + $0x60] sm:$0xf]
        %v4703 = vld [vmem:[%s4677 + $0x64] sm:$0xf]
        %v4704 = vld [vmem:[%s4677 + $0x68] sm:$0xf]
        %v4705 = vld [vmem:[%s4677 + $0x6c] sm:$0xf]
        %v4706 = vld [vmem:[%s4677 + $0x70] sm:$0xf]
        %v4707 = vld [vmem:[%s4677 + $0x74] sm:$0xf]
        %v4708 = vld [vmem:[%s4677 + $0x78] sm:$0xf]
        %v4709 = vld [vmem:[%s4677 + $0x7c] sm:$0xf]
        %v4710 = vld [vmem:[%s4677 + $0x80] sm:$0xf]
        %v4711 = vld [vmem:[%s4677 + $0x84] sm:$0xf]
        %v4712 = vld [vmem:[%s4677 + $0x88] sm:$0xf]
        %v4713 = vld [vmem:[%s4677 + $0x8c] sm:$0xf]
        %v4714 = vld [vmem:[%s4677 + $0x90] sm:$0xf]
        %v4715 = vld [vmem:[%s4677 + $0x94] sm:$0xf]
        %v4716 = vld [vmem:[%s4677 + $0x98] sm:$0xf]
        %v4717 = vld [vmem:[%s4677 + $0x9c] sm:$0xf]
        %v4718 = vld [vmem:[%s4677 + $0xa0] sm:$0xf]
        %v4719 = vld [vmem:[%s4677 + $0xa4] sm:$0xf]
        %v4720 = vld [vmem:[%s4677 + $0xa8] sm:$0xf]
        %v4721 = vld [vmem:[%s4677 + $0xac] sm:$0xf]
        %v4722 = vld [vmem:[%s4677 + $0xb0] sm:$0xf]
        %v4723 = vld [vmem:[%s4677 + $0xb4] sm:$0xf]
        %v4724 = vld [vmem:[%s4677 + $0xb8] sm:$0xf]
        %v4725 = vld [vmem:[%s4677 + $0xbc] sm:$0xf]
        %v4726 = vld [vmem:[%s4677 + $0xc0] sm:$0xf]
        %v4727 = vld [vmem:[%s4677 + $0xc4] sm:$0xf]
        %v4728 = vld [vmem:[%s4677 + $0xc8] sm:$0xf]
        %v4729 = vld [vmem:[%s4677 + $0xcc] sm:$0xf]
        %v4730 = vld [vmem:[%s4677 + $0xd0] sm:$0xf]
        %v4731 = vld [vmem:[%s4677 + $0xd4] sm:$0xf]
        %v4732 = vld [vmem:[%s4677 + $0xd8] sm:$0xf]
        %v4733 = vld [vmem:[%s4677 + $0xdc] sm:$0xf]
        %v4734 = vld [vmem:[%s4677 + $0xe0] sm:$0xf]
        %v4735 = vld [vmem:[%s4677 + $0xe4] sm:$0xf]
        %v4736 = vld [vmem:[%s4677 + $0xe8] sm:$0xf]
        %v4737 = vld [vmem:[%s4677 + $0xec] sm:$0xf]
        %v4738 = vld [vmem:[%s4677 + $0xf0] sm:$0xf]
        %v4739 = vld [vmem:[%s4677 + $0xf4] sm:$0xf]
        %v4740 = vld [vmem:[%s4677 + $0xf8] sm:$0xf]
        %v4741 = vld [vmem:[%s4677 + $0xfc] sm:$0xf]
        %s4742 = scalar_lea.vmem [#allocation23], 1
        %v4743 = vld [vmem:[%s4742] sm:$0x1]
        %s4744 = scalar_lea.vmem [#allocation25], 1
        %v4745 = vld [vmem:[%s4744] sm:$0x1]
        %s4746 = scalar_lea.vmem [#allocation26], 1
        %v4747 = vld [vmem:[%s4746] sm:$0x1]
        %v4750 = vcombine.high %v4338, %v4338
        %v4752 = vunpack.c.l.s4 1966171168
        %v4753 = vunpack.c.0.s8 %v4752
        %v4754 = vlaneseq
        %v4755 = vshrl.u32 %v4754, 7
        %v4756 = vsub.s32 %v4753, %v4755
        %v4757 = vrot.slane %v4338, %v4756
        %v4759 = vunpack.c.l.s4 1966171168
        %v4760 = vunpack.c.0.s8 %v4759
        %v4761 = vlaneseq
        %v4762 = vshrl.u32 %v4761, 7
        %v4763 = vsub.s32 %v4760, %v4762
        %v4764 = vrot.slane %v4750, %v4763
        %v4765 = vcombine.high %v4757, %v4757
        %v4766 = vcombine.high %v4764, %v4764
        %v4768 = vunpack.c.l.s4 1966171168
        %v4769 = vunpack.c.0.s8 %v4768
        %v4770 = vlaneseq
        %v4771 = vshrl.u32 %v4770, 7
        %v4772 = vsub.s32 %v4769, %v4771
        %v4773 = vrot.slane %v4757, %v4772
        %v4775 = vunpack.c.l.s4 1966171168
        %v4776 = vunpack.c.0.s8 %v4775
        %v4777 = vlaneseq
        %v4778 = vshrl.u32 %v4777, 7
        %v4779 = vsub.s32 %v4776, %v4778
        %v4780 = vrot.slane %v4764, %v4779
        %v4782 = vunpack.c.l.s4 1966171168
        %v4783 = vunpack.c.0.s8 %v4782
        %v4784 = vlaneseq
        %v4785 = vshrl.u32 %v4784, 7
        %v4786 = vsub.s32 %v4783, %v4785
        %v4787 = vrot.slane %v4765, %v4786
        %v4789 = vunpack.c.l.s4 1966171168
        %v4790 = vunpack.c.0.s8 %v4789
        %v4791 = vlaneseq
        %v4792 = vshrl.u32 %v4791, 7
        %v4793 = vsub.s32 %v4790, %v4792
        %v4794 = vrot.slane %v4766, %v4793
        %v4795 = vcombine.high %v4773, %v4773
        %v4796 = vcombine.high %v4780, %v4780
        %v4797 = vcombine.high %v4787, %v4787
        %v4798 = vcombine.high %v4794, %v4794
        %v4799 = vcombine.high %v4339, %v4339
        %v4801 = vunpack.c.l.s4 1966171168
        %v4802 = vunpack.c.0.s8 %v4801
        %v4803 = vlaneseq
        %v4804 = vshrl.u32 %v4803, 7
        %v4805 = vsub.s32 %v4802, %v4804
        %v4806 = vrot.slane %v4339, %v4805
        %v4808 = vunpack.c.l.s4 1966171168
        %v4809 = vunpack.c.0.s8 %v4808
        %v4810 = vlaneseq
        %v4811 = vshrl.u32 %v4810, 7
        %v4812 = vsub.s32 %v4809, %v4811
        %v4813 = vrot.slane %v4799, %v4812
        %v4814 = vcombine.high %v4806, %v4806
        %v4815 = vcombine.high %v4813, %v4813
        %v4817 = vunpack.c.l.s4 1966171168
        %v4818 = vunpack.c.0.s8 %v4817
        %v4819 = vlaneseq
        %v4820 = vshrl.u32 %v4819, 7
        %v4821 = vsub.s32 %v4818, %v4820
        %v4822 = vrot.slane %v4806, %v4821
        %v4824 = vunpack.c.l.s4 1966171168
        %v4825 = vunpack.c.0.s8 %v4824
        %v4826 = vlaneseq
        %v4827 = vshrl.u32 %v4826, 7
        %v4828 = vsub.s32 %v4825, %v4827
        %v4829 = vrot.slane %v4813, %v4828
        %v4831 = vunpack.c.l.s4 1966171168
        %v4832 = vunpack.c.0.s8 %v4831
        %v4833 = vlaneseq
        %v4834 = vshrl.u32 %v4833, 7
        %v4835 = vsub.s32 %v4832, %v4834
        %v4836 = vrot.slane %v4814, %v4835
        %v4838 = vunpack.c.l.s4 1966171168
        %v4839 = vunpack.c.0.s8 %v4838
        %v4840 = vlaneseq
        %v4841 = vshrl.u32 %v4840, 7
        %v4842 = vsub.s32 %v4839, %v4841
        %v4843 = vrot.slane %v4815, %v4842
        %v4844 = vcombine.high %v4822, %v4822
        %v4845 = vcombine.high %v4829, %v4829
        %v4846 = vcombine.high %v4836, %v4836
        %v4847 = vcombine.high %v4843, %v4843
        %v4848 = vlaneseq
        %v4849 = vshrl.u32 %v4848, 7
        %v4850 = vsub.s32 0, %v4849
        %v4851 = vrot.slane %v4773, %v4850
        %v4852 = vlaneseq
        %v4853 = vshrl.u32 %v4852, 7
        %v4854 = vsub.s32 0, %v4853
        %v4855 = vrot.slane %v4787, %v4854
        %v4856 = vlaneseq
        %v4857 = vshrl.u32 %v4856, 7
        %v4858 = vsub.s32 0, %v4857
        %v4859 = vrot.slane %v4795, %v4858
        %v4860 = vlaneseq
        %v4861 = vshrl.u32 %v4860, 7
        %v4862 = vsub.s32 0, %v4861
        %v4863 = vrot.slane %v4797, %v4862
        %v4864 = vlaneseq
        %v4865 = vshrl.u32 %v4864, 7
        %v4866 = vsub.s32 0, %v4865
        %v4867 = vrot.slane %v4780, %v4866
        %v4868 = vlaneseq
        %v4869 = vshrl.u32 %v4868, 7
        %v4870 = vsub.s32 0, %v4869
        %v4871 = vrot.slane %v4794, %v4870
        %v4872 = vlaneseq
        %v4873 = vshrl.u32 %v4872, 7
        %v4874 = vsub.s32 0, %v4873
        %v4875 = vrot.slane %v4796, %v4874
        %v4876 = vlaneseq
        %v4877 = vshrl.u32 %v4876, 7
        %v4878 = vsub.s32 0, %v4877
        %v4879 = vrot.slane %v4798, %v4878
        %v4880 = vlaneseq
        %v4881 = vshrl.u32 %v4880, 7
        %v4882 = vsub.s32 0, %v4881
        %v4883 = vrot.slane %v4822, %v4882
        %v4884 = vlaneseq
        %v4885 = vshrl.u32 %v4884, 7
        %v4886 = vsub.s32 0, %v4885
        %v4887 = vrot.slane %v4836, %v4886
        %v4888 = vlaneseq
        %v4889 = vshrl.u32 %v4888, 7
        %v4890 = vsub.s32 0, %v4889
        %v4891 = vrot.slane %v4844, %v4890
        %v4892 = vlaneseq
        %v4893 = vshrl.u32 %v4892, 7
        %v4894 = vsub.s32 0, %v4893
        %v4895 = vrot.slane %v4846, %v4894
        %v4896 = vlaneseq
        %v4897 = vshrl.u32 %v4896, 7
        %v4898 = vsub.s32 0, %v4897
        %v4899 = vrot.slane %v4829, %v4898
        %v4900 = vlaneseq
        %v4901 = vshrl.u32 %v4900, 7
        %v4902 = vsub.s32 0, %v4901
        %v4903 = vrot.slane %v4843, %v4902
        %v4904 = vlaneseq
        %v4905 = vshrl.u32 %v4904, 7
        %v4906 = vsub.s32 0, %v4905
        %v4907 = vrot.slane %v4845, %v4906
        %v4908 = vlaneseq
        %v4909 = vshrl.u32 %v4908, 7
        %v4910 = vsub.s32 0, %v4909
        %v4911 = vrot.slane %v4847, %v4910
        %v4928 = vadd.f32 %v4538, %v4851
        %v4929 = vadd.f32 %v4541, %v4855
        %v4930 = vadd.f32 %v4546, %v4859
        %v4931 = vadd.f32 %v4549, %v4863
        %v4932 = vadd.f32 %v4554, %v4867
        %v4933 = vadd.f32 %v4557, %v4871
        %v4934 = vadd.f32 %v4562, %v4875
        %v4935 = vadd.f32 %v4565, %v4879
        %v4936 = vadd.f32 %v4570, %v4883
        %v4937 = vadd.f32 %v4573, %v4887
        %v4938 = vadd.f32 %v4578, %v4891
        %v4939 = vadd.f32 %v4581, %v4895
        %v4940 = vadd.f32 %v4586, %v4899
        %v4941 = vadd.f32 %v4589, %v4903
        %v4942 = vadd.f32 %v4594, %v4907
        %v4943 = vadd.f32 %v4597, %v4911
        %v4944 = vmax.f32 %v4928, 0.0
        %v4945 = vmax.f32 %v4929, 0.0
        %v4946 = vmax.f32 %v4930, 0.0
        %v4947 = vmax.f32 %v4931, 0.0
        %v4948 = vmax.f32 %v4932, 0.0
        %v4949 = vmax.f32 %v4933, 0.0
        %v4950 = vmax.f32 %v4934, 0.0
        %v4951 = vmax.f32 %v4935, 0.0
        %v4952 = vmax.f32 %v4936, 0.0
        %v4953 = vmax.f32 %v4937, 0.0
        %v4954 = vmax.f32 %v4938, 0.0
        %v4955 = vmax.f32 %v4939, 0.0
        %v4956 = vmax.f32 %v4940, 0.0
        %v4957 = vmax.f32 %v4941, 0.0
        %v4958 = vmax.f32 %v4942, 0.0
        %v4959 = vmax.f32 %v4943, 0.0
        %v4960 = vpack.c.bf16 %v4945, %v4944
        %v4961 = vpack.c.bf16 %v4947, %v4946
        %v4962 = vpack.c.bf16 %v4949, %v4948
        %v4963 = vpack.c.bf16 %v4951, %v4950
        %v4964 = vpack.c.bf16 %v4953, %v4952
        %v4965 = vpack.c.bf16 %v4955, %v4954
        %v4966 = vpack.c.bf16 %v4957, %v4956
        %v4967 = vpack.c.bf16 %v4959, %v4958
        %v4969 = vlaneseq
        %v4970 = vshrl.u32 %v4969, 7
        %v4971 = vsub.s32 0, %v4970
        %v4972 = vrot.slane %v4618, %v4971
        %v4990 = vunpack.c.l.b16 %v4601
        %v4991 = vunpack.c.l.b16 %v4602
        %v4992 = vunpack.c.l.b16 %v4603
        %v4993 = vunpack.c.l.b16 %v4604
        %v4994 = vunpack.c.l.b16 %v4605
        %v4995 = vunpack.c.l.b16 %v4606
        %v4996 = vunpack.c.l.b16 %v4607
        %v4997 = vunpack.c.l.b16 %v4608
        %v4998 = vunpack.c.l.b16 %v4609
        %v4999 = vunpack.c.l.b16 %v4610
        %v5000 = vunpack.c.l.b16 %v4611
        %v5001 = vunpack.c.l.b16 %v4612
        %v5002 = vunpack.c.l.b16 %v4613
        %v5003 = vunpack.c.l.b16 %v4614
        %v5004 = vunpack.c.l.b16 %v4615
        %v5005 = vunpack.c.l.b16 %v4616
        %v5006 = vpack.c.b16 %v4991, %v4990
        %v5007 = vpack.c.b16 %v4993, %v4992
        %v5008 = vpack.c.b16 %v4995, %v4994
        %v5009 = vpack.c.b16 %v4997, %v4996
        %v5010 = vpack.c.b16 %v4999, %v4998
        %v5011 = vpack.c.b16 %v5001, %v5000
        %v5012 = vpack.c.b16 %v5003, %v5002
        %v5013 = vpack.c.b16 %v5005, %v5004
        %5022 = vmatprep.subr.bf16.mxu0 0
        %5023 = vmatpush1.bf16.msra.mxu0 %v5006
        %5024 = vmatprep.subr.bf16.mxu0 0
        %5025 = vmatpush1.bf16.msra.mxu0 %v5007
        %5026 = vmatprep.subr.bf16.mxu0 0
        %5027 = vmatpush1.bf16.msra.mxu0 %v5008
        %5028 = vmatprep.subr.bf16.mxu0 0
        %5029 = vmatpush1.bf16.msra.mxu0 %v5009
        %5030 = vmatprep.subr.bf16.mxu0 0
        %5031 = vmatpush1.bf16.msra.mxu0 %v5010
        %5032 = vmatprep.subr.bf16.mxu0 0
        %5033 = vmatpush1.bf16.msra.mxu0 %v5011
        %5034 = vmatprep.subr.bf16.mxu0 0
        %5035 = vmatpush1.bf16.msra.mxu0 %v5012
        %5036 = vmatprep.subr.bf16.mxu0 0
        %5037 = vmatpush1.bf16.msra.mxu0 %v5013
        %5038 = vmatprep.subr.bf16.mxu0 0
        %5039 = vmatpush1.bf16.msra.mxu0 0
        %5040 = vmatprep.subr.bf16.mxu0 0
        %5041 = vmatpush1.bf16.msra.mxu0 0
        %5042 = vmatprep.subr.bf16.mxu0 0
        %5043 = vmatpush1.bf16.msra.mxu0 0
        %5044 = vmatprep.subr.bf16.mxu0 0
        %5045 = vmatpush1.bf16.msra.mxu0 0
        %5046 = vmatprep.subr.bf16.mxu0 0
        %5047 = vmatpush1.bf16.msra.mxu0 0
        %5048 = vmatprep.subr.bf16.mxu0 0
        %5049 = vmatpush1.bf16.msra.mxu0 0
        %5050 = vmatprep.subr.bf16.mxu0 0
        %5051 = vmatpush1.bf16.msra.mxu0 0
        %5052 = vmatprep.subr.bf16.mxu0 0
        %5053 = vmatpush1.bf16.msra.mxu0 0
        %5054 = vmatprep.mubr.bf16.mxu0 0
        %5055 = vmatmul.mubr.bf16.gmra.mrb[0].mxu0 %v4960
        %v5056 = vpop.f32.mrb[0].mxu0
        %v5057 = vadd.f32 %v4972, %v5056
        %v5058 = vpop.f32.mrb[0].mxu0
        %v5059 = vpop.f32.mrb[0].mxu0
        %v5060 = vadd.f32 %v4972, %v5059
        %v5061 = vpop.f32.mrb[0].mxu0
        %5062 = vmatprep.mubr.bf16.mxu0 0
        %5063 = vmatmul.mubr.bf16.gmra.mrb[0].mxu0 %v4961
        %v5064 = vpop.f32.mrb[0].mxu0
        %v5065 = vadd.f32 %v4972, %v5064
        %v5066 = vpop.f32.mrb[0].mxu0
        %v5067 = vpop.f32.mrb[0].mxu0
        %v5068 = vadd.f32 %v4972, %v5067
        %v5069 = vpop.f32.mrb[0].mxu0
        %5070 = vmatprep.mubr.bf16.mxu0 0
        %5071 = vmatmul.mubr.bf16.gmra.mrb[0].mxu0 %v4962
        %v5072 = vpop.f32.mrb[0].mxu0
        %v5073 = vadd.f32 %v4972, %v5072
        %v5074 = vpop.f32.mrb[0].mxu0
        %v5075 = vpop.f32.mrb[0].mxu0
        %v5076 = vadd.f32 %v4972, %v5075
        %v5077 = vpop.f32.mrb[0].mxu0
        %5078 = vmatprep.mubr.bf16.mxu0 0
        %5079 = vmatmul.mubr.bf16.gmra.mrb[0].mxu0 %v4963
        %v5080 = vpop.f32.mrb[0].mxu0
        %v5081 = vadd.f32 %v4972, %v5080
        %v5082 = vpop.f32.mrb[0].mxu0
        %v5083 = vpop.f32.mrb[0].mxu0
        %v5084 = vadd.f32 %v4972, %v5083
        %v5085 = vpop.f32.mrb[0].mxu0
        %5086 = vmatprep.mubr.bf16.mxu0 0
        %5087 = vmatmul.mubr.bf16.gmra.mrb[0].mxu0 %v4964
        %v5088 = vpop.f32.mrb[0].mxu0
        %v5089 = vadd.f32 %v4972, %v5088
        %v5090 = vpop.f32.mrb[0].mxu0
        %v5091 = vpop.f32.mrb[0].mxu0
        %v5092 = vadd.f32 %v4972, %v5091
        %v5093 = vpop.f32.mrb[0].mxu0
        %5094 = vmatprep.mubr.bf16.mxu0 0
        %5095 = vmatmul.mubr.bf16.gmra.mrb[0].mxu0 %v4965
        %v5096 = vpop.f32.mrb[0].mxu0
        %v5097 = vadd.f32 %v4972, %v5096
        %v5098 = vpop.f32.mrb[0].mxu0
        %v5099 = vpop.f32.mrb[0].mxu0
        %v5100 = vadd.f32 %v4972, %v5099
        %v5101 = vpop.f32.mrb[0].mxu0
        %5102 = vmatprep.mubr.bf16.mxu0 0
        %5103 = vmatmul.mubr.bf16.gmra.mrb[0].mxu0 %v4966
        %v5104 = vpop.f32.mrb[0].mxu0
        %v5105 = vadd.f32 %v4972, %v5104
        %v5106 = vpop.f32.mrb[0].mxu0
        %v5107 = vpop.f32.mrb[0].mxu0
        %v5108 = vadd.f32 %v4972, %v5107
        %v5109 = vpop.f32.mrb[0].mxu0
        %5110 = vmatprep.mubr.bf16.mxu0 0
        %5111 = vmatmul.mubr.bf16.gmra.mrb[0].mxu0 %v4967
        %v5112 = vpop.f32.mrb[0].mxu0
        %v5113 = vadd.f32 %v4972, %v5112
        %v5114 = vpop.f32.mrb[0].mxu0
        %v5115 = vpop.f32.mrb[0].mxu0
        %v5116 = vadd.f32 %v4972, %v5115
        %v5117 = vpop.f32.mrb[0].mxu0
        %5118 = vdwg.mxu0
        %v5119 = vmax.f32 %v5057, 0.0
        %v5120 = vmax.f32 %v5060, 0.0
        %v5121 = vmax.f32 %v5065, 0.0
        %v5122 = vmax.f32 %v5068, 0.0
        %v5123 = vmax.f32 %v5073, 0.0
        %v5124 = vmax.f32 %v5076, 0.0
        %v5125 = vmax.f32 %v5081, 0.0
        %v5126 = vmax.f32 %v5084, 0.0
        %v5127 = vmax.f32 %v5089, 0.0
        %v5128 = vmax.f32 %v5092, 0.0
        %v5129 = vmax.f32 %v5097, 0.0
        %v5130 = vmax.f32 %v5100, 0.0
        %v5131 = vmax.f32 %v5105, 0.0
        %v5132 = vmax.f32 %v5108, 0.0
        %v5133 = vmax.f32 %v5113, 0.0
        %v5134 = vmax.f32 %v5116, 0.0
        %v5135 = vpack.c.bf16 %v5120, %v5119
        %v5136 = vpack.c.bf16 %v5122, %v5121
        %v5137 = vpack.c.bf16 %v5124, %v5123
        %v5138 = vpack.c.bf16 %v5126, %v5125
        %v5139 = vpack.c.bf16 %v5128, %v5127
        %v5140 = vpack.c.bf16 %v5130, %v5129
        %v5141 = vpack.c.bf16 %v5132, %v5131
        %v5142 = vpack.c.bf16 %v5134, %v5133
        %v5144 = vlaneseq
        %v5145 = vshrl.u32 %v5144, 7
        %v5146 = vsub.s32 0, %v5145
        %v5147 = vrot.slane %v4637, %v5146
        %v5165 = vunpack.c.l.b16 %v4620
        %v5166 = vunpack.c.l.b16 %v4621
        %v5167 = vunpack.c.l.b16 %v4622
        %v5168 = vunpack.c.l.b16 %v4623
        %v5169 = vunpack.c.l.b16 %v4624
        %v5170 = vunpack.c.l.b16 %v4625
        %v5171 = vunpack.c.l.b16 %v4626
        %v5172 = vunpack.c.l.b16 %v4627
        %v5173 = vunpack.c.l.b16 %v4628
        %v5174 = vunpack.c.l.b16 %v4629
        %v5175 = vunpack.c.l.b16 %v4630
        %v5176 = vunpack.c.l.b16 %v4631
        %v5177 = vunpack.c.l.b16 %v4632
        %v5178 = vunpack.c.l.b16 %v4633
        %v5179 = vunpack.c.l.b16 %v4634
        %v5180 = vunpack.c.l.b16 %v4635
        %v5181 = vpack.c.b16 %v5166, %v5165
        %v5182 = vpack.c.b16 %v5168, %v5167
        %v5183 = vpack.c.b16 %v5170, %v5169
        %v5184 = vpack.c.b16 %v5172, %v5171
        %v5185 = vpack.c.b16 %v5174, %v5173
        %v5186 = vpack.c.b16 %v5176, %v5175
        %v5187 = vpack.c.b16 %v5178, %v5177
        %v5188 = vpack.c.b16 %v5180, %v5179
        %5197 = vmatprep.subr.bf16.mxu0 0
        %5198 = vmatpush1.bf16.msra.mxu0 %v5181
        %5199 = vmatprep.subr.bf16.mxu0 0
        %5200 = vmatpush1.bf16.msra.mxu0 %v5182
        %5201 = vmatprep.subr.bf16.mxu0 0
        %5202 = vmatpush1.bf16.msra.mxu0 %v5183
        %5203 = vmatprep.subr.bf16.mxu0 0
        %5204 = vmatpush1.bf16.msra.mxu0 %v5184
        %5205 = vmatprep.subr.bf16.mxu0 0
        %5206 = vmatpush1.bf16.msra.mxu0 %v5185
        %5207 = vmatprep.subr.bf16.mxu0 0
        %5208 = vmatpush1.bf16.msra.mxu0 %v5186
        %5209 = vmatprep.subr.bf16.mxu0 0
        %5210 = vmatpush1.bf16.msra.mxu0 %v5187
        %5211 = vmatprep.subr.bf16.mxu0 0
        %5212 = vmatpush1.bf16.msra.mxu0 %v5188
        %5213 = vmatprep.subr.bf16.mxu0 0
        %5214 = vmatpush1.bf16.msra.mxu0 0
        %5215 = vmatprep.subr.bf16.mxu0 0
        %5216 = vmatpush1.bf16.msra.mxu0 0
        %5217 = vmatprep.subr.bf16.mxu0 0
        %5218 = vmatpush1.bf16.msra.mxu0 0
        %5219 = vmatprep.subr.bf16.mxu0 0
        %5220 = vmatpush1.bf16.msra.mxu0 0
        %5221 = vmatprep.subr.bf16.mxu0 0
        %5222 = vmatpush1.bf16.msra.mxu0 0
        %5223 = vmatprep.subr.bf16.mxu0 0
        %5224 = vmatpush1.bf16.msra.mxu0 0
        %5225 = vmatprep.subr.bf16.mxu0 0
        %5226 = vmatpush1.bf16.msra.mxu0 0
        %5227 = vmatprep.subr.bf16.mxu0 0
        %5228 = vmatpush1.bf16.msra.mxu0 0
        %5229 = vmatprep.mubr.bf16.mxu0 0
        %5230 = vmatmul.mubr.bf16.gmra.mrb[0].mxu0 %v5135
        %v5231 = vpop.f32.mrb[0].mxu0
        %v5232 = vadd.f32 %v5147, %v5231
        %v5233 = vpop.f32.mrb[0].mxu0
        %v5234 = vpop.f32.mrb[0].mxu0
        %v5235 = vadd.f32 %v5147, %v5234
        %v5236 = vpop.f32.mrb[0].mxu0
        %5237 = vmatprep.mubr.bf16.mxu0 0
        %5238 = vmatmul.mubr.bf16.gmra.mrb[0].mxu0 %v5136
        %v5239 = vpop.f32.mrb[0].mxu0
        %v5240 = vadd.f32 %v5147, %v5239
        %v5241 = vpop.f32.mrb[0].mxu0
        %v5242 = vpop.f32.mrb[0].mxu0
        %v5243 = vadd.f32 %v5147, %v5242
        %v5244 = vpop.f32.mrb[0].mxu0
        %5245 = vmatprep.mubr.bf16.mxu0 0
        %5246 = vmatmul.mubr.bf16.gmra.mrb[0].mxu0 %v5137
        %v5247 = vpop.f32.mrb[0].mxu0
        %v5248 = vadd.f32 %v5147, %v5247
        %v5249 = vpop.f32.mrb[0].mxu0
        %v5250 = vpop.f32.mrb[0].mxu0
        %v5251 = vadd.f32 %v5147, %v5250
        %v5252 = vpop.f32.mrb[0].mxu0
        %5253 = vmatprep.mubr.bf16.mxu0 0
        %5254 = vmatmul.mubr.bf16.gmra.mrb[0].mxu0 %v5138
        %v5255 = vpop.f32.mrb[0].mxu0
        %v5256 = vadd.f32 %v5147, %v5255
        %v5257 = vpop.f32.mrb[0].mxu0
        %v5258 = vpop.f32.mrb[0].mxu0
        %v5259 = vadd.f32 %v5147, %v5258
        %v5260 = vpop.f32.mrb[0].mxu0
        %5261 = vmatprep.mubr.bf16.mxu0 0
        %5262 = vmatmul.mubr.bf16.gmra.mrb[0].mxu0 %v5139
        %v5263 = vpop.f32.mrb[0].mxu0
        %v5264 = vadd.f32 %v5147, %v5263
        %v5265 = vpop.f32.mrb[0].mxu0
        %v5266 = vpop.f32.mrb[0].mxu0
        %v5267 = vadd.f32 %v5147, %v5266
        %v5268 = vpop.f32.mrb[0].mxu0
        %5269 = vmatprep.mubr.bf16.mxu0 0
        %5270 = vmatmul.mubr.bf16.gmra.mrb[0].mxu0 %v5140
        %v5271 = vpop.f32.mrb[0].mxu0
        %v5272 = vadd.f32 %v5147, %v5271
        %v5273 = vpop.f32.mrb[0].mxu0
        %v5274 = vpop.f32.mrb[0].mxu0
        %v5275 = vadd.f32 %v5147, %v5274
        %v5276 = vpop.f32.mrb[0].mxu0
        %5277 = vmatprep.mubr.bf16.mxu0 0
        %5278 = vmatmul.mubr.bf16.gmra.mrb[0].mxu0 %v5141
        %v5279 = vpop.f32.mrb[0].mxu0
        %v5280 = vadd.f32 %v5147, %v5279
        %v5281 = vpop.f32.mrb[0].mxu0
        %v5282 = vpop.f32.mrb[0].mxu0
        %v5283 = vadd.f32 %v5147, %v5282
        %v5284 = vpop.f32.mrb[0].mxu0
        %5285 = vmatprep.mubr.bf16.mxu0 0
        %5286 = vmatmul.mubr.bf16.gmra.mrb[0].mxu0 %v5142
        %v5287 = vpop.f32.mrb[0].mxu0
        %v5288 = vadd.f32 %v5147, %v5287
        %v5289 = vpop.f32.mrb[0].mxu0
        %v5290 = vpop.f32.mrb[0].mxu0
        %v5291 = vadd.f32 %v5147, %v5290
        %v5292 = vpop.f32.mrb[0].mxu0
        %5293 = vdwg.mxu0
        %v5294 = vmul.f32 %v5232, %v3267
        %v5295 = vmul.f32 %v5235, %v3272
        %v5296 = vmul.f32 %v5240, %v3277
        %v5297 = vmul.f32 %v5243, %v3282
        %v5298 = vmul.f32 %v5248, %v3287
        %v5299 = vmul.f32 %v5251, %v3292
        %v5300 = vmul.f32 %v5256, %v3297
        %v5301 = vmul.f32 %v5259, %v3302
        %v5302 = vmul.f32 %v5264, %v3307
        %v5303 = vmul.f32 %v5267, %v3312
        %v5304 = vmul.f32 %v5272, %v3317
        %v5305 = vmul.f32 %v5275, %v3322
        %v5306 = vmul.f32 %v5280, %v3327
        %v5307 = vmul.f32 %v5283, %v3332
        %v5308 = vmul.f32 %v5288, %v3337
        %v5309 = vmul.f32 %v5291, %v3342
        %v5310 = vrot.slane %v5294, 4
        %v5311 = vadd.f32 %v5294, %v5310
        %v5312 = vrot.slane %v5311, 2
        %v5313 = vadd.f32 %v5311, %v5312
        %v5314 = vrot.slane %v5313, 1
        %v5315 = vadd.f32 %v5313, %v5314
        %v5316 = vrot.slane %v5295, 4
        %v5317 = vadd.f32 %v5295, %v5316
        %v5318 = vrot.slane %v5317, 2
        %v5319 = vadd.f32 %v5317, %v5318
        %v5320 = vrot.slane %v5319, 1
        %v5321 = vadd.f32 %v5319, %v5320
        %v5322 = vrot.slane %v5296, 4
        %v5323 = vadd.f32 %v5296, %v5322
        %v5324 = vrot.slane %v5323, 2
        %v5325 = vadd.f32 %v5323, %v5324
        %v5326 = vrot.slane %v5325, 1
        %v5327 = vadd.f32 %v5325, %v5326
        %v5328 = vrot.slane %v5297, 4
        %v5329 = vadd.f32 %v5297, %v5328
        %v5330 = vrot.slane %v5329, 2
        %v5331 = vadd.f32 %v5329, %v5330
        %v5332 = vrot.slane %v5331, 1
        %v5333 = vadd.f32 %v5331, %v5332
        %v5334 = vrot.slane %v5298, 4
        %v5335 = vadd.f32 %v5298, %v5334
        %v5336 = vrot.slane %v5335, 2
        %v5337 = vadd.f32 %v5335, %v5336
        %v5338 = vrot.slane %v5337, 1
        %v5339 = vadd.f32 %v5337, %v5338
        %v5340 = vrot.slane %v5299, 4
        %v5341 = vadd.f32 %v5299, %v5340
        %v5342 = vrot.slane %v5341, 2
        %v5343 = vadd.f32 %v5341, %v5342
        %v5344 = vrot.slane %v5343, 1
        %v5345 = vadd.f32 %v5343, %v5344
        %v5346 = vrot.slane %v5300, 4
        %v5347 = vadd.f32 %v5300, %v5346
        %v5348 = vrot.slane %v5347, 2
        %v5349 = vadd.f32 %v5347, %v5348
        %v5350 = vrot.slane %v5349, 1
        %v5351 = vadd.f32 %v5349, %v5350
        %v5352 = vrot.slane %v5301, 4
        %v5353 = vadd.f32 %v5301, %v5352
        %v5354 = vrot.slane %v5353, 2
        %v5355 = vadd.f32 %v5353, %v5354
        %v5356 = vrot.slane %v5355, 1
        %v5357 = vadd.f32 %v5355, %v5356
        %v5358 = vrot.slane %v5302, 4
        %v5359 = vadd.f32 %v5302, %v5358
        %v5360 = vrot.slane %v5359, 2
        %v5361 = vadd.f32 %v5359, %v5360
        %v5362 = vrot.slane %v5361, 1
        %v5363 = vadd.f32 %v5361, %v5362
        %v5364 = vrot.slane %v5303, 4
        %v5365 = vadd.f32 %v5303, %v5364
        %v5366 = vrot.slane %v5365, 2
        %v5367 = vadd.f32 %v5365, %v5366
        %v5368 = vrot.slane %v5367, 1
        %v5369 = vadd.f32 %v5367, %v5368
        %v5370 = vrot.slane %v5304, 4
        %v5371 = vadd.f32 %v5304, %v5370
        %v5372 = vrot.slane %v5371, 2
        %v5373 = vadd.f32 %v5371, %v5372
        %v5374 = vrot.slane %v5373, 1
        %v5375 = vadd.f32 %v5373, %v5374
        %v5376 = vrot.slane %v5305, 4
        %v5377 = vadd.f32 %v5305, %v5376
        %v5378 = vrot.slane %v5377, 2
        %v5379 = vadd.f32 %v5377, %v5378
        %v5380 = vrot.slane %v5379, 1
        %v5381 = vadd.f32 %v5379, %v5380
        %v5382 = vrot.slane %v5306, 4
        %v5383 = vadd.f32 %v5306, %v5382
        %v5384 = vrot.slane %v5383, 2
        %v5385 = vadd.f32 %v5383, %v5384
        %v5386 = vrot.slane %v5385, 1
        %v5387 = vadd.f32 %v5385, %v5386
        %v5388 = vrot.slane %v5307, 4
        %v5389 = vadd.f32 %v5307, %v5388
        %v5390 = vrot.slane %v5389, 2
        %v5391 = vadd.f32 %v5389, %v5390
        %v5392 = vrot.slane %v5391, 1
        %v5393 = vadd.f32 %v5391, %v5392
        %v5394 = vrot.slane %v5308, 4
        %v5395 = vadd.f32 %v5308, %v5394
        %v5396 = vrot.slane %v5395, 2
        %v5397 = vadd.f32 %v5395, %v5396
        %v5398 = vrot.slane %v5397, 1
        %v5399 = vadd.f32 %v5397, %v5398
        %v5400 = vrot.slane %v5309, 4
        %v5401 = vadd.f32 %v5309, %v5400
        %v5402 = vrot.slane %v5401, 2
        %v5403 = vadd.f32 %v5401, %v5402
        %v5404 = vrot.slane %v5403, 1
        %v5405 = vadd.f32 %v5403, %v5404
        %v5406 = vmul.f32 %v5315, 0.033333335
        %v5407 = vmul.f32 %v5321, 0.033333335
        %v5408 = vmul.f32 %v5327, 0.033333335
        %v5409 = vmul.f32 %v5333, 0.033333335
        %v5410 = vmul.f32 %v5339, 0.033333335
        %v5411 = vmul.f32 %v5345, 0.033333335
        %v5412 = vmul.f32 %v5351, 0.033333335
        %v5413 = vmul.f32 %v5357, 0.033333335
        %v5414 = vmul.f32 %v5363, 0.033333335
        %v5415 = vmul.f32 %v5369, 0.033333335
        %v5416 = vmul.f32 %v5375, 0.033333335
        %v5417 = vmul.f32 %v5381, 0.033333335
        %v5418 = vmul.f32 %v5387, 0.033333335
        %v5419 = vmul.f32 %v5393, 0.033333335
        %v5420 = vmul.f32 %v5399, 0.033333335
        %v5421 = vmul.f32 %v5405, 0.033333335
        %v5438 = vsel %vm3488, %v5407, %v5406
        %v5439 = vsel %vm3490, %v5408, %v5438
        %v5440 = vsel %vm3492, %v5409, %v5439
        %v5441 = vsel %vm3494, %v5410, %v5440
        %v5442 = vsel %vm3496, %v5411, %v5441
        %v5443 = vsel %vm3498, %v5412, %v5442
        %v5444 = vsel %vm3500, %v5413, %v5443
        %v5445 = vsel %vm3488, %v5415, %v5414
        %v5446 = vsel %vm3490, %v5416, %v5445
        %v5447 = vsel %vm3492, %v5417, %v5446
        %v5448 = vsel %vm3494, %v5418, %v5447
        %v5449 = vsel %vm3496, %v5419, %v5448
        %v5450 = vsel %vm3498, %v5420, %v5449
        %v5451 = vsel %vm3500, %v5421, %v5450
        %v5454 = vadd.f32 %v4187, %v5444
        %v5455 = vadd.f32 %v4188, %v5451
        %5456 = vadd.xlane.f32.xlu0 %v5454
        %v5457 = vpop.xlane.xlu0 %5456
        %5458 = vadd.xlane.f32.xlu0 %v5455
        %v5459 = vpop.xlane.xlu0 %5458
        %v5460 = vmul.f32 %v5457, %v3517
        %v5461 = vmul.f32 %v5459, %v3517
        %v5462 = vsub.f32 %v5454, %v5460
        %v5463 = vsub.f32 %v5455, %v5461
        %v5464 = vmul.f32 %v5462, %v5462
        %v5465 = vmul.f32 %v5463, %v5463
        %5466 = vadd.xlane.f32.xlu0 %v5464
        %v5467 = vpop.xlane.xlu0 %5466
        %5468 = vadd.xlane.f32.xlu0 %v5465
        %v5469 = vpop.xlane.xlu0 %5468
        %v5470 = vmul.f32 %v5467, %v3528
        %v5471 = vmul.f32 %v5469, %v3528
        %v5472 = vadd.f32 %v5470, 1e-06
        %v5473 = vadd.f32 %v5471, 1e-06
        %v5474 = vrsqrt.pop %v5472
        %v5475 = vmul.f32 %v5472, %v5474
        %vm5476 = vcmp.eq.f32.partialorder %v5472, inf
        %v5477 = vsel %vm5476, %v5472, %v5475
        %vm5478 = vcmp.eq.f32.partialorder %v5472, 0.0
        %v5479 = vand.u32 %v5472, 2147483648
        %v5480 = vsel %vm5478, %v5479, %v5477
        %v5481 = vrsqrt.pop %v5473
        %v5482 = vmul.f32 %v5473, %v5481
        %vm5483 = vcmp.eq.f32.partialorder %v5473, inf
        %v5484 = vsel %vm5483, %v5473, %v5482
        %vm5485 = vcmp.eq.f32.partialorder %v5473, 0.0
        %v5486 = vand.u32 %v5473, 2147483648
        %v5487 = vsel %vm5485, %v5486, %v5484
        %v5488 = vadd.f32 %v5480, 1e-06
        %v5489 = vadd.f32 %v5487, 1e-06
        %v5490 = vrcp.pop %v5488
        %v5491 = vmul.f32 1.0, %v5490
        %v5492 = vrcp.pop %v5489
        %v5493 = vmul.f32 1.0, %v5492
        %v5495 = vlaneseq
        %v5496 = vshrl.u32 %v5495, 7
        %v5497 = vsub.s32 0, %v5496
        %v5498 = vrot.slane %v4639, %v5497
        %v5500 = vmul.f32 %v5498, %v5462
        %v5501 = vmul.f32 %v5498, %v5463
        %v5502 = vmul.f32 %v5500, %v5491
        %v5503 = vmul.f32 %v5501, %v5493
        %v5505 = vlaneseq
        %v5506 = vshrl.u32 %v5505, 7
        %v5507 = vsub.s32 0, %v5506
        %v5508 = vrot.slane %v4641, %v5507
        %v5510 = vadd.f32 %v5502, %v5508
        %v5511 = vadd.f32 %v5503, %v5508
        %v5512 = vpack.c.bf16 %v5511, %v5510
        %v5514 = vlaneseq
        %v5515 = vshrl.u32 %v5514, 7
        %v5516 = vsub.s32 0, %v5515
        %v5517 = vrot.slane %v4676, %v5516
        %v5518 = vlaneseq
        %v5519 = vshrl.u32 %v5518, 7
        %v5520 = vsub.s32 1, %v5519
        %v5521 = vrot.slane %v4676, %v5520
        %v5522 = vlaneseq
        %v5523 = vshrl.u32 %v5522, 7
        %v5524 = vsub.s32 2, %v5523
        %v5525 = vrot.slane %v4676, %v5524
        %v5526 = vlaneseq
        %v5527 = vshrl.u32 %v5526, 7
        %v5528 = vsub.s32 3, %v5527
        %v5529 = vrot.slane %v4676, %v5528
        %v5566 = vunpack.c.l.b16 %v4643
        %v5567 = vunpack.c.h.b16 %v4643
        %v5568 = vunpack.c.l.b16 %v4644
        %v5569 = vunpack.c.h.b16 %v4644
        %v5570 = vunpack.c.l.b16 %v4645
        %v5571 = vunpack.c.h.b16 %v4645
        %v5572 = vunpack.c.l.b16 %v4646
        %v5573 = vunpack.c.h.b16 %v4646
        %v5574 = vunpack.c.l.b16 %v4647
        %v5575 = vunpack.c.h.b16 %v4647
        %v5576 = vunpack.c.l.b16 %v4648
        %v5577 = vunpack.c.h.b16 %v4648
        %v5578 = vunpack.c.l.b16 %v4649
        %v5579 = vunpack.c.h.b16 %v4649
        %v5580 = vunpack.c.l.b16 %v4650
        %v5581 = vunpack.c.h.b16 %v4650
        %v5582 = vunpack.c.l.b16 %v4651
        %v5583 = vunpack.c.h.b16 %v4651
        %v5584 = vunpack.c.l.b16 %v4652
        %v5585 = vunpack.c.h.b16 %v4652
        %v5586 = vunpack.c.l.b16 %v4653
        %v5587 = vunpack.c.h.b16 %v4653
        %v5588 = vunpack.c.l.b16 %v4654
        %v5589 = vunpack.c.h.b16 %v4654
        %v5590 = vunpack.c.l.b16 %v4655
        %v5591 = vunpack.c.h.b16 %v4655
        %v5592 = vunpack.c.l.b16 %v4656
        %v5593 = vunpack.c.h.b16 %v4656
        %v5594 = vunpack.c.l.b16 %v4657
        %v5595 = vunpack.c.h.b16 %v4657
        %v5596 = vunpack.c.l.b16 %v4658
        %v5597 = vunpack.c.h.b16 %v4658
        %v5598 = vunpack.c.l.b16 %v4659
        %v5599 = vunpack.c.h.b16 %v4659
        %v5600 = vunpack.c.l.b16 %v4660
        %v5601 = vunpack.c.h.b16 %v4660
        %v5602 = vunpack.c.l.b16 %v4661
        %v5603 = vunpack.c.h.b16 %v4661
        %v5604 = vunpack.c.l.b16 %v4662
        %v5605 = vunpack.c.h.b16 %v4662
        %v5606 = vunpack.c.l.b16 %v4663
        %v5607 = vunpack.c.h.b16 %v4663
        %v5608 = vunpack.c.l.b16 %v4664
        %v5609 = vunpack.c.h.b16 %v4664
        %v5610 = vunpack.c.l.b16 %v4665
        %v5611 = vunpack.c.h.b16 %v4665
        %v5612 = vunpack.c.l.b16 %v4666
        %v5613 = vunpack.c.h.b16 %v4666
        %v5614 = vunpack.c.l.b16 %v4667
        %v5615 = vunpack.c.h.b16 %v4667
        %v5616 = vunpack.c.l.b16 %v4668
        %v5617 = vunpack.c.h.b16 %v4668
        %v5618 = vunpack.c.l.b16 %v4669
        %v5619 = vunpack.c.h.b16 %v4669
        %v5620 = vunpack.c.l.b16 %v4670
        %v5621 = vunpack.c.h.b16 %v4670
        %v5622 = vunpack.c.l.b16 %v4671
        %v5623 = vunpack.c.h.b16 %v4671
        %v5624 = vunpack.c.l.b16 %v4672
        %v5625 = vunpack.c.h.b16 %v4672
        %v5626 = vunpack.c.l.b16 %v4673
        %v5627 = vunpack.c.h.b16 %v4673
        %v5628 = vunpack.c.l.b16 %v4674
        %v5629 = vunpack.c.h.b16 %v4674
        %v5630 = vpack.c.b16 %v5570, %v5566
        %v5631 = vpack.c.b16 %v5571, %v5567
        %v5632 = vpack.c.b16 %v5572, %v5568
        %v5633 = vpack.c.b16 %v5573, %v5569
        %v5634 = vpack.c.b16 %v5578, %v5574
        %v5635 = vpack.c.b16 %v5579, %v5575
        %v5636 = vpack.c.b16 %v5580, %v5576
        %v5637 = vpack.c.b16 %v5581, %v5577
        %v5638 = vpack.c.b16 %v5586, %v5582
        %v5639 = vpack.c.b16 %v5587, %v5583
        %v5640 = vpack.c.b16 %v5588, %v5584
        %v5641 = vpack.c.b16 %v5589, %v5585
        %v5642 = vpack.c.b16 %v5594, %v5590
        %v5643 = vpack.c.b16 %v5595, %v5591
        %v5644 = vpack.c.b16 %v5596, %v5592
        %v5645 = vpack.c.b16 %v5597, %v5593
        %v5646 = vpack.c.b16 %v5602, %v5598
        %v5647 = vpack.c.b16 %v5603, %v5599
        %v5648 = vpack.c.b16 %v5604, %v5600
        %v5649 = vpack.c.b16 %v5605, %v5601
        %v5650 = vpack.c.b16 %v5610, %v5606
        %v5651 = vpack.c.b16 %v5611, %v5607
        %v5652 = vpack.c.b16 %v5612, %v5608
        %v5653 = vpack.c.b16 %v5613, %v5609
        %v5654 = vpack.c.b16 %v5618, %v5614
        %v5655 = vpack.c.b16 %v5619, %v5615
        %v5656 = vpack.c.b16 %v5620, %v5616
        %v5657 = vpack.c.b16 %v5621, %v5617
        %v5658 = vpack.c.b16 %v5626, %v5622
        %v5659 = vpack.c.b16 %v5627, %v5623
        %v5660 = vpack.c.b16 %v5628, %v5624
        %v5661 = vpack.c.b16 %v5629, %v5625
        %5694 = vmatprep.subr.bf16.mxu0 %v5631
        %5695 = vmatpush1.bf16.msra.mxu0 %v5630
        %5696 = vmatprep.subr.bf16.mxu0 %v5635
        %5697 = vmatpush1.bf16.msra.mxu0 %v5634
        %5698 = vmatprep.subr.bf16.mxu0 %v5639
        %5699 = vmatpush1.bf16.msra.mxu0 %v5638
        %5700 = vmatprep.subr.bf16.mxu0 %v5643
        %5701 = vmatpush1.bf16.msra.mxu0 %v5642
        %5702 = vmatprep.subr.bf16.mxu0 %v5647
        %5703 = vmatpush1.bf16.msra.mxu0 %v5646
        %5704 = vmatprep.subr.bf16.mxu0 %v5651
        %5705 = vmatpush1.bf16.msra.mxu0 %v5650
        %5706 = vmatprep.subr.bf16.mxu0 %v5655
        %5707 = vmatpush1.bf16.msra.mxu0 %v5654
        %5708 = vmatprep.subr.bf16.mxu0 %v5659
        %5709 = vmatpush1.bf16.msra.mxu0 %v5658
        %5710 = vmatprep.subr.bf16.mxu0 0
        %5711 = vmatpush1.bf16.msra.mxu0 0
        %5712 = vmatprep.subr.bf16.mxu0 0
        %5713 = vmatpush1.bf16.msra.mxu0 0
        %5714 = vmatprep.subr.bf16.mxu0 0
        %5715 = vmatpush1.bf16.msra.mxu0 0
        %5716 = vmatprep.subr.bf16.mxu0 0
        %5717 = vmatpush1.bf16.msra.mxu0 0
        %5718 = vmatprep.subr.bf16.mxu0 0
        %5719 = vmatpush1.bf16.msra.mxu0 0
        %5720 = vmatprep.subr.bf16.mxu0 0
        %5721 = vmatpush1.bf16.msra.mxu0 0
        %5722 = vmatprep.subr.bf16.mxu0 0
        %5723 = vmatpush1.bf16.msra.mxu0 0
        %5724 = vmatprep.subr.bf16.mxu0 0
        %5725 = vmatpush1.bf16.msra.mxu0 0
        %5726 = vmatprep.mubr.bf16.mxu0 0
        %5727 = vmatmul.mubr.bf16.gmra.mrb[0].mxu0 %v5512
        %v5728 = vpop.f32.mrb[0].mxu0
        %v5729 = vadd.f32 %v5517, %v5728
        %v5730 = vpop.f32.mrb[0].mxu0
        %v5731 = vadd.f32 %v5521, %v5730
        %v5732 = vpop.f32.mrb[0].mxu0
        %v5733 = vadd.f32 %v5517, %v5732
        %v5734 = vpop.f32.mrb[0].mxu0
        %v5735 = vadd.f32 %v5521, %v5734
        %5736 = vdwg.mxu0
        %5737 = vmatprep.subr.bf16.mxu0 %v5633
        %5738 = vmatpush1.bf16.msra.mxu0 %v5632
        %5739 = vmatprep.subr.bf16.mxu0 %v5637
        %5740 = vmatpush1.bf16.msra.mxu0 %v5636
        %5741 = vmatprep.subr.bf16.mxu0 %v5641
        %5742 = vmatpush1.bf16.msra.mxu0 %v5640
        %5743 = vmatprep.subr.bf16.mxu0 %v5645
        %5744 = vmatpush1.bf16.msra.mxu0 %v5644
        %5745 = vmatprep.subr.bf16.mxu0 %v5649
        %5746 = vmatpush1.bf16.msra.mxu0 %v5648
        %5747 = vmatprep.subr.bf16.mxu0 %v5653
        %5748 = vmatpush1.bf16.msra.mxu0 %v5652
        %5749 = vmatprep.subr.bf16.mxu0 %v5657
        %5750 = vmatpush1.bf16.msra.mxu0 %v5656
        %5751 = vmatprep.subr.bf16.mxu0 %v5661
        %5752 = vmatpush1.bf16.msra.mxu0 %v5660
        %5753 = vmatprep.subr.bf16.mxu0 0
        %5754 = vmatpush1.bf16.msra.mxu0 0
        %5755 = vmatprep.subr.bf16.mxu0 0
        %5756 = vmatpush1.bf16.msra.mxu0 0
        %5757 = vmatprep.subr.bf16.mxu0 0
        %5758 = vmatpush1.bf16.msra.mxu0 0
        %5759 = vmatprep.subr.bf16.mxu0 0
        %5760 = vmatpush1.bf16.msra.mxu0 0
        %5761 = vmatprep.subr.bf16.mxu0 0
        %5762 = vmatpush1.bf16.msra.mxu0 0
        %5763 = vmatprep.subr.bf16.mxu0 0
        %5764 = vmatpush1.bf16.msra.mxu0 0
        %5765 = vmatprep.subr.bf16.mxu0 0
        %5766 = vmatpush1.bf16.msra.mxu0 0
        %5767 = vmatprep.subr.bf16.mxu0 0
        %5768 = vmatpush1.bf16.msra.mxu0 0
        %5769 = vmatprep.mubr.bf16.mxu0 0
        %5770 = vmatmul.mubr.bf16.gmra.mrb[0].mxu0 %v5512
        %v5771 = vpop.f32.mrb[0].mxu0
        %v5772 = vadd.f32 %v5525, %v5771
        %v5773 = vpop.f32.mrb[0].mxu0
        %v5774 = vadd.f32 %v5529, %v5773
        %v5775 = vpop.f32.mrb[0].mxu0
        %v5776 = vadd.f32 %v5525, %v5775
        %v5777 = vpop.f32.mrb[0].mxu0
        %v5778 = vadd.f32 %v5529, %v5777
        %5779 = vdwg.mxu0
        %v5780 = vmax.f32 %v5729, 0.0
        %v5781 = vmax.f32 %v5731, 0.0
        %v5782 = vmax.f32 %v5772, 0.0
        %v5783 = vmax.f32 %v5774, 0.0
        %v5784 = vmax.f32 %v5733, 0.0
        %v5785 = vmax.f32 %v5735, 0.0
        %v5786 = vmax.f32 %v5776, 0.0
        %v5787 = vmax.f32 %v5778, 0.0
        %v5788 = vpack.c.bf16 %v5784, %v5780
        %v5789 = vpack.c.bf16 %v5785, %v5781
        %v5790 = vpack.c.bf16 %v5786, %v5782
        %v5791 = vpack.c.bf16 %v5787, %v5783
        %v5793 = vlaneseq
        %v5794 = vshrl.u32 %v5793, 7
        %v5795 = vsub.s32 0, %v5794
        %v5796 = vrot.slane %v4743, %v5795
        %v5862 = vunpack.c.l.b16 %v4678
        %v5863 = vunpack.c.l.b16 %v4679
        %v5864 = vunpack.c.l.b16 %v4680
        %v5865 = vunpack.c.l.b16 %v4681
        %v5866 = vunpack.c.l.b16 %v4682
        %v5867 = vunpack.c.l.b16 %v4683
        %v5868 = vunpack.c.l.b16 %v4684
        %v5869 = vunpack.c.l.b16 %v4685
        %v5870 = vunpack.c.l.b16 %v4686
        %v5871 = vunpack.c.l.b16 %v4687
        %v5872 = vunpack.c.l.b16 %v4688
        %v5873 = vunpack.c.l.b16 %v4689
        %v5874 = vunpack.c.l.b16 %v4690
        %v5875 = vunpack.c.l.b16 %v4691
        %v5876 = vunpack.c.l.b16 %v4692
        %v5877 = vunpack.c.l.b16 %v4693
        %v5878 = vunpack.c.l.b16 %v4694
        %v5879 = vunpack.c.l.b16 %v4695
        %v5880 = vunpack.c.l.b16 %v4696
        %v5881 = vunpack.c.l.b16 %v4697
        %v5882 = vunpack.c.l.b16 %v4698
        %v5883 = vunpack.c.l.b16 %v4699
        %v5884 = vunpack.c.l.b16 %v4700
        %v5885 = vunpack.c.l.b16 %v4701
        %v5886 = vunpack.c.l.b16 %v4702
        %v5887 = vunpack.c.l.b16 %v4703
        %v5888 = vunpack.c.l.b16 %v4704
        %v5889 = vunpack.c.l.b16 %v4705
        %v5890 = vunpack.c.l.b16 %v4706
        %v5891 = vunpack.c.l.b16 %v4707
        %v5892 = vunpack.c.l.b16 %v4708
        %v5893 = vunpack.c.l.b16 %v4709
        %v5894 = vunpack.c.l.b16 %v4710
        %v5895 = vunpack.c.l.b16 %v4711
        %v5896 = vunpack.c.l.b16 %v4712
        %v5897 = vunpack.c.l.b16 %v4713
        %v5898 = vunpack.c.l.b16 %v4714
        %v5899 = vunpack.c.l.b16 %v4715
        %v5900 = vunpack.c.l.b16 %v4716
        %v5901 = vunpack.c.l.b16 %v4717
        %v5902 = vunpack.c.l.b16 %v4718
        %v5903 = vunpack.c.l.b16 %v4719
        %v5904 = vunpack.c.l.b16 %v4720
        %v5905 = vunpack.c.l.b16 %v4721
        %v5906 = vunpack.c.l.b16 %v4722
        %v5907 = vunpack.c.l.b16 %v4723
        %v5908 = vunpack.c.l.b16 %v4724
        %v5909 = vunpack.c.l.b16 %v4725
        %v5910 = vunpack.c.l.b16 %v4726
        %v5911 = vunpack.c.l.b16 %v4727
        %v5912 = vunpack.c.l.b16 %v4728
        %v5913 = vunpack.c.l.b16 %v4729
        %v5914 = vunpack.c.l.b16 %v4730
        %v5915 = vunpack.c.l.b16 %v4731
        %v5916 = vunpack.c.l.b16 %v4732
        %v5917 = vunpack.c.l.b16 %v4733
        %v5918 = vunpack.c.l.b16 %v4734
        %v5919 = vunpack.c.l.b16 %v4735
        %v5920 = vunpack.c.l.b16 %v4736
        %v5921 = vunpack.c.l.b16 %v4737
        %v5922 = vunpack.c.l.b16 %v4738
        %v5923 = vunpack.c.l.b16 %v4739
        %v5924 = vunpack.c.l.b16 %v4740
        %v5925 = vunpack.c.l.b16 %v4741
        %v5926 = vpack.c.b16 %v5863, %v5862
        %v5927 = vpack.c.b16 %v5865, %v5864
        %v5928 = vpack.c.b16 %v5867, %v5866
        %v5929 = vpack.c.b16 %v5869, %v5868
        %v5930 = vpack.c.b16 %v5871, %v5870
        %v5931 = vpack.c.b16 %v5873, %v5872
        %v5932 = vpack.c.b16 %v5875, %v5874
        %v5933 = vpack.c.b16 %v5877, %v5876
        %v5934 = vpack.c.b16 %v5879, %v5878
        %v5935 = vpack.c.b16 %v5881, %v5880
        %v5936 = vpack.c.b16 %v5883, %v5882
        %v5937 = vpack.c.b16 %v5885, %v5884
        %v5938 = vpack.c.b16 %v5887, %v5886
        %v5939 = vpack.c.b16 %v5889, %v5888
        %v5940 = vpack.c.b16 %v5891, %v5890
        %v5941 = vpack.c.b16 %v5893, %v5892
        %v5942 = vpack.c.b16 %v5895, %v5894
        %v5943 = vpack.c.b16 %v5897, %v5896
        %v5944 = vpack.c.b16 %v5899, %v5898
        %v5945 = vpack.c.b16 %v5901, %v5900
        %v5946 = vpack.c.b16 %v5903, %v5902
        %v5947 = vpack.c.b16 %v5905, %v5904
        %v5948 = vpack.c.b16 %v5907, %v5906
        %v5949 = vpack.c.b16 %v5909, %v5908
        %v5950 = vpack.c.b16 %v5911, %v5910
        %v5951 = vpack.c.b16 %v5913, %v5912
        %v5952 = vpack.c.b16 %v5915, %v5914
        %v5953 = vpack.c.b16 %v5917, %v5916
        %v5954 = vpack.c.b16 %v5919, %v5918
        %v5955 = vpack.c.b16 %v5921, %v5920
        %v5956 = vpack.c.b16 %v5923, %v5922
        %v5957 = vpack.c.b16 %v5925, %v5924
        %5990 = vmatprep.subr.bf16.mxu0 0
        %5991 = vmatpush1.bf16.msra.mxu0 %v5926
        %5992 = vmatprep.subr.bf16.mxu0 0
        %5993 = vmatpush1.bf16.msra.mxu0 %v5927
        %5994 = vmatprep.subr.bf16.mxu0 0
        %5995 = vmatpush1.bf16.msra.mxu0 %v5928
        %5996 = vmatprep.subr.bf16.mxu0 0
        %5997 = vmatpush1.bf16.msra.mxu0 %v5929
        %5998 = vmatprep.subr.bf16.mxu0 0
        %5999 = vmatpush1.bf16.msra.mxu0 %v5930
        %6000 = vmatprep.subr.bf16.mxu0 0
        %6001 = vmatpush1.bf16.msra.mxu0 %v5931
        %6002 = vmatprep.subr.bf16.mxu0 0
        %6003 = vmatpush1.bf16.msra.mxu0 %v5932
        %6004 = vmatprep.subr.bf16.mxu0 0
        %6005 = vmatpush1.bf16.msra.mxu0 %v5933
        %6006 = vmatprep.subr.bf16.mxu0 0
        %6007 = vmatpush1.bf16.msra.mxu0 %v5934
        %6008 = vmatprep.subr.bf16.mxu0 0
        %6009 = vmatpush1.bf16.msra.mxu0 %v5935
        %6010 = vmatprep.subr.bf16.mxu0 0
        %6011 = vmatpush1.bf16.msra.mxu0 %v5936
        %6012 = vmatprep.subr.bf16.mxu0 0
        %6013 = vmatpush1.bf16.msra.mxu0 %v5937
        %6014 = vmatprep.subr.bf16.mxu0 0
        %6015 = vmatpush1.bf16.msra.mxu0 %v5938
        %6016 = vmatprep.subr.bf16.mxu0 0
        %6017 = vmatpush1.bf16.msra.mxu0 %v5939
        %6018 = vmatprep.subr.bf16.mxu0 0
        %6019 = vmatpush1.bf16.msra.mxu0 %v5940
        %6020 = vmatprep.subr.bf16.mxu0 0
        %6021 = vmatpush1.bf16.msra.mxu0 %v5941
        %6022 = vmatprep.mubr.bf16.mxu0 %v5789
        %6023 = vmatmul.mubr.bf16.gmra.mrb[0].mxu0 %v5788
        %v6024 = vpop.f32.mrb[0].mxu0
        %v6025 = vadd.f32 %v5796, %v6024
        %v6026 = vpop.f32.mrb[0].mxu0
        %v6027 = vpop.f32.mrb[0].mxu0
        %v6028 = vadd.f32 %v5796, %v6027
        %v6029 = vpop.f32.mrb[0].mxu0
        %6030 = vdwg.mxu0
        %6031 = vmatprep.subr.bf16.mxu0 0
        %6032 = vmatpush1.bf16.msra.mxu0 %v5942
        %6033 = vmatprep.subr.bf16.mxu0 0
        %6034 = vmatpush1.bf16.msra.mxu0 %v5943
        %6035 = vmatprep.subr.bf16.mxu0 0
        %6036 = vmatpush1.bf16.msra.mxu0 %v5944
        %6037 = vmatprep.subr.bf16.mxu0 0
        %6038 = vmatpush1.bf16.msra.mxu0 %v5945
        %6039 = vmatprep.subr.bf16.mxu0 0
        %6040 = vmatpush1.bf16.msra.mxu0 %v5946
        %6041 = vmatprep.subr.bf16.mxu0 0
        %6042 = vmatpush1.bf16.msra.mxu0 %v5947
        %6043 = vmatprep.subr.bf16.mxu0 0
        %6044 = vmatpush1.bf16.msra.mxu0 %v5948
        %6045 = vmatprep.subr.bf16.mxu0 0
        %6046 = vmatpush1.bf16.msra.mxu0 %v5949
        %6047 = vmatprep.subr.bf16.mxu0 0
        %6048 = vmatpush1.bf16.msra.mxu0 %v5950
        %6049 = vmatprep.subr.bf16.mxu0 0
        %6050 = vmatpush1.bf16.msra.mxu0 %v5951
        %6051 = vmatprep.subr.bf16.mxu0 0
        %6052 = vmatpush1.bf16.msra.mxu0 %v5952
        %6053 = vmatprep.subr.bf16.mxu0 0
        %6054 = vmatpush1.bf16.msra.mxu0 %v5953
        %6055 = vmatprep.subr.bf16.mxu0 0
        %6056 = vmatpush1.bf16.msra.mxu0 %v5954
        %6057 = vmatprep.subr.bf16.mxu0 0
        %6058 = vmatpush1.bf16.msra.mxu0 %v5955
        %6059 = vmatprep.subr.bf16.mxu0 0
        %6060 = vmatpush1.bf16.msra.mxu0 %v5956
        %6061 = vmatprep.subr.bf16.mxu0 0
        %6062 = vmatpush1.bf16.msra.mxu0 %v5957
        %6063 = vmatprep.mubr.bf16.mxu0 %v5791
        %6064 = vmatmul.mubr.bf16.gmra.mrb[0].mxu0 %v5790
        %v6065 = vpop.f32.mrb[0].mxu0
        %v6066 = vadd.f32 %v6025, %v6065
        %v6067 = vpop.f32.mrb[0].mxu0
        %v6068 = vpop.f32.mrb[0].mxu0
        %v6069 = vadd.f32 %v6028, %v6068
        %v6070 = vpop.f32.mrb[0].mxu0
        %6071 = vdwg.mxu0
        %v6072 = vadd.f32 %v5510, %v6066
        %v6073 = vadd.f32 %v5511, %v6069
        %6074 = vadd.xlane.f32.xlu0 %v6072
        %v6075 = vpop.xlane.xlu0 %6074
        %6076 = vadd.xlane.f32.xlu0 %v6073
        %v6077 = vpop.xlane.xlu0 %6076
        %v6078 = vmul.f32 %v6075, %v3517
        %v6079 = vmul.f32 %v6077, %v3517
        %v6080 = vsub.f32 %v6072, %v6078
        %v6081 = vsub.f32 %v6073, %v6079
        %v6082 = vmul.f32 %v6080, %v6080
        %v6083 = vmul.f32 %v6081, %v6081
        %6084 = vadd.xlane.f32.xlu0 %v6082
        %v6085 = vpop.xlane.xlu0 %6084
        %6086 = vadd.xlane.f32.xlu0 %v6083
        %v6087 = vpop.xlane.xlu0 %6086
        %v6088 = vmul.f32 %v6085, %v3528
        %v6089 = vmul.f32 %v6087, %v3528
        %v6090 = vadd.f32 %v6088, 1e-06
        %v6091 = vadd.f32 %v6089, 1e-06
        %v6092 = vrsqrt.pop %v6090
        %v6093 = vmul.f32 %v6090, %v6092
        %vm6094 = vcmp.eq.f32.partialorder %v6090, inf
        %v6095 = vsel %vm6094, %v6090, %v6093
        %vm6096 = vcmp.eq.f32.partialorder %v6090, 0.0
        %v6097 = vand.u32 %v6090, 2147483648
        %v6098 = vsel %vm6096, %v6097, %v6095
        %v6099 = vrsqrt.pop %v6091
        %v6100 = vmul.f32 %v6091, %v6099
        %vm6101 = vcmp.eq.f32.partialorder %v6091, inf
        %v6102 = vsel %vm6101, %v6091, %v6100
        %vm6103 = vcmp.eq.f32.partialorder %v6091, 0.0
        %v6104 = vand.u32 %v6091, 2147483648
        %v6105 = vsel %vm6103, %v6104, %v6102
        %v6106 = vadd.f32 %v6098, 1e-06
        %v6107 = vadd.f32 %v6105, 1e-06
        %v6108 = vrcp.pop %v6106
        %v6109 = vmul.f32 1.0, %v6108
        %v6110 = vrcp.pop %v6107
        %v6111 = vmul.f32 1.0, %v6110
        %v6113 = vlaneseq
        %v6114 = vshrl.u32 %v6113, 7
        %v6115 = vsub.s32 0, %v6114
        %v6116 = vrot.slane %v4745, %v6115
        %v6118 = vmul.f32 %v6116, %v6080
        %v6119 = vmul.f32 %v6116, %v6081
        %v6120 = vmul.f32 %v6118, %v6109
        %v6121 = vmul.f32 %v6119, %v6111
        %v6123 = vlaneseq
        %v6124 = vshrl.u32 %v6123, 7
        %v6125 = vsub.s32 0, %v6124
        %v6126 = vrot.slane %v4747, %v6125
        %v6128 = vadd.f32 %v6120, %v6126
        %v6129 = vadd.f32 %v6121, %v6126
        %v6130 = vld [vmem:[#allocation31] sm:$0xff]
        %v6131 = vld [vmem:[#allocation31 + $0x8] sm:$0xff]
        %v6132 = vld [vmem:[#allocation31 + $0x10] sm:$0xff]
        %v6133 = vld [vmem:[#allocation31 + $0x18] sm:$0xff]
        %v6134 = vld [vmem:[#allocation31 + $0x20] sm:$0xff]
        %v6135 = vld [vmem:[#allocation31 + $0x28] sm:$0xff]
        %v6136 = vld [vmem:[#allocation31 + $0x30] sm:$0xff]
        %v6137 = vld [vmem:[#allocation31 + $0x38] sm:$0xff]
        %v6138 = vld [vmem:[#allocation31 + $0x40] sm:$0xff]
        %v6139 = vld [vmem:[#allocation31 + $0x48] sm:$0xff]
        %v6140 = vld [vmem:[#allocation31 + $0x50] sm:$0xff]
        %v6141 = vld [vmem:[#allocation31 + $0x58] sm:$0xff]
        %v6142 = vld [vmem:[#allocation31 + $0x60] sm:$0xff]
        %v6143 = vld [vmem:[#allocation31 + $0x68] sm:$0xff]
        %v6144 = vld [vmem:[#allocation31 + $0x70] sm:$0xff]
        %v6145 = vld [vmem:[#allocation31 + $0x78] sm:$0xff]
        %v6162 = vunpack.c.l.b16 %v6130
        %v6163 = vunpack.c.h.b16 %v6130
        %v6164 = vunpack.c.l.b16 %v6131
        %v6165 = vunpack.c.h.b16 %v6131
        %v6166 = vunpack.c.l.b16 %v6132
        %v6167 = vunpack.c.h.b16 %v6132
        %v6168 = vunpack.c.l.b16 %v6133
        %v6169 = vunpack.c.h.b16 %v6133
        %v6170 = vunpack.c.l.b16 %v6134
        %v6171 = vunpack.c.h.b16 %v6134
        %v6172 = vunpack.c.l.b16 %v6135
        %v6173 = vunpack.c.h.b16 %v6135
        %v6174 = vunpack.c.l.b16 %v6136
        %v6175 = vunpack.c.h.b16 %v6136
        %v6176 = vunpack.c.l.b16 %v6137
        %v6177 = vunpack.c.h.b16 %v6137
        %v6178 = vunpack.c.l.b16 %v6138
        %v6179 = vunpack.c.h.b16 %v6138
        %v6180 = vunpack.c.l.b16 %v6139
        %v6181 = vunpack.c.h.b16 %v6139
        %v6182 = vunpack.c.l.b16 %v6140
        %v6183 = vunpack.c.h.b16 %v6140
        %v6184 = vunpack.c.l.b16 %v6141
        %v6185 = vunpack.c.h.b16 %v6141
        %v6186 = vunpack.c.l.b16 %v6142
        %v6187 = vunpack.c.h.b16 %v6142
        %v6188 = vunpack.c.l.b16 %v6143
        %v6189 = vunpack.c.h.b16 %v6143
        %v6190 = vunpack.c.l.b16 %v6144
        %v6191 = vunpack.c.h.b16 %v6144
        %v6192 = vunpack.c.l.b16 %v6145
        %v6193 = vunpack.c.h.b16 %v6145
        %v6194 = vpack.c.b16 %v6164, %v6162
        %v6195 = vpack.c.b16 %v6165, %v6163
        %v6196 = vpack.c.b16 %v6168, %v6166
        %v6197 = vpack.c.b16 %v6169, %v6167
        %v6198 = vpack.c.b16 %v6172, %v6170
        %v6199 = vpack.c.b16 %v6173, %v6171
        %v6200 = vpack.c.b16 %v6176, %v6174
        %v6201 = vpack.c.b16 %v6177, %v6175
        %v6202 = vpack.c.b16 %v6180, %v6178
        %v6203 = vpack.c.b16 %v6181, %v6179
        %v6204 = vpack.c.b16 %v6184, %v6182
        %v6205 = vpack.c.b16 %v6185, %v6183
        %v6206 = vpack.c.b16 %v6188, %v6186
        %v6207 = vpack.c.b16 %v6189, %v6187
        %v6208 = vpack.c.b16 %v6192, %v6190
        %v6209 = vpack.c.b16 %v6193, %v6191
        %6226 = vmatprep.subr.bf16.mxu0 %v6195
        %6227 = vmatpush1.bf16.msra.mxu0 %v6194
        %6228 = vmatprep.subr.bf16.mxu0 %v6197
        %6229 = vmatpush1.bf16.msra.mxu0 %v6196
        %6230 = vmatprep.subr.bf16.mxu0 %v6199
        %6231 = vmatpush1.bf16.msra.mxu0 %v6198
        %6232 = vmatprep.subr.bf16.mxu0 %v6201
        %6233 = vmatpush1.bf16.msra.mxu0 %v6200
        %6234 = vmatprep.subr.bf16.mxu0 %v6203
        %6235 = vmatpush1.bf16.msra.mxu0 %v6202
        %6236 = vmatprep.subr.bf16.mxu0 %v6205
        %6237 = vmatpush1.bf16.msra.mxu0 %v6204
        %6238 = vmatprep.subr.bf16.mxu0 %v6207
        %6239 = vmatpush1.bf16.msra.mxu0 %v6206
        %6240 = vmatprep.subr.bf16.mxu0 %v6209
        %6241 = vmatpush1.bf16.msra.mxu0 %v6208
        %6242 = vmatprep.subr.bf16.mxu0 0
        %6243 = vmatpush1.bf16.msra.mxu0 0
        %6244 = vmatprep.subr.bf16.mxu0 0
        %6245 = vmatpush1.bf16.msra.mxu0 0
        %6246 = vmatprep.subr.bf16.mxu0 0
        %6247 = vmatpush1.bf16.msra.mxu0 0
        %6248 = vmatprep.subr.bf16.mxu0 0
        %6249 = vmatpush1.bf16.msra.mxu0 0
        %6250 = vmatprep.subr.bf16.mxu0 0
        %6251 = vmatpush1.bf16.msra.mxu0 0
        %6252 = vmatprep.subr.bf16.mxu0 0
        %6253 = vmatpush1.bf16.msra.mxu0 0
        %6254 = vmatprep.subr.bf16.mxu0 0
        %6255 = vmatpush1.bf16.msra.mxu0 0
        %6256 = vmatprep.subr.bf16.mxu0 0
        %6257 = vmatpush1.bf16.msra.mxu0 0
        %6258 = vmatprep.mubr.bf16.mxu0 0
        %6259 = vmatmul.mubr.bf16.gmra.mrb[0].mxu0 %v1820
        %v6260 = vpop.f32.mrb[0].mxu0
        %v6261 = vadd.f32 0.0, %v6260
        %v6262 = vpop.f32.mrb[0].mxu0
        %v6263 = vadd.f32 0.0, %v6262
        %v6264 = vpop.f32.mrb[0].mxu0
        %v6265 = vadd.f32 0.0, %v6264
        %v6266 = vpop.f32.mrb[0].mxu0
        %v6267 = vadd.f32 0.0, %v6266
        %6268 = vdwg.mxu0
        %v6269 = vpack.c.bf16 %v6129, %v6128
        %v6270 = vld [vmem:[#allocation28] sm:$0xff]
        %v6271 = vld [vmem:[#allocation28 + $0x8] sm:$0xff]
        %v6272 = vld [vmem:[#allocation28 + $0x10] sm:$0xff]
        %v6273 = vld [vmem:[#allocation28 + $0x18] sm:$0xff]
        %v6274 = vld [vmem:[#allocation28 + $0x20] sm:$0xff]
        %v6275 = vld [vmem:[#allocation28 + $0x28] sm:$0xff]
        %v6276 = vld [vmem:[#allocation28 + $0x30] sm:$0xff]
        %v6277 = vld [vmem:[#allocation28 + $0x38] sm:$0xff]
        %v6278 = vld [vmem:[#allocation28 + $0x40] sm:$0xff]
        %v6279 = vld [vmem:[#allocation28 + $0x48] sm:$0xff]
        %v6280 = vld [vmem:[#allocation28 + $0x50] sm:$0xff]
        %v6281 = vld [vmem:[#allocation28 + $0x58] sm:$0xff]
        %v6282 = vld [vmem:[#allocation28 + $0x60] sm:$0xff]
        %v6283 = vld [vmem:[#allocation28 + $0x68] sm:$0xff]
        %v6284 = vld [vmem:[#allocation28 + $0x70] sm:$0xff]
        %v6285 = vld [vmem:[#allocation28 + $0x78] sm:$0xff]
        %v6302 = vunpack.c.l.b16 %v6270
        %v6303 = vunpack.c.h.b16 %v6270
        %v6304 = vunpack.c.l.b16 %v6271
        %v6305 = vunpack.c.h.b16 %v6271
        %v6306 = vunpack.c.l.b16 %v6272
        %v6307 = vunpack.c.h.b16 %v6272
        %v6308 = vunpack.c.l.b16 %v6273
        %v6309 = vunpack.c.h.b16 %v6273
        %v6310 = vunpack.c.l.b16 %v6274
        %v6311 = vunpack.c.h.b16 %v6274
        %v6312 = vunpack.c.l.b16 %v6275
        %v6313 = vunpack.c.h.b16 %v6275
        %v6314 = vunpack.c.l.b16 %v6276
        %v6315 = vunpack.c.h.b16 %v6276
        %v6316 = vunpack.c.l.b16 %v6277
        %v6317 = vunpack.c.h.b16 %v6277
        %v6318 = vunpack.c.l.b16 %v6278
        %v6319 = vunpack.c.h.b16 %v6278
        %v6320 = vunpack.c.l.b16 %v6279
        %v6321 = vunpack.c.h.b16 %v6279
        %v6322 = vunpack.c.l.b16 %v6280
        %v6323 = vunpack.c.h.b16 %v6280
        %v6324 = vunpack.c.l.b16 %v6281
        %v6325 = vunpack.c.h.b16 %v6281
        %v6326 = vunpack.c.l.b16 %v6282
        %v6327 = vunpack.c.h.b16 %v6282
        %v6328 = vunpack.c.l.b16 %v6283
        %v6329 = vunpack.c.h.b16 %v6283
        %v6330 = vunpack.c.l.b16 %v6284
        %v6331 = vunpack.c.h.b16 %v6284
        %v6332 = vunpack.c.l.b16 %v6285
        %v6333 = vunpack.c.h.b16 %v6285
        %v6334 = vpack.c.b16 %v6304, %v6302
        %v6335 = vpack.c.b16 %v6305, %v6303
        %v6336 = vpack.c.b16 %v6308, %v6306
        %v6337 = vpack.c.b16 %v6309, %v6307
        %v6338 = vpack.c.b16 %v6312, %v6310
        %v6339 = vpack.c.b16 %v6313, %v6311
        %v6340 = vpack.c.b16 %v6316, %v6314
        %v6341 = vpack.c.b16 %v6317, %v6315
        %v6342 = vpack.c.b16 %v6320, %v6318
        %v6343 = vpack.c.b16 %v6321, %v6319
        %v6344 = vpack.c.b16 %v6324, %v6322
        %v6345 = vpack.c.b16 %v6325, %v6323
        %v6346 = vpack.c.b16 %v6328, %v6326
        %v6347 = vpack.c.b16 %v6329, %v6327
        %v6348 = vpack.c.b16 %v6332, %v6330
        %v6349 = vpack.c.b16 %v6333, %v6331
        %6366 = vmatprep.subr.bf16.mxu0 %v6335
        %6367 = vmatpush1.bf16.msra.mxu0 %v6334
        %6368 = vmatprep.subr.bf16.mxu0 %v6337
        %6369 = vmatpush1.bf16.msra.mxu0 %v6336
        %6370 = vmatprep.subr.bf16.mxu0 %v6339
        %6371 = vmatpush1.bf16.msra.mxu0 %v6338
        %6372 = vmatprep.subr.bf16.mxu0 %v6341
        %6373 = vmatpush1.bf16.msra.mxu0 %v6340
        %6374 = vmatprep.subr.bf16.mxu0 %v6343
        %6375 = vmatpush1.bf16.msra.mxu0 %v6342
        %6376 = vmatprep.subr.bf16.mxu0 %v6345
        %6377 = vmatpush1.bf16.msra.mxu0 %v6344
        %6378 = vmatprep.subr.bf16.mxu0 %v6347
        %6379 = vmatpush1.bf16.msra.mxu0 %v6346
        %6380 = vmatprep.subr.bf16.mxu0 %v6349
        %6381 = vmatpush1.bf16.msra.mxu0 %v6348
        %6382 = vmatprep.subr.bf16.mxu0 0
        %6383 = vmatpush1.bf16.msra.mxu0 0
        %6384 = vmatprep.subr.bf16.mxu0 0
        %6385 = vmatpush1.bf16.msra.mxu0 0
        %6386 = vmatprep.subr.bf16.mxu0 0
        %6387 = vmatpush1.bf16.msra.mxu0 0
        %6388 = vmatprep.subr.bf16.mxu0 0
        %6389 = vmatpush1.bf16.msra.mxu0 0
        %6390 = vmatprep.subr.bf16.mxu0 0
        %6391 = vmatpush1.bf16.msra.mxu0 0
        %6392 = vmatprep.subr.bf16.mxu0 0
        %6393 = vmatpush1.bf16.msra.mxu0 0
        %6394 = vmatprep.subr.bf16.mxu0 0
        %6395 = vmatpush1.bf16.msra.mxu0 0
        %6396 = vmatprep.subr.bf16.mxu0 0
        %6397 = vmatpush1.bf16.msra.mxu0 0
        %6398 = vmatprep.mubr.bf16.mxu0 0
        %6399 = vmatmul.mubr.bf16.gmra.mrb[0].mxu0 %v6269
        %v6400 = vpop.f32.mrb[0].mxu0
        %v6401 = vadd.f32 0.0, %v6400
        %v6402 = vpop.f32.mrb[0].mxu0
        %v6403 = vadd.f32 0.0, %v6402
        %v6404 = vpop.f32.mrb[0].mxu0
        %v6405 = vadd.f32 0.0, %v6404
        %v6406 = vpop.f32.mrb[0].mxu0
        %v6407 = vadd.f32 0.0, %v6406
        %6408 = vdwg.mxu0
        %v6409 = vld [vmem:[#allocation32] sm:$0x1]
        %v6411 = vlaneseq
        %v6412 = vshrl.u32 %v6411, 7
        %v6413 = vsub.s32 0, %v6412
        %v6414 = vrot.slane %v6409, %v6413
        %v6416 = vadd.f32 %v6401, %v6414
        %v6417 = vadd.f32 %v6405, %v6414
        %v6418 = vadd.f32 %v6403, %v6261
        %v6419 = vadd.f32 %v6407, %v6265
        %v6420 = vld [vmem:[#allocation29] sm:$0xf]
        %v6421 = vld [vmem:[#allocation29 + $0x4] sm:$0xf]
        %v6422 = vld [vmem:[#allocation29 + $0x8] sm:$0xf]
        %v6423 = vld [vmem:[#allocation29 + $0xc] sm:$0xf]
        %v6424 = vld [vmem:[#allocation29 + $0x10] sm:$0xf]
        %v6425 = vld [vmem:[#allocation29 + $0x14] sm:$0xf]
        %v6426 = vld [vmem:[#allocation29 + $0x18] sm:$0xf]
        %v6427 = vld [vmem:[#allocation29 + $0x1c] sm:$0xf]
        %v6428 = vld [vmem:[#allocation29 + $0x20] sm:$0xf]
        %v6429 = vld [vmem:[#allocation29 + $0x24] sm:$0xf]
        %v6430 = vld [vmem:[#allocation29 + $0x28] sm:$0xf]
        %v6431 = vld [vmem:[#allocation29 + $0x2c] sm:$0xf]
        %v6432 = vld [vmem:[#allocation29 + $0x30] sm:$0xf]
        %v6433 = vld [vmem:[#allocation29 + $0x34] sm:$0xf]
        %v6434 = vld [vmem:[#allocation29 + $0x38] sm:$0xf]
        %v6435 = vld [vmem:[#allocation29 + $0x3c] sm:$0xf]
        %v6436 = vpack.c.bf16 %v6419, %v6418
        %6437 = vmatprep.subr.bf16.mxu0 0
        %6438 = vmatpush1.bf16.msra.mxu0 %v6436
        %6439 = vmatprep.subr.bf16.mxu0 0
        %6440 = vmatpush1.bf16.msra.mxu0 0
        %6441 = vmatprep.subr.bf16.mxu0 0
        %6442 = vmatpush1.bf16.msra.mxu0 0
        %6443 = vmatprep.subr.bf16.mxu0 0
        %6444 = vmatpush1.bf16.msra.mxu0 0
        %6445 = vmatprep.subr.bf16.mxu0 0
        %6446 = vmatpush1.bf16.msra.mxu0 0
        %6447 = vmatprep.subr.bf16.mxu0 0
        %6448 = vmatpush1.bf16.msra.mxu0 0
        %6449 = vmatprep.subr.bf16.mxu0 0
        %6450 = vmatpush1.bf16.msra.mxu0 0
        %6451 = vmatprep.subr.bf16.mxu0 0
        %6452 = vmatpush1.bf16.msra.mxu0 0
        %6453 = vmatprep.subr.bf16.mxu0 0
        %6454 = vmatpush1.bf16.msra.mxu0 0
        %6455 = vmatprep.subr.bf16.mxu0 0
        %6456 = vmatpush1.bf16.msra.mxu0 0
        %6457 = vmatprep.subr.bf16.mxu0 0
        %6458 = vmatpush1.bf16.msra.mxu0 0
        %6459 = vmatprep.subr.bf16.mxu0 0
        %6460 = vmatpush1.bf16.msra.mxu0 0
        %6461 = vmatprep.subr.bf16.mxu0 0
        %6462 = vmatpush1.bf16.msra.mxu0 0
        %6463 = vmatprep.subr.bf16.mxu0 0
        %6464 = vmatpush1.bf16.msra.mxu0 0
        %6465 = vmatprep.subr.bf16.mxu0 0
        %6466 = vmatpush1.bf16.msra.mxu0 0
        %6467 = vmatprep.subr.bf16.mxu0 0
        %6468 = vmatpush1.bf16.msra.mxu0 0
        %6469 = vmatprep.mubr.bf16.mxu0 0
        %6470 = vmatmul.mubr.bf16.gmra.mrb[0].mxu0 %v2317
        %v6471 = vpop.f32.mrb[0].mxu0
        %v6472 = vadd.f32 0.0, %v6471
        %v6473 = vpop.f32.mrb[0].mxu0
        %v6474 = vpop.f32.mrb[0].mxu0
        %v6475 = vadd.f32 0.0, %v6474
        %v6476 = vpop.f32.mrb[0].mxu0
        %6477 = vmatprep.mubr.bf16.mxu0 0
        %6478 = vmatmul.mubr.bf16.gmra.mrb[0].mxu0 %v2320
        %v6479 = vpop.f32.mrb[0].mxu0
        %v6480 = vadd.f32 0.0, %v6479
        %v6481 = vpop.f32.mrb[0].mxu0
        %v6482 = vpop.f32.mrb[0].mxu0
        %v6483 = vadd.f32 0.0, %v6482
        %v6484 = vpop.f32.mrb[0].mxu0
        %6485 = vmatprep.mubr.bf16.mxu0 0
        %6486 = vmatmul.mubr.bf16.gmra.mrb[0].mxu0 %v2323
        %v6487 = vpop.f32.mrb[0].mxu0
        %v6488 = vadd.f32 0.0, %v6487
        %v6489 = vpop.f32.mrb[0].mxu0
        %v6490 = vpop.f32.mrb[0].mxu0
        %v6491 = vadd.f32 0.0, %v6490
        %v6492 = vpop.f32.mrb[0].mxu0
        %6493 = vmatprep.mubr.bf16.mxu0 0
        %6494 = vmatmul.mubr.bf16.gmra.mrb[0].mxu0 %v2326
        %v6495 = vpop.f32.mrb[0].mxu0
        %v6496 = vadd.f32 0.0, %v6495
        %v6497 = vpop.f32.mrb[0].mxu0
        %v6498 = vpop.f32.mrb[0].mxu0
        %v6499 = vadd.f32 0.0, %v6498
        %v6500 = vpop.f32.mrb[0].mxu0
        %6501 = vmatprep.mubr.bf16.mxu0 0
        %6502 = vmatmul.mubr.bf16.gmra.mrb[0].mxu0 %v2329
        %v6503 = vpop.f32.mrb[0].mxu0
        %v6504 = vadd.f32 0.0, %v6503
        %v6505 = vpop.f32.mrb[0].mxu0
        %v6506 = vpop.f32.mrb[0].mxu0
        %v6507 = vadd.f32 0.0, %v6506
        %v6508 = vpop.f32.mrb[0].mxu0
        %6509 = vmatprep.mubr.bf16.mxu0 0
        %6510 = vmatmul.mubr.bf16.gmra.mrb[0].mxu0 %v2332
        %v6511 = vpop.f32.mrb[0].mxu0
        %v6512 = vadd.f32 0.0, %v6511
        %v6513 = vpop.f32.mrb[0].mxu0
        %v6514 = vpop.f32.mrb[0].mxu0
        %v6515 = vadd.f32 0.0, %v6514
        %v6516 = vpop.f32.mrb[0].mxu0
        %6517 = vmatprep.mubr.bf16.mxu0 0
        %6518 = vmatmul.mubr.bf16.gmra.mrb[0].mxu0 %v2335
        %v6519 = vpop.f32.mrb[0].mxu0
        %v6520 = vadd.f32 0.0, %v6519
        %v6521 = vpop.f32.mrb[0].mxu0
        %v6522 = vpop.f32.mrb[0].mxu0
        %v6523 = vadd.f32 0.0, %v6522
        %v6524 = vpop.f32.mrb[0].mxu0
        %6525 = vmatprep.mubr.bf16.mxu0 0
        %6526 = vmatmul.mubr.bf16.gmra.mrb[0].mxu0 %v2338
        %v6527 = vpop.f32.mrb[0].mxu0
        %v6528 = vadd.f32 0.0, %v6527
        %v6529 = vpop.f32.mrb[0].mxu0
        %v6530 = vpop.f32.mrb[0].mxu0
        %v6531 = vadd.f32 0.0, %v6530
        %v6532 = vpop.f32.mrb[0].mxu0
        %6533 = vdwg.mxu0
        %v6550 = vunpack.c.l.b16 %v6420
        %v6551 = vunpack.c.l.b16 %v6421
        %v6552 = vunpack.c.l.b16 %v6422
        %v6553 = vunpack.c.l.b16 %v6423
        %v6554 = vunpack.c.l.b16 %v6424
        %v6555 = vunpack.c.l.b16 %v6425
        %v6556 = vunpack.c.l.b16 %v6426
        %v6557 = vunpack.c.l.b16 %v6427
        %v6558 = vunpack.c.l.b16 %v6428
        %v6559 = vunpack.c.l.b16 %v6429
        %v6560 = vunpack.c.l.b16 %v6430
        %v6561 = vunpack.c.l.b16 %v6431
        %v6562 = vunpack.c.l.b16 %v6432
        %v6563 = vunpack.c.l.b16 %v6433
        %v6564 = vunpack.c.l.b16 %v6434
        %v6565 = vunpack.c.l.b16 %v6435
        %v6566 = vpack.c.b16 %v6551, %v6550
        %v6567 = vpack.c.b16 %v6553, %v6552
        %v6568 = vpack.c.b16 %v6555, %v6554
        %v6569 = vpack.c.b16 %v6557, %v6556
        %v6570 = vpack.c.b16 %v6559, %v6558
        %v6571 = vpack.c.b16 %v6561, %v6560
        %v6572 = vpack.c.b16 %v6563, %v6562
        %v6573 = vpack.c.b16 %v6565, %v6564
        %6582 = vmatprep.subr.bf16.mxu0 0
        %6583 = vmatpush1.bf16.msra.mxu0 %v6566
        %6584 = vmatprep.subr.bf16.mxu0 0
        %6585 = vmatpush1.bf16.msra.mxu0 %v6567
        %6586 = vmatprep.subr.bf16.mxu0 0
        %6587 = vmatpush1.bf16.msra.mxu0 %v6568
        %6588 = vmatprep.subr.bf16.mxu0 0
        %6589 = vmatpush1.bf16.msra.mxu0 %v6569
        %6590 = vmatprep.subr.bf16.mxu0 0
        %6591 = vmatpush1.bf16.msra.mxu0 %v6570
        %6592 = vmatprep.subr.bf16.mxu0 0
        %6593 = vmatpush1.bf16.msra.mxu0 %v6571
        %6594 = vmatprep.subr.bf16.mxu0 0
        %6595 = vmatpush1.bf16.msra.mxu0 %v6572
        %6596 = vmatprep.subr.bf16.mxu0 0
        %6597 = vmatpush1.bf16.msra.mxu0 %v6573
        %6598 = vmatprep.subr.bf16.mxu0 0
        %6599 = vmatpush1.bf16.msra.mxu0 0
        %6600 = vmatprep.subr.bf16.mxu0 0
        %6601 = vmatpush1.bf16.msra.mxu0 0
        %6602 = vmatprep.subr.bf16.mxu0 0
        %6603 = vmatpush1.bf16.msra.mxu0 0
        %6604 = vmatprep.subr.bf16.mxu0 0
        %6605 = vmatpush1.bf16.msra.mxu0 0
        %6606 = vmatprep.subr.bf16.mxu0 0
        %6607 = vmatpush1.bf16.msra.mxu0 0
        %6608 = vmatprep.subr.bf16.mxu0 0
        %6609 = vmatpush1.bf16.msra.mxu0 0
        %6610 = vmatprep.subr.bf16.mxu0 0
        %6611 = vmatpush1.bf16.msra.mxu0 0
        %6612 = vmatprep.subr.bf16.mxu0 0
        %6613 = vmatpush1.bf16.msra.mxu0 0
        %6614 = vmatprep.mubr.bf16.mxu0 0
        %6615 = vmatmul.mubr.bf16.gmra.mrb[0].mxu0 %v2035
        %v6616 = vpop.f32.mrb[0].mxu0
        %v6617 = vadd.f32 %v6472, %v6616
        %v6618 = vpop.f32.mrb[0].mxu0
        %v6619 = vpop.f32.mrb[0].mxu0
        %v6620 = vadd.f32 %v6475, %v6619
        %v6621 = vpop.f32.mrb[0].mxu0
        %6622 = vmatprep.mubr.bf16.mxu0 0
        %6623 = vmatmul.mubr.bf16.gmra.mrb[0].mxu0 %v2036
        %v6624 = vpop.f32.mrb[0].mxu0
        %v6625 = vadd.f32 %v6480, %v6624
        %v6626 = vpop.f32.mrb[0].mxu0
        %v6627 = vpop.f32.mrb[0].mxu0
        %v6628 = vadd.f32 %v6483, %v6627
        %v6629 = vpop.f32.mrb[0].mxu0
        %6630 = vmatprep.mubr.bf16.mxu0 0
        %6631 = vmatmul.mubr.bf16.gmra.mrb[0].mxu0 %v2037
        %v6632 = vpop.f32.mrb[0].mxu0
        %v6633 = vadd.f32 %v6488, %v6632
        %v6634 = vpop.f32.mrb[0].mxu0
        %v6635 = vpop.f32.mrb[0].mxu0
        %v6636 = vadd.f32 %v6491, %v6635
        %v6637 = vpop.f32.mrb[0].mxu0
        %6638 = vmatprep.mubr.bf16.mxu0 0
        %6639 = vmatmul.mubr.bf16.gmra.mrb[0].mxu0 %v2038
        %v6640 = vpop.f32.mrb[0].mxu0
        %v6641 = vadd.f32 %v6496, %v6640
        %v6642 = vpop.f32.mrb[0].mxu0
        %v6643 = vpop.f32.mrb[0].mxu0
        %v6644 = vadd.f32 %v6499, %v6643
        %v6645 = vpop.f32.mrb[0].mxu0
        %6646 = vmatprep.mubr.bf16.mxu0 0
        %6647 = vmatmul.mubr.bf16.gmra.mrb[0].mxu0 %v2039
        %v6648 = vpop.f32.mrb[0].mxu0
        %v6649 = vadd.f32 %v6504, %v6648
        %v6650 = vpop.f32.mrb[0].mxu0
        %v6651 = vpop.f32.mrb[0].mxu0
        %v6652 = vadd.f32 %v6507, %v6651
        %v6653 = vpop.f32.mrb[0].mxu0
        %6654 = vmatprep.mubr.bf16.mxu0 0
        %6655 = vmatmul.mubr.bf16.gmra.mrb[0].mxu0 %v2040
        %v6656 = vpop.f32.mrb[0].mxu0
        %v6657 = vadd.f32 %v6512, %v6656
        %v6658 = vpop.f32.mrb[0].mxu0
        %v6659 = vpop.f32.mrb[0].mxu0
        %v6660 = vadd.f32 %v6515, %v6659
        %v6661 = vpop.f32.mrb[0].mxu0
        %6662 = vmatprep.mubr.bf16.mxu0 0
        %6663 = vmatmul.mubr.bf16.gmra.mrb[0].mxu0 %v2041
        %v6664 = vpop.f32.mrb[0].mxu0
        %v6665 = vadd.f32 %v6520, %v6664
        %v6666 = vpop.f32.mrb[0].mxu0
        %v6667 = vpop.f32.mrb[0].mxu0
        %v6668 = vadd.f32 %v6523, %v6667
        %v6669 = vpop.f32.mrb[0].mxu0
        %6670 = vmatprep.mubr.bf16.mxu0 0
        %6671 = vmatmul.mubr.bf16.gmra.mrb[0].mxu0 %v2042
        %v6672 = vpop.f32.mrb[0].mxu0
        %v6673 = vadd.f32 %v6528, %v6672
        %v6674 = vpop.f32.mrb[0].mxu0
        %v6675 = vpop.f32.mrb[0].mxu0
        %v6676 = vadd.f32 %v6531, %v6675
        %v6677 = vpop.f32.mrb[0].mxu0
        %6678 = vdwg.mxu0
        %v6679 = vld [vmem:[#allocation34] sm:$0xf]
        %v6680 = vld [vmem:[#allocation34 + $0x4] sm:$0xf]
        %v6681 = vld [vmem:[#allocation34 + $0x8] sm:$0xf]
        %v6682 = vld [vmem:[#allocation34 + $0xc] sm:$0xf]
        %v6683 = vld [vmem:[#allocation34 + $0x10] sm:$0xf]
        %v6684 = vld [vmem:[#allocation34 + $0x14] sm:$0xf]
        %v6685 = vld [vmem:[#allocation34 + $0x18] sm:$0xf]
        %v6686 = vld [vmem:[#allocation34 + $0x1c] sm:$0xf]
        %v6687 = vld [vmem:[#allocation34 + $0x20] sm:$0xf]
        %v6688 = vld [vmem:[#allocation34 + $0x24] sm:$0xf]
        %v6689 = vld [vmem:[#allocation34 + $0x28] sm:$0xf]
        %v6690 = vld [vmem:[#allocation34 + $0x2c] sm:$0xf]
        %v6691 = vld [vmem:[#allocation34 + $0x30] sm:$0xf]
        %v6692 = vld [vmem:[#allocation34 + $0x34] sm:$0xf]
        %v6693 = vld [vmem:[#allocation34 + $0x38] sm:$0xf]
        %v6694 = vld [vmem:[#allocation34 + $0x3c] sm:$0xf]
        %v6695 = vld [vmem:[#allocation35] sm:$0x1]
        %v6696 = vld [vmem:[#allocation37] sm:$0xf]
        %v6697 = vld [vmem:[#allocation37 + $0x4] sm:$0xf]
        %v6698 = vld [vmem:[#allocation37 + $0x8] sm:$0xf]
        %v6699 = vld [vmem:[#allocation37 + $0xc] sm:$0xf]
        %v6700 = vld [vmem:[#allocation37 + $0x10] sm:$0xf]
        %v6701 = vld [vmem:[#allocation37 + $0x14] sm:$0xf]
        %v6702 = vld [vmem:[#allocation37 + $0x18] sm:$0xf]
        %v6703 = vld [vmem:[#allocation37 + $0x1c] sm:$0xf]
        %v6704 = vld [vmem:[#allocation37 + $0x20] sm:$0xf]
        %v6705 = vld [vmem:[#allocation37 + $0x24] sm:$0xf]
        %v6706 = vld [vmem:[#allocation37 + $0x28] sm:$0xf]
        %v6707 = vld [vmem:[#allocation37 + $0x2c] sm:$0xf]
        %v6708 = vld [vmem:[#allocation37 + $0x30] sm:$0xf]
        %v6709 = vld [vmem:[#allocation37 + $0x34] sm:$0xf]
        %v6710 = vld [vmem:[#allocation37 + $0x38] sm:$0xf]
        %v6711 = vld [vmem:[#allocation37 + $0x3c] sm:$0xf]
        %v6712 = vld [vmem:[#allocation38] sm:$0x1]
        %v6713 = vld [vmem:[#allocation40] sm:$0x1]
        %v6714 = vld [vmem:[#allocation41] sm:$0x1]
        %v6715 = vld [vmem:[#allocation43] sm:$0xff]
        %v6716 = vld [vmem:[#allocation43 + $0x8] sm:$0xff]
        %v6717 = vld [vmem:[#allocation43 + $0x10] sm:$0xff]
        %v6718 = vld [vmem:[#allocation43 + $0x18] sm:$0xff]
        %v6719 = vld [vmem:[#allocation43 + $0x20] sm:$0xff]
        %v6720 = vld [vmem:[#allocation43 + $0x28] sm:$0xff]
        %v6721 = vld [vmem:[#allocation43 + $0x30] sm:$0xff]
        %v6722 = vld [vmem:[#allocation43 + $0x38] sm:$0xff]
        %v6723 = vld [vmem:[#allocation43 + $0x40] sm:$0xff]
        %v6724 = vld [vmem:[#allocation43 + $0x48] sm:$0xff]
        %v6725 = vld [vmem:[#allocation43 + $0x50] sm:$0xff]
        %v6726 = vld [vmem:[#allocation43 + $0x58] sm:$0xff]
        %v6727 = vld [vmem:[#allocation43 + $0x60] sm:$0xff]
        %v6728 = vld [vmem:[#allocation43 + $0x68] sm:$0xff]
        %v6729 = vld [vmem:[#allocation43 + $0x70] sm:$0xff]
        %v6730 = vld [vmem:[#allocation43 + $0x78] sm:$0xff]
        %v6731 = vld [vmem:[#allocation43 + $0x80] sm:$0xff]
        %v6732 = vld [vmem:[#allocation43 + $0x88] sm:$0xff]
        %v6733 = vld [vmem:[#allocation43 + $0x90] sm:$0xff]
        %v6734 = vld [vmem:[#allocation43 + $0x98] sm:$0xff]
        %v6735 = vld [vmem:[#allocation43 + $0xa0] sm:$0xff]
        %v6736 = vld [vmem:[#allocation43 + $0xa8] sm:$0xff]
        %v6737 = vld [vmem:[#allocation43 + $0xb0] sm:$0xff]
        %v6738 = vld [vmem:[#allocation43 + $0xb8] sm:$0xff]
        %v6739 = vld [vmem:[#allocation43 + $0xc0] sm:$0xff]
        %v6740 = vld [vmem:[#allocation43 + $0xc8] sm:$0xff]
        %v6741 = vld [vmem:[#allocation43 + $0xd0] sm:$0xff]
        %v6742 = vld [vmem:[#allocation43 + $0xd8] sm:$0xff]
        %v6743 = vld [vmem:[#allocation43 + $0xe0] sm:$0xff]
        %v6744 = vld [vmem:[#allocation43 + $0xe8] sm:$0xff]
        %v6745 = vld [vmem:[#allocation43 + $0xf0] sm:$0xff]
        %v6746 = vld [vmem:[#allocation43 + $0xf8] sm:$0xff]
        %v6747 = vld [vmem:[#allocation44] sm:$0xf]
        %v6748 = vld [vmem:[#allocation46] sm:$0xf]
        %v6749 = vld [vmem:[#allocation46 + $0x4] sm:$0xf]
        %v6750 = vld [vmem:[#allocation46 + $0x8] sm:$0xf]
        %v6751 = vld [vmem:[#allocation46 + $0xc] sm:$0xf]
        %v6752 = vld [vmem:[#allocation46 + $0x10] sm:$0xf]
        %v6753 = vld [vmem:[#allocation46 + $0x14] sm:$0xf]
        %v6754 = vld [vmem:[#allocation46 + $0x18] sm:$0xf]
        %v6755 = vld [vmem:[#allocation46 + $0x1c] sm:$0xf]
        %v6756 = vld [vmem:[#allocation46 + $0x20] sm:$0xf]
        %v6757 = vld [vmem:[#allocation46 + $0x24] sm:$0xf]
        %v6758 = vld [vmem:[#allocation46 + $0x28] sm:$0xf]
        %v6759 = vld [vmem:[#allocation46 + $0x2c] sm:$0xf]
        %v6760 = vld [vmem:[#allocation46 + $0x30] sm:$0xf]
        %v6761 = vld [vmem:[#allocation46 + $0x34] sm:$0xf]
        %v6762 = vld [vmem:[#allocation46 + $0x38] sm:$0xf]
        %v6763 = vld [vmem:[#allocation46 + $0x3c] sm:$0xf]
        %v6764 = vld [vmem:[#allocation46 + $0x40] sm:$0xf]
        %v6765 = vld [vmem:[#allocation46 + $0x44] sm:$0xf]
        %v6766 = vld [vmem:[#allocation46 + $0x48] sm:$0xf]
        %v6767 = vld [vmem:[#allocation46 + $0x4c] sm:$0xf]
        %v6768 = vld [vmem:[#allocation46 + $0x50] sm:$0xf]
        %v6769 = vld [vmem:[#allocation46 + $0x54] sm:$0xf]
        %v6770 = vld [vmem:[#allocation46 + $0x58] sm:$0xf]
        %v6771 = vld [vmem:[#allocation46 + $0x5c] sm:$0xf]
        %v6772 = vld [vmem:[#allocation46 + $0x60] sm:$0xf]
        %v6773 = vld [vmem:[#allocation46 + $0x64] sm:$0xf]
        %v6774 = vld [vmem:[#allocation46 + $0x68] sm:$0xf]
        %v6775 = vld [vmem:[#allocation46 + $0x6c] sm:$0xf]
        %v6776 = vld [vmem:[#allocation46 + $0x70] sm:$0xf]
        %v6777 = vld [vmem:[#allocation46 + $0x74] sm:$0xf]
        %v6778 = vld [vmem:[#allocation46 + $0x78] sm:$0xf]
        %v6779 = vld [vmem:[#allocation46 + $0x7c] sm:$0xf]
        %v6780 = vld [vmem:[#allocation46 + $0x80] sm:$0xf]
        %v6781 = vld [vmem:[#allocation46 + $0x84] sm:$0xf]
        %v6782 = vld [vmem:[#allocation46 + $0x88] sm:$0xf]
        %v6783 = vld [vmem:[#allocation46 + $0x8c] sm:$0xf]
        %v6784 = vld [vmem:[#allocation46 + $0x90] sm:$0xf]
        %v6785 = vld [vmem:[#allocation46 + $0x94] sm:$0xf]
        %v6786 = vld [vmem:[#allocation46 + $0x98] sm:$0xf]
        %v6787 = vld [vmem:[#allocation46 + $0x9c] sm:$0xf]
        %v6788 = vld [vmem:[#allocation46 + $0xa0] sm:$0xf]
        %v6789 = vld [vmem:[#allocation46 + $0xa4] sm:$0xf]
        %v6790 = vld [vmem:[#allocation46 + $0xa8] sm:$0xf]
        %v6791 = vld [vmem:[#allocation46 + $0xac] sm:$0xf]
        %v6792 = vld [vmem:[#allocation46 + $0xb0] sm:$0xf]
        %v6793 = vld [vmem:[#allocation46 + $0xb4] sm:$0xf]
        %v6794 = vld [vmem:[#allocation46 + $0xb8] sm:$0xf]
        %v6795 = vld [vmem:[#allocation46 + $0xbc] sm:$0xf]
        %v6796 = vld [vmem:[#allocation46 + $0xc0] sm:$0xf]
        %v6797 = vld [vmem:[#allocation46 + $0xc4] sm:$0xf]
        %v6798 = vld [vmem:[#allocation46 + $0xc8] sm:$0xf]
        %v6799 = vld [vmem:[#allocation46 + $0xcc] sm:$0xf]
        %v6800 = vld [vmem:[#allocation46 + $0xd0] sm:$0xf]
        %v6801 = vld [vmem:[#allocation46 + $0xd4] sm:$0xf]
        %v6802 = vld [vmem:[#allocation46 + $0xd8] sm:$0xf]
        %v6803 = vld [vmem:[#allocation46 + $0xdc] sm:$0xf]
        %v6804 = vld [vmem:[#allocation46 + $0xe0] sm:$0xf]
        %v6805 = vld [vmem:[#allocation46 + $0xe4] sm:$0xf]
        %v6806 = vld [vmem:[#allocation46 + $0xe8] sm:$0xf]
        %v6807 = vld [vmem:[#allocation46 + $0xec] sm:$0xf]
        %v6808 = vld [vmem:[#allocation46 + $0xf0] sm:$0xf]
        %v6809 = vld [vmem:[#allocation46 + $0xf4] sm:$0xf]
        %v6810 = vld [vmem:[#allocation46 + $0xf8] sm:$0xf]
        %v6811 = vld [vmem:[#allocation46 + $0xfc] sm:$0xf]
        %v6812 = vld [vmem:[%s75] sm:$0x1]
        %v6813 = vld [vmem:[%s77] sm:$0x1]
        %v6814 = vld [vmem:[%s79] sm:$0x1]
        %v6817 = vcombine.high %v6416, %v6416
        %v6819 = vunpack.c.l.s4 1966171168
        %v6820 = vunpack.c.0.s8 %v6819
        %v6821 = vlaneseq
        %v6822 = vshrl.u32 %v6821, 7
        %v6823 = vsub.s32 %v6820, %v6822
        %v6824 = vrot.slane %v6416, %v6823
        %v6826 = vunpack.c.l.s4 1966171168
        %v6827 = vunpack.c.0.s8 %v6826
        %v6828 = vlaneseq
        %v6829 = vshrl.u32 %v6828, 7
        %v6830 = vsub.s32 %v6827, %v6829
        %v6831 = vrot.slane %v6817, %v6830
        %v6832 = vcombine.high %v6824, %v6824
        %v6833 = vcombine.high %v6831, %v6831
        %v6835 = vunpack.c.l.s4 1966171168
        %v6836 = vunpack.c.0.s8 %v6835
        %v6837 = vlaneseq
        %v6838 = vshrl.u32 %v6837, 7
        %v6839 = vsub.s32 %v6836, %v6838
        %v6840 = vrot.slane %v6824, %v6839
        %v6842 = vunpack.c.l.s4 1966171168
        %v6843 = vunpack.c.0.s8 %v6842
        %v6844 = vlaneseq
        %v6845 = vshrl.u32 %v6844, 7
        %v6846 = vsub.s32 %v6843, %v6845
        %v6847 = vrot.slane %v6831, %v6846
        %v6849 = vunpack.c.l.s4 1966171168
        %v6850 = vunpack.c.0.s8 %v6849
        %v6851 = vlaneseq
        %v6852 = vshrl.u32 %v6851, 7
        %v6853 = vsub.s32 %v6850, %v6852
        %v6854 = vrot.slane %v6832, %v6853
        %v6856 = vunpack.c.l.s4 1966171168
        %v6857 = vunpack.c.0.s8 %v6856
        %v6858 = vlaneseq
        %v6859 = vshrl.u32 %v6858, 7
        %v6860 = vsub.s32 %v6857, %v6859
        %v6861 = vrot.slane %v6833, %v6860
        %v6862 = vcombine.high %v6840, %v6840
        %v6863 = vcombine.high %v6847, %v6847
        %v6864 = vcombine.high %v6854, %v6854
        %v6865 = vcombine.high %v6861, %v6861
        %v6866 = vcombine.high %v6417, %v6417
        %v6868 = vunpack.c.l.s4 1966171168
        %v6869 = vunpack.c.0.s8 %v6868
        %v6870 = vlaneseq
        %v6871 = vshrl.u32 %v6870, 7
        %v6872 = vsub.s32 %v6869, %v6871
        %v6873 = vrot.slane %v6417, %v6872
        %v6875 = vunpack.c.l.s4 1966171168
        %v6876 = vunpack.c.0.s8 %v6875
        %v6877 = vlaneseq
        %v6878 = vshrl.u32 %v6877, 7
        %v6879 = vsub.s32 %v6876, %v6878
        %v6880 = vrot.slane %v6866, %v6879
        %v6881 = vcombine.high %v6873, %v6873
        %v6882 = vcombine.high %v6880, %v6880
        %v6884 = vunpack.c.l.s4 1966171168
        %v6885 = vunpack.c.0.s8 %v6884
        %v6886 = vlaneseq
        %v6887 = vshrl.u32 %v6886, 7
        %v6888 = vsub.s32 %v6885, %v6887
        %v6889 = vrot.slane %v6873, %v6888
        %v6891 = vunpack.c.l.s4 1966171168
        %v6892 = vunpack.c.0.s8 %v6891
        %v6893 = vlaneseq
        %v6894 = vshrl.u32 %v6893, 7
        %v6895 = vsub.s32 %v6892, %v6894
        %v6896 = vrot.slane %v6880, %v6895
        %v6898 = vunpack.c.l.s4 1966171168
        %v6899 = vunpack.c.0.s8 %v6898
        %v6900 = vlaneseq
        %v6901 = vshrl.u32 %v6900, 7
        %v6902 = vsub.s32 %v6899, %v6901
        %v6903 = vrot.slane %v6881, %v6902
        %v6905 = vunpack.c.l.s4 1966171168
        %v6906 = vunpack.c.0.s8 %v6905
        %v6907 = vlaneseq
        %v6908 = vshrl.u32 %v6907, 7
        %v6909 = vsub.s32 %v6906, %v6908
        %v6910 = vrot.slane %v6882, %v6909
        %v6911 = vcombine.high %v6889, %v6889
        %v6912 = vcombine.high %v6896, %v6896
        %v6913 = vcombine.high %v6903, %v6903
        %v6914 = vcombine.high %v6910, %v6910
        %v6915 = vlaneseq
        %v6916 = vshrl.u32 %v6915, 7
        %v6917 = vsub.s32 0, %v6916
        %v6918 = vrot.slane %v6840, %v6917
        %v6919 = vlaneseq
        %v6920 = vshrl.u32 %v6919, 7
        %v6921 = vsub.s32 0, %v6920
        %v6922 = vrot.slane %v6854, %v6921
        %v6923 = vlaneseq
        %v6924 = vshrl.u32 %v6923, 7
        %v6925 = vsub.s32 0, %v6924
        %v6926 = vrot.slane %v6862, %v6925
        %v6927 = vlaneseq
        %v6928 = vshrl.u32 %v6927, 7
        %v6929 = vsub.s32 0, %v6928
        %v6930 = vrot.slane %v6864, %v6929
        %v6931 = vlaneseq
        %v6932 = vshrl.u32 %v6931, 7
        %v6933 = vsub.s32 0, %v6932
        %v6934 = vrot.slane %v6847, %v6933
        %v6935 = vlaneseq
        %v6936 = vshrl.u32 %v6935, 7
        %v6937 = vsub.s32 0, %v6936
        %v6938 = vrot.slane %v6861, %v6937
        %v6939 = vlaneseq
        %v6940 = vshrl.u32 %v6939, 7
        %v6941 = vsub.s32 0, %v6940
        %v6942 = vrot.slane %v6863, %v6941
        %v6943 = vlaneseq
        %v6944 = vshrl.u32 %v6943, 7
        %v6945 = vsub.s32 0, %v6944
        %v6946 = vrot.slane %v6865, %v6945
        %v6947 = vlaneseq
        %v6948 = vshrl.u32 %v6947, 7
        %v6949 = vsub.s32 0, %v6948
        %v6950 = vrot.slane %v6889, %v6949
        %v6951 = vlaneseq
        %v6952 = vshrl.u32 %v6951, 7
        %v6953 = vsub.s32 0, %v6952
        %v6954 = vrot.slane %v6903, %v6953
        %v6955 = vlaneseq
        %v6956 = vshrl.u32 %v6955, 7
        %v6957 = vsub.s32 0, %v6956
        %v6958 = vrot.slane %v6911, %v6957
        %v6959 = vlaneseq
        %v6960 = vshrl.u32 %v6959, 7
        %v6961 = vsub.s32 0, %v6960
        %v6962 = vrot.slane %v6913, %v6961
        %v6963 = vlaneseq
        %v6964 = vshrl.u32 %v6963, 7
        %v6965 = vsub.s32 0, %v6964
        %v6966 = vrot.slane %v6896, %v6965
        %v6967 = vlaneseq
        %v6968 = vshrl.u32 %v6967, 7
        %v6969 = vsub.s32 0, %v6968
        %v6970 = vrot.slane %v6910, %v6969
        %v6971 = vlaneseq
        %v6972 = vshrl.u32 %v6971, 7
        %v6973 = vsub.s32 0, %v6972
        %v6974 = vrot.slane %v6912, %v6973
        %v6975 = vlaneseq
        %v6976 = vshrl.u32 %v6975, 7
        %v6977 = vsub.s32 0, %v6976
        %v6978 = vrot.slane %v6914, %v6977
        %v6995 = vadd.f32 %v6617, %v6918
        %v6996 = vadd.f32 %v6620, %v6922
        %v6997 = vadd.f32 %v6625, %v6926
        %v6998 = vadd.f32 %v6628, %v6930
        %v6999 = vadd.f32 %v6633, %v6934
        %v7000 = vadd.f32 %v6636, %v6938
        %v7001 = vadd.f32 %v6641, %v6942
        %v7002 = vadd.f32 %v6644, %v6946
        %v7003 = vadd.f32 %v6649, %v6950
        %v7004 = vadd.f32 %v6652, %v6954
        %v7005 = vadd.f32 %v6657, %v6958
        %v7006 = vadd.f32 %v6660, %v6962
        %v7007 = vadd.f32 %v6665, %v6966
        %v7008 = vadd.f32 %v6668, %v6970
        %v7009 = vadd.f32 %v6673, %v6974
        %v7010 = vadd.f32 %v6676, %v6978
        %v7011 = vmax.f32 %v6995, 0.0
        %v7012 = vmax.f32 %v6996, 0.0
        %v7013 = vmax.f32 %v6997, 0.0
        %v7014 = vmax.f32 %v6998, 0.0
        %v7015 = vmax.f32 %v6999, 0.0
        %v7016 = vmax.f32 %v7000, 0.0
        %v7017 = vmax.f32 %v7001, 0.0
        %v7018 = vmax.f32 %v7002, 0.0
        %v7019 = vmax.f32 %v7003, 0.0
        %v7020 = vmax.f32 %v7004, 0.0
        %v7021 = vmax.f32 %v7005, 0.0
        %v7022 = vmax.f32 %v7006, 0.0
        %v7023 = vmax.f32 %v7007, 0.0
        %v7024 = vmax.f32 %v7008, 0.0
        %v7025 = vmax.f32 %v7009, 0.0
        %v7026 = vmax.f32 %v7010, 0.0
        %v7027 = vpack.c.bf16 %v7012, %v7011
        %v7028 = vpack.c.bf16 %v7014, %v7013
        %v7029 = vpack.c.bf16 %v7016, %v7015
        %v7030 = vpack.c.bf16 %v7018, %v7017
        %v7031 = vpack.c.bf16 %v7020, %v7019
        %v7032 = vpack.c.bf16 %v7022, %v7021
        %v7033 = vpack.c.bf16 %v7024, %v7023
        %v7034 = vpack.c.bf16 %v7026, %v7025
        %v7036 = vlaneseq
        %v7037 = vshrl.u32 %v7036, 7
        %v7038 = vsub.s32 0, %v7037
        %v7039 = vrot.slane %v6695, %v7038
        %v7057 = vunpack.c.l.b16 %v6679
        %v7058 = vunpack.c.l.b16 %v6680
        %v7059 = vunpack.c.l.b16 %v6681
        %v7060 = vunpack.c.l.b16 %v6682
        %v7061 = vunpack.c.l.b16 %v6683
        %v7062 = vunpack.c.l.b16 %v6684
        %v7063 = vunpack.c.l.b16 %v6685
        %v7064 = vunpack.c.l.b16 %v6686
        %v7065 = vunpack.c.l.b16 %v6687
        %v7066 = vunpack.c.l.b16 %v6688
        %v7067 = vunpack.c.l.b16 %v6689
        %v7068 = vunpack.c.l.b16 %v6690
        %v7069 = vunpack.c.l.b16 %v6691
        %v7070 = vunpack.c.l.b16 %v6692
        %v7071 = vunpack.c.l.b16 %v6693
        %v7072 = vunpack.c.l.b16 %v6694
        %v7073 = vpack.c.b16 %v7058, %v7057
        %v7074 = vpack.c.b16 %v7060, %v7059
        %v7075 = vpack.c.b16 %v7062, %v7061
        %v7076 = vpack.c.b16 %v7064, %v7063
        %v7077 = vpack.c.b16 %v7066, %v7065
        %v7078 = vpack.c.b16 %v7068, %v7067
        %v7079 = vpack.c.b16 %v7070, %v7069
        %v7080 = vpack.c.b16 %v7072, %v7071
        %7089 = vmatprep.subr.bf16.mxu0 0
        %7090 = vmatpush1.bf16.msra.mxu0 %v7073
        %7091 = vmatprep.subr.bf16.mxu0 0
        %7092 = vmatpush1.bf16.msra.mxu0 %v7074
        %7093 = vmatprep.subr.bf16.mxu0 0
        %7094 = vmatpush1.bf16.msra.mxu0 %v7075
        %7095 = vmatprep.subr.bf16.mxu0 0
        %7096 = vmatpush1.bf16.msra.mxu0 %v7076
        %7097 = vmatprep.subr.bf16.mxu0 0
        %7098 = vmatpush1.bf16.msra.mxu0 %v7077
        %7099 = vmatprep.subr.bf16.mxu0 0
        %7100 = vmatpush1.bf16.msra.mxu0 %v7078
        %7101 = vmatprep.subr.bf16.mxu0 0
        %7102 = vmatpush1.bf16.msra.mxu0 %v7079
        %7103 = vmatprep.subr.bf16.mxu0 0
        %7104 = vmatpush1.bf16.msra.mxu0 %v7080
        %7105 = vmatprep.subr.bf16.mxu0 0
        %7106 = vmatpush1.bf16.msra.mxu0 0
        %7107 = vmatprep.subr.bf16.mxu0 0
        %7108 = vmatpush1.bf16.msra.mxu0 0
        %7109 = vmatprep.subr.bf16.mxu0 0
        %7110 = vmatpush1.bf16.msra.mxu0 0
        %7111 = vmatprep.subr.bf16.mxu0 0
        %7112 = vmatpush1.bf16.msra.mxu0 0
        %7113 = vmatprep.subr.bf16.mxu0 0
        %7114 = vmatpush1.bf16.msra.mxu0 0
        %7115 = vmatprep.subr.bf16.mxu0 0
        %7116 = vmatpush1.bf16.msra.mxu0 0
        %7117 = vmatprep.subr.bf16.mxu0 0
        %7118 = vmatpush1.bf16.msra.mxu0 0
        %7119 = vmatprep.subr.bf16.mxu0 0
        %7120 = vmatpush1.bf16.msra.mxu0 0
        %7121 = vmatprep.mubr.bf16.mxu0 0
        %7122 = vmatmul.mubr.bf16.gmra.mrb[0].mxu0 %v7027
        %v7123 = vpop.f32.mrb[0].mxu0
        %v7124 = vadd.f32 %v7039, %v7123
        %v7125 = vpop.f32.mrb[0].mxu0
        %v7126 = vpop.f32.mrb[0].mxu0
        %v7127 = vadd.f32 %v7039, %v7126
        %v7128 = vpop.f32.mrb[0].mxu0
        %7129 = vmatprep.mubr.bf16.mxu0 0
        %7130 = vmatmul.mubr.bf16.gmra.mrb[0].mxu0 %v7028
        %v7131 = vpop.f32.mrb[0].mxu0
        %v7132 = vadd.f32 %v7039, %v7131
        %v7133 = vpop.f32.mrb[0].mxu0
        %v7134 = vpop.f32.mrb[0].mxu0
        %v7135 = vadd.f32 %v7039, %v7134
        %v7136 = vpop.f32.mrb[0].mxu0
        %7137 = vmatprep.mubr.bf16.mxu0 0
        %7138 = vmatmul.mubr.bf16.gmra.mrb[0].mxu0 %v7029
        %v7139 = vpop.f32.mrb[0].mxu0
        %v7140 = vadd.f32 %v7039, %v7139
        %v7141 = vpop.f32.mrb[0].mxu0
        %v7142 = vpop.f32.mrb[0].mxu0
        %v7143 = vadd.f32 %v7039, %v7142
        %v7144 = vpop.f32.mrb[0].mxu0
        %7145 = vmatprep.mubr.bf16.mxu0 0
        %7146 = vmatmul.mubr.bf16.gmra.mrb[0].mxu0 %v7030
        %v7147 = vpop.f32.mrb[0].mxu0
        %v7148 = vadd.f32 %v7039, %v7147
        %v7149 = vpop.f32.mrb[0].mxu0
        %v7150 = vpop.f32.mrb[0].mxu0
        %v7151 = vadd.f32 %v7039, %v7150
        %v7152 = vpop.f32.mrb[0].mxu0
        %7153 = vmatprep.mubr.bf16.mxu0 0
        %7154 = vmatmul.mubr.bf16.gmra.mrb[0].mxu0 %v7031
        %v7155 = vpop.f32.mrb[0].mxu0
        %v7156 = vadd.f32 %v7039, %v7155
        %v7157 = vpop.f32.mrb[0].mxu0
        %v7158 = vpop.f32.mrb[0].mxu0
        %v7159 = vadd.f32 %v7039, %v7158
        %v7160 = vpop.f32.mrb[0].mxu0
        %7161 = vmatprep.mubr.bf16.mxu0 0
        %7162 = vmatmul.mubr.bf16.gmra.mrb[0].mxu0 %v7032
        %v7163 = vpop.f32.mrb[0].mxu0
        %v7164 = vadd.f32 %v7039, %v7163
        %v7165 = vpop.f32.mrb[0].mxu0
        %v7166 = vpop.f32.mrb[0].mxu0
        %v7167 = vadd.f32 %v7039, %v7166
        %v7168 = vpop.f32.mrb[0].mxu0
        %7169 = vmatprep.mubr.bf16.mxu0 0
        %7170 = vmatmul.mubr.bf16.gmra.mrb[0].mxu0 %v7033
        %v7171 = vpop.f32.mrb[0].mxu0
        %v7172 = vadd.f32 %v7039, %v7171
        %v7173 = vpop.f32.mrb[0].mxu0
        %v7174 = vpop.f32.mrb[0].mxu0
        %v7175 = vadd.f32 %v7039, %v7174
        %v7176 = vpop.f32.mrb[0].mxu0
        %7177 = vmatprep.mubr.bf16.mxu0 0
        %7178 = vmatmul.mubr.bf16.gmra.mrb[0].mxu0 %v7034
        %v7179 = vpop.f32.mrb[0].mxu0
        %v7180 = vadd.f32 %v7039, %v7179
        %v7181 = vpop.f32.mrb[0].mxu0
        %v7182 = vpop.f32.mrb[0].mxu0
        %v7183 = vadd.f32 %v7039, %v7182
        %v7184 = vpop.f32.mrb[0].mxu0
        %7185 = vdwg.mxu0
        %v7186 = vmax.f32 %v7124, 0.0
        %v7187 = vmax.f32 %v7127, 0.0
        %v7188 = vmax.f32 %v7132, 0.0
        %v7189 = vmax.f32 %v7135, 0.0
        %v7190 = vmax.f32 %v7140, 0.0
        %v7191 = vmax.f32 %v7143, 0.0
        %v7192 = vmax.f32 %v7148, 0.0
        %v7193 = vmax.f32 %v7151, 0.0
        %v7194 = vmax.f32 %v7156, 0.0
        %v7195 = vmax.f32 %v7159, 0.0
        %v7196 = vmax.f32 %v7164, 0.0
        %v7197 = vmax.f32 %v7167, 0.0
        %v7198 = vmax.f32 %v7172, 0.0
        %v7199 = vmax.f32 %v7175, 0.0
        %v7200 = vmax.f32 %v7180, 0.0
        %v7201 = vmax.f32 %v7183, 0.0
        %v7202 = vpack.c.bf16 %v7187, %v7186
        %v7203 = vpack.c.bf16 %v7189, %v7188
        %v7204 = vpack.c.bf16 %v7191, %v7190
        %v7205 = vpack.c.bf16 %v7193, %v7192
        %v7206 = vpack.c.bf16 %v7195, %v7194
        %v7207 = vpack.c.bf16 %v7197, %v7196
        %v7208 = vpack.c.bf16 %v7199, %v7198
        %v7209 = vpack.c.bf16 %v7201, %v7200
        %v7211 = vlaneseq
        %v7212 = vshrl.u32 %v7211, 7
        %v7213 = vsub.s32 0, %v7212
        %v7214 = vrot.slane %v6712, %v7213
        %v7232 = vunpack.c.l.b16 %v6696
        %v7233 = vunpack.c.l.b16 %v6697
        %v7234 = vunpack.c.l.b16 %v6698
        %v7235 = vunpack.c.l.b16 %v6699
        %v7236 = vunpack.c.l.b16 %v6700
        %v7237 = vunpack.c.l.b16 %v6701
        %v7238 = vunpack.c.l.b16 %v6702
        %v7239 = vunpack.c.l.b16 %v6703
        %v7240 = vunpack.c.l.b16 %v6704
        %v7241 = vunpack.c.l.b16 %v6705
        %v7242 = vunpack.c.l.b16 %v6706
        %v7243 = vunpack.c.l.b16 %v6707
        %v7244 = vunpack.c.l.b16 %v6708
        %v7245 = vunpack.c.l.b16 %v6709
        %v7246 = vunpack.c.l.b16 %v6710
        %v7247 = vunpack.c.l.b16 %v6711
        %v7248 = vpack.c.b16 %v7233, %v7232
        %v7249 = vpack.c.b16 %v7235, %v7234
        %v7250 = vpack.c.b16 %v7237, %v7236
        %v7251 = vpack.c.b16 %v7239, %v7238
        %v7252 = vpack.c.b16 %v7241, %v7240
        %v7253 = vpack.c.b16 %v7243, %v7242
        %v7254 = vpack.c.b16 %v7245, %v7244
        %v7255 = vpack.c.b16 %v7247, %v7246
        %7264 = vmatprep.subr.bf16.mxu0 0
        %7265 = vmatpush1.bf16.msra.mxu0 %v7248
        %7266 = vmatprep.subr.bf16.mxu0 0
        %7267 = vmatpush1.bf16.msra.mxu0 %v7249
        %7268 = vmatprep.subr.bf16.mxu0 0
        %7269 = vmatpush1.bf16.msra.mxu0 %v7250
        %7270 = vmatprep.subr.bf16.mxu0 0
        %7271 = vmatpush1.bf16.msra.mxu0 %v7251
        %7272 = vmatprep.subr.bf16.mxu0 0
        %7273 = vmatpush1.bf16.msra.mxu0 %v7252
        %7274 = vmatprep.subr.bf16.mxu0 0
        %7275 = vmatpush1.bf16.msra.mxu0 %v7253
        %7276 = vmatprep.subr.bf16.mxu0 0
        %7277 = vmatpush1.bf16.msra.mxu0 %v7254
        %7278 = vmatprep.subr.bf16.mxu0 0
        %7279 = vmatpush1.bf16.msra.mxu0 %v7255
        %7280 = vmatprep.subr.bf16.mxu0 0
        %7281 = vmatpush1.bf16.msra.mxu0 0
        %7282 = vmatprep.subr.bf16.mxu0 0
        %7283 = vmatpush1.bf16.msra.mxu0 0
        %7284 = vmatprep.subr.bf16.mxu0 0
        %7285 = vmatpush1.bf16.msra.mxu0 0
        %7286 = vmatprep.subr.bf16.mxu0 0
        %7287 = vmatpush1.bf16.msra.mxu0 0
        %7288 = vmatprep.subr.bf16.mxu0 0
        %7289 = vmatpush1.bf16.msra.mxu0 0
        %7290 = vmatprep.subr.bf16.mxu0 0
        %7291 = vmatpush1.bf16.msra.mxu0 0
        %7292 = vmatprep.subr.bf16.mxu0 0
        %7293 = vmatpush1.bf16.msra.mxu0 0
        %7294 = vmatprep.subr.bf16.mxu0 0
        %7295 = vmatpush1.bf16.msra.mxu0 0
        %7296 = vmatprep.mubr.bf16.mxu0 0
        %7297 = vmatmul.mubr.bf16.gmra.mrb[0].mxu0 %v7202
        %v7298 = vpop.f32.mrb[0].mxu0
        %v7299 = vadd.f32 %v7214, %v7298
        %v7300 = vpop.f32.mrb[0].mxu0
        %v7301 = vpop.f32.mrb[0].mxu0
        %v7302 = vadd.f32 %v7214, %v7301
        %v7303 = vpop.f32.mrb[0].mxu0
        %7304 = vmatprep.mubr.bf16.mxu0 0
        %7305 = vmatmul.mubr.bf16.gmra.mrb[0].mxu0 %v7203
        %v7306 = vpop.f32.mrb[0].mxu0
        %v7307 = vadd.f32 %v7214, %v7306
        %v7308 = vpop.f32.mrb[0].mxu0
        %v7309 = vpop.f32.mrb[0].mxu0
        %v7310 = vadd.f32 %v7214, %v7309
        %v7311 = vpop.f32.mrb[0].mxu0
        %7312 = vmatprep.mubr.bf16.mxu0 0
        %7313 = vmatmul.mubr.bf16.gmra.mrb[0].mxu0 %v7204
        %v7314 = vpop.f32.mrb[0].mxu0
        %v7315 = vadd.f32 %v7214, %v7314
        %v7316 = vpop.f32.mrb[0].mxu0
        %v7317 = vpop.f32.mrb[0].mxu0
        %v7318 = vadd.f32 %v7214, %v7317
        %v7319 = vpop.f32.mrb[0].mxu0
        %7320 = vmatprep.mubr.bf16.mxu0 0
        %7321 = vmatmul.mubr.bf16.gmra.mrb[0].mxu0 %v7205
        %v7322 = vpop.f32.mrb[0].mxu0
        %v7323 = vadd.f32 %v7214, %v7322
        %v7324 = vpop.f32.mrb[0].mxu0
        %v7325 = vpop.f32.mrb[0].mxu0
        %v7326 = vadd.f32 %v7214, %v7325
        %v7327 = vpop.f32.mrb[0].mxu0
        %7328 = vmatprep.mubr.bf16.mxu0 0
        %7329 = vmatmul.mubr.bf16.gmra.mrb[0].mxu0 %v7206
        %v7330 = vpop.f32.mrb[0].mxu0
        %v7331 = vadd.f32 %v7214, %v7330
        %v7332 = vpop.f32.mrb[0].mxu0
        %v7333 = vpop.f32.mrb[0].mxu0
        %v7334 = vadd.f32 %v7214, %v7333
        %v7335 = vpop.f32.mrb[0].mxu0
        %7336 = vmatprep.mubr.bf16.mxu0 0
        %7337 = vmatmul.mubr.bf16.gmra.mrb[0].mxu0 %v7207
        %v7338 = vpop.f32.mrb[0].mxu0
        %v7339 = vadd.f32 %v7214, %v7338
        %v7340 = vpop.f32.mrb[0].mxu0
        %v7341 = vpop.f32.mrb[0].mxu0
        %v7342 = vadd.f32 %v7214, %v7341
        %v7343 = vpop.f32.mrb[0].mxu0
        %7344 = vmatprep.mubr.bf16.mxu0 0
        %7345 = vmatmul.mubr.bf16.gmra.mrb[0].mxu0 %v7208
        %v7346 = vpop.f32.mrb[0].mxu0
        %v7347 = vadd.f32 %v7214, %v7346
        %v7348 = vpop.f32.mrb[0].mxu0
        %v7349 = vpop.f32.mrb[0].mxu0
        %v7350 = vadd.f32 %v7214, %v7349
        %v7351 = vpop.f32.mrb[0].mxu0
        %7352 = vmatprep.mubr.bf16.mxu0 0
        %7353 = vmatmul.mubr.bf16.gmra.mrb[0].mxu0 %v7209
        %v7354 = vpop.f32.mrb[0].mxu0
        %v7355 = vadd.f32 %v7214, %v7354
        %v7356 = vpop.f32.mrb[0].mxu0
        %v7357 = vpop.f32.mrb[0].mxu0
        %v7358 = vadd.f32 %v7214, %v7357
        %v7359 = vpop.f32.mrb[0].mxu0
        %7360 = vdwg.mxu0
        %v7361 = vmul.f32 %v7299, %v3267
        %v7362 = vmul.f32 %v7302, %v3272
        %v7363 = vmul.f32 %v7307, %v3277
        %v7364 = vmul.f32 %v7310, %v3282
        %v7365 = vmul.f32 %v7315, %v3287
        %v7366 = vmul.f32 %v7318, %v3292
        %v7367 = vmul.f32 %v7323, %v3297
        %v7368 = vmul.f32 %v7326, %v3302
        %v7369 = vmul.f32 %v7331, %v3307
        %v7370 = vmul.f32 %v7334, %v3312
        %v7371 = vmul.f32 %v7339, %v3317
        %v7372 = vmul.f32 %v7342, %v3322
        %v7373 = vmul.f32 %v7347, %v3327
        %v7374 = vmul.f32 %v7350, %v3332
        %v7375 = vmul.f32 %v7355, %v3337
        %v7376 = vmul.f32 %v7358, %v3342
        %v7377 = vrot.slane %v7361, 4
        %v7378 = vadd.f32 %v7361, %v7377
        %v7379 = vrot.slane %v7378, 2
        %v7380 = vadd.f32 %v7378, %v7379
        %v7381 = vrot.slane %v7380, 1
        %v7382 = vadd.f32 %v7380, %v7381
        %v7383 = vrot.slane %v7362, 4
        %v7384 = vadd.f32 %v7362, %v7383
        %v7385 = vrot.slane %v7384, 2
        %v7386 = vadd.f32 %v7384, %v7385
        %v7387 = vrot.slane %v7386, 1
        %v7388 = vadd.f32 %v7386, %v7387
        %v7389 = vrot.slane %v7363, 4
        %v7390 = vadd.f32 %v7363, %v7389
        %v7391 = vrot.slane %v7390, 2
        %v7392 = vadd.f32 %v7390, %v7391
        %v7393 = vrot.slane %v7392, 1
        %v7394 = vadd.f32 %v7392, %v7393
        %v7395 = vrot.slane %v7364, 4
        %v7396 = vadd.f32 %v7364, %v7395
        %v7397 = vrot.slane %v7396, 2
        %v7398 = vadd.f32 %v7396, %v7397
        %v7399 = vrot.slane %v7398, 1
        %v7400 = vadd.f32 %v7398, %v7399
        %v7401 = vrot.slane %v7365, 4
        %v7402 = vadd.f32 %v7365, %v7401
        %v7403 = vrot.slane %v7402, 2
        %v7404 = vadd.f32 %v7402, %v7403
        %v7405 = vrot.slane %v7404, 1
        %v7406 = vadd.f32 %v7404, %v7405
        %v7407 = vrot.slane %v7366, 4
        %v7408 = vadd.f32 %v7366, %v7407
        %v7409 = vrot.slane %v7408, 2
        %v7410 = vadd.f32 %v7408, %v7409
        %v7411 = vrot.slane %v7410, 1
        %v7412 = vadd.f32 %v7410, %v7411
        %v7413 = vrot.slane %v7367, 4
        %v7414 = vadd.f32 %v7367, %v7413
        %v7415 = vrot.slane %v7414, 2
        %v7416 = vadd.f32 %v7414, %v7415
        %v7417 = vrot.slane %v7416, 1
        %v7418 = vadd.f32 %v7416, %v7417
        %v7419 = vrot.slane %v7368, 4
        %v7420 = vadd.f32 %v7368, %v7419
        %v7421 = vrot.slane %v7420, 2
        %v7422 = vadd.f32 %v7420, %v7421
        %v7423 = vrot.slane %v7422, 1
        %v7424 = vadd.f32 %v7422, %v7423
        %v7425 = vrot.slane %v7369, 4
        %v7426 = vadd.f32 %v7369, %v7425
        %v7427 = vrot.slane %v7426, 2
        %v7428 = vadd.f32 %v7426, %v7427
        %v7429 = vrot.slane %v7428, 1
        %v7430 = vadd.f32 %v7428, %v7429
        %v7431 = vrot.slane %v7370, 4
        %v7432 = vadd.f32 %v7370, %v7431
        %v7433 = vrot.slane %v7432, 2
        %v7434 = vadd.f32 %v7432, %v7433
        %v7435 = vrot.slane %v7434, 1
        %v7436 = vadd.f32 %v7434, %v7435
        %v7437 = vrot.slane %v7371, 4
        %v7438 = vadd.f32 %v7371, %v7437
        %v7439 = vrot.slane %v7438, 2
        %v7440 = vadd.f32 %v7438, %v7439
        %v7441 = vrot.slane %v7440, 1
        %v7442 = vadd.f32 %v7440, %v7441
        %v7443 = vrot.slane %v7372, 4
        %v7444 = vadd.f32 %v7372, %v7443
        %v7445 = vrot.slane %v7444, 2
        %v7446 = vadd.f32 %v7444, %v7445
        %v7447 = vrot.slane %v7446, 1
        %v7448 = vadd.f32 %v7446, %v7447
        %v7449 = vrot.slane %v7373, 4
        %v7450 = vadd.f32 %v7373, %v7449
        %v7451 = vrot.slane %v7450, 2
        %v7452 = vadd.f32 %v7450, %v7451
        %v7453 = vrot.slane %v7452, 1
        %v7454 = vadd.f32 %v7452, %v7453
        %v7455 = vrot.slane %v7374, 4
        %v7456 = vadd.f32 %v7374, %v7455
        %v7457 = vrot.slane %v7456, 2
        %v7458 = vadd.f32 %v7456, %v7457
        %v7459 = vrot.slane %v7458, 1
        %v7460 = vadd.f32 %v7458, %v7459
        %v7461 = vrot.slane %v7375, 4
        %v7462 = vadd.f32 %v7375, %v7461
        %v7463 = vrot.slane %v7462, 2
        %v7464 = vadd.f32 %v7462, %v7463
        %v7465 = vrot.slane %v7464, 1
        %v7466 = vadd.f32 %v7464, %v7465
        %v7467 = vrot.slane %v7376, 4
        %v7468 = vadd.f32 %v7376, %v7467
        %v7469 = vrot.slane %v7468, 2
        %v7470 = vadd.f32 %v7468, %v7469
        %v7471 = vrot.slane %v7470, 1
        %v7472 = vadd.f32 %v7470, %v7471
        %v7473 = vmul.f32 %v7382, 0.033333335
        %v7474 = vmul.f32 %v7388, 0.033333335
        %v7475 = vmul.f32 %v7394, 0.033333335
        %v7476 = vmul.f32 %v7400, 0.033333335
        %v7477 = vmul.f32 %v7406, 0.033333335
        %v7478 = vmul.f32 %v7412, 0.033333335
        %v7479 = vmul.f32 %v7418, 0.033333335
        %v7480 = vmul.f32 %v7424, 0.033333335
        %v7481 = vmul.f32 %v7430, 0.033333335
        %v7482 = vmul.f32 %v7436, 0.033333335
        %v7483 = vmul.f32 %v7442, 0.033333335
        %v7484 = vmul.f32 %v7448, 0.033333335
        %v7485 = vmul.f32 %v7454, 0.033333335
        %v7486 = vmul.f32 %v7460, 0.033333335
        %v7487 = vmul.f32 %v7466, 0.033333335
        %v7488 = vmul.f32 %v7472, 0.033333335
        %v7505 = vsel %vm3488, %v7474, %v7473
        %v7506 = vsel %vm3490, %v7475, %v7505
        %v7507 = vsel %vm3492, %v7476, %v7506
        %v7508 = vsel %vm3494, %v7477, %v7507
        %v7509 = vsel %vm3496, %v7478, %v7508
        %v7510 = vsel %vm3498, %v7479, %v7509
        %v7511 = vsel %vm3500, %v7480, %v7510
        %v7512 = vsel %vm3488, %v7482, %v7481
        %v7513 = vsel %vm3490, %v7483, %v7512
        %v7514 = vsel %vm3492, %v7484, %v7513
        %v7515 = vsel %vm3494, %v7485, %v7514
        %v7516 = vsel %vm3496, %v7486, %v7515
        %v7517 = vsel %vm3498, %v7487, %v7516
        %v7518 = vsel %vm3500, %v7488, %v7517
        %v7521 = vadd.f32 %v6128, %v7511
        %v7522 = vadd.f32 %v6129, %v7518
        %7523 = vadd.xlane.f32.xlu0 %v7521
        %v7524 = vpop.xlane.xlu0 %7523
        %7525 = vadd.xlane.f32.xlu0 %v7522
        %v7526 = vpop.xlane.xlu0 %7525
        %v7527 = vmul.f32 %v7524, %v3517
        %v7528 = vmul.f32 %v7526, %v3517
        %v7529 = vsub.f32 %v7521, %v7527
        %v7530 = vsub.f32 %v7522, %v7528
        %v7531 = vmul.f32 %v7529, %v7529
        %v7532 = vmul.f32 %v7530, %v7530
        %7533 = vadd.xlane.f32.xlu0 %v7531
        %v7534 = vpop.xlane.xlu0 %7533
        %7535 = vadd.xlane.f32.xlu0 %v7532
        %v7536 = vpop.xlane.xlu0 %7535
        %v7537 = vmul.f32 %v7534, %v3528
        %v7538 = vmul.f32 %v7536, %v3528
        %v7539 = vadd.f32 %v7537, 1e-06
        %v7540 = vadd.f32 %v7538, 1e-06
        %v7541 = vrsqrt.pop %v7539
        %v7542 = vmul.f32 %v7539, %v7541
        %vm7543 = vcmp.eq.f32.partialorder %v7539, inf
        %v7544 = vsel %vm7543, %v7539, %v7542
        %vm7545 = vcmp.eq.f32.partialorder %v7539, 0.0
        %v7546 = vand.u32 %v7539, 2147483648
        %v7547 = vsel %vm7545, %v7546, %v7544
        %v7548 = vrsqrt.pop %v7540
        %v7549 = vmul.f32 %v7540, %v7548
        %vm7550 = vcmp.eq.f32.partialorder %v7540, inf
        %v7551 = vsel %vm7550, %v7540, %v7549
        %vm7552 = vcmp.eq.f32.partialorder %v7540, 0.0
        %v7553 = vand.u32 %v7540, 2147483648
        %v7554 = vsel %vm7552, %v7553, %v7551
        %v7555 = vadd.f32 %v7547, 1e-06
        %v7556 = vadd.f32 %v7554, 1e-06
        %v7557 = vrcp.pop %v7555
        %v7558 = vmul.f32 1.0, %v7557
        %v7559 = vrcp.pop %v7556
        %v7560 = vmul.f32 1.0, %v7559
        %v7562 = vlaneseq
        %v7563 = vshrl.u32 %v7562, 7
        %v7564 = vsub.s32 0, %v7563
        %v7565 = vrot.slane %v6713, %v7564
        %v7567 = vmul.f32 %v7565, %v7529
        %v7568 = vmul.f32 %v7565, %v7530
        %v7569 = vmul.f32 %v7567, %v7558
        %v7570 = vmul.f32 %v7568, %v7560
        %v7572 = vlaneseq
        %v7573 = vshrl.u32 %v7572, 7
        %v7574 = vsub.s32 0, %v7573
        %v7575 = vrot.slane %v6714, %v7574
        %v7577 = vadd.f32 %v7569, %v7575
        %v7578 = vadd.f32 %v7570, %v7575
        %v7579 = vpack.c.bf16 %v7578, %v7577
        %v7581 = vlaneseq
        %v7582 = vshrl.u32 %v7581, 7
        %v7583 = vsub.s32 0, %v7582
        %v7584 = vrot.slane %v6747, %v7583
        %v7585 = vlaneseq
        %v7586 = vshrl.u32 %v7585, 7
        %v7587 = vsub.s32 1, %v7586
        %v7588 = vrot.slane %v6747, %v7587
        %v7589 = vlaneseq
        %v7590 = vshrl.u32 %v7589, 7
        %v7591 = vsub.s32 2, %v7590
        %v7592 = vrot.slane %v6747, %v7591
        %v7593 = vlaneseq
        %v7594 = vshrl.u32 %v7593, 7
        %v7595 = vsub.s32 3, %v7594
        %v7596 = vrot.slane %v6747, %v7595
        %v7633 = vunpack.c.l.b16 %v6715
        %v7634 = vunpack.c.h.b16 %v6715
        %v7635 = vunpack.c.l.b16 %v6716
        %v7636 = vunpack.c.h.b16 %v6716
        %v7637 = vunpack.c.l.b16 %v6717
        %v7638 = vunpack.c.h.b16 %v6717
        %v7639 = vunpack.c.l.b16 %v6718
        %v7640 = vunpack.c.h.b16 %v6718
        %v7641 = vunpack.c.l.b16 %v6719
        %v7642 = vunpack.c.h.b16 %v6719
        %v7643 = vunpack.c.l.b16 %v6720
        %v7644 = vunpack.c.h.b16 %v6720
        %v7645 = vunpack.c.l.b16 %v6721
        %v7646 = vunpack.c.h.b16 %v6721
        %v7647 = vunpack.c.l.b16 %v6722
        %v7648 = vunpack.c.h.b16 %v6722
        %v7649 = vunpack.c.l.b16 %v6723
        %v7650 = vunpack.c.h.b16 %v6723
        %v7651 = vunpack.c.l.b16 %v6724
        %v7652 = vunpack.c.h.b16 %v6724
        %v7653 = vunpack.c.l.b16 %v6725
        %v7654 = vunpack.c.h.b16 %v6725
        %v7655 = vunpack.c.l.b16 %v6726
        %v7656 = vunpack.c.h.b16 %v6726
        %v7657 = vunpack.c.l.b16 %v6727
        %v7658 = vunpack.c.h.b16 %v6727
        %v7659 = vunpack.c.l.b16 %v6728
        %v7660 = vunpack.c.h.b16 %v6728
        %v7661 = vunpack.c.l.b16 %v6729
        %v7662 = vunpack.c.h.b16 %v6729
        %v7663 = vunpack.c.l.b16 %v6730
        %v7664 = vunpack.c.h.b16 %v6730
        %v7665 = vunpack.c.l.b16 %v6731
        %v7666 = vunpack.c.h.b16 %v6731
        %v7667 = vunpack.c.l.b16 %v6732
        %v7668 = vunpack.c.h.b16 %v6732
        %v7669 = vunpack.c.l.b16 %v6733
        %v7670 = vunpack.c.h.b16 %v6733
        %v7671 = vunpack.c.l.b16 %v6734
        %v7672 = vunpack.c.h.b16 %v6734
        %v7673 = vunpack.c.l.b16 %v6735
        %v7674 = vunpack.c.h.b16 %v6735
        %v7675 = vunpack.c.l.b16 %v6736
        %v7676 = vunpack.c.h.b16 %v6736
        %v7677 = vunpack.c.l.b16 %v6737
        %v7678 = vunpack.c.h.b16 %v6737
        %v7679 = vunpack.c.l.b16 %v6738
        %v7680 = vunpack.c.h.b16 %v6738
        %v7681 = vunpack.c.l.b16 %v6739
        %v7682 = vunpack.c.h.b16 %v6739
        %v7683 = vunpack.c.l.b16 %v6740
        %v7684 = vunpack.c.h.b16 %v6740
        %v7685 = vunpack.c.l.b16 %v6741
        %v7686 = vunpack.c.h.b16 %v6741
        %v7687 = vunpack.c.l.b16 %v6742
        %v7688 = vunpack.c.h.b16 %v6742
        %v7689 = vunpack.c.l.b16 %v6743
        %v7690 = vunpack.c.h.b16 %v6743
        %v7691 = vunpack.c.l.b16 %v6744
        %v7692 = vunpack.c.h.b16 %v6744
        %v7693 = vunpack.c.l.b16 %v6745
        %v7694 = vunpack.c.h.b16 %v6745
        %v7695 = vunpack.c.l.b16 %v6746
        %v7696 = vunpack.c.h.b16 %v6746
        %v7697 = vpack.c.b16 %v7637, %v7633
        %v7698 = vpack.c.b16 %v7638, %v7634
        %v7699 = vpack.c.b16 %v7639, %v7635
        %v7700 = vpack.c.b16 %v7640, %v7636
        %v7701 = vpack.c.b16 %v7645, %v7641
        %v7702 = vpack.c.b16 %v7646, %v7642
        %v7703 = vpack.c.b16 %v7647, %v7643
        %v7704 = vpack.c.b16 %v7648, %v7644
        %v7705 = vpack.c.b16 %v7653, %v7649
        %v7706 = vpack.c.b16 %v7654, %v7650
        %v7707 = vpack.c.b16 %v7655, %v7651
        %v7708 = vpack.c.b16 %v7656, %v7652
        %v7709 = vpack.c.b16 %v7661, %v7657
        %v7710 = vpack.c.b16 %v7662, %v7658
        %v7711 = vpack.c.b16 %v7663, %v7659
        %v7712 = vpack.c.b16 %v7664, %v7660
        %v7713 = vpack.c.b16 %v7669, %v7665
        %v7714 = vpack.c.b16 %v7670, %v7666
        %v7715 = vpack.c.b16 %v7671, %v7667
        %v7716 = vpack.c.b16 %v7672, %v7668
        %v7717 = vpack.c.b16 %v7677, %v7673
        %v7718 = vpack.c.b16 %v7678, %v7674
        %v7719 = vpack.c.b16 %v7679, %v7675
        %v7720 = vpack.c.b16 %v7680, %v7676
        %v7721 = vpack.c.b16 %v7685, %v7681
        %v7722 = vpack.c.b16 %v7686, %v7682
        %v7723 = vpack.c.b16 %v7687, %v7683
        %v7724 = vpack.c.b16 %v7688, %v7684
        %v7725 = vpack.c.b16 %v7693, %v7689
        %v7726 = vpack.c.b16 %v7694, %v7690
        %v7727 = vpack.c.b16 %v7695, %v7691
        %v7728 = vpack.c.b16 %v7696, %v7692
        %7761 = vmatprep.subr.bf16.mxu0 %v7698
        %7762 = vmatpush1.bf16.msra.mxu0 %v7697
        %7763 = vmatprep.subr.bf16.mxu0 %v7702
        %7764 = vmatpush1.bf16.msra.mxu0 %v7701
        %7765 = vmatprep.subr.bf16.mxu0 %v7706
        %7766 = vmatpush1.bf16.msra.mxu0 %v7705
        %7767 = vmatprep.subr.bf16.mxu0 %v7710
        %7768 = vmatpush1.bf16.msra.mxu0 %v7709
        %7769 = vmatprep.subr.bf16.mxu0 %v7714
        %7770 = vmatpush1.bf16.msra.mxu0 %v7713
        %7771 = vmatprep.subr.bf16.mxu0 %v7718
        %7772 = vmatpush1.bf16.msra.mxu0 %v7717
        %7773 = vmatprep.subr.bf16.mxu0 %v7722
        %7774 = vmatpush1.bf16.msra.mxu0 %v7721
        %7775 = vmatprep.subr.bf16.mxu0 %v7726
        %7776 = vmatpush1.bf16.msra.mxu0 %v7725
        %7777 = vmatprep.subr.bf16.mxu0 0
        %7778 = vmatpush1.bf16.msra.mxu0 0
        %7779 = vmatprep.subr.bf16.mxu0 0
        %7780 = vmatpush1.bf16.msra.mxu0 0
        %7781 = vmatprep.subr.bf16.mxu0 0
        %7782 = vmatpush1.bf16.msra.mxu0 0
        %7783 = vmatprep.subr.bf16.mxu0 0
        %7784 = vmatpush1.bf16.msra.mxu0 0
        %7785 = vmatprep.subr.bf16.mxu0 0
        %7786 = vmatpush1.bf16.msra.mxu0 0
        %7787 = vmatprep.subr.bf16.mxu0 0
        %7788 = vmatpush1.bf16.msra.mxu0 0
        %7789 = vmatprep.subr.bf16.mxu0 0
        %7790 = vmatpush1.bf16.msra.mxu0 0
        %7791 = vmatprep.subr.bf16.mxu0 0
        %7792 = vmatpush1.bf16.msra.mxu0 0
        %7793 = vmatprep.mubr.bf16.mxu0 0
        %7794 = vmatmul.mubr.bf16.gmra.mrb[0].mxu0 %v7579
        %v7795 = vpop.f32.mrb[0].mxu0
        %v7796 = vadd.f32 %v7584, %v7795
        %v7797 = vpop.f32.mrb[0].mxu0
        %v7798 = vadd.f32 %v7588, %v7797
        %v7799 = vpop.f32.mrb[0].mxu0
        %v7800 = vadd.f32 %v7584, %v7799
        %v7801 = vpop.f32.mrb[0].mxu0
        %v7802 = vadd.f32 %v7588, %v7801
        %7803 = vdwg.mxu0
        %7804 = vmatprep.subr.bf16.mxu0 %v7700
        %7805 = vmatpush1.bf16.msra.mxu0 %v7699
        %7806 = vmatprep.subr.bf16.mxu0 %v7704
        %7807 = vmatpush1.bf16.msra.mxu0 %v7703
        %7808 = vmatprep.subr.bf16.mxu0 %v7708
        %7809 = vmatpush1.bf16.msra.mxu0 %v7707
        %7810 = vmatprep.subr.bf16.mxu0 %v7712
        %7811 = vmatpush1.bf16.msra.mxu0 %v7711
        %7812 = vmatprep.subr.bf16.mxu0 %v7716
        %7813 = vmatpush1.bf16.msra.mxu0 %v7715
        %7814 = vmatprep.subr.bf16.mxu0 %v7720
        %7815 = vmatpush1.bf16.msra.mxu0 %v7719
        %7816 = vmatprep.subr.bf16.mxu0 %v7724
        %7817 = vmatpush1.bf16.msra.mxu0 %v7723
        %7818 = vmatprep.subr.bf16.mxu0 %v7728
        %7819 = vmatpush1.bf16.msra.mxu0 %v7727
        %7820 = vmatprep.subr.bf16.mxu0 0
        %7821 = vmatpush1.bf16.msra.mxu0 0
        %7822 = vmatprep.subr.bf16.mxu0 0
        %7823 = vmatpush1.bf16.msra.mxu0 0
        %7824 = vmatprep.subr.bf16.mxu0 0
        %7825 = vmatpush1.bf16.msra.mxu0 0
        %7826 = vmatprep.subr.bf16.mxu0 0
        %7827 = vmatpush1.bf16.msra.mxu0 0
        %7828 = vmatprep.subr.bf16.mxu0 0
        %7829 = vmatpush1.bf16.msra.mxu0 0
        %7830 = vmatprep.subr.bf16.mxu0 0
        %7831 = vmatpush1.bf16.msra.mxu0 0
        %7832 = vmatprep.subr.bf16.mxu0 0
        %7833 = vmatpush1.bf16.msra.mxu0 0
        %7834 = vmatprep.subr.bf16.mxu0 0
        %7835 = vmatpush1.bf16.msra.mxu0 0
        %7836 = vmatprep.mubr.bf16.mxu0 0
        %7837 = vmatmul.mubr.bf16.gmra.mrb[0].mxu0 %v7579
        %v7838 = vpop.f32.mrb[0].mxu0
        %v7839 = vadd.f32 %v7592, %v7838
        %v7840 = vpop.f32.mrb[0].mxu0
        %v7841 = vadd.f32 %v7596, %v7840
        %v7842 = vpop.f32.mrb[0].mxu0
        %v7843 = vadd.f32 %v7592, %v7842
        %v7844 = vpop.f32.mrb[0].mxu0
        %v7845 = vadd.f32 %v7596, %v7844
        %7846 = vdwg.mxu0
        %v7847 = vmax.f32 %v7796, 0.0
        %v7848 = vmax.f32 %v7798, 0.0
        %v7849 = vmax.f32 %v7839, 0.0
        %v7850 = vmax.f32 %v7841, 0.0
        %v7851 = vmax.f32 %v7800, 0.0
        %v7852 = vmax.f32 %v7802, 0.0
        %v7853 = vmax.f32 %v7843, 0.0
        %v7854 = vmax.f32 %v7845, 0.0
        %v7855 = vpack.c.bf16 %v7851, %v7847
        %v7856 = vpack.c.bf16 %v7852, %v7848
        %v7857 = vpack.c.bf16 %v7853, %v7849
        %v7858 = vpack.c.bf16 %v7854, %v7850
        %v7860 = vlaneseq
        %v7861 = vshrl.u32 %v7860, 7
        %v7862 = vsub.s32 0, %v7861
        %v7863 = vrot.slane %v6812, %v7862
        %v7929 = vunpack.c.l.b16 %v6748
        %v7930 = vunpack.c.l.b16 %v6749
        %v7931 = vunpack.c.l.b16 %v6750
        %v7932 = vunpack.c.l.b16 %v6751
        %v7933 = vunpack.c.l.b16 %v6752
        %v7934 = vunpack.c.l.b16 %v6753
        %v7935 = vunpack.c.l.b16 %v6754
        %v7936 = vunpack.c.l.b16 %v6755
        %v7937 = vunpack.c.l.b16 %v6756
        %v7938 = vunpack.c.l.b16 %v6757
        %v7939 = vunpack.c.l.b16 %v6758
        %v7940 = vunpack.c.l.b16 %v6759
        %v7941 = vunpack.c.l.b16 %v6760
        %v7942 = vunpack.c.l.b16 %v6761
        %v7943 = vunpack.c.l.b16 %v6762
        %v7944 = vunpack.c.l.b16 %v6763
        %v7945 = vunpack.c.l.b16 %v6764
        %v7946 = vunpack.c.l.b16 %v6765
        %v7947 = vunpack.c.l.b16 %v6766
        %v7948 = vunpack.c.l.b16 %v6767
        %v7949 = vunpack.c.l.b16 %v6768
        %v7950 = vunpack.c.l.b16 %v6769
        %v7951 = vunpack.c.l.b16 %v6770
        %v7952 = vunpack.c.l.b16 %v6771
        %v7953 = vunpack.c.l.b16 %v6772
        %v7954 = vunpack.c.l.b16 %v6773
        %v7955 = vunpack.c.l.b16 %v6774
        %v7956 = vunpack.c.l.b16 %v6775
        %v7957 = vunpack.c.l.b16 %v6776
        %v7958 = vunpack.c.l.b16 %v6777
        %v7959 = vunpack.c.l.b16 %v6778
        %v7960 = vunpack.c.l.b16 %v6779
        %v7961 = vunpack.c.l.b16 %v6780
        %v7962 = vunpack.c.l.b16 %v6781
        %v7963 = vunpack.c.l.b16 %v6782
        %v7964 = vunpack.c.l.b16 %v6783
        %v7965 = vunpack.c.l.b16 %v6784
        %v7966 = vunpack.c.l.b16 %v6785
        %v7967 = vunpack.c.l.b16 %v6786
        %v7968 = vunpack.c.l.b16 %v6787
        %v7969 = vunpack.c.l.b16 %v6788
        %v7970 = vunpack.c.l.b16 %v6789
        %v7971 = vunpack.c.l.b16 %v6790
        %v7972 = vunpack.c.l.b16 %v6791
        %v7973 = vunpack.c.l.b16 %v6792
        %v7974 = vunpack.c.l.b16 %v6793
        %v7975 = vunpack.c.l.b16 %v6794
        %v7976 = vunpack.c.l.b16 %v6795
        %v7977 = vunpack.c.l.b16 %v6796
        %v7978 = vunpack.c.l.b16 %v6797
        %v7979 = vunpack.c.l.b16 %v6798
        %v7980 = vunpack.c.l.b16 %v6799
        %v7981 = vunpack.c.l.b16 %v6800
        %v7982 = vunpack.c.l.b16 %v6801
        %v7983 = vunpack.c.l.b16 %v6802
        %v7984 = vunpack.c.l.b16 %v6803
        %v7985 = vunpack.c.l.b16 %v6804
        %v7986 = vunpack.c.l.b16 %v6805
        %v7987 = vunpack.c.l.b16 %v6806
        %v7988 = vunpack.c.l.b16 %v6807
        %v7989 = vunpack.c.l.b16 %v6808
        %v7990 = vunpack.c.l.b16 %v6809
        %v7991 = vunpack.c.l.b16 %v6810
        %v7992 = vunpack.c.l.b16 %v6811
        %v7993 = vpack.c.b16 %v7930, %v7929
        %v7994 = vpack.c.b16 %v7932, %v7931
        %v7995 = vpack.c.b16 %v7934, %v7933
        %v7996 = vpack.c.b16 %v7936, %v7935
        %v7997 = vpack.c.b16 %v7938, %v7937
        %v7998 = vpack.c.b16 %v7940, %v7939
        %v7999 = vpack.c.b16 %v7942, %v7941
        %v8000 = vpack.c.b16 %v7944, %v7943
        %v8001 = vpack.c.b16 %v7946, %v7945
        %v8002 = vpack.c.b16 %v7948, %v7947
        %v8003 = vpack.c.b16 %v7950, %v7949
        %v8004 = vpack.c.b16 %v7952, %v7951
        %v8005 = vpack.c.b16 %v7954, %v7953
        %v8006 = vpack.c.b16 %v7956, %v7955
        %v8007 = vpack.c.b16 %v7958, %v7957
        %v8008 = vpack.c.b16 %v7960, %v7959
        %v8009 = vpack.c.b16 %v7962, %v7961
        %v8010 = vpack.c.b16 %v7964, %v7963
        %v8011 = vpack.c.b16 %v7966, %v7965
        %v8012 = vpack.c.b16 %v7968, %v7967
        %v8013 = vpack.c.b16 %v7970, %v7969
        %v8014 = vpack.c.b16 %v7972, %v7971
        %v8015 = vpack.c.b16 %v7974, %v7973
        %v8016 = vpack.c.b16 %v7976, %v7975
        %v8017 = vpack.c.b16 %v7978, %v7977
        %v8018 = vpack.c.b16 %v7980, %v7979
        %v8019 = vpack.c.b16 %v7982, %v7981
        %v8020 = vpack.c.b16 %v7984, %v7983
        %v8021 = vpack.c.b16 %v7986, %v7985
        %v8022 = vpack.c.b16 %v7988, %v7987
        %v8023 = vpack.c.b16 %v7990, %v7989
        %v8024 = vpack.c.b16 %v7992, %v7991
        %8057 = vmatprep.subr.bf16.mxu0 0
        %8058 = vmatpush1.bf16.msra.mxu0 %v7993
        %8059 = vmatprep.subr.bf16.mxu0 0
        %8060 = vmatpush1.bf16.msra.mxu0 %v7994
        %8061 = vmatprep.subr.bf16.mxu0 0
        %8062 = vmatpush1.bf16.msra.mxu0 %v7995
        %8063 = vmatprep.subr.bf16.mxu0 0
        %8064 = vmatpush1.bf16.msra.mxu0 %v7996
        %8065 = vmatprep.subr.bf16.mxu0 0
        %8066 = vmatpush1.bf16.msra.mxu0 %v7997
        %8067 = vmatprep.subr.bf16.mxu0 0
        %8068 = vmatpush1.bf16.msra.mxu0 %v7998
        %8069 = vmatprep.subr.bf16.mxu0 0
        %8070 = vmatpush1.bf16.msra.mxu0 %v7999
        %8071 = vmatprep.subr.bf16.mxu0 0
        %8072 = vmatpush1.bf16.msra.mxu0 %v8000
        %8073 = vmatprep.subr.bf16.mxu0 0
        %8074 = vmatpush1.bf16.msra.mxu0 %v8001
        %8075 = vmatprep.subr.bf16.mxu0 0
        %8076 = vmatpush1.bf16.msra.mxu0 %v8002
        %8077 = vmatprep.subr.bf16.mxu0 0
        %8078 = vmatpush1.bf16.msra.mxu0 %v8003
        %8079 = vmatprep.subr.bf16.mxu0 0
        %8080 = vmatpush1.bf16.msra.mxu0 %v8004
        %8081 = vmatprep.subr.bf16.mxu0 0
        %8082 = vmatpush1.bf16.msra.mxu0 %v8005
        %8083 = vmatprep.subr.bf16.mxu0 0
        %8084 = vmatpush1.bf16.msra.mxu0 %v8006
        %8085 = vmatprep.subr.bf16.mxu0 0
        %8086 = vmatpush1.bf16.msra.mxu0 %v8007
        %8087 = vmatprep.subr.bf16.mxu0 0
        %8088 = vmatpush1.bf16.msra.mxu0 %v8008
        %8089 = vmatprep.mubr.bf16.mxu0 %v7856
        %8090 = vmatmul.mubr.bf16.gmra.mrb[0].mxu0 %v7855
        %v8091 = vpop.f32.mrb[0].mxu0
        %v8092 = vadd.f32 %v7863, %v8091
        %v8093 = vpop.f32.mrb[0].mxu0
        %v8094 = vpop.f32.mrb[0].mxu0
        %v8095 = vadd.f32 %v7863, %v8094
        %v8096 = vpop.f32.mrb[0].mxu0
        %8097 = vdwg.mxu0
        %8098 = vmatprep.subr.bf16.mxu0 0
        %8099 = vmatpush1.bf16.msra.mxu0 %v8009
        %8100 = vmatprep.subr.bf16.mxu0 0
        %8101 = vmatpush1.bf16.msra.mxu0 %v8010
        %8102 = vmatprep.subr.bf16.mxu0 0
        %8103 = vmatpush1.bf16.msra.mxu0 %v8011
        %8104 = vmatprep.subr.bf16.mxu0 0
        %8105 = vmatpush1.bf16.msra.mxu0 %v8012
        %8106 = vmatprep.subr.bf16.mxu0 0
        %8107 = vmatpush1.bf16.msra.mxu0 %v8013
        %8108 = vmatprep.subr.bf16.mxu0 0
        %8109 = vmatpush1.bf16.msra.mxu0 %v8014
        %8110 = vmatprep.subr.bf16.mxu0 0
        %8111 = vmatpush1.bf16.msra.mxu0 %v8015
        %8112 = vmatprep.subr.bf16.mxu0 0
        %8113 = vmatpush1.bf16.msra.mxu0 %v8016
        %8114 = vmatprep.subr.bf16.mxu0 0
        %8115 = vmatpush1.bf16.msra.mxu0 %v8017
        %8116 = vmatprep.subr.bf16.mxu0 0
        %8117 = vmatpush1.bf16.msra.mxu0 %v8018
        %8118 = vmatprep.subr.bf16.mxu0 0
        %8119 = vmatpush1.bf16.msra.mxu0 %v8019
        %8120 = vmatprep.subr.bf16.mxu0 0
        %8121 = vmatpush1.bf16.msra.mxu0 %v8020
        %8122 = vmatprep.subr.bf16.mxu0 0
        %8123 = vmatpush1.bf16.msra.mxu0 %v8021
        %8124 = vmatprep.subr.bf16.mxu0 0
        %8125 = vmatpush1.bf16.msra.mxu0 %v8022
        %8126 = vmatprep.subr.bf16.mxu0 0
        %8127 = vmatpush1.bf16.msra.mxu0 %v8023
        %8128 = vmatprep.subr.bf16.mxu0 0
        %8129 = vmatpush1.bf16.msra.mxu0 %v8024
        %8130 = vmatprep.mubr.bf16.mxu0 %v7858
        %8131 = vmatmul.mubr.bf16.gmra.mrb[0].mxu0 %v7857
        %v8132 = vpop.f32.mrb[0].mxu0
        %v8133 = vadd.f32 %v8092, %v8132
        %v8134 = vpop.f32.mrb[0].mxu0
        %v8135 = vpop.f32.mrb[0].mxu0
        %v8136 = vadd.f32 %v8095, %v8135
        %v8137 = vpop.f32.mrb[0].mxu0
        %8138 = vdwg.mxu0
        %v8139 = vadd.f32 %v7577, %v8133
        %v8140 = vadd.f32 %v7578, %v8136
        %8141 = vadd.xlane.f32.xlu0 %v8139
        %v8142 = vpop.xlane.xlu0 %8141
        %8143 = vadd.xlane.f32.xlu0 %v8140
        %v8144 = vpop.xlane.xlu0 %8143
        %v8145 = vmul.f32 %v8142, %v3517
        %v8146 = vmul.f32 %v8144, %v3517
        %v8147 = vsub.f32 %v8139, %v8145
        %v8148 = vsub.f32 %v8140, %v8146
        %v8149 = vmul.f32 %v8147, %v8147
        %v8150 = vmul.f32 %v8148, %v8148
        %8151 = vadd.xlane.f32.xlu0 %v8149
        %v8152 = vpop.xlane.xlu0 %8151
        %8153 = vadd.xlane.f32.xlu0 %v8150
        %v8154 = vpop.xlane.xlu0 %8153
        %v8155 = vmul.f32 %v8152, %v3528
        %v8156 = vmul.f32 %v8154, %v3528
        %v8157 = vadd.f32 %v8155, 1e-06
        %v8158 = vadd.f32 %v8156, 1e-06
        %v8159 = vrsqrt.pop %v8157
        %v8160 = vmul.f32 %v8157, %v8159
        %vm8161 = vcmp.eq.f32.partialorder %v8157, inf
        %v8162 = vsel %vm8161, %v8157, %v8160
        %vm8163 = vcmp.eq.f32.partialorder %v8157, 0.0
        %v8164 = vand.u32 %v8157, 2147483648
        %v8165 = vsel %vm8163, %v8164, %v8162
        %v8166 = vrsqrt.pop %v8158
        %v8167 = vmul.f32 %v8158, %v8166
        %vm8168 = vcmp.eq.f32.partialorder %v8158, inf
        %v8169 = vsel %vm8168, %v8158, %v8167
        %vm8170 = vcmp.eq.f32.partialorder %v8158, 0.0
        %v8171 = vand.u32 %v8158, 2147483648
        %v8172 = vsel %vm8170, %v8171, %v8169
        %v8173 = vadd.f32 %v8165, 1e-06
        %v8174 = vadd.f32 %v8172, 1e-06
        %v8175 = vrcp.pop %v8173
        %v8176 = vmul.f32 1.0, %v8175
        %v8177 = vrcp.pop %v8174
        %v8178 = vmul.f32 1.0, %v8177
        %v8180 = vlaneseq
        %v8181 = vshrl.u32 %v8180, 7
        %v8182 = vsub.s32 0, %v8181
        %v8183 = vrot.slane %v6813, %v8182
        %v8185 = vmul.f32 %v8183, %v8147
        %v8186 = vmul.f32 %v8183, %v8148
        %v8187 = vmul.f32 %v8185, %v8176
        %v8188 = vmul.f32 %v8186, %v8178
        %v8190 = vlaneseq
        %v8191 = vshrl.u32 %v8190, 7
        %v8192 = vsub.s32 0, %v8191
        %v8193 = vrot.slane %v6814, %v8192
        %v8195 = vadd.f32 %v8187, %v8193
        %v8196 = vadd.f32 %v8188, %v8193
        %v8197 = vpack.c.bf16 %v8196, %v8195
        %s8198 = scalar_lea.vmem [#allocation28], 128
        %v8199 = vld [vmem:[%s8198] sm:$0xff]
        %v8200 = vld [vmem:[%s8198 + $0x8] sm:$0xff]
        %v8201 = vld [vmem:[%s8198 + $0x10] sm:$0xff]
        %v8202 = vld [vmem:[%s8198 + $0x18] sm:$0xff]
        %v8203 = vld [vmem:[%s8198 + $0x20] sm:$0xff]
        %v8204 = vld [vmem:[%s8198 + $0x28] sm:$0xff]
        %v8205 = vld [vmem:[%s8198 + $0x30] sm:$0xff]
        %v8206 = vld [vmem:[%s8198 + $0x38] sm:$0xff]
        %v8207 = vld [vmem:[%s8198 + $0x40] sm:$0xff]
        %v8208 = vld [vmem:[%s8198 + $0x48] sm:$0xff]
        %v8209 = vld [vmem:[%s8198 + $0x50] sm:$0xff]
        %v8210 = vld [vmem:[%s8198 + $0x58] sm:$0xff]
        %v8211 = vld [vmem:[%s8198 + $0x60] sm:$0xff]
        %v8212 = vld [vmem:[%s8198 + $0x68] sm:$0xff]
        %v8213 = vld [vmem:[%s8198 + $0x70] sm:$0xff]
        %v8214 = vld [vmem:[%s8198 + $0x78] sm:$0xff]
        %v8231 = vunpack.c.l.b16 %v8199
        %v8232 = vunpack.c.h.b16 %v8199
        %v8233 = vunpack.c.l.b16 %v8200
        %v8234 = vunpack.c.h.b16 %v8200
        %v8235 = vunpack.c.l.b16 %v8201
        %v8236 = vunpack.c.h.b16 %v8201
        %v8237 = vunpack.c.l.b16 %v8202
        %v8238 = vunpack.c.h.b16 %v8202
        %v8239 = vunpack.c.l.b16 %v8203
        %v8240 = vunpack.c.h.b16 %v8203
        %v8241 = vunpack.c.l.b16 %v8204
        %v8242 = vunpack.c.h.b16 %v8204
        %v8243 = vunpack.c.l.b16 %v8205
        %v8244 = vunpack.c.h.b16 %v8205
        %v8245 = vunpack.c.l.b16 %v8206
        %v8246 = vunpack.c.h.b16 %v8206
        %v8247 = vunpack.c.l.b16 %v8207
        %v8248 = vunpack.c.h.b16 %v8207
        %v8249 = vunpack.c.l.b16 %v8208
        %v8250 = vunpack.c.h.b16 %v8208
        %v8251 = vunpack.c.l.b16 %v8209
        %v8252 = vunpack.c.h.b16 %v8209
        %v8253 = vunpack.c.l.b16 %v8210
        %v8254 = vunpack.c.h.b16 %v8210
        %v8255 = vunpack.c.l.b16 %v8211
        %v8256 = vunpack.c.h.b16 %v8211
        %v8257 = vunpack.c.l.b16 %v8212
        %v8258 = vunpack.c.h.b16 %v8212
        %v8259 = vunpack.c.l.b16 %v8213
        %v8260 = vunpack.c.h.b16 %v8213
        %v8261 = vunpack.c.l.b16 %v8214
        %v8262 = vunpack.c.h.b16 %v8214
        %v8263 = vpack.c.b16 %v8233, %v8231
        %v8264 = vpack.c.b16 %v8234, %v8232
        %v8265 = vpack.c.b16 %v8237, %v8235
        %v8266 = vpack.c.b16 %v8238, %v8236
        %v8267 = vpack.c.b16 %v8241, %v8239
        %v8268 = vpack.c.b16 %v8242, %v8240
        %v8269 = vpack.c.b16 %v8245, %v8243
        %v8270 = vpack.c.b16 %v8246, %v8244
        %v8271 = vpack.c.b16 %v8249, %v8247
        %v8272 = vpack.c.b16 %v8250, %v8248
        %v8273 = vpack.c.b16 %v8253, %v8251
        %v8274 = vpack.c.b16 %v8254, %v8252
        %v8275 = vpack.c.b16 %v8257, %v8255
        %v8276 = vpack.c.b16 %v8258, %v8256
        %v8277 = vpack.c.b16 %v8261, %v8259
        %v8278 = vpack.c.b16 %v8262, %v8260
        %8295 = vmatprep.subr.bf16.mxu0 %v8264
        %8296 = vmatpush1.bf16.msra.mxu0 %v8263
        %8297 = vmatprep.subr.bf16.mxu0 %v8266
        %8298 = vmatpush1.bf16.msra.mxu0 %v8265
        %8299 = vmatprep.subr.bf16.mxu0 %v8268
        %8300 = vmatpush1.bf16.msra.mxu0 %v8267
        %8301 = vmatprep.subr.bf16.mxu0 %v8270
        %8302 = vmatpush1.bf16.msra.mxu0 %v8269
        %8303 = vmatprep.subr.bf16.mxu0 %v8272
        %8304 = vmatpush1.bf16.msra.mxu0 %v8271
        %8305 = vmatprep.subr.bf16.mxu0 %v8274
        %8306 = vmatpush1.bf16.msra.mxu0 %v8273
        %8307 = vmatprep.subr.bf16.mxu0 %v8276
        %8308 = vmatpush1.bf16.msra.mxu0 %v8275
        %8309 = vmatprep.subr.bf16.mxu0 %v8278
        %8310 = vmatpush1.bf16.msra.mxu0 %v8277
        %8311 = vmatprep.subr.bf16.mxu0 0
        %8312 = vmatpush1.bf16.msra.mxu0 0
        %8313 = vmatprep.subr.bf16.mxu0 0
        %8314 = vmatpush1.bf16.msra.mxu0 0
        %8315 = vmatprep.subr.bf16.mxu0 0
        %8316 = vmatpush1.bf16.msra.mxu0 0
        %8317 = vmatprep.subr.bf16.mxu0 0
        %8318 = vmatpush1.bf16.msra.mxu0 0
        %8319 = vmatprep.subr.bf16.mxu0 0
        %8320 = vmatpush1.bf16.msra.mxu0 0
        %8321 = vmatprep.subr.bf16.mxu0 0
        %8322 = vmatpush1.bf16.msra.mxu0 0
        %8323 = vmatprep.subr.bf16.mxu0 0
        %8324 = vmatpush1.bf16.msra.mxu0 0
        %8325 = vmatprep.subr.bf16.mxu0 0
        %8326 = vmatpush1.bf16.msra.mxu0 0
        %8327 = vmatprep.mubr.bf16.mxu0 0
        %8328 = vmatmul.mubr.bf16.gmra.mrb[0].mxu0 %v8197
        %v8329 = vpop.f32.mrb[0].mxu0
        %v8330 = vadd.f32 0.0, %v8329
        %v8331 = vpop.f32.mrb[0].mxu0
        %v8332 = vadd.f32 0.0, %v8331
        %v8333 = vpop.f32.mrb[0].mxu0
        %v8334 = vadd.f32 0.0, %v8333
        %v8335 = vpop.f32.mrb[0].mxu0
        %v8336 = vadd.f32 0.0, %v8335
        %8337 = vdwg.mxu0
        %s8338 = scalar_lea.vmem [#allocation32], 1
        %v8339 = vld [vmem:[%s8338] sm:$0x1]
        %v8341 = vlaneseq
        %v8342 = vshrl.u32 %v8341, 7
        %v8343 = vsub.s32 0, %v8342
        %v8344 = vrot.slane %v8339, %v8343
        %v8346 = vadd.f32 %v8330, %v8344
        %v8347 = vadd.f32 %v8334, %v8344
        %v8348 = vadd.f32 %v8332, %v6263
        %v8349 = vadd.f32 %v8336, %v6267
        %s8350 = scalar_lea.vmem [#allocation29], 64
        %v8351 = vld [vmem:[%s8350] sm:$0xf]
        %v8352 = vld [vmem:[%s8350 + $0x4] sm:$0xf]
        %v8353 = vld [vmem:[%s8350 + $0x8] sm:$0xf]
        %v8354 = vld [vmem:[%s8350 + $0xc] sm:$0xf]
        %v8355 = vld [vmem:[%s8350 + $0x10] sm:$0xf]
        %v8356 = vld [vmem:[%s8350 + $0x14] sm:$0xf]
        %v8357 = vld [vmem:[%s8350 + $0x18] sm:$0xf]
        %v8358 = vld [vmem:[%s8350 + $0x1c] sm:$0xf]
        %v8359 = vld [vmem:[%s8350 + $0x20] sm:$0xf]
        %v8360 = vld [vmem:[%s8350 + $0x24] sm:$0xf]
        %v8361 = vld [vmem:[%s8350 + $0x28] sm:$0xf]
        %v8362 = vld [vmem:[%s8350 + $0x2c] sm:$0xf]
        %v8363 = vld [vmem:[%s8350 + $0x30] sm:$0xf]
        %v8364 = vld [vmem:[%s8350 + $0x34] sm:$0xf]
        %v8365 = vld [vmem:[%s8350 + $0x38] sm:$0xf]
        %v8366 = vld [vmem:[%s8350 + $0x3c] sm:$0xf]
        %v8367 = vpack.c.bf16 %v8349, %v8348
        %8368 = vmatprep.subr.bf16.mxu0 0
        %8369 = vmatpush1.bf16.msra.mxu0 %v8367
        %8370 = vmatprep.subr.bf16.mxu0 0
        %8371 = vmatpush1.bf16.msra.mxu0 0
        %8372 = vmatprep.subr.bf16.mxu0 0
        %8373 = vmatpush1.bf16.msra.mxu0 0
        %8374 = vmatprep.subr.bf16.mxu0 0
        %8375 = vmatpush1.bf16.msra.mxu0 0
        %8376 = vmatprep.subr.bf16.mxu0 0
        %8377 = vmatpush1.bf16.msra.mxu0 0
        %8378 = vmatprep.subr.bf16.mxu0 0
        %8379 = vmatpush1.bf16.msra.mxu0 0
        %8380 = vmatprep.subr.bf16.mxu0 0
        %8381 = vmatpush1.bf16.msra.mxu0 0
        %8382 = vmatprep.subr.bf16.mxu0 0
        %8383 = vmatpush1.bf16.msra.mxu0 0
        %8384 = vmatprep.subr.bf16.mxu0 0
        %8385 = vmatpush1.bf16.msra.mxu0 0
        %8386 = vmatprep.subr.bf16.mxu0 0
        %8387 = vmatpush1.bf16.msra.mxu0 0
        %8388 = vmatprep.subr.bf16.mxu0 0
        %8389 = vmatpush1.bf16.msra.mxu0 0
        %8390 = vmatprep.subr.bf16.mxu0 0
        %8391 = vmatpush1.bf16.msra.mxu0 0
        %8392 = vmatprep.subr.bf16.mxu0 0
        %8393 = vmatpush1.bf16.msra.mxu0 0
        %8394 = vmatprep.subr.bf16.mxu0 0
        %8395 = vmatpush1.bf16.msra.mxu0 0
        %8396 = vmatprep.subr.bf16.mxu0 0
        %8397 = vmatpush1.bf16.msra.mxu0 0
        %8398 = vmatprep.subr.bf16.mxu0 0
        %8399 = vmatpush1.bf16.msra.mxu0 0
        %8400 = vmatprep.mubr.bf16.mxu0 0
        %8401 = vmatmul.mubr.bf16.gmra.mrb[0].mxu0 %v2317
        %v8402 = vpop.f32.mrb[0].mxu0
        %v8403 = vadd.f32 0.0, %v8402
        %v8404 = vpop.f32.mrb[0].mxu0
        %v8405 = vpop.f32.mrb[0].mxu0
        %v8406 = vadd.f32 0.0, %v8405
        %v8407 = vpop.f32.mrb[0].mxu0
        %8408 = vmatprep.mubr.bf16.mxu0 0
        %8409 = vmatmul.mubr.bf16.gmra.mrb[0].mxu0 %v2320
        %v8410 = vpop.f32.mrb[0].mxu0
        %v8411 = vadd.f32 0.0, %v8410
        %v8412 = vpop.f32.mrb[0].mxu0
        %v8413 = vpop.f32.mrb[0].mxu0
        %v8414 = vadd.f32 0.0, %v8413
        %v8415 = vpop.f32.mrb[0].mxu0
        %8416 = vmatprep.mubr.bf16.mxu0 0
        %8417 = vmatmul.mubr.bf16.gmra.mrb[0].mxu0 %v2323
        %v8418 = vpop.f32.mrb[0].mxu0
        %v8419 = vadd.f32 0.0, %v8418
        %v8420 = vpop.f32.mrb[0].mxu0
        %v8421 = vpop.f32.mrb[0].mxu0
        %v8422 = vadd.f32 0.0, %v8421
        %v8423 = vpop.f32.mrb[0].mxu0
        %8424 = vmatprep.mubr.bf16.mxu0 0
        %8425 = vmatmul.mubr.bf16.gmra.mrb[0].mxu0 %v2326
        %v8426 = vpop.f32.mrb[0].mxu0
        %v8427 = vadd.f32 0.0, %v8426
        %v8428 = vpop.f32.mrb[0].mxu0
        %v8429 = vpop.f32.mrb[0].mxu0
        %v8430 = vadd.f32 0.0, %v8429
        %v8431 = vpop.f32.mrb[0].mxu0
        %8432 = vmatprep.mubr.bf16.mxu0 0
        %8433 = vmatmul.mubr.bf16.gmra.mrb[0].mxu0 %v2329
        %v8434 = vpop.f32.mrb[0].mxu0
        %v8435 = vadd.f32 0.0, %v8434
        %v8436 = vpop.f32.mrb[0].mxu0
        %v8437 = vpop.f32.mrb[0].mxu0
        %v8438 = vadd.f32 0.0, %v8437
        %v8439 = vpop.f32.mrb[0].mxu0
        %8440 = vmatprep.mubr.bf16.mxu0 0
        %8441 = vmatmul.mubr.bf16.gmra.mrb[0].mxu0 %v2332
        %v8442 = vpop.f32.mrb[0].mxu0
        %v8443 = vadd.f32 0.0, %v8442
        %v8444 = vpop.f32.mrb[0].mxu0
        %v8445 = vpop.f32.mrb[0].mxu0
        %v8446 = vadd.f32 0.0, %v8445
        %v8447 = vpop.f32.mrb[0].mxu0
        %8448 = vmatprep.mubr.bf16.mxu0 0
        %8449 = vmatmul.mubr.bf16.gmra.mrb[0].mxu0 %v2335
        %v8450 = vpop.f32.mrb[0].mxu0
        %v8451 = vadd.f32 0.0, %v8450
        %v8452 = vpop.f32.mrb[0].mxu0
        %v8453 = vpop.f32.mrb[0].mxu0
        %v8454 = vadd.f32 0.0, %v8453
        %v8455 = vpop.f32.mrb[0].mxu0
        %8456 = vmatprep.mubr.bf16.mxu0 0
        %8457 = vmatmul.mubr.bf16.gmra.mrb[0].mxu0 %v2338
        %v8458 = vpop.f32.mrb[0].mxu0
        %v8459 = vadd.f32 0.0, %v8458
        %v8460 = vpop.f32.mrb[0].mxu0
        %v8461 = vpop.f32.mrb[0].mxu0
        %v8462 = vadd.f32 0.0, %v8461
        %v8463 = vpop.f32.mrb[0].mxu0
        %8464 = vdwg.mxu0
        %v8481 = vunpack.c.l.b16 %v8351
        %v8482 = vunpack.c.l.b16 %v8352
        %v8483 = vunpack.c.l.b16 %v8353
        %v8484 = vunpack.c.l.b16 %v8354
        %v8485 = vunpack.c.l.b16 %v8355
        %v8486 = vunpack.c.l.b16 %v8356
        %v8487 = vunpack.c.l.b16 %v8357
        %v8488 = vunpack.c.l.b16 %v8358
        %v8489 = vunpack.c.l.b16 %v8359
        %v8490 = vunpack.c.l.b16 %v8360
        %v8491 = vunpack.c.l.b16 %v8361
        %v8492 = vunpack.c.l.b16 %v8362
        %v8493 = vunpack.c.l.b16 %v8363
        %v8494 = vunpack.c.l.b16 %v8364
        %v8495 = vunpack.c.l.b16 %v8365
        %v8496 = vunpack.c.l.b16 %v8366
        %v8497 = vpack.c.b16 %v8482, %v8481
        %v8498 = vpack.c.b16 %v8484, %v8483
        %v8499 = vpack.c.b16 %v8486, %v8485
        %v8500 = vpack.c.b16 %v8488, %v8487
        %v8501 = vpack.c.b16 %v8490, %v8489
        %v8502 = vpack.c.b16 %v8492, %v8491
        %v8503 = vpack.c.b16 %v8494, %v8493
        %v8504 = vpack.c.b16 %v8496, %v8495
        %8513 = vmatprep.subr.bf16.mxu0 0
        %8514 = vmatpush1.bf16.msra.mxu0 %v8497
        %8515 = vmatprep.subr.bf16.mxu0 0
        %8516 = vmatpush1.bf16.msra.mxu0 %v8498
        %8517 = vmatprep.subr.bf16.mxu0 0
        %8518 = vmatpush1.bf16.msra.mxu0 %v8499
        %8519 = vmatprep.subr.bf16.mxu0 0
        %8520 = vmatpush1.bf16.msra.mxu0 %v8500
        %8521 = vmatprep.subr.bf16.mxu0 0
        %8522 = vmatpush1.bf16.msra.mxu0 %v8501
        %8523 = vmatprep.subr.bf16.mxu0 0
        %8524 = vmatpush1.bf16.msra.mxu0 %v8502
        %8525 = vmatprep.subr.bf16.mxu0 0
        %8526 = vmatpush1.bf16.msra.mxu0 %v8503
        %8527 = vmatprep.subr.bf16.mxu0 0
        %8528 = vmatpush1.bf16.msra.mxu0 %v8504
        %8529 = vmatprep.subr.bf16.mxu0 0
        %8530 = vmatpush1.bf16.msra.mxu0 0
        %8531 = vmatprep.subr.bf16.mxu0 0
        %8532 = vmatpush1.bf16.msra.mxu0 0
        %8533 = vmatprep.subr.bf16.mxu0 0
        %8534 = vmatpush1.bf16.msra.mxu0 0
        %8535 = vmatprep.subr.bf16.mxu0 0
        %8536 = vmatpush1.bf16.msra.mxu0 0
        %8537 = vmatprep.subr.bf16.mxu0 0
        %8538 = vmatpush1.bf16.msra.mxu0 0
        %8539 = vmatprep.subr.bf16.mxu0 0
        %8540 = vmatpush1.bf16.msra.mxu0 0
        %8541 = vmatprep.subr.bf16.mxu0 0
        %8542 = vmatpush1.bf16.msra.mxu0 0
        %8543 = vmatprep.subr.bf16.mxu0 0
        %8544 = vmatpush1.bf16.msra.mxu0 0
        %8545 = vmatprep.mubr.bf16.mxu0 0
        %8546 = vmatmul.mubr.bf16.gmra.mrb[0].mxu0 %v2035
        %v8547 = vpop.f32.mrb[0].mxu0
        %v8548 = vadd.f32 %v8403, %v8547
        %v8549 = vpop.f32.mrb[0].mxu0
        %v8550 = vpop.f32.mrb[0].mxu0
        %v8551 = vadd.f32 %v8406, %v8550
        %v8552 = vpop.f32.mrb[0].mxu0
        %8553 = vmatprep.mubr.bf16.mxu0 0
        %8554 = vmatmul.mubr.bf16.gmra.mrb[0].mxu0 %v2036
        %v8555 = vpop.f32.mrb[0].mxu0
        %v8556 = vadd.f32 %v8411, %v8555
        %v8557 = vpop.f32.mrb[0].mxu0
        %v8558 = vpop.f32.mrb[0].mxu0
        %v8559 = vadd.f32 %v8414, %v8558
        %v8560 = vpop.f32.mrb[0].mxu0
        %8561 = vmatprep.mubr.bf16.mxu0 0
        %8562 = vmatmul.mubr.bf16.gmra.mrb[0].mxu0 %v2037
        %v8563 = vpop.f32.mrb[0].mxu0
        %v8564 = vadd.f32 %v8419, %v8563
        %v8565 = vpop.f32.mrb[0].mxu0
        %v8566 = vpop.f32.mrb[0].mxu0
        %v8567 = vadd.f32 %v8422, %v8566
        %v8568 = vpop.f32.mrb[0].mxu0
        %8569 = vmatprep.mubr.bf16.mxu0 0
        %8570 = vmatmul.mubr.bf16.gmra.mrb[0].mxu0 %v2038
        %v8571 = vpop.f32.mrb[0].mxu0
        %v8572 = vadd.f32 %v8427, %v8571
        %v8573 = vpop.f32.mrb[0].mxu0
        %v8574 = vpop.f32.mrb[0].mxu0
        %v8575 = vadd.f32 %v8430, %v8574
        %v8576 = vpop.f32.mrb[0].mxu0
        %8577 = vmatprep.mubr.bf16.mxu0 0
        %8578 = vmatmul.mubr.bf16.gmra.mrb[0].mxu0 %v2039
        %v8579 = vpop.f32.mrb[0].mxu0
        %v8580 = vadd.f32 %v8435, %v8579
        %v8581 = vpop.f32.mrb[0].mxu0
        %v8582 = vpop.f32.mrb[0].mxu0
        %v8583 = vadd.f32 %v8438, %v8582
        %v8584 = vpop.f32.mrb[0].mxu0
        %8585 = vmatprep.mubr.bf16.mxu0 0
        %8586 = vmatmul.mubr.bf16.gmra.mrb[0].mxu0 %v2040
        %v8587 = vpop.f32.mrb[0].mxu0
        %v8588 = vadd.f32 %v8443, %v8587
        %v8589 = vpop.f32.mrb[0].mxu0
        %v8590 = vpop.f32.mrb[0].mxu0
        %v8591 = vadd.f32 %v8446, %v8590
        %v8592 = vpop.f32.mrb[0].mxu0
        %8593 = vmatprep.mubr.bf16.mxu0 0
        %8594 = vmatmul.mubr.bf16.gmra.mrb[0].mxu0 %v2041
        %v8595 = vpop.f32.mrb[0].mxu0
        %v8596 = vadd.f32 %v8451, %v8595
        %v8597 = vpop.f32.mrb[0].mxu0
        %v8598 = vpop.f32.mrb[0].mxu0
        %v8599 = vadd.f32 %v8454, %v8598
        %v8600 = vpop.f32.mrb[0].mxu0
        %8601 = vmatprep.mubr.bf16.mxu0 0
        %8602 = vmatmul.mubr.bf16.gmra.mrb[0].mxu0 %v2042
        %v8603 = vpop.f32.mrb[0].mxu0
        %v8604 = vadd.f32 %v8459, %v8603
        %v8605 = vpop.f32.mrb[0].mxu0
        %v8606 = vpop.f32.mrb[0].mxu0
        %v8607 = vadd.f32 %v8462, %v8606
        %v8608 = vpop.f32.mrb[0].mxu0
        %8609 = vdwg.mxu0
        %s8610 = scalar_lea.vmem [#allocation34], 64
        %v8611 = vld [vmem:[%s8610] sm:$0xf]
        %v8612 = vld [vmem:[%s8610 + $0x4] sm:$0xf]
        %v8613 = vld [vmem:[%s8610 + $0x8] sm:$0xf]
        %v8614 = vld [vmem:[%s8610 + $0xc] sm:$0xf]
        %v8615 = vld [vmem:[%s8610 + $0x10] sm:$0xf]
        %v8616 = vld [vmem:[%s8610 + $0x14] sm:$0xf]
        %v8617 = vld [vmem:[%s8610 + $0x18] sm:$0xf]
        %v8618 = vld [vmem:[%s8610 + $0x1c] sm:$0xf]
        %v8619 = vld [vmem:[%s8610 + $0x20] sm:$0xf]
        %v8620 = vld [vmem:[%s8610 + $0x24] sm:$0xf]
        %v8621 = vld [vmem:[%s8610 + $0x28] sm:$0xf]
        %v8622 = vld [vmem:[%s8610 + $0x2c] sm:$0xf]
        %v8623 = vld [vmem:[%s8610 + $0x30] sm:$0xf]
        %v8624 = vld [vmem:[%s8610 + $0x34] sm:$0xf]
        %v8625 = vld [vmem:[%s8610 + $0x38] sm:$0xf]
        %v8626 = vld [vmem:[%s8610 + $0x3c] sm:$0xf]
        %s8627 = scalar_lea.vmem [#allocation35], 1
        %v8628 = vld [vmem:[%s8627] sm:$0x1]
        %s8629 = scalar_lea.vmem [#allocation37], 64
        %v8630 = vld [vmem:[%s8629] sm:$0xf]
        %v8631 = vld [vmem:[%s8629 + $0x4] sm:$0xf]
        %v8632 = vld [vmem:[%s8629 + $0x8] sm:$0xf]
        %v8633 = vld [vmem:[%s8629 + $0xc] sm:$0xf]
        %v8634 = vld [vmem:[%s8629 + $0x10] sm:$0xf]
        %v8635 = vld [vmem:[%s8629 + $0x14] sm:$0xf]
        %v8636 = vld [vmem:[%s8629 + $0x18] sm:$0xf]
        %v8637 = vld [vmem:[%s8629 + $0x1c] sm:$0xf]
        %v8638 = vld [vmem:[%s8629 + $0x20] sm:$0xf]
        %v8639 = vld [vmem:[%s8629 + $0x24] sm:$0xf]
        %v8640 = vld [vmem:[%s8629 + $0x28] sm:$0xf]
        %v8641 = vld [vmem:[%s8629 + $0x2c] sm:$0xf]
        %v8642 = vld [vmem:[%s8629 + $0x30] sm:$0xf]
        %v8643 = vld [vmem:[%s8629 + $0x34] sm:$0xf]
        %v8644 = vld [vmem:[%s8629 + $0x38] sm:$0xf]
        %v8645 = vld [vmem:[%s8629 + $0x3c] sm:$0xf]
        %s8646 = scalar_lea.vmem [#allocation38], 1
        %v8647 = vld [vmem:[%s8646] sm:$0x1]
        %s8648 = scalar_lea.vmem [#allocation40], 1
        %v8649 = vld [vmem:[%s8648] sm:$0x1]
        %s8650 = scalar_lea.vmem [#allocation41], 1
        %v8651 = vld [vmem:[%s8650] sm:$0x1]
        %s8652 = scalar_lea.vmem [#allocation43], 256
        %v8653 = vld [vmem:[%s8652] sm:$0xff]
        %v8654 = vld [vmem:[%s8652 + $0x8] sm:$0xff]
        %v8655 = vld [vmem:[%s8652 + $0x10] sm:$0xff]
        %v8656 = vld [vmem:[%s8652 + $0x18] sm:$0xff]
        %v8657 = vld [vmem:[%s8652 + $0x20] sm:$0xff]
        %v8658 = vld [vmem:[%s8652 + $0x28] sm:$0xff]
        %v8659 = vld [vmem:[%s8652 + $0x30] sm:$0xff]
        %v8660 = vld [vmem:[%s8652 + $0x38] sm:$0xff]
        %v8661 = vld [vmem:[%s8652 + $0x40] sm:$0xff]
        %v8662 = vld [vmem:[%s8652 + $0x48] sm:$0xff]
        %v8663 = vld [vmem:[%s8652 + $0x50] sm:$0xff]
        %v8664 = vld [vmem:[%s8652 + $0x58] sm:$0xff]
        %v8665 = vld [vmem:[%s8652 + $0x60] sm:$0xff]
        %v8666 = vld [vmem:[%s8652 + $0x68] sm:$0xff]
        %v8667 = vld [vmem:[%s8652 + $0x70] sm:$0xff]
        %v8668 = vld [vmem:[%s8652 + $0x78] sm:$0xff]
        %v8669 = vld [vmem:[%s8652 + $0x80] sm:$0xff]
        %v8670 = vld [vmem:[%s8652 + $0x88] sm:$0xff]
        %v8671 = vld [vmem:[%s8652 + $0x90] sm:$0xff]
        %v8672 = vld [vmem:[%s8652 + $0x98] sm:$0xff]
        %v8673 = vld [vmem:[%s8652 + $0xa0] sm:$0xff]
        %v8674 = vld [vmem:[%s8652 + $0xa8] sm:$0xff]
        %v8675 = vld [vmem:[%s8652 + $0xb0] sm:$0xff]
        %v8676 = vld [vmem:[%s8652 + $0xb8] sm:$0xff]
        %v8677 = vld [vmem:[%s8652 + $0xc0] sm:$0xff]
        %v8678 = vld [vmem:[%s8652 + $0xc8] sm:$0xff]
        %v8679 = vld [vmem:[%s8652 + $0xd0] sm:$0xff]
        %v8680 = vld [vmem:[%s8652 + $0xd8] sm:$0xff]
        %v8681 = vld [vmem:[%s8652 + $0xe0] sm:$0xff]
        %v8682 = vld [vmem:[%s8652 + $0xe8] sm:$0xff]
        %v8683 = vld [vmem:[%s8652 + $0xf0] sm:$0xff]
        %v8684 = vld [vmem:[%s8652 + $0xf8] sm:$0xff]
        %s8685 = scalar_lea.vmem [#allocation44], 4
        %v8686 = vld [vmem:[%s8685] sm:$0xf]
        %s8687 = scalar_lea.vmem [#allocation46], 256
        %v8688 = vld [vmem:[%s8687] sm:$0xf]
        %v8689 = vld [vmem:[%s8687 + $0x4] sm:$0xf]
        %v8690 = vld [vmem:[%s8687 + $0x8] sm:$0xf]
        %v8691 = vld [vmem:[%s8687 + $0xc] sm:$0xf]
        %v8692 = vld [vmem:[%s8687 + $0x10] sm:$0xf]
        %v8693 = vld [vmem:[%s8687 + $0x14] sm:$0xf]
        %v8694 = vld [vmem:[%s8687 + $0x18] sm:$0xf]
        %v8695 = vld [vmem:[%s8687 + $0x1c] sm:$0xf]
        %v8696 = vld [vmem:[%s8687 + $0x20] sm:$0xf]
        %v8697 = vld [vmem:[%s8687 + $0x24] sm:$0xf]
        %v8698 = vld [vmem:[%s8687 + $0x28] sm:$0xf]
        %v8699 = vld [vmem:[%s8687 + $0x2c] sm:$0xf]
        %v8700 = vld [vmem:[%s8687 + $0x30] sm:$0xf]
        %v8701 = vld [vmem:[%s8687 + $0x34] sm:$0xf]
        %v8702 = vld [vmem:[%s8687 + $0x38] sm:$0xf]
        %v8703 = vld [vmem:[%s8687 + $0x3c] sm:$0xf]
        %v8704 = vld [vmem:[%s8687 + $0x40] sm:$0xf]
        %v8705 = vld [vmem:[%s8687 + $0x44] sm:$0xf]
        %v8706 = vld [vmem:[%s8687 + $0x48] sm:$0xf]
        %v8707 = vld [vmem:[%s8687 + $0x4c] sm:$0xf]
        %v8708 = vld [vmem:[%s8687 + $0x50] sm:$0xf]
        %v8709 = vld [vmem:[%s8687 + $0x54] sm:$0xf]
        %v8710 = vld [vmem:[%s8687 + $0x58] sm:$0xf]
        %v8711 = vld [vmem:[%s8687 + $0x5c] sm:$0xf]
        %v8712 = vld [vmem:[%s8687 + $0x60] sm:$0xf]
        %v8713 = vld [vmem:[%s8687 + $0x64] sm:$0xf]
        %v8714 = vld [vmem:[%s8687 + $0x68] sm:$0xf]
        %v8715 = vld [vmem:[%s8687 + $0x6c] sm:$0xf]
        %v8716 = vld [vmem:[%s8687 + $0x70] sm:$0xf]
        %v8717 = vld [vmem:[%s8687 + $0x74] sm:$0xf]
        %v8718 = vld [vmem:[%s8687 + $0x78] sm:$0xf]
        %v8719 = vld [vmem:[%s8687 + $0x7c] sm:$0xf]
        %v8720 = vld [vmem:[%s8687 + $0x80] sm:$0xf]
        %v8721 = vld [vmem:[%s8687 + $0x84] sm:$0xf]
        %v8722 = vld [vmem:[%s8687 + $0x88] sm:$0xf]
        %v8723 = vld [vmem:[%s8687 + $0x8c] sm:$0xf]
        %v8724 = vld [vmem:[%s8687 + $0x90] sm:$0xf]
        %v8725 = vld [vmem:[%s8687 + $0x94] sm:$0xf]
        %v8726 = vld [vmem:[%s8687 + $0x98] sm:$0xf]
        %v8727 = vld [vmem:[%s8687 + $0x9c] sm:$0xf]
        %v8728 = vld [vmem:[%s8687 + $0xa0] sm:$0xf]
        %v8729 = vld [vmem:[%s8687 + $0xa4] sm:$0xf]
        %v8730 = vld [vmem:[%s8687 + $0xa8] sm:$0xf]
        %v8731 = vld [vmem:[%s8687 + $0xac] sm:$0xf]
        %v8732 = vld [vmem:[%s8687 + $0xb0] sm:$0xf]
        %v8733 = vld [vmem:[%s8687 + $0xb4] sm:$0xf]
        %v8734 = vld [vmem:[%s8687 + $0xb8] sm:$0xf]
        %v8735 = vld [vmem:[%s8687 + $0xbc] sm:$0xf]
        %v8736 = vld [vmem:[%s8687 + $0xc0] sm:$0xf]
        %v8737 = vld [vmem:[%s8687 + $0xc4] sm:$0xf]
        %v8738 = vld [vmem:[%s8687 + $0xc8] sm:$0xf]
        %v8739 = vld [vmem:[%s8687 + $0xcc] sm:$0xf]
        %v8740 = vld [vmem:[%s8687 + $0xd0] sm:$0xf]
        %v8741 = vld [vmem:[%s8687 + $0xd4] sm:$0xf]
        %v8742 = vld [vmem:[%s8687 + $0xd8] sm:$0xf]
        %v8743 = vld [vmem:[%s8687 + $0xdc] sm:$0xf]
        %v8744 = vld [vmem:[%s8687 + $0xe0] sm:$0xf]
        %v8745 = vld [vmem:[%s8687 + $0xe4] sm:$0xf]
        %v8746 = vld [vmem:[%s8687 + $0xe8] sm:$0xf]
        %v8747 = vld [vmem:[%s8687 + $0xec] sm:$0xf]
        %v8748 = vld [vmem:[%s8687 + $0xf0] sm:$0xf]
        %v8749 = vld [vmem:[%s8687 + $0xf4] sm:$0xf]
        %v8750 = vld [vmem:[%s8687 + $0xf8] sm:$0xf]
        %v8751 = vld [vmem:[%s8687 + $0xfc] sm:$0xf]
        %s8752 = scalar_lea.vmem %s75, 1
        %v8753 = vld [vmem:[%s8752] sm:$0x1]
        %s8754 = scalar_lea.vmem %s77, 1
        %v8755 = vld [vmem:[%s8754] sm:$0x1]
        %s8756 = scalar_lea.vmem %s79, 1
        %v8757 = vld [vmem:[%s8756] sm:$0x1]
        %v8760 = vcombine.high %v8346, %v8346
        %v8762 = vunpack.c.l.s4 1966171168
        %v8763 = vunpack.c.0.s8 %v8762
        %v8764 = vlaneseq
        %v8765 = vshrl.u32 %v8764, 7
        %v8766 = vsub.s32 %v8763, %v8765
        %v8767 = vrot.slane %v8346, %v8766
        %v8769 = vunpack.c.l.s4 1966171168
        %v8770 = vunpack.c.0.s8 %v8769
        %v8771 = vlaneseq
        %v8772 = vshrl.u32 %v8771, 7
        %v8773 = vsub.s32 %v8770, %v8772
        %v8774 = vrot.slane %v8760, %v8773
        %v8775 = vcombine.high %v8767, %v8767
        %v8776 = vcombine.high %v8774, %v8774
        %v8778 = vunpack.c.l.s4 1966171168
        %v8779 = vunpack.c.0.s8 %v8778
        %v8780 = vlaneseq
        %v8781 = vshrl.u32 %v8780, 7
        %v8782 = vsub.s32 %v8779, %v8781
        %v8783 = vrot.slane %v8767, %v8782
        %v8785 = vunpack.c.l.s4 1966171168
        %v8786 = vunpack.c.0.s8 %v8785
        %v8787 = vlaneseq
        %v8788 = vshrl.u32 %v8787, 7
        %v8789 = vsub.s32 %v8786, %v8788
        %v8790 = vrot.slane %v8774, %v8789
        %v8792 = vunpack.c.l.s4 1966171168
        %v8793 = vunpack.c.0.s8 %v8792
        %v8794 = vlaneseq
        %v8795 = vshrl.u32 %v8794, 7
        %v8796 = vsub.s32 %v8793, %v8795
        %v8797 = vrot.slane %v8775, %v8796
        %v8799 = vunpack.c.l.s4 1966171168
        %v8800 = vunpack.c.0.s8 %v8799
        %v8801 = vlaneseq
        %v8802 = vshrl.u32 %v8801, 7
        %v8803 = vsub.s32 %v8800, %v8802
        %v8804 = vrot.slane %v8776, %v8803
        %v8805 = vcombine.high %v8783, %v8783
        %v8806 = vcombine.high %v8790, %v8790
        %v8807 = vcombine.high %v8797, %v8797
        %v8808 = vcombine.high %v8804, %v8804
        %v8809 = vcombine.high %v8347, %v8347
        %v8811 = vunpack.c.l.s4 1966171168
        %v8812 = vunpack.c.0.s8 %v8811
        %v8813 = vlaneseq
        %v8814 = vshrl.u32 %v8813, 7
        %v8815 = vsub.s32 %v8812, %v8814
        %v8816 = vrot.slane %v8347, %v8815
        %v8818 = vunpack.c.l.s4 1966171168
        %v8819 = vunpack.c.0.s8 %v8818
        %v8820 = vlaneseq
        %v8821 = vshrl.u32 %v8820, 7
        %v8822 = vsub.s32 %v8819, %v8821
        %v8823 = vrot.slane %v8809, %v8822
        %v8824 = vcombine.high %v8816, %v8816
        %v8825 = vcombine.high %v8823, %v8823
        %v8827 = vunpack.c.l.s4 1966171168
        %v8828 = vunpack.c.0.s8 %v8827
        %v8829 = vlaneseq
        %v8830 = vshrl.u32 %v8829, 7
        %v8831 = vsub.s32 %v8828, %v8830
        %v8832 = vrot.slane %v8816, %v8831
        %v8834 = vunpack.c.l.s4 1966171168
        %v8835 = vunpack.c.0.s8 %v8834
        %v8836 = vlaneseq
        %v8837 = vshrl.u32 %v8836, 7
        %v8838 = vsub.s32 %v8835, %v8837
        %v8839 = vrot.slane %v8823, %v8838
        %v8841 = vunpack.c.l.s4 1966171168
        %v8842 = vunpack.c.0.s8 %v8841
        %v8843 = vlaneseq
        %v8844 = vshrl.u32 %v8843, 7
        %v8845 = vsub.s32 %v8842, %v8844
        %v8846 = vrot.slane %v8824, %v8845
        %v8848 = vunpack.c.l.s4 1966171168
        %v8849 = vunpack.c.0.s8 %v8848
        %v8850 = vlaneseq
        %v8851 = vshrl.u32 %v8850, 7
        %v8852 = vsub.s32 %v8849, %v8851
        %v8853 = vrot.slane %v8825, %v8852
        %v8854 = vcombine.high %v8832, %v8832
        %v8855 = vcombine.high %v8839, %v8839
        %v8856 = vcombine.high %v8846, %v8846
        %v8857 = vcombine.high %v8853, %v8853
        %v8858 = vlaneseq
        %v8859 = vshrl.u32 %v8858, 7
        %v8860 = vsub.s32 0, %v8859
        %v8861 = vrot.slane %v8783, %v8860
        %v8862 = vlaneseq
        %v8863 = vshrl.u32 %v8862, 7
        %v8864 = vsub.s32 0, %v8863
        %v8865 = vrot.slane %v8797, %v8864
        %v8866 = vlaneseq
        %v8867 = vshrl.u32 %v8866, 7
        %v8868 = vsub.s32 0, %v8867
        %v8869 = vrot.slane %v8805, %v8868
        %v8870 = vlaneseq
        %v8871 = vshrl.u32 %v8870, 7
        %v8872 = vsub.s32 0, %v8871
        %v8873 = vrot.slane %v8807, %v8872
        %v8874 = vlaneseq
        %v8875 = vshrl.u32 %v8874, 7
        %v8876 = vsub.s32 0, %v8875
        %v8877 = vrot.slane %v8790, %v8876
        %v8878 = vlaneseq
        %v8879 = vshrl.u32 %v8878, 7
        %v8880 = vsub.s32 0, %v8879
        %v8881 = vrot.slane %v8804, %v8880
        %v8882 = vlaneseq
        %v8883 = vshrl.u32 %v8882, 7
        %v8884 = vsub.s32 0, %v8883
        %v8885 = vrot.slane %v8806, %v8884
        %v8886 = vlaneseq
        %v8887 = vshrl.u32 %v8886, 7
        %v8888 = vsub.s32 0, %v8887
        %v8889 = vrot.slane %v8808, %v8888
        %v8890 = vlaneseq
        %v8891 = vshrl.u32 %v8890, 7
        %v8892 = vsub.s32 0, %v8891
        %v8893 = vrot.slane %v8832, %v8892
        %v8894 = vlaneseq
        %v8895 = vshrl.u32 %v8894, 7
        %v8896 = vsub.s32 0, %v8895
        %v8897 = vrot.slane %v8846, %v8896
        %v8898 = vlaneseq
        %v8899 = vshrl.u32 %v8898, 7
        %v8900 = vsub.s32 0, %v8899
        %v8901 = vrot.slane %v8854, %v8900
        %v8902 = vlaneseq
        %v8903 = vshrl.u32 %v8902, 7
        %v8904 = vsub.s32 0, %v8903
        %v8905 = vrot.slane %v8856, %v8904
        %v8906 = vlaneseq
        %v8907 = vshrl.u32 %v8906, 7
        %v8908 = vsub.s32 0, %v8907
        %v8909 = vrot.slane %v8839, %v8908
        %v8910 = vlaneseq
        %v8911 = vshrl.u32 %v8910, 7
        %v8912 = vsub.s32 0, %v8911
        %v8913 = vrot.slane %v8853, %v8912
        %v8914 = vlaneseq
        %v8915 = vshrl.u32 %v8914, 7
        %v8916 = vsub.s32 0, %v8915
        %v8917 = vrot.slane %v8855, %v8916
        %v8918 = vlaneseq
        %v8919 = vshrl.u32 %v8918, 7
        %v8920 = vsub.s32 0, %v8919
        %v8921 = vrot.slane %v8857, %v8920
        %v8938 = vadd.f32 %v8548, %v8861
        %v8939 = vadd.f32 %v8551, %v8865
        %v8940 = vadd.f32 %v8556, %v8869
        %v8941 = vadd.f32 %v8559, %v8873
        %v8942 = vadd.f32 %v8564, %v8877
        %v8943 = vadd.f32 %v8567, %v8881
        %v8944 = vadd.f32 %v8572, %v8885
        %v8945 = vadd.f32 %v8575, %v8889
        %v8946 = vadd.f32 %v8580, %v8893
        %v8947 = vadd.f32 %v8583, %v8897
        %v8948 = vadd.f32 %v8588, %v8901
        %v8949 = vadd.f32 %v8591, %v8905
        %v8950 = vadd.f32 %v8596, %v8909
        %v8951 = vadd.f32 %v8599, %v8913
        %v8952 = vadd.f32 %v8604, %v8917
        %v8953 = vadd.f32 %v8607, %v8921
        %v8954 = vmax.f32 %v8938, 0.0
        %v8955 = vmax.f32 %v8939, 0.0
        %v8956 = vmax.f32 %v8940, 0.0
        %v8957 = vmax.f32 %v8941, 0.0
        %v8958 = vmax.f32 %v8942, 0.0
        %v8959 = vmax.f32 %v8943, 0.0
        %v8960 = vmax.f32 %v8944, 0.0
        %v8961 = vmax.f32 %v8945, 0.0
        %v8962 = vmax.f32 %v8946, 0.0
        %v8963 = vmax.f32 %v8947, 0.0
        %v8964 = vmax.f32 %v8948, 0.0
        %v8965 = vmax.f32 %v8949, 0.0
        %v8966 = vmax.f32 %v8950, 0.0
        %v8967 = vmax.f32 %v8951, 0.0
        %v8968 = vmax.f32 %v8952, 0.0
        %v8969 = vmax.f32 %v8953, 0.0
        %v8970 = vpack.c.bf16 %v8955, %v8954
        %v8971 = vpack.c.bf16 %v8957, %v8956
        %v8972 = vpack.c.bf16 %v8959, %v8958
        %v8973 = vpack.c.bf16 %v8961, %v8960
        %v8974 = vpack.c.bf16 %v8963, %v8962
        %v8975 = vpack.c.bf16 %v8965, %v8964
        %v8976 = vpack.c.bf16 %v8967, %v8966
        %v8977 = vpack.c.bf16 %v8969, %v8968
        %v8979 = vlaneseq
        %v8980 = vshrl.u32 %v8979, 7
        %v8981 = vsub.s32 0, %v8980
        %v8982 = vrot.slane %v8628, %v8981
        %v9000 = vunpack.c.l.b16 %v8611
        %v9001 = vunpack.c.l.b16 %v8612
        %v9002 = vunpack.c.l.b16 %v8613
        %v9003 = vunpack.c.l.b16 %v8614
        %v9004 = vunpack.c.l.b16 %v8615
        %v9005 = vunpack.c.l.b16 %v8616
        %v9006 = vunpack.c.l.b16 %v8617
        %v9007 = vunpack.c.l.b16 %v8618
        %v9008 = vunpack.c.l.b16 %v8619
        %v9009 = vunpack.c.l.b16 %v8620
        %v9010 = vunpack.c.l.b16 %v8621
        %v9011 = vunpack.c.l.b16 %v8622
        %v9012 = vunpack.c.l.b16 %v8623
        %v9013 = vunpack.c.l.b16 %v8624
        %v9014 = vunpack.c.l.b16 %v8625
        %v9015 = vunpack.c.l.b16 %v8626
        %v9016 = vpack.c.b16 %v9001, %v9000
        %v9017 = vpack.c.b16 %v9003, %v9002
        %v9018 = vpack.c.b16 %v9005, %v9004
        %v9019 = vpack.c.b16 %v9007, %v9006
        %v9020 = vpack.c.b16 %v9009, %v9008
        %v9021 = vpack.c.b16 %v9011, %v9010
        %v9022 = vpack.c.b16 %v9013, %v9012
        %v9023 = vpack.c.b16 %v9015, %v9014
        %9032 = vmatprep.subr.bf16.mxu0 0
        %9033 = vmatpush1.bf16.msra.mxu0 %v9016
        %9034 = vmatprep.subr.bf16.mxu0 0
        %9035 = vmatpush1.bf16.msra.mxu0 %v9017
        %9036 = vmatprep.subr.bf16.mxu0 0
        %9037 = vmatpush1.bf16.msra.mxu0 %v9018
        %9038 = vmatprep.subr.bf16.mxu0 0
        %9039 = vmatpush1.bf16.msra.mxu0 %v9019
        %9040 = vmatprep.subr.bf16.mxu0 0
        %9041 = vmatpush1.bf16.msra.mxu0 %v9020
        %9042 = vmatprep.subr.bf16.mxu0 0
        %9043 = vmatpush1.bf16.msra.mxu0 %v9021
        %9044 = vmatprep.subr.bf16.mxu0 0
        %9045 = vmatpush1.bf16.msra.mxu0 %v9022
        %9046 = vmatprep.subr.bf16.mxu0 0
        %9047 = vmatpush1.bf16.msra.mxu0 %v9023
        %9048 = vmatprep.subr.bf16.mxu0 0
        %9049 = vmatpush1.bf16.msra.mxu0 0
        %9050 = vmatprep.subr.bf16.mxu0 0
        %9051 = vmatpush1.bf16.msra.mxu0 0
        %9052 = vmatprep.subr.bf16.mxu0 0
        %9053 = vmatpush1.bf16.msra.mxu0 0
        %9054 = vmatprep.subr.bf16.mxu0 0
        %9055 = vmatpush1.bf16.msra.mxu0 0
        %9056 = vmatprep.subr.bf16.mxu0 0
        %9057 = vmatpush1.bf16.msra.mxu0 0
        %9058 = vmatprep.subr.bf16.mxu0 0
        %9059 = vmatpush1.bf16.msra.mxu0 0
        %9060 = vmatprep.subr.bf16.mxu0 0
        %9061 = vmatpush1.bf16.msra.mxu0 0
        %9062 = vmatprep.subr.bf16.mxu0 0
        %9063 = vmatpush1.bf16.msra.mxu0 0
        %9064 = vmatprep.mubr.bf16.mxu0 0
        %9065 = vmatmul.mubr.bf16.gmra.mrb[0].mxu0 %v8970
        %v9066 = vpop.f32.mrb[0].mxu0
        %v9067 = vadd.f32 %v8982, %v9066
        %v9068 = vpop.f32.mrb[0].mxu0
        %v9069 = vpop.f32.mrb[0].mxu0
        %v9070 = vadd.f32 %v8982, %v9069
        %v9071 = vpop.f32.mrb[0].mxu0
        %9072 = vmatprep.mubr.bf16.mxu0 0
        %9073 = vmatmul.mubr.bf16.gmra.mrb[0].mxu0 %v8971
        %v9074 = vpop.f32.mrb[0].mxu0
        %v9075 = vadd.f32 %v8982, %v9074
        %v9076 = vpop.f32.mrb[0].mxu0
        %v9077 = vpop.f32.mrb[0].mxu0
        %v9078 = vadd.f32 %v8982, %v9077
        %v9079 = vpop.f32.mrb[0].mxu0
        %9080 = vmatprep.mubr.bf16.mxu0 0
        %9081 = vmatmul.mubr.bf16.gmra.mrb[0].mxu0 %v8972
        %v9082 = vpop.f32.mrb[0].mxu0
        %v9083 = vadd.f32 %v8982, %v9082
        %v9084 = vpop.f32.mrb[0].mxu0
        %v9085 = vpop.f32.mrb[0].mxu0
        %v9086 = vadd.f32 %v8982, %v9085
        %v9087 = vpop.f32.mrb[0].mxu0
        %9088 = vmatprep.mubr.bf16.mxu0 0
        %9089 = vmatmul.mubr.bf16.gmra.mrb[0].mxu0 %v8973
        %v9090 = vpop.f32.mrb[0].mxu0
        %v9091 = vadd.f32 %v8982, %v9090
        %v9092 = vpop.f32.mrb[0].mxu0
        %v9093 = vpop.f32.mrb[0].mxu0
        %v9094 = vadd.f32 %v8982, %v9093
        %v9095 = vpop.f32.mrb[0].mxu0
        %9096 = vmatprep.mubr.bf16.mxu0 0
        %9097 = vmatmul.mubr.bf16.gmra.mrb[0].mxu0 %v8974
        %v9098 = vpop.f32.mrb[0].mxu0
        %v9099 = vadd.f32 %v8982, %v9098
        %v9100 = vpop.f32.mrb[0].mxu0
        %v9101 = vpop.f32.mrb[0].mxu0
        %v9102 = vadd.f32 %v8982, %v9101
        %v9103 = vpop.f32.mrb[0].mxu0
        %9104 = vmatprep.mubr.bf16.mxu0 0
        %9105 = vmatmul.mubr.bf16.gmra.mrb[0].mxu0 %v8975
        %v9106 = vpop.f32.mrb[0].mxu0
        %v9107 = vadd.f32 %v8982, %v9106
        %v9108 = vpop.f32.mrb[0].mxu0
        %v9109 = vpop.f32.mrb[0].mxu0
        %v9110 = vadd.f32 %v8982, %v9109
        %v9111 = vpop.f32.mrb[0].mxu0
        %9112 = vmatprep.mubr.bf16.mxu0 0
        %9113 = vmatmul.mubr.bf16.gmra.mrb[0].mxu0 %v8976
        %v9114 = vpop.f32.mrb[0].mxu0
        %v9115 = vadd.f32 %v8982, %v9114
        %v9116 = vpop.f32.mrb[0].mxu0
        %v9117 = vpop.f32.mrb[0].mxu0
        %v9118 = vadd.f32 %v8982, %v9117
        %v9119 = vpop.f32.mrb[0].mxu0
        %9120 = vmatprep.mubr.bf16.mxu0 0
        %9121 = vmatmul.mubr.bf16.gmra.mrb[0].mxu0 %v8977
        %v9122 = vpop.f32.mrb[0].mxu0
        %v9123 = vadd.f32 %v8982, %v9122
        %v9124 = vpop.f32.mrb[0].mxu0
        %v9125 = vpop.f32.mrb[0].mxu0
        %v9126 = vadd.f32 %v8982, %v9125
        %v9127 = vpop.f32.mrb[0].mxu0
        %9128 = vdwg.mxu0
        %v9129 = vmax.f32 %v9067, 0.0
        %v9130 = vmax.f32 %v9070, 0.0
        %v9131 = vmax.f32 %v9075, 0.0
        %v9132 = vmax.f32 %v9078, 0.0
        %v9133 = vmax.f32 %v9083, 0.0
        %v9134 = vmax.f32 %v9086, 0.0
        %v9135 = vmax.f32 %v9091, 0.0
        %v9136 = vmax.f32 %v9094, 0.0
        %v9137 = vmax.f32 %v9099, 0.0
        %v9138 = vmax.f32 %v9102, 0.0
        %v9139 = vmax.f32 %v9107, 0.0
        %v9140 = vmax.f32 %v9110, 0.0
        %v9141 = vmax.f32 %v9115, 0.0
        %v9142 = vmax.f32 %v9118, 0.0
        %v9143 = vmax.f32 %v9123, 0.0
        %v9144 = vmax.f32 %v9126, 0.0
        %v9145 = vpack.c.bf16 %v9130, %v9129
        %v9146 = vpack.c.bf16 %v9132, %v9131
        %v9147 = vpack.c.bf16 %v9134, %v9133
        %v9148 = vpack.c.bf16 %v9136, %v9135
        %v9149 = vpack.c.bf16 %v9138, %v9137
        %v9150 = vpack.c.bf16 %v9140, %v9139
        %v9151 = vpack.c.bf16 %v9142, %v9141
        %v9152 = vpack.c.bf16 %v9144, %v9143
        %v9154 = vlaneseq
        %v9155 = vshrl.u32 %v9154, 7
        %v9156 = vsub.s32 0, %v9155
        %v9157 = vrot.slane %v8647, %v9156
        %v9175 = vunpack.c.l.b16 %v8630
        %v9176 = vunpack.c.l.b16 %v8631
        %v9177 = vunpack.c.l.b16 %v8632
        %v9178 = vunpack.c.l.b16 %v8633
        %v9179 = vunpack.c.l.b16 %v8634
        %v9180 = vunpack.c.l.b16 %v8635
        %v9181 = vunpack.c.l.b16 %v8636
        %v9182 = vunpack.c.l.b16 %v8637
        %v9183 = vunpack.c.l.b16 %v8638
        %v9184 = vunpack.c.l.b16 %v8639
        %v9185 = vunpack.c.l.b16 %v8640
        %v9186 = vunpack.c.l.b16 %v8641
        %v9187 = vunpack.c.l.b16 %v8642
        %v9188 = vunpack.c.l.b16 %v8643
        %v9189 = vunpack.c.l.b16 %v8644
        %v9190 = vunpack.c.l.b16 %v8645
        %v9191 = vpack.c.b16 %v9176, %v9175
        %v9192 = vpack.c.b16 %v9178, %v9177
        %v9193 = vpack.c.b16 %v9180, %v9179
        %v9194 = vpack.c.b16 %v9182, %v9181
        %v9195 = vpack.c.b16 %v9184, %v9183
        %v9196 = vpack.c.b16 %v9186, %v9185
        %v9197 = vpack.c.b16 %v9188, %v9187
        %v9198 = vpack.c.b16 %v9190, %v9189
        %9207 = vmatprep.subr.bf16.mxu0 0
        %9208 = vmatpush1.bf16.msra.mxu0 %v9191
        %9209 = vmatprep.subr.bf16.mxu0 0
        %9210 = vmatpush1.bf16.msra.mxu0 %v9192
        %9211 = vmatprep.subr.bf16.mxu0 0
        %9212 = vmatpush1.bf16.msra.mxu0 %v9193
        %9213 = vmatprep.subr.bf16.mxu0 0
        %9214 = vmatpush1.bf16.msra.mxu0 %v9194
        %9215 = vmatprep.subr.bf16.mxu0 0
        %9216 = vmatpush1.bf16.msra.mxu0 %v9195
        %9217 = vmatprep.subr.bf16.mxu0 0
        %9218 = vmatpush1.bf16.msra.mxu0 %v9196
        %9219 = vmatprep.subr.bf16.mxu0 0
        %9220 = vmatpush1.bf16.msra.mxu0 %v9197
        %9221 = vmatprep.subr.bf16.mxu0 0
        %9222 = vmatpush1.bf16.msra.mxu0 %v9198
        %9223 = vmatprep.subr.bf16.mxu0 0
        %9224 = vmatpush1.bf16.msra.mxu0 0
        %9225 = vmatprep.subr.bf16.mxu0 0
        %9226 = vmatpush1.bf16.msra.mxu0 0
        %9227 = vmatprep.subr.bf16.mxu0 0
        %9228 = vmatpush1.bf16.msra.mxu0 0
        %9229 = vmatprep.subr.bf16.mxu0 0
        %9230 = vmatpush1.bf16.msra.mxu0 0
        %9231 = vmatprep.subr.bf16.mxu0 0
        %9232 = vmatpush1.bf16.msra.mxu0 0
        %9233 = vmatprep.subr.bf16.mxu0 0
        %9234 = vmatpush1.bf16.msra.mxu0 0
        %9235 = vmatprep.subr.bf16.mxu0 0
        %9236 = vmatpush1.bf16.msra.mxu0 0
        %9237 = vmatprep.subr.bf16.mxu0 0
        %9238 = vmatpush1.bf16.msra.mxu0 0
        %9239 = vmatprep.mubr.bf16.mxu0 0
        %9240 = vmatmul.mubr.bf16.gmra.mrb[0].mxu0 %v9145
        %v9241 = vpop.f32.mrb[0].mxu0
        %v9242 = vadd.f32 %v9157, %v9241
        %v9243 = vpop.f32.mrb[0].mxu0
        %v9244 = vpop.f32.mrb[0].mxu0
        %v9245 = vadd.f32 %v9157, %v9244
        %v9246 = vpop.f32.mrb[0].mxu0
        %9247 = vmatprep.mubr.bf16.mxu0 0
        %9248 = vmatmul.mubr.bf16.gmra.mrb[0].mxu0 %v9146
        %v9249 = vpop.f32.mrb[0].mxu0
        %v9250 = vadd.f32 %v9157, %v9249
        %v9251 = vpop.f32.mrb[0].mxu0
        %v9252 = vpop.f32.mrb[0].mxu0
        %v9253 = vadd.f32 %v9157, %v9252
        %v9254 = vpop.f32.mrb[0].mxu0
        %9255 = vmatprep.mubr.bf16.mxu0 0
        %9256 = vmatmul.mubr.bf16.gmra.mrb[0].mxu0 %v9147
        %v9257 = vpop.f32.mrb[0].mxu0
        %v9258 = vadd.f32 %v9157, %v9257
        %v9259 = vpop.f32.mrb[0].mxu0
        %v9260 = vpop.f32.mrb[0].mxu0
        %v9261 = vadd.f32 %v9157, %v9260
        %v9262 = vpop.f32.mrb[0].mxu0
        %9263 = vmatprep.mubr.bf16.mxu0 0
        %9264 = vmatmul.mubr.bf16.gmra.mrb[0].mxu0 %v9148
        %v9265 = vpop.f32.mrb[0].mxu0
        %v9266 = vadd.f32 %v9157, %v9265
        %v9267 = vpop.f32.mrb[0].mxu0
        %v9268 = vpop.f32.mrb[0].mxu0
        %v9269 = vadd.f32 %v9157, %v9268
        %v9270 = vpop.f32.mrb[0].mxu0
        %9271 = vmatprep.mubr.bf16.mxu0 0
        %9272 = vmatmul.mubr.bf16.gmra.mrb[0].mxu0 %v9149
        %v9273 = vpop.f32.mrb[0].mxu0
        %v9274 = vadd.f32 %v9157, %v9273
        %v9275 = vpop.f32.mrb[0].mxu0
        %v9276 = vpop.f32.mrb[0].mxu0
        %v9277 = vadd.f32 %v9157, %v9276
        %v9278 = vpop.f32.mrb[0].mxu0
        %9279 = vmatprep.mubr.bf16.mxu0 0
        %9280 = vmatmul.mubr.bf16.gmra.mrb[0].mxu0 %v9150
        %v9281 = vpop.f32.mrb[0].mxu0
        %v9282 = vadd.f32 %v9157, %v9281
        %v9283 = vpop.f32.mrb[0].mxu0
        %v9284 = vpop.f32.mrb[0].mxu0
        %v9285 = vadd.f32 %v9157, %v9284
        %v9286 = vpop.f32.mrb[0].mxu0
        %9287 = vmatprep.mubr.bf16.mxu0 0
        %9288 = vmatmul.mubr.bf16.gmra.mrb[0].mxu0 %v9151
        %v9289 = vpop.f32.mrb[0].mxu0
        %v9290 = vadd.f32 %v9157, %v9289
        %v9291 = vpop.f32.mrb[0].mxu0
        %v9292 = vpop.f32.mrb[0].mxu0
        %v9293 = vadd.f32 %v9157, %v9292
        %v9294 = vpop.f32.mrb[0].mxu0
        %9295 = vmatprep.mubr.bf16.mxu0 0
        %9296 = vmatmul.mubr.bf16.gmra.mrb[0].mxu0 %v9152
        %v9297 = vpop.f32.mrb[0].mxu0
        %v9298 = vadd.f32 %v9157, %v9297
        %v9299 = vpop.f32.mrb[0].mxu0
        %v9300 = vpop.f32.mrb[0].mxu0
        %v9301 = vadd.f32 %v9157, %v9300
        %v9302 = vpop.f32.mrb[0].mxu0
        %9303 = vdwg.mxu0
        %v9304 = vmul.f32 %v9242, %v3267
        %v9305 = vmul.f32 %v9245, %v3272
        %v9306 = vmul.f32 %v9250, %v3277
        %v9307 = vmul.f32 %v9253, %v3282
        %v9308 = vmul.f32 %v9258, %v3287
        %v9309 = vmul.f32 %v9261, %v3292
        %v9310 = vmul.f32 %v9266, %v3297
        %v9311 = vmul.f32 %v9269, %v3302
        %v9312 = vmul.f32 %v9274, %v3307
        %v9313 = vmul.f32 %v9277, %v3312
        %v9314 = vmul.f32 %v9282, %v3317
        %v9315 = vmul.f32 %v9285, %v3322
        %v9316 = vmul.f32 %v9290, %v3327
        %v9317 = vmul.f32 %v9293, %v3332
        %v9318 = vmul.f32 %v9298, %v3337
        %v9319 = vmul.f32 %v9301, %v3342
        %v9320 = vrot.slane %v9304, 4
        %v9321 = vadd.f32 %v9304, %v9320
        %v9322 = vrot.slane %v9321, 2
        %v9323 = vadd.f32 %v9321, %v9322
        %v9324 = vrot.slane %v9323, 1
        %v9325 = vadd.f32 %v9323, %v9324
        %v9326 = vrot.slane %v9305, 4
        %v9327 = vadd.f32 %v9305, %v9326
        %v9328 = vrot.slane %v9327, 2
        %v9329 = vadd.f32 %v9327, %v9328
        %v9330 = vrot.slane %v9329, 1
        %v9331 = vadd.f32 %v9329, %v9330
        %v9332 = vrot.slane %v9306, 4
        %v9333 = vadd.f32 %v9306, %v9332
        %v9334 = vrot.slane %v9333, 2
        %v9335 = vadd.f32 %v9333, %v9334
        %v9336 = vrot.slane %v9335, 1
        %v9337 = vadd.f32 %v9335, %v9336
        %v9338 = vrot.slane %v9307, 4
        %v9339 = vadd.f32 %v9307, %v9338
        %v9340 = vrot.slane %v9339, 2
        %v9341 = vadd.f32 %v9339, %v9340
        %v9342 = vrot.slane %v9341, 1
        %v9343 = vadd.f32 %v9341, %v9342
        %v9344 = vrot.slane %v9308, 4
        %v9345 = vadd.f32 %v9308, %v9344
        %v9346 = vrot.slane %v9345, 2
        %v9347 = vadd.f32 %v9345, %v9346
        %v9348 = vrot.slane %v9347, 1
        %v9349 = vadd.f32 %v9347, %v9348
        %v9350 = vrot.slane %v9309, 4
        %v9351 = vadd.f32 %v9309, %v9350
        %v9352 = vrot.slane %v9351, 2
        %v9353 = vadd.f32 %v9351, %v9352
        %v9354 = vrot.slane %v9353, 1
        %v9355 = vadd.f32 %v9353, %v9354
        %v9356 = vrot.slane %v9310, 4
        %v9357 = vadd.f32 %v9310, %v9356
        %v9358 = vrot.slane %v9357, 2
        %v9359 = vadd.f32 %v9357, %v9358
        %v9360 = vrot.slane %v9359, 1
        %v9361 = vadd.f32 %v9359, %v9360
        %v9362 = vrot.slane %v9311, 4
        %v9363 = vadd.f32 %v9311, %v9362
        %v9364 = vrot.slane %v9363, 2
        %v9365 = vadd.f32 %v9363, %v9364
        %v9366 = vrot.slane %v9365, 1
        %v9367 = vadd.f32 %v9365, %v9366
        %v9368 = vrot.slane %v9312, 4
        %v9369 = vadd.f32 %v9312, %v9368
        %v9370 = vrot.slane %v9369, 2
        %v9371 = vadd.f32 %v9369, %v9370
        %v9372 = vrot.slane %v9371, 1
        %v9373 = vadd.f32 %v9371, %v9372
        %v9374 = vrot.slane %v9313, 4
        %v9375 = vadd.f32 %v9313, %v9374
        %v9376 = vrot.slane %v9375, 2
        %v9377 = vadd.f32 %v9375, %v9376
        %v9378 = vrot.slane %v9377, 1
        %v9379 = vadd.f32 %v9377, %v9378
        %v9380 = vrot.slane %v9314, 4
        %v9381 = vadd.f32 %v9314, %v9380
        %v9382 = vrot.slane %v9381, 2
        %v9383 = vadd.f32 %v9381, %v9382
        %v9384 = vrot.slane %v9383, 1
        %v9385 = vadd.f32 %v9383, %v9384
        %v9386 = vrot.slane %v9315, 4
        %v9387 = vadd.f32 %v9315, %v9386
        %v9388 = vrot.slane %v9387, 2
        %v9389 = vadd.f32 %v9387, %v9388
        %v9390 = vrot.slane %v9389, 1
        %v9391 = vadd.f32 %v9389, %v9390
        %v9392 = vrot.slane %v9316, 4
        %v9393 = vadd.f32 %v9316, %v9392
        %v9394 = vrot.slane %v9393, 2
        %v9395 = vadd.f32 %v9393, %v9394
        %v9396 = vrot.slane %v9395, 1
        %v9397 = vadd.f32 %v9395, %v9396
        %v9398 = vrot.slane %v9317, 4
        %v9399 = vadd.f32 %v9317, %v9398
        %v9400 = vrot.slane %v9399, 2
        %v9401 = vadd.f32 %v9399, %v9400
        %v9402 = vrot.slane %v9401, 1
        %v9403 = vadd.f32 %v9401, %v9402
        %v9404 = vrot.slane %v9318, 4
        %v9405 = vadd.f32 %v9318, %v9404
        %v9406 = vrot.slane %v9405, 2
        %v9407 = vadd.f32 %v9405, %v9406
        %v9408 = vrot.slane %v9407, 1
        %v9409 = vadd.f32 %v9407, %v9408
        %v9410 = vrot.slane %v9319, 4
        %v9411 = vadd.f32 %v9319, %v9410
        %v9412 = vrot.slane %v9411, 2
        %v9413 = vadd.f32 %v9411, %v9412
        %v9414 = vrot.slane %v9413, 1
        %v9415 = vadd.f32 %v9413, %v9414
        %v9416 = vmul.f32 %v9325, 0.033333335
        %v9417 = vmul.f32 %v9331, 0.033333335
        %v9418 = vmul.f32 %v9337, 0.033333335
        %v9419 = vmul.f32 %v9343, 0.033333335
        %v9420 = vmul.f32 %v9349, 0.033333335
        %v9421 = vmul.f32 %v9355, 0.033333335
        %v9422 = vmul.f32 %v9361, 0.033333335
        %v9423 = vmul.f32 %v9367, 0.033333335
        %v9424 = vmul.f32 %v9373, 0.033333335
        %v9425 = vmul.f32 %v9379, 0.033333335
        %v9426 = vmul.f32 %v9385, 0.033333335
        %v9427 = vmul.f32 %v9391, 0.033333335
        %v9428 = vmul.f32 %v9397, 0.033333335
        %v9429 = vmul.f32 %v9403, 0.033333335
        %v9430 = vmul.f32 %v9409, 0.033333335
        %v9431 = vmul.f32 %v9415, 0.033333335
        %v9448 = vsel %vm3488, %v9417, %v9416
        %v9449 = vsel %vm3490, %v9418, %v9448
        %v9450 = vsel %vm3492, %v9419, %v9449
        %v9451 = vsel %vm3494, %v9420, %v9450
        %v9452 = vsel %vm3496, %v9421, %v9451
        %v9453 = vsel %vm3498, %v9422, %v9452
        %v9454 = vsel %vm3500, %v9423, %v9453
        %v9455 = vsel %vm3488, %v9425, %v9424
        %v9456 = vsel %vm3490, %v9426, %v9455
        %v9457 = vsel %vm3492, %v9427, %v9456
        %v9458 = vsel %vm3494, %v9428, %v9457
        %v9459 = vsel %vm3496, %v9429, %v9458
        %v9460 = vsel %vm3498, %v9430, %v9459
        %v9461 = vsel %vm3500, %v9431, %v9460
        %v9464 = vadd.f32 %v8195, %v9454
        %v9465 = vadd.f32 %v8196, %v9461
        %9466 = vadd.xlane.f32.xlu0 %v9464
        %v9467 = vpop.xlane.xlu0 %9466
        %9468 = vadd.xlane.f32.xlu0 %v9465
        %v9469 = vpop.xlane.xlu0 %9468
        %v9470 = vmul.f32 %v9467, %v3517
        %v9471 = vmul.f32 %v9469, %v3517
        %v9472 = vsub.f32 %v9464, %v9470
        %v9473 = vsub.f32 %v9465, %v9471
        %v9474 = vmul.f32 %v9472, %v9472
        %v9475 = vmul.f32 %v9473, %v9473
        %9476 = vadd.xlane.f32.xlu0 %v9474
        %v9477 = vpop.xlane.xlu0 %9476
        %9478 = vadd.xlane.f32.xlu0 %v9475
        %v9479 = vpop.xlane.xlu0 %9478
        %v9480 = vmul.f32 %v9477, %v3528
        %v9481 = vmul.f32 %v9479, %v3528
        %v9482 = vadd.f32 %v9480, 1e-06
        %v9483 = vadd.f32 %v9481, 1e-06
        %v9484 = vrsqrt.pop %v9482
        %v9485 = vmul.f32 %v9482, %v9484
        %vm9486 = vcmp.eq.f32.partialorder %v9482, inf
        %v9487 = vsel %vm9486, %v9482, %v9485
        %vm9488 = vcmp.eq.f32.partialorder %v9482, 0.0
        %v9489 = vand.u32 %v9482, 2147483648
        %v9490 = vsel %vm9488, %v9489, %v9487
        %v9491 = vrsqrt.pop %v9483
        %v9492 = vmul.f32 %v9483, %v9491
        %vm9493 = vcmp.eq.f32.partialorder %v9483, inf
        %v9494 = vsel %vm9493, %v9483, %v9492
        %vm9495 = vcmp.eq.f32.partialorder %v9483, 0.0
        %v9496 = vand.u32 %v9483, 2147483648
        %v9497 = vsel %vm9495, %v9496, %v9494
        %v9498 = vadd.f32 %v9490, 1e-06
        %v9499 = vadd.f32 %v9497, 1e-06
        %v9500 = vrcp.pop %v9498
        %v9501 = vmul.f32 1.0, %v9500
        %v9502 = vrcp.pop %v9499
        %v9503 = vmul.f32 1.0, %v9502
        %v9505 = vlaneseq
        %v9506 = vshrl.u32 %v9505, 7
        %v9507 = vsub.s32 0, %v9506
        %v9508 = vrot.slane %v8649, %v9507
        %v9510 = vmul.f32 %v9508, %v9472
        %v9511 = vmul.f32 %v9508, %v9473
        %v9512 = vmul.f32 %v9510, %v9501
        %v9513 = vmul.f32 %v9511, %v9503
        %v9515 = vlaneseq
        %v9516 = vshrl.u32 %v9515, 7
        %v9517 = vsub.s32 0, %v9516
        %v9518 = vrot.slane %v8651, %v9517
        %v9520 = vadd.f32 %v9512, %v9518
        %v9521 = vadd.f32 %v9513, %v9518
        %v9522 = vpack.c.bf16 %v9521, %v9520
        %v9524 = vlaneseq
        %v9525 = vshrl.u32 %v9524, 7
        %v9526 = vsub.s32 0, %v9525
        %v9527 = vrot.slane %v8686, %v9526
        %v9528 = vlaneseq
        %v9529 = vshrl.u32 %v9528, 7
        %v9530 = vsub.s32 1, %v9529
        %v9531 = vrot.slane %v8686, %v9530
        %v9532 = vlaneseq
        %v9533 = vshrl.u32 %v9532, 7
        %v9534 = vsub.s32 2, %v9533
        %v9535 = vrot.slane %v8686, %v9534
        %v9536 = vlaneseq
        %v9537 = vshrl.u32 %v9536, 7
        %v9538 = vsub.s32 3, %v9537
        %v9539 = vrot.slane %v8686, %v9538
        %v9576 = vunpack.c.l.b16 %v8653
        %v9577 = vunpack.c.h.b16 %v8653
        %v9578 = vunpack.c.l.b16 %v8654
        %v9579 = vunpack.c.h.b16 %v8654
        %v9580 = vunpack.c.l.b16 %v8655
        %v9581 = vunpack.c.h.b16 %v8655
        %v9582 = vunpack.c.l.b16 %v8656
        %v9583 = vunpack.c.h.b16 %v8656
        %v9584 = vunpack.c.l.b16 %v8657
        %v9585 = vunpack.c.h.b16 %v8657
        %v9586 = vunpack.c.l.b16 %v8658
        %v9587 = vunpack.c.h.b16 %v8658
        %v9588 = vunpack.c.l.b16 %v8659
        %v9589 = vunpack.c.h.b16 %v8659
        %v9590 = vunpack.c.l.b16 %v8660
        %v9591 = vunpack.c.h.b16 %v8660
        %v9592 = vunpack.c.l.b16 %v8661
        %v9593 = vunpack.c.h.b16 %v8661
        %v9594 = vunpack.c.l.b16 %v8662
        %v9595 = vunpack.c.h.b16 %v8662
        %v9596 = vunpack.c.l.b16 %v8663
        %v9597 = vunpack.c.h.b16 %v8663
        %v9598 = vunpack.c.l.b16 %v8664
        %v9599 = vunpack.c.h.b16 %v8664
        %v9600 = vunpack.c.l.b16 %v8665
        %v9601 = vunpack.c.h.b16 %v8665
        %v9602 = vunpack.c.l.b16 %v8666
        %v9603 = vunpack.c.h.b16 %v8666
        %v9604 = vunpack.c.l.b16 %v8667
        %v9605 = vunpack.c.h.b16 %v8667
        %v9606 = vunpack.c.l.b16 %v8668
        %v9607 = vunpack.c.h.b16 %v8668
        %v9608 = vunpack.c.l.b16 %v8669
        %v9609 = vunpack.c.h.b16 %v8669
        %v9610 = vunpack.c.l.b16 %v8670
        %v9611 = vunpack.c.h.b16 %v8670
        %v9612 = vunpack.c.l.b16 %v8671
        %v9613 = vunpack.c.h.b16 %v8671
        %v9614 = vunpack.c.l.b16 %v8672
        %v9615 = vunpack.c.h.b16 %v8672
        %v9616 = vunpack.c.l.b16 %v8673
        %v9617 = vunpack.c.h.b16 %v8673
        %v9618 = vunpack.c.l.b16 %v8674
        %v9619 = vunpack.c.h.b16 %v8674
        %v9620 = vunpack.c.l.b16 %v8675
        %v9621 = vunpack.c.h.b16 %v8675
        %v9622 = vunpack.c.l.b16 %v8676
        %v9623 = vunpack.c.h.b16 %v8676
        %v9624 = vunpack.c.l.b16 %v8677
        %v9625 = vunpack.c.h.b16 %v8677
        %v9626 = vunpack.c.l.b16 %v8678
        %v9627 = vunpack.c.h.b16 %v8678
        %v9628 = vunpack.c.l.b16 %v8679
        %v9629 = vunpack.c.h.b16 %v8679
        %v9630 = vunpack.c.l.b16 %v8680
        %v9631 = vunpack.c.h.b16 %v8680
        %v9632 = vunpack.c.l.b16 %v8681
        %v9633 = vunpack.c.h.b16 %v8681
        %v9634 = vunpack.c.l.b16 %v8682
        %v9635 = vunpack.c.h.b16 %v8682
        %v9636 = vunpack.c.l.b16 %v8683
        %v9637 = vunpack.c.h.b16 %v8683
        %v9638 = vunpack.c.l.b16 %v8684
        %v9639 = vunpack.c.h.b16 %v8684
        %v9640 = vpack.c.b16 %v9580, %v9576
        %v9641 = vpack.c.b16 %v9581, %v9577
        %v9642 = vpack.c.b16 %v9582, %v9578
        %v9643 = vpack.c.b16 %v9583, %v9579
        %v9644 = vpack.c.b16 %v9588, %v9584
        %v9645 = vpack.c.b16 %v9589, %v9585
        %v9646 = vpack.c.b16 %v9590, %v9586
        %v9647 = vpack.c.b16 %v9591, %v9587
        %v9648 = vpack.c.b16 %v9596, %v9592
        %v9649 = vpack.c.b16 %v9597, %v9593
        %v9650 = vpack.c.b16 %v9598, %v9594
        %v9651 = vpack.c.b16 %v9599, %v9595
        %v9652 = vpack.c.b16 %v9604, %v9600
        %v9653 = vpack.c.b16 %v9605, %v9601
        %v9654 = vpack.c.b16 %v9606, %v9602
        %v9655 = vpack.c.b16 %v9607, %v9603
        %v9656 = vpack.c.b16 %v9612, %v9608
        %v9657 = vpack.c.b16 %v9613, %v9609
        %v9658 = vpack.c.b16 %v9614, %v9610
        %v9659 = vpack.c.b16 %v9615, %v9611
        %v9660 = vpack.c.b16 %v9620, %v9616
        %v9661 = vpack.c.b16 %v9621, %v9617
        %v9662 = vpack.c.b16 %v9622, %v9618
        %v9663 = vpack.c.b16 %v9623, %v9619
        %v9664 = vpack.c.b16 %v9628, %v9624
        %v9665 = vpack.c.b16 %v9629, %v9625
        %v9666 = vpack.c.b16 %v9630, %v9626
        %v9667 = vpack.c.b16 %v9631, %v9627
        %v9668 = vpack.c.b16 %v9636, %v9632
        %v9669 = vpack.c.b16 %v9637, %v9633
        %v9670 = vpack.c.b16 %v9638, %v9634
        %v9671 = vpack.c.b16 %v9639, %v9635
        %9704 = vmatprep.subr.bf16.mxu0 %v9641
        %9705 = vmatpush1.bf16.msra.mxu0 %v9640
        %9706 = vmatprep.subr.bf16.mxu0 %v9645
        %9707 = vmatpush1.bf16.msra.mxu0 %v9644
        %9708 = vmatprep.subr.bf16.mxu0 %v9649
        %9709 = vmatpush1.bf16.msra.mxu0 %v9648
        %9710 = vmatprep.subr.bf16.mxu0 %v9653
        %9711 = vmatpush1.bf16.msra.mxu0 %v9652
        %9712 = vmatprep.subr.bf16.mxu0 %v9657
        %9713 = vmatpush1.bf16.msra.mxu0 %v9656
        %9714 = vmatprep.subr.bf16.mxu0 %v9661
        %9715 = vmatpush1.bf16.msra.mxu0 %v9660
        %9716 = vmatprep.subr.bf16.mxu0 %v9665
        %9717 = vmatpush1.bf16.msra.mxu0 %v9664
        %9718 = vmatprep.subr.bf16.mxu0 %v9669
        %9719 = vmatpush1.bf16.msra.mxu0 %v9668
        %9720 = vmatprep.subr.bf16.mxu0 0
        %9721 = vmatpush1.bf16.msra.mxu0 0
        %9722 = vmatprep.subr.bf16.mxu0 0
        %9723 = vmatpush1.bf16.msra.mxu0 0
        %9724 = vmatprep.subr.bf16.mxu0 0
        %9725 = vmatpush1.bf16.msra.mxu0 0
        %9726 = vmatprep.subr.bf16.mxu0 0
        %9727 = vmatpush1.bf16.msra.mxu0 0
        %9728 = vmatprep.subr.bf16.mxu0 0
        %9729 = vmatpush1.bf16.msra.mxu0 0
        %9730 = vmatprep.subr.bf16.mxu0 0
        %9731 = vmatpush1.bf16.msra.mxu0 0
        %9732 = vmatprep.subr.bf16.mxu0 0
        %9733 = vmatpush1.bf16.msra.mxu0 0
        %9734 = vmatprep.subr.bf16.mxu0 0
        %9735 = vmatpush1.bf16.msra.mxu0 0
        %9736 = vmatprep.mubr.bf16.mxu0 0
        %9737 = vmatmul.mubr.bf16.gmra.mrb[0].mxu0 %v9522
        %v9738 = vpop.f32.mrb[0].mxu0
        %v9739 = vadd.f32 %v9527, %v9738
        %v9740 = vpop.f32.mrb[0].mxu0
        %v9741 = vadd.f32 %v9531, %v9740
        %v9742 = vpop.f32.mrb[0].mxu0
        %v9743 = vadd.f32 %v9527, %v9742
        %v9744 = vpop.f32.mrb[0].mxu0
        %v9745 = vadd.f32 %v9531, %v9744
        %9746 = vdwg.mxu0
        %9747 = vmatprep.subr.bf16.mxu0 %v9643
        %9748 = vmatpush1.bf16.msra.mxu0 %v9642
        %9749 = vmatprep.subr.bf16.mxu0 %v9647
        %9750 = vmatpush1.bf16.msra.mxu0 %v9646
        %9751 = vmatprep.subr.bf16.mxu0 %v9651
        %9752 = vmatpush1.bf16.msra.mxu0 %v9650
        %9753 = vmatprep.subr.bf16.mxu0 %v9655
        %9754 = vmatpush1.bf16.msra.mxu0 %v9654
        %9755 = vmatprep.subr.bf16.mxu0 %v9659
        %9756 = vmatpush1.bf16.msra.mxu0 %v9658
        %9757 = vmatprep.subr.bf16.mxu0 %v9663
        %9758 = vmatpush1.bf16.msra.mxu0 %v9662
        %9759 = vmatprep.subr.bf16.mxu0 %v9667
        %9760 = vmatpush1.bf16.msra.mxu0 %v9666
        %9761 = vmatprep.subr.bf16.mxu0 %v9671
        %9762 = vmatpush1.bf16.msra.mxu0 %v9670
        %9763 = vmatprep.subr.bf16.mxu0 0
        %9764 = vmatpush1.bf16.msra.mxu0 0
        %9765 = vmatprep.subr.bf16.mxu0 0
        %9766 = vmatpush1.bf16.msra.mxu0 0
        %9767 = vmatprep.subr.bf16.mxu0 0
        %9768 = vmatpush1.bf16.msra.mxu0 0
        %9769 = vmatprep.subr.bf16.mxu0 0
        %9770 = vmatpush1.bf16.msra.mxu0 0
        %9771 = vmatprep.subr.bf16.mxu0 0
        %9772 = vmatpush1.bf16.msra.mxu0 0
        %9773 = vmatprep.subr.bf16.mxu0 0
        %9774 = vmatpush1.bf16.msra.mxu0 0
        %9775 = vmatprep.subr.bf16.mxu0 0
        %9776 = vmatpush1.bf16.msra.mxu0 0
        %9777 = vmatprep.subr.bf16.mxu0 0
        %9778 = vmatpush1.bf16.msra.mxu0 0
        %9779 = vmatprep.mubr.bf16.mxu0 0
        %9780 = vmatmul.mubr.bf16.gmra.mrb[0].mxu0 %v9522
        %v9781 = vpop.f32.mrb[0].mxu0
        %v9782 = vadd.f32 %v9535, %v9781
        %v9783 = vpop.f32.mrb[0].mxu0
        %v9784 = vadd.f32 %v9539, %v9783
        %v9785 = vpop.f32.mrb[0].mxu0
        %v9786 = vadd.f32 %v9535, %v9785
        %v9787 = vpop.f32.mrb[0].mxu0
        %v9788 = vadd.f32 %v9539, %v9787
        %9789 = vdwg.mxu0
        %v9790 = vmax.f32 %v9739, 0.0
        %v9791 = vmax.f32 %v9741, 0.0
        %v9792 = vmax.f32 %v9782, 0.0
        %v9793 = vmax.f32 %v9784, 0.0
        %v9794 = vmax.f32 %v9743, 0.0
        %v9795 = vmax.f32 %v9745, 0.0
        %v9796 = vmax.f32 %v9786, 0.0
        %v9797 = vmax.f32 %v9788, 0.0
        %v9798 = vpack.c.bf16 %v9794, %v9790
        %v9799 = vpack.c.bf16 %v9795, %v9791
        %v9800 = vpack.c.bf16 %v9796, %v9792
        %v9801 = vpack.c.bf16 %v9797, %v9793
        %v9803 = vlaneseq
        %v9804 = vshrl.u32 %v9803, 7
        %v9805 = vsub.s32 0, %v9804
        %v9806 = vrot.slane %v8753, %v9805
        %v9872 = vunpack.c.l.b16 %v8688
        %v9873 = vunpack.c.l.b16 %v8689
        %v9874 = vunpack.c.l.b16 %v8690
        %v9875 = vunpack.c.l.b16 %v8691
        %v9876 = vunpack.c.l.b16 %v8692
        %v9877 = vunpack.c.l.b16 %v8693
        %v9878 = vunpack.c.l.b16 %v8694
        %v9879 = vunpack.c.l.b16 %v8695
        %v9880 = vunpack.c.l.b16 %v8696
        %v9881 = vunpack.c.l.b16 %v8697
        %v9882 = vunpack.c.l.b16 %v8698
        %v9883 = vunpack.c.l.b16 %v8699
        %v9884 = vunpack.c.l.b16 %v8700
        %v9885 = vunpack.c.l.b16 %v8701
        %v9886 = vunpack.c.l.b16 %v8702
        %v9887 = vunpack.c.l.b16 %v8703
        %v9888 = vunpack.c.l.b16 %v8704
        %v9889 = vunpack.c.l.b16 %v8705
        %v9890 = vunpack.c.l.b16 %v8706
        %v9891 = vunpack.c.l.b16 %v8707
        %v9892 = vunpack.c.l.b16 %v8708
        %v9893 = vunpack.c.l.b16 %v8709
        %v9894 = vunpack.c.l.b16 %v8710
        %v9895 = vunpack.c.l.b16 %v8711
        %v9896 = vunpack.c.l.b16 %v8712
        %v9897 = vunpack.c.l.b16 %v8713
        %v9898 = vunpack.c.l.b16 %v8714
        %v9899 = vunpack.c.l.b16 %v8715
        %v9900 = vunpack.c.l.b16 %v8716
        %v9901 = vunpack.c.l.b16 %v8717
        %v9902 = vunpack.c.l.b16 %v8718
        %v9903 = vunpack.c.l.b16 %v8719
        %v9904 = vunpack.c.l.b16 %v8720
        %v9905 = vunpack.c.l.b16 %v8721
        %v9906 = vunpack.c.l.b16 %v8722
        %v9907 = vunpack.c.l.b16 %v8723
        %v9908 = vunpack.c.l.b16 %v8724
        %v9909 = vunpack.c.l.b16 %v8725
        %v9910 = vunpack.c.l.b16 %v8726
        %v9911 = vunpack.c.l.b16 %v8727
        %v9912 = vunpack.c.l.b16 %v8728
        %v9913 = vunpack.c.l.b16 %v8729
        %v9914 = vunpack.c.l.b16 %v8730
        %v9915 = vunpack.c.l.b16 %v8731
        %v9916 = vunpack.c.l.b16 %v8732
        %v9917 = vunpack.c.l.b16 %v8733
        %v9918 = vunpack.c.l.b16 %v8734
        %v9919 = vunpack.c.l.b16 %v8735
        %v9920 = vunpack.c.l.b16 %v8736
        %v9921 = vunpack.c.l.b16 %v8737
        %v9922 = vunpack.c.l.b16 %v8738
        %v9923 = vunpack.c.l.b16 %v8739
        %v9924 = vunpack.c.l.b16 %v8740
        %v9925 = vunpack.c.l.b16 %v8741
        %v9926 = vunpack.c.l.b16 %v8742
        %v9927 = vunpack.c.l.b16 %v8743
        %v9928 = vunpack.c.l.b16 %v8744
        %v9929 = vunpack.c.l.b16 %v8745
        %v9930 = vunpack.c.l.b16 %v8746
        %v9931 = vunpack.c.l.b16 %v8747
        %v9932 = vunpack.c.l.b16 %v8748
        %v9933 = vunpack.c.l.b16 %v8749
        %v9934 = vunpack.c.l.b16 %v8750
        %v9935 = vunpack.c.l.b16 %v8751
        %v9936 = vpack.c.b16 %v9873, %v9872
        %v9937 = vpack.c.b16 %v9875, %v9874
        %v9938 = vpack.c.b16 %v9877, %v9876
        %v9939 = vpack.c.b16 %v9879, %v9878
        %v9940 = vpack.c.b16 %v9881, %v9880
        %v9941 = vpack.c.b16 %v9883, %v9882
        %v9942 = vpack.c.b16 %v9885, %v9884
        %v9943 = vpack.c.b16 %v9887, %v9886
        %v9944 = vpack.c.b16 %v9889, %v9888
        %v9945 = vpack.c.b16 %v9891, %v9890
        %v9946 = vpack.c.b16 %v9893, %v9892
        %v9947 = vpack.c.b16 %v9895, %v9894
        %v9948 = vpack.c.b16 %v9897, %v9896
        %v9949 = vpack.c.b16 %v9899, %v9898
        %v9950 = vpack.c.b16 %v9901, %v9900
        %v9951 = vpack.c.b16 %v9903, %v9902
        %v9952 = vpack.c.b16 %v9905, %v9904
        %v9953 = vpack.c.b16 %v9907, %v9906
        %v9954 = vpack.c.b16 %v9909, %v9908
        %v9955 = vpack.c.b16 %v9911, %v9910
        %v9956 = vpack.c.b16 %v9913, %v9912
        %v9957 = vpack.c.b16 %v9915, %v9914
        %v9958 = vpack.c.b16 %v9917, %v9916
        %v9959 = vpack.c.b16 %v9919, %v9918
        %v9960 = vpack.c.b16 %v9921, %v9920
        %v9961 = vpack.c.b16 %v9923, %v9922
        %v9962 = vpack.c.b16 %v9925, %v9924
        %v9963 = vpack.c.b16 %v9927, %v9926
        %v9964 = vpack.c.b16 %v9929, %v9928
        %v9965 = vpack.c.b16 %v9931, %v9930
        %v9966 = vpack.c.b16 %v9933, %v9932
        %v9967 = vpack.c.b16 %v9935, %v9934
        %10000 = vmatprep.subr.bf16.mxu0 0
        %10001 = vmatpush1.bf16.msra.mxu0 %v9936
        %10002 = vmatprep.subr.bf16.mxu0 0
        %10003 = vmatpush1.bf16.msra.mxu0 %v9937
        %10004 = vmatprep.subr.bf16.mxu0 0
        %10005 = vmatpush1.bf16.msra.mxu0 %v9938
        %10006 = vmatprep.subr.bf16.mxu0 0
        %10007 = vmatpush1.bf16.msra.mxu0 %v9939
        %10008 = vmatprep.subr.bf16.mxu0 0
        %10009 = vmatpush1.bf16.msra.mxu0 %v9940
        %10010 = vmatprep.subr.bf16.mxu0 0
        %10011 = vmatpush1.bf16.msra.mxu0 %v9941
        %10012 = vmatprep.subr.bf16.mxu0 0
        %10013 = vmatpush1.bf16.msra.mxu0 %v9942
        %10014 = vmatprep.subr.bf16.mxu0 0
        %10015 = vmatpush1.bf16.msra.mxu0 %v9943
        %10016 = vmatprep.subr.bf16.mxu0 0
        %10017 = vmatpush1.bf16.msra.mxu0 %v9944
        %10018 = vmatprep.subr.bf16.mxu0 0
        %10019 = vmatpush1.bf16.msra.mxu0 %v9945
        %10020 = vmatprep.subr.bf16.mxu0 0
        %10021 = vmatpush1.bf16.msra.mxu0 %v9946
        %10022 = vmatprep.subr.bf16.mxu0 0
        %10023 = vmatpush1.bf16.msra.mxu0 %v9947
        %10024 = vmatprep.subr.bf16.mxu0 0
        %10025 = vmatpush1.bf16.msra.mxu0 %v9948
        %10026 = vmatprep.subr.bf16.mxu0 0
        %10027 = vmatpush1.bf16.msra.mxu0 %v9949
        %10028 = vmatprep.subr.bf16.mxu0 0
        %10029 = vmatpush1.bf16.msra.mxu0 %v9950
        %10030 = vmatprep.subr.bf16.mxu0 0
        %10031 = vmatpush1.bf16.msra.mxu0 %v9951
        %10032 = vmatprep.mubr.bf16.mxu0 %v9799
        %10033 = vmatmul.mubr.bf16.gmra.mrb[0].mxu0 %v9798
        %v10034 = vpop.f32.mrb[0].mxu0
        %v10035 = vadd.f32 %v9806, %v10034
        %v10036 = vpop.f32.mrb[0].mxu0
        %v10037 = vpop.f32.mrb[0].mxu0
        %v10038 = vadd.f32 %v9806, %v10037
        %v10039 = vpop.f32.mrb[0].mxu0
        %10040 = vdwg.mxu0
        %10041 = vmatprep.subr.bf16.mxu0 0
        %10042 = vmatpush1.bf16.msra.mxu0 %v9952
        %10043 = vmatprep.subr.bf16.mxu0 0
        %10044 = vmatpush1.bf16.msra.mxu0 %v9953
        %10045 = vmatprep.subr.bf16.mxu0 0
        %10046 = vmatpush1.bf16.msra.mxu0 %v9954
        %10047 = vmatprep.subr.bf16.mxu0 0
        %10048 = vmatpush1.bf16.msra.mxu0 %v9955
        %10049 = vmatprep.subr.bf16.mxu0 0
        %10050 = vmatpush1.bf16.msra.mxu0 %v9956
        %10051 = vmatprep.subr.bf16.mxu0 0
        %10052 = vmatpush1.bf16.msra.mxu0 %v9957
        %10053 = vmatprep.subr.bf16.mxu0 0
        %10054 = vmatpush1.bf16.msra.mxu0 %v9958
        %10055 = vmatprep.subr.bf16.mxu0 0
        %10056 = vmatpush1.bf16.msra.mxu0 %v9959
        %10057 = vmatprep.subr.bf16.mxu0 0
        %10058 = vmatpush1.bf16.msra.mxu0 %v9960
        %10059 = vmatprep.subr.bf16.mxu0 0
        %10060 = vmatpush1.bf16.msra.mxu0 %v9961
        %10061 = vmatprep.subr.bf16.mxu0 0
        %10062 = vmatpush1.bf16.msra.mxu0 %v9962
        %10063 = vmatprep.subr.bf16.mxu0 0
        %10064 = vmatpush1.bf16.msra.mxu0 %v9963
        %10065 = vmatprep.subr.bf16.mxu0 0
        %10066 = vmatpush1.bf16.msra.mxu0 %v9964
        %10067 = vmatprep.subr.bf16.mxu0 0
        %10068 = vmatpush1.bf16.msra.mxu0 %v9965
        %10069 = vmatprep.subr.bf16.mxu0 0
        %10070 = vmatpush1.bf16.msra.mxu0 %v9966
        %10071 = vmatprep.subr.bf16.mxu0 0
        %10072 = vmatpush1.bf16.msra.mxu0 %v9967
        %10073 = vmatprep.mubr.bf16.mxu0 %v9801
        %10074 = vmatmul.mubr.bf16.gmra.mrb[0].mxu0 %v9800
        %v10075 = vpop.f32.mrb[0].mxu0
        %v10076 = vadd.f32 %v10035, %v10075
        %v10077 = vpop.f32.mrb[0].mxu0
        %v10078 = vpop.f32.mrb[0].mxu0
        %v10079 = vadd.f32 %v10038, %v10078
        %v10080 = vpop.f32.mrb[0].mxu0
        %10081 = vdwg.mxu0
        %v10082 = vadd.f32 %v9520, %v10076
        %v10083 = vadd.f32 %v9521, %v10079
        %10084 = vadd.xlane.f32.xlu0 %v10082
        %v10085 = vpop.xlane.xlu0 %10084
        %10086 = vadd.xlane.f32.xlu0 %v10083
        %v10087 = vpop.xlane.xlu0 %10086
        %v10088 = vmul.f32 %v10085, %v3517
        %v10089 = vmul.f32 %v10087, %v3517
        %v10090 = vsub.f32 %v10082, %v10088
        %v10091 = vsub.f32 %v10083, %v10089
        %v10092 = vmul.f32 %v10090, %v10090
        %v10093 = vmul.f32 %v10091, %v10091
        %10094 = vadd.xlane.f32.xlu0 %v10092
        %v10095 = vpop.xlane.xlu0 %10094
        %10096 = vadd.xlane.f32.xlu0 %v10093
        %v10097 = vpop.xlane.xlu0 %10096
        %v10098 = vmul.f32 %v10095, %v3528
        %v10099 = vmul.f32 %v10097, %v3528
        %v10100 = vadd.f32 %v10098, 1e-06
        %v10101 = vadd.f32 %v10099, 1e-06
        %v10102 = vrsqrt.pop %v10100
        %v10103 = vmul.f32 %v10100, %v10102
        %vm10104 = vcmp.eq.f32.partialorder %v10100, inf
        %v10105 = vsel %vm10104, %v10100, %v10103
        %vm10106 = vcmp.eq.f32.partialorder %v10100, 0.0
        %v10107 = vand.u32 %v10100, 2147483648
        %v10108 = vsel %vm10106, %v10107, %v10105
        %v10109 = vrsqrt.pop %v10101
        %v10110 = vmul.f32 %v10101, %v10109
        %vm10111 = vcmp.eq.f32.partialorder %v10101, inf
        %v10112 = vsel %vm10111, %v10101, %v10110
        %vm10113 = vcmp.eq.f32.partialorder %v10101, 0.0
        %v10114 = vand.u32 %v10101, 2147483648
        %v10115 = vsel %vm10113, %v10114, %v10112
        %v10116 = vadd.f32 %v10108, 1e-06
        %v10117 = vadd.f32 %v10115, 1e-06
        %v10118 = vrcp.pop %v10116
        %v10119 = vmul.f32 1.0, %v10118
        %v10120 = vrcp.pop %v10117
        %v10121 = vmul.f32 1.0, %v10120
        %v10123 = vlaneseq
        %v10124 = vshrl.u32 %v10123, 7
        %v10125 = vsub.s32 0, %v10124
        %v10126 = vrot.slane %v8755, %v10125
        %v10128 = vmul.f32 %v10126, %v10090
        %v10129 = vmul.f32 %v10126, %v10091
        %v10130 = vmul.f32 %v10128, %v10119
        %v10131 = vmul.f32 %v10129, %v10121
        %v10133 = vlaneseq
        %v10134 = vshrl.u32 %v10133, 7
        %v10135 = vsub.s32 0, %v10134
        %v10136 = vrot.slane %v8757, %v10135
        %v10138 = vadd.f32 %v10130, %v10136
        %v10139 = vadd.f32 %v10131, %v10136
        %10140 = vst [vmem:[%s1746] sm:$0xff] %v10138
        %10141 = vst [vmem:[%s1746 + $0x8] sm:$0xff] %v10139
        %s10142 = sand.u32 %s1031, 1
        %s10143 = scalar_lea.sflag [#allocation4], %s10142
        %s10144 = sand.u32 %s1031, 1
        %s10145 = smul.addr %s10144, 16
        %s10146 = scalar_lea.vmem [#allocation47], %s10145
        // Predicated region
        $region305: #{tpu_custom_call.1} parent=187 // pred_check
          %p10147 = pneg %p1041
        $region306: #{tpu_custom_call.1} parent=187 // pred_check_branch
          %10149 = sbr.rel (%p10147) target = $region308
        $region307: #{tpu_custom_call.1} parent=187 // pred_region
          %s10151 = ssub.s32 256, 256
          %10152 = vsyncadd %s10143, %s10151
          %s10153 = smul.addr %s116, 2
          %s10154 = smul.addr %s10153, 128
          %s10155 = scalar_lea.hbm %s85, %s10154
          %s10156 = sshll.u32 %s10146, 4
          %s10157 = int_to_ptr.vmem [resolvable:$true] %s10156
          %10162 = dma.vmem_to_hbm [thread:$0]  %s10157, 256, %s10155, %s10143, 128, 128, 8
        $region308: #{tpu_custom_call.1} parent=187 // pred_fallthru
          _
      $region188: #{tpu_custom_call.1} parent=5 // pred_fallthru
        _
      %p10163 = scmp.le.s32.totalorder 2, %s111
      // Predicated region
      $region309: #{tpu_custom_call.1} parent=5 // pred_check
        %p10164 = pneg %p10163
      $region310: #{tpu_custom_call.1} parent=5 // pred_check_branch
        %10166 = sbr.rel (%p10164) target = $region312
      $region311: #{tpu_custom_call.1} parent=5 // pred_region
        %s10167 = ssub.s32 %s111, 2
        // Predicated region
        $region313: #{tpu_custom_call.1} parent=311 // pred_check
          %p10168 = pneg %p1047
        $region314: #{tpu_custom_call.1} parent=311 // pred_check_branch
          %10170 = sbr.rel (%p10168) target = $region316
        $region315: #{tpu_custom_call.1} parent=311 // pred_region
          %s10171 = sand.u32 %s1032, 1
          %s10172 = scalar_lea.sflag [#allocation4], %s10171
          %s10173 = sand.u32 %s1032, 1
          %s10174 = smul.addr %s10173, 16
          %s10175 = scalar_lea.vmem [#allocation47], %s10174
          %10176 = dma.done %s10172, 256
        $region316: #{tpu_custom_call.1} parent=311 // pred_fallthru
          _
      $region312: #{tpu_custom_call.1} parent=5 // pred_fallthru
        _
    $region6: #{tpu_custom_call.1} parent=1 // loop_footer
      %s115 = sadd.s32 1, %s111
    $region7: #{tpu_custom_call.1} parent=1 // loop_footer_branch
      %110 = sbr.rel target = $region3
    $region8: #{tpu_custom_call.1} parent=1 // loop_exit
      _
    %10177 = vsyncpa [#allocation3], 1
    %s10178 = scalar_lea.sflag [#allocation3], 1
    %10179 = vsyncpa %s10178, 1
    %10180 = vsyncpa [#allocation6], 1
    %10181 = vsyncpa [#allocation9], 1
    %10182 = vsyncpa [#allocation12], 1
    %10183 = vsyncpa [#allocation15], 1
    %10184 = vsyncpa [#allocation18], 1
    %10185 = vsyncpa [#allocation21], 1
    %10186 = vsyncpa [#allocation24], 1
    %10187 = vsyncpa [#allocation27], 1
    %10188 = vsyncpa [#allocation30], 1
    %10189 = vsyncpa [#allocation33], 1
    %10190 = vsyncpa [#allocation36], 1
    %10191 = vsyncpa [#allocation39], 1
    %10192 = vsyncpa [#allocation42], 1
    %10193 = vsyncpa [#allocation45], 1
    %10194 = vsyncpa [#allocation4], 1
    %s10195 = scalar_lea.sflag [#allocation4], 1
    %10196 = vsyncpa %s10195, 1

</llo_original>
